<compile_context>
chip_gen: v6e
topology: v6e:2x2x1
jax: 0.10.0
libtpu: 0.0.40
codegen_flags: <defaults>
</compile_context>

<pallas_src>
import functools

import jax
import jax.numpy as jnp
from jax.experimental import pallas as pl
from jax.experimental.pallas import tpu as pltpu


def _round_up(v, m):
    return (v + m - 1) // m * m


# ------------------------------ fused kernel --------------------------------

def _basic_block_kernel(x_ref, w1_ref, s1_ref, t1_ref, w2_ref, s2_ref, t2_ref,
                        o_ref, xpad_ref, midp_ref, *, H, W, HP, WP):
    # x_ref:    (1, H, W, Cin)  f32  input block (one batch element)
    # w1_ref:   (3, 3, Cin, C)  bf16
    # w2_ref:   (3, 3, C,   C)  bf16
    # s*_ref:   (1, C)          f32  folded BN scale
    # t*_ref:   (1, C)          f32  folded BN shift
    # o_ref:    (1, H, W, C)
    # xpad_ref: (HP, WP, Cin)   f32  VMEM scratch, zero halo + interior = x
    # midp_ref: (HP, WP, C)     f32  VMEM scratch, zero halo + interior = stage1
    Cin = x_ref.shape[3]
    C = o_ref.shape[3]

    # ---- stage 0: zero-halo padded input slab built in VMEM (no host pad) ---
    xpad_ref[...] = jnp.zeros((HP, WP, Cin), xpad_ref.dtype)
    xpad_ref[1:1 + H, 1:1 + W, :] = x_ref[0]

    # ---- stage 1: conv1 -> BN1 -> ReLU (f32 accumulate, bf16 MXU inputs) ----
    # Flatten padded slab to (HP*WP, Cin).  Each tap (kh, kw) is then a single
    # uniform sublane shift (offset kh*WP + kw; the kh*WP part is tile-aligned
    # since WP % 8 == 0) followed by one MXU matmul accumulated in f32.
    xp = xpad_ref[...].astype(jnp.bfloat16).reshape(HP * WP, Cin)
    acc1 = jnp.zeros((H * WP, C), jnp.float32)
    for kh in range(3):
        for kw in range(3):
            off = kh * WP + kw
            acc1 = acc1 + jnp.dot(xp[off:off + H * WP, :], w1_ref[kh, kw],
                                  preferred_element_type=jnp.float32)
    y1 = jnp.maximum(acc1 * s1_ref[...] + t1_ref[...], 0.0)       # (H*WP, C)

    # ---- stage 2: stash intermediate (fresh zero halo) in VMEM --------------
    midp_ref[...] = jnp.zeros((HP, WP, C), midp_ref.dtype)
    midp_ref[1:1 + H, 1:1 + W, :] = y1.reshape(H, WP, C)[:, :W, :]

    # ---- stage 3: conv2 -> BN2 -> add identity -> ReLU ----------------------
    mp = midp_ref[...].astype(jnp.bfloat16).reshape(HP * WP, C)
    acc2 = jnp.zeros((H * WP, C), jnp.float32)
    for kh in range(3):
        for kw in range(3):
            off = kh * WP + kw
            acc2 = acc2 + jnp.dot(mp[off:off + H * WP, :], w2_ref[kh, kw],
                                  preferred_element_type=jnp.float32)
    y2 = acc2 * s2_ref[...] + t2_ref[...]                         # (H*WP, C)
    y2 = y2.reshape(H, WP, C)[:, :W, :] + x_ref[0].astype(jnp.float32)
    o_ref[0] = jnp.maximum(y2, 0.0).astype(o_ref.dtype)


# ------------------------------ call wrapper ---------------------------------

def _basic_block_pallas(x_nhwc, w1, s1, t1, w2, s2, t2):
    N, H, W, Cin = x_nhwc.shape
    C = w1.shape[-1]
    WP = _round_up(W + 2, 8)    # padded width, multiple of 8 (layout-friendly)
    HP = _round_up(H + 3, 8)    # padded height + slack for the flat tap shift

    kernel = functools.partial(_basic_block_kernel, H=H, W=W, HP=HP, WP=WP)

    return pl.pallas_call(
        kernel,
        out_shape=jax.ShapeDtypeStruct((N, H, W, C), x_nhwc.dtype),
        grid=(N,),
        in_specs=[
            pl.BlockSpec((1, H, W, Cin), lambda n: (n, 0, 0, 0)),
            pl.BlockSpec((3, 3, Cin, C), lambda n: (0, 0, 0, 0)),
            pl.BlockSpec((1, C), lambda n: (0, 0)),
            pl.BlockSpec((1, C), lambda n: (0, 0)),
            pl.BlockSpec((3, 3, C, C), lambda n: (0, 0, 0, 0)),
            pl.BlockSpec((1, C), lambda n: (0, 0)),
            pl.BlockSpec((1, C), lambda n: (0, 0)),
        ],
        out_specs=pl.BlockSpec((1, H, W, C), lambda n: (n, 0, 0, 0)),
        scratch_shapes=[
            pltpu.VMEM((HP, WP, Cin), jnp.float32),   # padded input slab
            pltpu.VMEM((HP, WP, C), jnp.float32),     # padded conv1 output
        ],
        compiler_params=pltpu.CompilerParams(
            dimension_semantics=("parallel",),
            # explicit, safe on all generations (<= 64 MiB physical on v7x);
            # actual per-step footprint here is well under 1 MiB.
            vmem_limit_bytes=32 * 1024 * 1024,
        ),
    )(x_nhwc, w1, s1.reshape(1, C), t1.reshape(1, C),
      w2, s2.reshape(1, C), t2.reshape(1, C))


# --------------------------- BasicBlock forward ------------------------------

def basic_block_forward(x_nchw, params, eps=1e-5):
    """PyTorch BasicBlock.forward (stride=1, downsample=None), NCHW in/out."""
    x = jnp.transpose(x_nchw, (0, 2, 3, 1))            # NCHW -> NHWC

    scale1 = params["g1"] / jnp.sqrt(params["v1"] + eps)
    shift1 = params["b1"] - params["m1"] * scale1
    scale2 = params["g2"] / jnp.sqrt(params["v2"] + eps)
    shift2 = params["b2"] - params["m2"] * scale2

    # bf16 MXU operands (weights cast once here, activations cast in-kernel);
    # accumulation stays f32.
    w1 = params["w1"].astype(jnp.bfloat16)
    w2 = params["w2"].astype(jnp.bfloat16)

    out = _basic_block_pallas(x, w1, scale1, shift1, w2, scale2, shift2)
    return jnp.transpose(out, (0, 3, 1, 2))            # NHWC -> NCHW


# ------------------------------- reference ----------------------------------

def _ref_forward(x_nchw, params, eps=1e-5):
    x = jnp.transpose(x_nchw, (0, 2, 3, 1))

    def conv(y, w):
        return jax.lax.conv_general_dilated(
            y, w, window_strides=(1, 1), padding=((1, 1), (1, 1)),
            dimension_numbers=("NHWC", "HWIO", "NHWC"),
            precision=jax.lax.Precision.HIGHEST)

    def bn(y, g, b, m, v):
        return (y - m) / jnp.sqrt(v + eps) * g + b

    out = jax.nn.relu(bn(conv(x, params["w1"]),
                         params["g1"], params["b1"], params["m1"], params["v1"]))
    out = bn(conv(out, params["w2"]),
             params["g2"], params["b2"], params["m2"], params["v2"]) + x
    out = jax.nn.relu(out)
    return jnp.transpose(out, (0, 3, 1, 2))


# ---------------------------------- main -------------------------------------

if __name__ == "__main__":
    key = jax.random.PRNGKey(0)
    kx, kw1, kw2, kg1, kb1, kg2, kb2, km1, kv1, km2, kv2 = jax.random.split(key, 11)

    # Real ResNet-18 first-stage channel count (lane-friendlier than C=4),
    # small batch/spatial. inplanes = planes = 64, stride = 1.
    N, C, H, W = 2, 64, 16, 16
    planes = C

    x = jax.random.normal(kx, (N, C, H, W), jnp.float32)

    params = {
        # conv weights stored HWIO (3, 3, Cin, Cout), equivalent to PyTorch OIHW
        "w1": jax.random.normal(kw1, (3, 3, C, planes), jnp.float32) * 0.1,
        "w2": jax.random.normal(kw2, (3, 3, planes, planes), jnp.float32) * 0.1,
        # BN1 / BN2 parameters + running stats (inference mode)
        "g1": 1.0 + 0.1 * jax.random.normal(kg1, (planes,), jnp.float32),
        "b1": 0.1 * jax.random.normal(kb1, (planes,), jnp.float32),
        "m1": 0.1 * jax.random.normal(km1, (planes,), jnp.float32),
        "v1": 1.0 + 0.1 * jax.random.uniform(kv1, (planes,), jnp.float32),
        "g2": 1.0 + 0.1 * jax.random.normal(kg2, (planes,), jnp.float32),
        "b2": 0.1 * jax.random.normal(kb2, (planes,), jnp.float32),
        "m2": 0.1 * jax.random.normal(km2, (planes,), jnp.float32),
        "v2": 1.0 + 0.1 * jax.random.uniform(kv2, (planes,), jnp.float32),
    }

    fwd = jax.jit(basic_block_forward)
    out = jax.block_until_ready(fwd(x, params))

    ref = jax.block_until_ready(_ref_forward(x, params))
    assert out.shape == (N, planes, H, W)

    # bf16 MXU operands with f32 accumulation: compare with a normalized
    # max-error tolerance against the full-precision reference.
    err = jnp.max(jnp.abs(out - ref)) / (jnp.max(jnp.abs(ref)) + 1e-6)
    assert err < 3e-2, f"mismatch vs reference: normalized max err {err}"

    print("KERNEL_OK")
</pallas_src>

<mosaic_0001>
module attributes {stable_mosaic.version = 11 : i64} {
  func.func @_basic_block_kernel(%arg0: i32, %arg1: memref<1x16x16x64xf32, #tpu.memory_space<vmem>>, %arg2: memref<3x3x64x64xbf16, #tpu.memory_space<vmem>>, %arg3: memref<1x64xf32, #tpu.memory_space<vmem>>, %arg4: memref<1x64xf32, #tpu.memory_space<vmem>>, %arg5: memref<3x3x64x64xbf16, #tpu.memory_space<vmem>>, %arg6: memref<1x64xf32, #tpu.memory_space<vmem>>, %arg7: memref<1x64xf32, #tpu.memory_space<vmem>>, %arg8: memref<1x16x16x64xf32, #tpu.memory_space<vmem>>, %arg9: memref<24x24x64xf32, #tpu.memory_space<vmem>>, %arg10: memref<24x24x64xf32, #tpu.memory_space<vmem>>) attributes {dimension_semantics = [#tpu.dimension_semantics<parallel>], iteration_bounds = array<i64: 2>, scalar_prefetch = 0 : i64, scratch_operands = 2 : i64, tpu.core_type = #tpu.core_type<tc>, window_params = [{transform_indices = @transform_0, window_bounds = array<i64: 1, 16, 16, 64>}, {pipeline_mode = #tpu.pipeline_mode<synchronous>, transform_indices = @transform_1, window_bounds = array<i64: 3, 3, 64, 64>}, {pipeline_mode = #tpu.pipeline_mode<synchronous>, transform_indices = @transform_2, window_bounds = array<i64: 1, 64>}, {pipeline_mode = #tpu.pipeline_mode<synchronous>, transform_indices = @transform_3, window_bounds = array<i64: 1, 64>}, {pipeline_mode = #tpu.pipeline_mode<synchronous>, transform_indices = @transform_4, window_bounds = array<i64: 3, 3, 64, 64>}, {pipeline_mode = #tpu.pipeline_mode<synchronous>, transform_indices = @transform_5, window_bounds = array<i64: 1, 64>}, {pipeline_mode = #tpu.pipeline_mode<synchronous>, transform_indices = @transform_6, window_bounds = array<i64: 1, 64>}, {transform_indices = @transform_7, window_bounds = array<i64: 1, 16, 16, 64>}]} {
    %cst = arith.constant 0.000000e+00 : f32
    %0 = vector.broadcast %cst : f32 to vector<24x24x64xf32>
    %c0 = arith.constant 0 : index
    %c0_0 = arith.constant 0 : index
    %c0_1 = arith.constant 0 : index
    %1 = vector.load %arg9[%c0, %c0_0, %c0_1] : memref<24x24x64xf32, #tpu.memory_space<vmem>>, vector<24x24x64xf32>
    tpu.vector_store %arg9[%c0, %c0_0, %c0_1], %0 {strides = array<i32>} : memref<24x24x64xf32, #tpu.memory_space<vmem>>, vector<24x24x64xf32>,
    %c0_2 = arith.constant 0 : index
    %c0_3 = arith.constant 0 : index
    %c0_4 = arith.constant 0 : index
    %c0_5 = arith.constant 0 : index
    %2 = vector.load %arg1[%c0_2, %c0_3, %c0_4, %c0_5] : memref<1x16x16x64xf32, #tpu.memory_space<vmem>>, vector<1x16x16x64xf32>
    %3 = vector.shape_cast %2 : vector<1x16x16x64xf32> to vector<16x16x64xf32>
    %c1 = arith.constant 1 : index
    %c1_6 = arith.constant 1 : index
    %c0_7 = arith.constant 0 : index
    %4 = vector.load %arg9[%c1, %c1_6, %c0_7] : memref<24x24x64xf32, #tpu.memory_space<vmem>>, vector<16x16x64xf32>
    tpu.vector_store %arg9[%c1, %c1_6, %c0_7], %3 {strides = array<i32>} : memref<24x24x64xf32, #tpu.memory_space<vmem>>, vector<16x16x64xf32>,
    %c0_8 = arith.constant 0 : index
    %c0_9 = arith.constant 0 : index
    %c0_10 = arith.constant 0 : index
    %5 = vector.load %arg9[%c0_8, %c0_9, %c0_10] : memref<24x24x64xf32, #tpu.memory_space<vmem>>, vector<24x24x64xf32>
    %6 = arith.truncf %5 : vector<24x24x64xf32> to vector<24x24x64xbf16>
    %7 = vector.shape_cast %6 : vector<24x24x64xbf16> to vector<576x64xbf16>
    %cst_11 = arith.constant 0.000000e+00 : f32
    %8 = vector.broadcast %cst_11 : f32 to vector<384x64xf32>
    %9 = vector.extract_strided_slice %7 {offsets = [0, 0], sizes = [384, 64], strides = [1, 1]} : vector<576x64xbf16> to vector<384x64xbf16>
    %c0_12 = arith.constant 0 : index
    %c0_13 = arith.constant 0 : index
    %c0_14 = arith.constant 0 : index
    %c0_15 = arith.constant 0 : index
    %10 = vector.load %arg2[%c0_12, %c0_13, %c0_14, %c0_15] : memref<3x3x64x64xbf16, #tpu.memory_space<vmem>>, vector<1x1x64x64xbf16>
    %11 = vector.shape_cast %10 : vector<1x1x64x64xbf16> to vector<64x64xbf16>
    %cst_16 = arith.constant dense<0.000000e+00> : vector<384x64xf32>
    %12 = tpu.matmul %9, %11, %cst_16 {dimension_numbers = #tpu.dot_dimension_numbers<[1], [0], [0], [1], [0, 0, 1, 1], [], []>} : vector<384x64xbf16>, vector<64x64xbf16>, vector<384x64xf32> -> vector<384x64xf32>
    %13 = arith.addf %8, %12 : vector<384x64xf32>
    %14 = vector.extract_strided_slice %7 {offsets = [1, 0], sizes = [384, 64], strides = [1, 1]} : vector<576x64xbf16> to vector<384x64xbf16>
    %c0_17 = arith.constant 0 : index
    %c1_18 = arith.constant 1 : index
    %c0_19 = arith.constant 0 : index
    %c0_20 = arith.constant 0 : index
    %15 = vector.load %arg2[%c0_17, %c1_18, %c0_19, %c0_20] : memref<3x3x64x64xbf16, #tpu.memory_space<vmem>>, vector<1x1x64x64xbf16>
    %16 = vector.shape_cast %15 : vector<1x1x64x64xbf16> to vector<64x64xbf16>
    %cst_21 = arith.constant dense<0.000000e+00> : vector<384x64xf32>
    %17 = tpu.matmul %14, %16, %cst_21 {dimension_numbers = #tpu.dot_dimension_numbers<[1], [0], [0], [1], [0, 0, 1, 1], [], []>} : vector<384x64xbf16>, vector<64x64xbf16>, vector<384x64xf32> -> vector<384x64xf32>
    %18 = arith.addf %13, %17 : vector<384x64xf32>
    %19 = vector.extract_strided_slice %7 {offsets = [2, 0], sizes = [384, 64], strides = [1, 1]} : vector<576x64xbf16> to vector<384x64xbf16>
    %c0_22 = arith.constant 0 : index
    %c2 = arith.constant 2 : index
    %c0_23 = arith.constant 0 : index
    %c0_24 = arith.constant 0 : index
    %20 = vector.load %arg2[%c0_22, %c2, %c0_23, %c0_24] : memref<3x3x64x64xbf16, #tpu.memory_space<vmem>>, vector<1x1x64x64xbf16>
    %21 = vector.shape_cast %20 : vector<1x1x64x64xbf16> to vector<64x64xbf16>
    %cst_25 = arith.constant dense<0.000000e+00> : vector<384x64xf32>
    %22 = tpu.matmul %19, %21, %cst_25 {dimension_numbers = #tpu.dot_dimension_numbers<[1], [0], [0], [1], [0, 0, 1, 1], [], []>} : vector<384x64xbf16>, vector<64x64xbf16>, vector<384x64xf32> -> vector<384x64xf32>
    %23 = arith.addf %18, %22 : vector<384x64xf32>
    %24 = vector.extract_strided_slice %7 {offsets = [24, 0], sizes = [384, 64], strides = [1, 1]} : vector<576x64xbf16> to vector<384x64xbf16>
    %c1_26 = arith.constant 1 : index
    %c0_27 = arith.constant 0 : index
    %c0_28 = arith.constant 0 : index
    %c0_29 = arith.constant 0 : index
    %25 = vector.load %arg2[%c1_26, %c0_27, %c0_28, %c0_29] : memref<3x3x64x64xbf16, #tpu.memory_space<vmem>>, vector<1x1x64x64xbf16>
    %26 = vector.shape_cast %25 : vector<1x1x64x64xbf16> to vector<64x64xbf16>
    %cst_30 = arith.constant dense<0.000000e+00> : vector<384x64xf32>
    %27 = tpu.matmul %24, %26, %cst_30 {dimension_numbers = #tpu.dot_dimension_numbers<[1], [0], [0], [1], [0, 0, 1, 1], [], []>} : vector<384x64xbf16>, vector<64x64xbf16>, vector<384x64xf32> -> vector<384x64xf32>
    %28 = arith.addf %23, %27 : vector<384x64xf32>
    %29 = vector.extract_strided_slice %7 {offsets = [25, 0], sizes = [384, 64], strides = [1, 1]} : vector<576x64xbf16> to vector<384x64xbf16>
    %c1_31 = arith.constant 1 : index
    %c1_32 = arith.constant 1 : index
    %c0_33 = arith.constant 0 : index
    %c0_34 = arith.constant 0 : index
    %30 = vector.load %arg2[%c1_31, %c1_32, %c0_33, %c0_34] : memref<3x3x64x64xbf16, #tpu.memory_space<vmem>>, vector<1x1x64x64xbf16>
    %31 = vector.shape_cast %30 : vector<1x1x64x64xbf16> to vector<64x64xbf16>
    %cst_35 = arith.constant dense<0.000000e+00> : vector<384x64xf32>
    %32 = tpu.matmul %29, %31, %cst_35 {dimension_numbers = #tpu.dot_dimension_numbers<[1], [0], [0], [1], [0, 0, 1, 1], [], []>} : vector<384x64xbf16>, vector<64x64xbf16>, vector<384x64xf32> -> vector<384x64xf32>
    %33 = arith.addf %28, %32 : vector<384x64xf32>
    %34 = vector.extract_strided_slice %7 {offsets = [26, 0], sizes = [384, 64], strides = [1, 1]} : vector<576x64xbf16> to vector<384x64xbf16>
    %c1_36 = arith.constant 1 : index
    %c2_37 = arith.constant 2 : index
    %c0_38 = arith.constant 0 : index
    %c0_39 = arith.constant 0 : index
    %35 = vector.load %arg2[%c1_36, %c2_37, %c0_38, %c0_39] : memref<3x3x64x64xbf16, #tpu.memory_space<vmem>>, vector<1x1x64x64xbf16>
    %36 = vector.shape_cast %35 : vector<1x1x64x64xbf16> to vector<64x64xbf16>
    %cst_40 = arith.constant dense<0.000000e+00> : vector<384x64xf32>
    %37 = tpu.matmul %34, %36, %cst_40 {dimension_numbers = #tpu.dot_dimension_numbers<[1], [0], [0], [1], [0, 0, 1, 1], [], []>} : vector<384x64xbf16>, vector<64x64xbf16>, vector<384x64xf32> -> vector<384x64xf32>
    %38 = arith.addf %33, %37 : vector<384x64xf32>
    %39 = vector.extract_strided_slice %7 {offsets = [48, 0], sizes = [384, 64], strides = [1, 1]} : vector<576x64xbf16> to vector<384x64xbf16>
    %c2_41 = arith.constant 2 : index
    %c0_42 = arith.constant 0 : index
    %c0_43 = arith.constant 0 : index
    %c0_44 = arith.constant 0 : index
    %40 = vector.load %arg2[%c2_41, %c0_42, %c0_43, %c0_44] : memref<3x3x64x64xbf16, #tpu.memory_space<vmem>>, vector<1x1x64x64xbf16>
    %41 = vector.shape_cast %40 : vector<1x1x64x64xbf16> to vector<64x64xbf16>
    %cst_45 = arith.constant dense<0.000000e+00> : vector<384x64xf32>
    %42 = tpu.matmul %39, %41, %cst_45 {dimension_numbers = #tpu.dot_dimension_numbers<[1], [0], [0], [1], [0, 0, 1, 1], [], []>} : vector<384x64xbf16>, vector<64x64xbf16>, vector<384x64xf32> -> vector<384x64xf32>
    %43 = arith.addf %38, %42 : vector<384x64xf32>
    %44 = vector.extract_strided_slice %7 {offsets = [49, 0], sizes = [384, 64], strides = [1, 1]} : vector<576x64xbf16> to vector<384x64xbf16>
    %c2_46 = arith.constant 2 : index
    %c1_47 = arith.constant 1 : index
    %c0_48 = arith.constant 0 : index
    %c0_49 = arith.constant 0 : index
    %45 = vector.load %arg2[%c2_46, %c1_47, %c0_48, %c0_49] : memref<3x3x64x64xbf16, #tpu.memory_space<vmem>>, vector<1x1x64x64xbf16>
    %46 = vector.shape_cast %45 : vector<1x1x64x64xbf16> to vector<64x64xbf16>
    %cst_50 = arith.constant dense<0.000000e+00> : vector<384x64xf32>
    %47 = tpu.matmul %44, %46, %cst_50 {dimension_numbers = #tpu.dot_dimension_numbers<[1], [0], [0], [1], [0, 0, 1, 1], [], []>} : vector<384x64xbf16>, vector<64x64xbf16>, vector<384x64xf32> -> vector<384x64xf32>
    %48 = arith.addf %43, %47 : vector<384x64xf32>
    %49 = vector.extract_strided_slice %7 {offsets = [50, 0], sizes = [384, 64], strides = [1, 1]} : vector<576x64xbf16> to vector<384x64xbf16>
    %c2_51 = arith.constant 2 : index
    %c2_52 = arith.constant 2 : index
    %c0_53 = arith.constant 0 : index
    %c0_54 = arith.constant 0 : index
    %50 = vector.load %arg2[%c2_51, %c2_52, %c0_53, %c0_54] : memref<3x3x64x64xbf16, #tpu.memory_space<vmem>>, vector<1x1x64x64xbf16>
    %51 = vector.shape_cast %50 : vector<1x1x64x64xbf16> to vector<64x64xbf16>
    %cst_55 = arith.constant dense<0.000000e+00> : vector<384x64xf32>
    %52 = tpu.matmul %49, %51, %cst_55 {dimension_numbers = #tpu.dot_dimension_numbers<[1], [0], [0], [1], [0, 0, 1, 1], [], []>} : vector<384x64xbf16>, vector<64x64xbf16>, vector<384x64xf32> -> vector<384x64xf32>
    %53 = arith.addf %48, %52 : vector<384x64xf32>
    %c0_56 = arith.constant 0 : index
    %c0_57 = arith.constant 0 : index
    %54 = vector.load %arg3[%c0_56, %c0_57] : memref<1x64xf32, #tpu.memory_space<vmem>>, vector<1x64xf32>
    %55 = vector.broadcast %54 : vector<1x64xf32> to vector<384x64xf32>
    %56 = arith.mulf %53, %55 : vector<384x64xf32>
    %c0_58 = arith.constant 0 : index
    %c0_59 = arith.constant 0 : index
    %57 = vector.load %arg4[%c0_58, %c0_59] : memref<1x64xf32, #tpu.memory_space<vmem>>, vector<1x64xf32>
    %58 = vector.broadcast %57 : vector<1x64xf32> to vector<384x64xf32>
    %59 = arith.addf %56, %58 : vector<384x64xf32>
    %cst_60 = arith.constant 0.000000e+00 : f32
    %60 = vector.broadcast %cst_60 : f32 to vector<384x64xf32>
    %61 = arith.maximumf %59, %60 : vector<384x64xf32>
    %cst_61 = arith.constant 0.000000e+00 : f32
    %62 = vector.broadcast %cst_61 : f32 to vector<24x24x64xf32>
    %c0_62 = arith.constant 0 : index
    %c0_63 = arith.constant 0 : index
    %c0_64 = arith.constant 0 : index
    %63 = vector.load %arg10[%c0_62, %c0_63, %c0_64] : memref<24x24x64xf32, #tpu.memory_space<vmem>>, vector<24x24x64xf32>
    tpu.vector_store %arg10[%c0_62, %c0_63, %c0_64], %62 {strides = array<i32>} : memref<24x24x64xf32, #tpu.memory_space<vmem>>, vector<24x24x64xf32>,
    %64 = vector.shape_cast %61 : vector<384x64xf32> to vector<16x24x64xf32>
    %65 = vector.extract_strided_slice %64 {offsets = [0, 0, 0], sizes = [16, 16, 64], strides = [1, 1, 1]} : vector<16x24x64xf32> to vector<16x16x64xf32>
    %c1_65 = arith.constant 1 : index
    %c1_66 = arith.constant 1 : index
    %c0_67 = arith.constant 0 : index
    %66 = vector.load %arg10[%c1_65, %c1_66, %c0_67] : memref<24x24x64xf32, #tpu.memory_space<vmem>>, vector<16x16x64xf32>
    tpu.vector_store %arg10[%c1_65, %c1_66, %c0_67], %65 {strides = array<i32>} : memref<24x24x64xf32, #tpu.memory_space<vmem>>, vector<16x16x64xf32>,
    %c0_68 = arith.constant 0 : index
    %c0_69 = arith.constant 0 : index
    %c0_70 = arith.constant 0 : index
    %67 = vector.load %arg10[%c0_68, %c0_69, %c0_70] : memref<24x24x64xf32, #tpu.memory_space<vmem>>, vector<24x24x64xf32>
    %68 = arith.truncf %67 : vector<24x24x64xf32> to vector<24x24x64xbf16>
    %69 = vector.shape_cast %68 : vector<24x24x64xbf16> to vector<576x64xbf16>
    %cst_71 = arith.constant 0.000000e+00 : f32
    %70 = vector.broadcast %cst_71 : f32 to vector<384x64xf32>
    %71 = vector.extract_strided_slice %69 {offsets = [0, 0], sizes = [384, 64], strides = [1, 1]} : vector<576x64xbf16> to vector<384x64xbf16>
    %c0_72 = arith.constant 0 : index
    %c0_73 = arith.constant 0 : index
    %c0_74 = arith.constant 0 : index
    %c0_75 = arith.constant 0 : index
    %72 = vector.load %arg5[%c0_72, %c0_73, %c0_74, %c0_75] : memref<3x3x64x64xbf16, #tpu.memory_space<vmem>>, vector<1x1x64x64xbf16>
    %73 = vector.shape_cast %72 : vector<1x1x64x64xbf16> to vector<64x64xbf16>
    %cst_76 = arith.constant dense<0.000000e+00> : vector<384x64xf32>
    %74 = tpu.matmul %71, %73, %cst_76 {dimension_numbers = #tpu.dot_dimension_numbers<[1], [0], [0], [1], [0, 0, 1, 1], [], []>} : vector<384x64xbf16>, vector<64x64xbf16>, vector<384x64xf32> -> vector<384x64xf32>
    %75 = arith.addf %70, %74 : vector<384x64xf32>
    %76 = vector.extract_strided_slice %69 {offsets = [1, 0], sizes = [384, 64], strides = [1, 1]} : vector<576x64xbf16> to vector<384x64xbf16>
    %c0_77 = arith.constant 0 : index
    %c1_78 = arith.constant 1 : index
    %c0_79 = arith.constant 0 : index
    %c0_80 = arith.constant 0 : index
    %77 = vector.load %arg5[%c0_77, %c1_78, %c0_79, %c0_80] : memref<3x3x64x64xbf16, #tpu.memory_space<vmem>>, vector<1x1x64x64xbf16>
    %78 = vector.shape_cast %77 : vector<1x1x64x64xbf16> to vector<64x64xbf16>
    %cst_81 = arith.constant dense<0.000000e+00> : vector<384x64xf32>
    %79 = tpu.matmul %76, %78, %cst_81 {dimension_numbers = #tpu.dot_dimension_numbers<[1], [0], [0], [1], [0, 0, 1, 1], [], []>} : vector<384x64xbf16>, vector<64x64xbf16>, vector<384x64xf32> -> vector<384x64xf32>
    %80 = arith.addf %75, %79 : vector<384x64xf32>
    %81 = vector.extract_strided_slice %69 {offsets = [2, 0], sizes = [384, 64], strides = [1, 1]} : vector<576x64xbf16> to vector<384x64xbf16>
    %c0_82 = arith.constant 0 : index
    %c2_83 = arith.constant 2 : index
    %c0_84 = arith.constant 0 : index
    %c0_85 = arith.constant 0 : index
    %82 = vector.load %arg5[%c0_82, %c2_83, %c0_84, %c0_85] : memref<3x3x64x64xbf16, #tpu.memory_space<vmem>>, vector<1x1x64x64xbf16>
    %83 = vector.shape_cast %82 : vector<1x1x64x64xbf16> to vector<64x64xbf16>
    %cst_86 = arith.constant dense<0.000000e+00> : vector<384x64xf32>
    %84 = tpu.matmul %81, %83, %cst_86 {dimension_numbers = #tpu.dot_dimension_numbers<[1], [0], [0], [1], [0, 0, 1, 1], [], []>} : vector<384x64xbf16>, vector<64x64xbf16>, vector<384x64xf32> -> vector<384x64xf32>
    %85 = arith.addf %80, %84 : vector<384x64xf32>
    %86 = vector.extract_strided_slice %69 {offsets = [24, 0], sizes = [384, 64], strides = [1, 1]} : vector<576x64xbf16> to vector<384x64xbf16>
    %c1_87 = arith.constant 1 : index
    %c0_88 = arith.constant 0 : index
    %c0_89 = arith.constant 0 : index
    %c0_90 = arith.constant 0 : index
    %87 = vector.load %arg5[%c1_87, %c0_88, %c0_89, %c0_90] : memref<3x3x64x64xbf16, #tpu.memory_space<vmem>>, vector<1x1x64x64xbf16>
    %88 = vector.shape_cast %87 : vector<1x1x64x64xbf16> to vector<64x64xbf16>
    %cst_91 = arith.constant dense<0.000000e+00> : vector<384x64xf32>
    %89 = tpu.matmul %86, %88, %cst_91 {dimension_numbers = #tpu.dot_dimension_numbers<[1], [0], [0], [1], [0, 0, 1, 1], [], []>} : vector<384x64xbf16>, vector<64x64xbf16>, vector<384x64xf32> -> vector<384x64xf32>
    %90 = arith.addf %85, %89 : vector<384x64xf32>
    %91 = vector.extract_strided_slice %69 {offsets = [25, 0], sizes = [384, 64], strides = [1, 1]} : vector<576x64xbf16> to vector<384x64xbf16>
    %c1_92 = arith.constant 1 : index
    %c1_93 = arith.constant 1 : index
    %c0_94 = arith.constant 0 : index
    %c0_95 = arith.constant 0 : index
    %92 = vector.load %arg5[%c1_92, %c1_93, %c0_94, %c0_95] : memref<3x3x64x64xbf16, #tpu.memory_space<vmem>>, vector<1x1x64x64xbf16>
    %93 = vector.shape_cast %92 : vector<1x1x64x64xbf16> to vector<64x64xbf16>
    %cst_96 = arith.constant dense<0.000000e+00> : vector<384x64xf32>
    %94 = tpu.matmul %91, %93, %cst_96 {dimension_numbers = #tpu.dot_dimension_numbers<[1], [0], [0], [1], [0, 0, 1, 1], [], []>} : vector<384x64xbf16>, vector<64x64xbf16>, vector<384x64xf32> -> vector<384x64xf32>
    %95 = arith.addf %90, %94 : vector<384x64xf32>
    %96 = vector.extract_strided_slice %69 {offsets = [26, 0], sizes = [384, 64], strides = [1, 1]} : vector<576x64xbf16> to vector<384x64xbf16>
    %c1_97 = arith.constant 1 : index
    %c2_98 = arith.constant 2 : index
    %c0_99 = arith.constant 0 : index
    %c0_100 = arith.constant 0 : index
    %97 = vector.load %arg5[%c1_97, %c2_98, %c0_99, %c0_100] : memref<3x3x64x64xbf16, #tpu.memory_space<vmem>>, vector<1x1x64x64xbf16>
    %98 = vector.shape_cast %97 : vector<1x1x64x64xbf16> to vector<64x64xbf16>
    %cst_101 = arith.constant dense<0.000000e+00> : vector<384x64xf32>
    %99 = tpu.matmul %96, %98, %cst_101 {dimension_numbers = #tpu.dot_dimension_numbers<[1], [0], [0], [1], [0, 0, 1, 1], [], []>} : vector<384x64xbf16>, vector<64x64xbf16>, vector<384x64xf32> -> vector<384x64xf32>
    %100 = arith.addf %95, %99 : vector<384x64xf32>
    %101 = vector.extract_strided_slice %69 {offsets = [48, 0], sizes = [384, 64], strides = [1, 1]} : vector<576x64xbf16> to vector<384x64xbf16>
    %c2_102 = arith.constant 2 : index
    %c0_103 = arith.constant 0 : index
    %c0_104 = arith.constant 0 : index
    %c0_105 = arith.constant 0 : index
    %102 = vector.load %arg5[%c2_102, %c0_103, %c0_104, %c0_105] : memref<3x3x64x64xbf16, #tpu.memory_space<vmem>>, vector<1x1x64x64xbf16>
    %103 = vector.shape_cast %102 : vector<1x1x64x64xbf16> to vector<64x64xbf16>
    %cst_106 = arith.constant dense<0.000000e+00> : vector<384x64xf32>
    %104 = tpu.matmul %101, %103, %cst_106 {dimension_numbers = #tpu.dot_dimension_numbers<[1], [0], [0], [1], [0, 0, 1, 1], [], []>} : vector<384x64xbf16>, vector<64x64xbf16>, vector<384x64xf32> -> vector<384x64xf32>
    %105 = arith.addf %100, %104 : vector<384x64xf32>
    %106 = vector.extract_strided_slice %69 {offsets = [49, 0], sizes = [384, 64], strides = [1, 1]} : vector<576x64xbf16> to vector<384x64xbf16>
    %c2_107 = arith.constant 2 : index
    %c1_108 = arith.constant 1 : index
    %c0_109 = arith.constant 0 : index
    %c0_110 = arith.constant 0 : index
    %107 = vector.load %arg5[%c2_107, %c1_108, %c0_109, %c0_110] : memref<3x3x64x64xbf16, #tpu.memory_space<vmem>>, vector<1x1x64x64xbf16>
    %108 = vector.shape_cast %107 : vector<1x1x64x64xbf16> to vector<64x64xbf16>
    %cst_111 = arith.constant dense<0.000000e+00> : vector<384x64xf32>
    %109 = tpu.matmul %106, %108, %cst_111 {dimension_numbers = #tpu.dot_dimension_numbers<[1], [0], [0], [1], [0, 0, 1, 1], [], []>} : vector<384x64xbf16>, vector<64x64xbf16>, vector<384x64xf32> -> vector<384x64xf32>
    %110 = arith.addf %105, %109 : vector<384x64xf32>
    %111 = vector.extract_strided_slice %69 {offsets = [50, 0], sizes = [384, 64], strides = [1, 1]} : vector<576x64xbf16> to vector<384x64xbf16>
    %c2_112 = arith.constant 2 : index
    %c2_113 = arith.constant 2 : index
    %c0_114 = arith.constant 0 : index
    %c0_115 = arith.constant 0 : index
    %112 = vector.load %arg5[%c2_112, %c2_113, %c0_114, %c0_115] : memref<3x3x64x64xbf16, #tpu.memory_space<vmem>>, vector<1x1x64x64xbf16>
    %113 = vector.shape_cast %112 : vector<1x1x64x64xbf16> to vector<64x64xbf16>
    %cst_116 = arith.constant dense<0.000000e+00> : vector<384x64xf32>
    %114 = tpu.matmul %111, %113, %cst_116 {dimension_numbers = #tpu.dot_dimension_numbers<[1], [0], [0], [1], [0, 0, 1, 1], [], []>} : vector<384x64xbf16>, vector<64x64xbf16>, vector<384x64xf32> -> vector<384x64xf32>
    %115 = arith.addf %110, %114 : vector<384x64xf32>
    %c0_117 = arith.constant 0 : index
    %c0_118 = arith.constant 0 : index
    %116 = vector.load %arg6[%c0_117, %c0_118] : memref<1x64xf32, #tpu.memory_space<vmem>>, vector<1x64xf32>
    %117 = vector.broadcast %116 : vector<1x64xf32> to vector<384x64xf32>
    %118 = arith.mulf %115, %117 : vector<384x64xf32>
    %c0_119 = arith.constant 0 : index
    %c0_120 = arith.constant 0 : index
    %119 = vector.load %arg7[%c0_119, %c0_120] : memref<1x64xf32, #tpu.memory_space<vmem>>, vector<1x64xf32>
    %120 = vector.broadcast %119 : vector<1x64xf32> to vector<384x64xf32>
    %121 = arith.addf %118, %120 : vector<384x64xf32>
    %122 = vector.shape_cast %121 : vector<384x64xf32> to vector<16x24x64xf32>
    %123 = vector.extract_strided_slice %122 {offsets = [0, 0, 0], sizes = [16, 16, 64], strides = [1, 1, 1]} : vector<16x24x64xf32> to vector<16x16x64xf32>
    %c0_121 = arith.constant 0 : index
    %c0_122 = arith.constant 0 : index
    %c0_123 = arith.constant 0 : index
    %c0_124 = arith.constant 0 : index
    %124 = vector.load %arg1[%c0_121, %c0_122, %c0_123, %c0_124] : memref<1x16x16x64xf32, #tpu.memory_space<vmem>>, vector<1x16x16x64xf32>
    %125 = vector.shape_cast %124 : vector<1x16x16x64xf32> to vector<16x16x64xf32>
    %126 = arith.addf %123, %125 : vector<16x16x64xf32>
    %cst_125 = arith.constant 0.000000e+00 : f32
    %127 = vector.broadcast %cst_125 : f32 to vector<16x16x64xf32>
    %128 = arith.maximumf %126, %127 : vector<16x16x64xf32>
    %c0_126 = arith.constant 0 : index
    %c0_127 = arith.constant 0 : index
    %c0_128 = arith.constant 0 : index
    %c0_129 = arith.constant 0 : index
    %129 = vector.load %arg8[%c0_126, %c0_127, %c0_128, %c0_129] : memref<1x16x16x64xf32, #tpu.memory_space<vmem>>, vector<1x16x16x64xf32>
    %130 = vector.shape_cast %129 : vector<1x16x16x64xf32> to vector<16x16x64xf32>
    %131 = vector.shape_cast %128 : vector<16x16x64xf32> to vector<1x16x16x64xf32>
    tpu.vector_store %arg8[%c0_126, %c0_127, %c0_128, %c0_129], %131 {strides = array<i32>} : memref<1x16x16x64xf32, #tpu.memory_space<vmem>>, vector<1x16x16x64xf32>,
    return
  }
  func.func @transform_0(%arg0: i32) -> (i32, i32, i32, i32) {
    %c0_i32 = arith.constant 0 : i32
    %c0_i32_0 = arith.constant 0 : i32
    %c0_i32_1 = arith.constant 0 : i32
    %c0_i32_2 = arith.constant 0 : i32
    return %arg0, %c0_i32, %c0_i32_0, %c0_i32_1 : i32, i32, i32, i32
  }
  func.func @transform_1(%arg0: i32) -> (i32, i32, i32, i32) {
    %c0_i32 = arith.constant 0 : i32
    %c0_i32_0 = arith.constant 0 : i32
    %c0_i32_1 = arith.constant 0 : i32
    %c0_i32_2 = arith.constant 0 : i32
    %c0_i32_3 = arith.constant 0 : i32
    return %c0_i32, %c0_i32_0, %c0_i32_1, %c0_i32_2 : i32, i32, i32, i32
  }
  func.func @transform_2(%arg0: i32) -> (i32, i32) {
    %c0_i32 = arith.constant 0 : i32
    %c0_i32_0 = arith.constant 0 : i32
    %c0_i32_1 = arith.constant 0 : i32
    return %c0_i32, %c0_i32_0 : i32, i32
  }
  func.func @transform_3(%arg0: i32) -> (i32, i32) {
    %c0_i32 = arith.constant 0 : i32
    %c0_i32_0 = arith.constant 0 : i32
    %c0_i32_1 = arith.constant 0 : i32
    return %c0_i32, %c0_i32_0 : i32, i32
  }
  func.func @transform_4(%arg0: i32) -> (i32, i32, i32, i32) {
    %c0_i32 = arith.constant 0 : i32
    %c0_i32_0 = arith.constant 0 : i32
    %c0_i32_1 = arith.constant 0 : i32
    %c0_i32_2 = arith.constant 0 : i32
    %c0_i32_3 = arith.constant 0 : i32
    return %c0_i32, %c0_i32_0, %c0_i32_1, %c0_i32_2 : i32, i32, i32, i32
  }
  func.func @transform_5(%arg0: i32) -> (i32, i32) {
    %c0_i32 = arith.constant 0 : i32
    %c0_i32_0 = arith.constant 0 : i32
    %c0_i32_1 = arith.constant 0 : i32
    return %c0_i32, %c0_i32_0 : i32, i32
  }
  func.func @transform_6(%arg0: i32) -> (i32, i32) {
    %c0_i32 = arith.constant 0 : i32
    %c0_i32_0 = arith.constant 0 : i32
    %c0_i32_1 = arith.constant 0 : i32
    return %c0_i32, %c0_i32_0 : i32, i32
  }
  func.func @transform_7(%arg0: i32) -> (i32, i32, i32, i32) {
    %c0_i32 = arith.constant 0 : i32
    %c0_i32_0 = arith.constant 0 : i32
    %c0_i32_1 = arith.constant 0 : i32
    %c0_i32_2 = arith.constant 0 : i32
    return %arg0, %c0_i32, %c0_i32_0, %c0_i32_1 : i32, i32, i32, i32
  }
}

</mosaic_0001>

<llo_original>
// kernel: basic_block_forward.1
$region0: #{basic_block_forward.1}
  #allocation0 [shape = 'u32[]', space=smem, size = 0x4, offset = 0x4, fixed_abs, tag = 'smem constant byte address 0x4 - core index']
  #allocation1 [shape = 'u32[144,128]{1,0:T(1,128)}', space=vmem, size = 0x12000, scoped, tag = 'internal scratch']
  #allocation2 [shape = 'f32[24,24,64]{2,1,0:T(8,128)}', space=vmem, size = 0x48000, scoped, tag = 'scratch operand']
  #allocation3 [shape = 'f32[24,24,64]{2,1,0:T(8,128)}', space=vmem, size = 0x48000, scoped, tag = 'scratch operand']
  %s0 = inlined_call_operand.vmem [shape: f32[2,16,16,64], index: 0, kind: input, shape index: {}]
  %s1 = inlined_call_operand.vmem [shape: bf16[3,3,64,64], index: 1, kind: input, shape index: {}]
  %s2 = inlined_call_operand.vmem [shape: f32[1,64], index: 2, kind: input, shape index: {}]
  %s3 = inlined_call_operand.vmem [shape: f32[1,64], index: 3, kind: input, shape index: {}]
  %s4 = inlined_call_operand.vmem [shape: bf16[3,3,64,64], index: 4, kind: input, shape index: {}]
  %s5 = inlined_call_operand.vmem [shape: f32[1,64], index: 5, kind: input, shape index: {}]
  %s6 = inlined_call_operand.vmem [shape: f32[1,64], index: 6, kind: input, shape index: {}]
  %s7 = inlined_call_operand.hbm [shape: f32[2,16,16,64], index: 7, kind: output, shape index: {}]
  %s8 = sld [smem:[#allocation0]]
  $region61: #{basic_block_forward.1} parent=0
    _
  %s10 = ssub.s32 1, %s8
  %s11 = scalar_select 0, %s10, %s8
  $region1: #{basic_block_forward.1} parent=0
    #allocation4 [shape = 'u8[262144]{0}', space=vmem, size = 0x40000, scoped, tag = 'output window, operand 0']
    #allocation5 [shape = 's32[2]{0}', space=sflag, size = 0x8, scoped, tag = 'scoped memory for basic_block_forward.1']
    %12 = vsyncpa [#allocation5], 0
    %s13 = scalar_lea.sflag [#allocation5], 1
    %14 = vsyncpa %s13, 0
    loop: start=0, step=1, limit=4
    $region2: #{basic_block_forward.1} parent=1 // loop_pre_header
      _
    $region3: #{basic_block_forward.1} parent=1 // loop_header
      %s16 = sphi 0, %s20
      %p17 = scmp.ge.s32.totalorder %s16, 4
      %s26 = sphi 0, %s28
      %s29 = sphi 0, %s26
      %s30 = sphi 0, %s29
      %s46 = sphi 0, %s30
      %s50 = sphi 0, %s50
      %s52 = sphi 0, %s50
      %s53 = sphi 0, %s52
      %s67 = sphi 0, %s53
      %s71 = sphi 0, %s71
      %s73 = sphi 0, %s71
      %s74 = sphi 0, %s73
      %s88 = sphi 0, %s74
      %s92 = sphi 0, %s92
      %s94 = sphi 0, %s92
      %s95 = sphi 0, %s94
      %s109 = sphi 0, %s95
      %s113 = sphi 0, %s113
      %s115 = sphi 0, %s113
      %s116 = sphi 0, %s115
      %s130 = sphi 0, %s116
      %s134 = sphi 0, %s134
      %s136 = sphi 0, %s134
      %s137 = sphi 0, %s136
      %s151 = sphi 0, %s137
      %s155 = sphi 0, %s155
      %s157 = sphi 0, %s155
      %s158 = sphi 0, %s157
      %s172 = sphi 0, %s158
      %s178 = sphi 0, %s180
      %s181 = sphi 0, %s178
      %s182 = sphi 0, %s181
      %s198 = sphi 0, %s182
    $region4: #{basic_block_forward.1} parent=1 // loop_header_branch
      %19 = sbr.rel (%p17) target = $region8
    $region5: #{basic_block_forward.1} parent=1 // loop_body
      %s21 = ssub.s32 %s16, 1
      %s22 = ssub.s32 %s16, 2
      %s23 = sadd.s32 %s16, 1
      %s24 = ssub.s32 %s16, %s23
      %p25 = scmp.eq.s32.totalorder %s24, 0
      %s27 = sadd.s32 %s26, 1
      %s28 = scalar_select %p25, %s26, %s27
      %p31 = pneg %p25
      %p32 = scmp.eq.s32.totalorder %s16, 1
      %p33 = por %p31, %p32
      %p34 = scmp.ne.s32.totalorder %s26, %s29
      %p35 = scmp.eq.s32.totalorder %s16, 0
      %p36 = por %p34, %p35
      %p37 = scmp.ne.s32.totalorder %s26, %s29
      %p38 = scmp.eq.s32.totalorder %s21, 1
      %p39 = por %p37, %p38
      %p40 = scmp.ne.s32.totalorder %s29, %s30
      %p41 = scmp.eq.s32.totalorder %s21, 0
      %p42 = por %p40, %p41
      %p43 = scmp.ne.s32.totalorder %s29, %s30
      %p44 = scmp.eq.s32.totalorder %s22, 1
      %p45 = por %p43, %p44
      %p47 = scmp.ne.s32.totalorder %s30, %s46
      %p48 = scmp.eq.s32.totalorder %s22, 0
      %p49 = por %p47, %p48
      %s51 = sadd.s32 %s50, 1
      %p54 = scmp.eq.s32.totalorder %s16, 1
      %p55 = scmp.ne.s32.totalorder %s50, %s52
      %p56 = scmp.eq.s32.totalorder %s16, 0
      %p57 = por %p55, %p56
      %p58 = scmp.ne.s32.totalorder %s50, %s52
      %p59 = scmp.eq.s32.totalorder %s21, 1
      %p60 = por %p58, %p59
      %p61 = scmp.ne.s32.totalorder %s52, %s53
      %p62 = scmp.eq.s32.totalorder %s21, 0
      %p63 = por %p61, %p62
      %p64 = scmp.ne.s32.totalorder %s52, %s53
      %p65 = scmp.eq.s32.totalorder %s22, 1
      %p66 = por %p64, %p65
      %p68 = scmp.ne.s32.totalorder %s53, %s67
      %p69 = scmp.eq.s32.totalorder %s22, 0
      %p70 = por %p68, %p69
      %s72 = sadd.s32 %s71, 1
      %p75 = scmp.eq.s32.totalorder %s16, 1
      %p76 = scmp.ne.s32.totalorder %s71, %s73
      %p77 = scmp.eq.s32.totalorder %s16, 0
      %p78 = por %p76, %p77
      %p79 = scmp.ne.s32.totalorder %s71, %s73
      %p80 = scmp.eq.s32.totalorder %s21, 1
      %p81 = por %p79, %p80
      %p82 = scmp.ne.s32.totalorder %s73, %s74
      %p83 = scmp.eq.s32.totalorder %s21, 0
      %p84 = por %p82, %p83
      %p85 = scmp.ne.s32.totalorder %s73, %s74
      %p86 = scmp.eq.s32.totalorder %s22, 1
      %p87 = por %p85, %p86
      %p89 = scmp.ne.s32.totalorder %s74, %s88
      %p90 = scmp.eq.s32.totalorder %s22, 0
      %p91 = por %p89, %p90
      %s93 = sadd.s32 %s92, 1
      %p96 = scmp.eq.s32.totalorder %s16, 1
      %p97 = scmp.ne.s32.totalorder %s92, %s94
      %p98 = scmp.eq.s32.totalorder %s16, 0
      %p99 = por %p97, %p98
      %p100 = scmp.ne.s32.totalorder %s92, %s94
      %p101 = scmp.eq.s32.totalorder %s21, 1
      %p102 = por %p100, %p101
      %p103 = scmp.ne.s32.totalorder %s94, %s95
      %p104 = scmp.eq.s32.totalorder %s21, 0
      %p105 = por %p103, %p104
      %p106 = scmp.ne.s32.totalorder %s94, %s95
      %p107 = scmp.eq.s32.totalorder %s22, 1
      %p108 = por %p106, %p107
      %p110 = scmp.ne.s32.totalorder %s95, %s109
      %p111 = scmp.eq.s32.totalorder %s22, 0
      %p112 = por %p110, %p111
      %s114 = sadd.s32 %s113, 1
      %p117 = scmp.eq.s32.totalorder %s16, 1
      %p118 = scmp.ne.s32.totalorder %s113, %s115
      %p119 = scmp.eq.s32.totalorder %s16, 0
      %p120 = por %p118, %p119
      %p121 = scmp.ne.s32.totalorder %s113, %s115
      %p122 = scmp.eq.s32.totalorder %s21, 1
      %p123 = por %p121, %p122
      %p124 = scmp.ne.s32.totalorder %s115, %s116
      %p125 = scmp.eq.s32.totalorder %s21, 0
      %p126 = por %p124, %p125
      %p127 = scmp.ne.s32.totalorder %s115, %s116
      %p128 = scmp.eq.s32.totalorder %s22, 1
      %p129 = por %p127, %p128
      %p131 = scmp.ne.s32.totalorder %s116, %s130
      %p132 = scmp.eq.s32.totalorder %s22, 0
      %p133 = por %p131, %p132
      %s135 = sadd.s32 %s134, 1
      %p138 = scmp.eq.s32.totalorder %s16, 1
      %p139 = scmp.ne.s32.totalorder %s134, %s136
      %p140 = scmp.eq.s32.totalorder %s16, 0
      %p141 = por %p139, %p140
      %p142 = scmp.ne.s32.totalorder %s134, %s136
      %p143 = scmp.eq.s32.totalorder %s21, 1
      %p144 = por %p142, %p143
      %p145 = scmp.ne.s32.totalorder %s136, %s137
      %p146 = scmp.eq.s32.totalorder %s21, 0
      %p147 = por %p145, %p146
      %p148 = scmp.ne.s32.totalorder %s136, %s137
      %p149 = scmp.eq.s32.totalorder %s22, 1
      %p150 = por %p148, %p149
      %p152 = scmp.ne.s32.totalorder %s137, %s151
      %p153 = scmp.eq.s32.totalorder %s22, 0
      %p154 = por %p152, %p153
      %s156 = sadd.s32 %s155, 1
      %p159 = scmp.eq.s32.totalorder %s16, 1
      %p160 = scmp.ne.s32.totalorder %s155, %s157
      %p161 = scmp.eq.s32.totalorder %s16, 0
      %p162 = por %p160, %p161
      %p163 = scmp.ne.s32.totalorder %s155, %s157
      %p164 = scmp.eq.s32.totalorder %s21, 1
      %p165 = por %p163, %p164
      %p166 = scmp.ne.s32.totalorder %s157, %s158
      %p167 = scmp.eq.s32.totalorder %s21, 0
      %p168 = por %p166, %p167
      %p169 = scmp.ne.s32.totalorder %s157, %s158
      %p170 = scmp.eq.s32.totalorder %s22, 1
      %p171 = por %p169, %p170
      %p173 = scmp.ne.s32.totalorder %s158, %s172
      %p174 = scmp.eq.s32.totalorder %s22, 0
      %p175 = por %p173, %p174
      %s176 = ssub.s32 %s16, %s23
      %p177 = scmp.eq.s32.totalorder %s176, 0
      %s179 = sadd.s32 %s178, 1
      %s180 = scalar_select %p177, %s178, %s179
      %p183 = pneg %p177
      %p184 = scmp.eq.s32.totalorder %s16, 1
      %p185 = por %p183, %p184
      %p186 = scmp.ne.s32.totalorder %s178, %s181
      %p187 = scmp.eq.s32.totalorder %s16, 0
      %p188 = por %p186, %p187
      %p189 = scmp.ne.s32.totalorder %s178, %s181
      %p190 = scmp.eq.s32.totalorder %s21, 1
      %p191 = por %p189, %p190
      %p192 = scmp.ne.s32.totalorder %s181, %s182
      %p193 = scmp.eq.s32.totalorder %s21, 0
      %p194 = por %p192, %p193
      %p195 = scmp.ne.s32.totalorder %s181, %s182
      %p196 = scmp.eq.s32.totalorder %s22, 1
      %p197 = por %p195, %p196
      %p199 = scmp.ne.s32.totalorder %s182, %s198
      %p200 = scmp.eq.s32.totalorder %s22, 0
      %p201 = por %p199, %p200
      %p202 = scmp.le.s32.totalorder 1, %s16
      %p203 = scmp.lt.s32.totalorder %s16, 3
      %p204 = pnand %p202, %p203
      %p205 = pneg %p204
      // Predicated region
      $region9: #{basic_block_forward.1} parent=5 // pred_check
        _
      $region10: #{basic_block_forward.1} parent=5 // pred_check_branch
        %207 = sbr.rel (%p204) target = $region12
      $region11: #{basic_block_forward.1} parent=5 // pred_region
        %s208 = ssub.s32 %s16, 1
        // Predicated region
        $region13: #{basic_block_forward.1} parent=11 // pred_check
          %p209 = pneg %p63
        $region14: #{basic_block_forward.1} parent=11 // pred_check_branch
          %211 = sbr.rel (%p209) target = $region16
        $region15: #{basic_block_forward.1} parent=11 // pred_region
          _
        $region16: #{basic_block_forward.1} parent=11 // pred_fallthru
          _
        // Predicated region
        $region17: #{basic_block_forward.1} parent=11 // pred_check
          %p212 = pneg %p84
        $region18: #{basic_block_forward.1} parent=11 // pred_check_branch
          %214 = sbr.rel (%p212) target = $region20
        $region19: #{basic_block_forward.1} parent=11 // pred_region
          _
        $region20: #{basic_block_forward.1} parent=11 // pred_fallthru
          _
        // Predicated region
        $region21: #{basic_block_forward.1} parent=11 // pred_check
          %p215 = pneg %p105
        $region22: #{basic_block_forward.1} parent=11 // pred_check_branch
          %217 = sbr.rel (%p215) target = $region24
        $region23: #{basic_block_forward.1} parent=11 // pred_region
          _
        $region24: #{basic_block_forward.1} parent=11 // pred_fallthru
          _
        // Predicated region
        $region25: #{basic_block_forward.1} parent=11 // pred_check
          %p218 = pneg %p126
        $region26: #{basic_block_forward.1} parent=11 // pred_check_branch
          %220 = sbr.rel (%p218) target = $region28
        $region27: #{basic_block_forward.1} parent=11 // pred_region
          _
        $region28: #{basic_block_forward.1} parent=11 // pred_fallthru
          _
        // Predicated region
        $region29: #{basic_block_forward.1} parent=11 // pred_check
          %p221 = pneg %p147
        $region30: #{basic_block_forward.1} parent=11 // pred_check_branch
          %223 = sbr.rel (%p221) target = $region32
        $region31: #{basic_block_forward.1} parent=11 // pred_region
          _
        $region32: #{basic_block_forward.1} parent=11 // pred_fallthru
          _
        // Predicated region
        $region33: #{basic_block_forward.1} parent=11 // pred_check
          %p224 = pneg %p168
        $region34: #{basic_block_forward.1} parent=11 // pred_check_branch
          %226 = sbr.rel (%p224) target = $region36
        $region35: #{basic_block_forward.1} parent=11 // pred_region
          _
        $region36: #{basic_block_forward.1} parent=11 // pred_fallthru
          _
      $region12: #{basic_block_forward.1} parent=5 // pred_fallthru
        _
      %p227 = scmp.lt.s32.totalorder %s16, 2
      // Predicated region
      $region37: #{basic_block_forward.1} parent=5 // pred_check
        %p228 = pneg %p227
      $region38: #{basic_block_forward.1} parent=5 // pred_check_branch
        %230 = sbr.rel (%p228) target = $region40
      $region39: #{basic_block_forward.1} parent=5 // pred_region
        // Predicated region
        $region41: #{basic_block_forward.1} parent=39 // pred_check
          %p231 = pneg %p36
        $region42: #{basic_block_forward.1} parent=39 // pred_check_branch
          %233 = sbr.rel (%p231) target = $region44
        $region43: #{basic_block_forward.1} parent=39 // pred_region
          %p234 = scmp.lt.s32.totalorder %s16, 1
          %s235 = scalar_select %p234, %s16, 1
          %s236 = smul.addr %s235, 32
          %s237 = smul.addr %s236, 8
          %s238 = scalar_lea.vmem %s0, %s237
        $region44: #{basic_block_forward.1} parent=39 // pred_fallthru
          _
      $region40: #{basic_block_forward.1} parent=5 // pred_fallthru
        _
      %p239 = scmp.le.s32.totalorder 1, %s16
      %p240 = scmp.lt.s32.totalorder %s16, 3
      %p241 = pnand %p239, %p240
      %p242 = pneg %p241
      // Predicated region
      $region45: #{basic_block_forward.1} parent=5 // pred_check
        _
      $region46: #{basic_block_forward.1} parent=5 // pred_check_branch
        %244 = sbr.rel (%p241) target = $region48
      $region47: #{basic_block_forward.1} parent=5 // pred_region
        %s245 = ssub.s32 %s16, 1
        %p246 = scmp.lt.s32.totalorder %s21, 1
        %s247 = scalar_select %p246, %s21, 1
        %s248 = smul.addr %s247, 32
        %s249 = smul.addr %s248, 8
        %s250 = scalar_lea.vmem %s0, %s249
        %p251 = pneg %p42
        %p252 = pneg %p39
        %p253 = pneg %p63
        %p254 = pneg %p60
        %p255 = pneg %p84
        %p256 = pneg %p81
        %p257 = pneg %p105
        %p258 = pneg %p102
        %p259 = pneg %p126
        %p260 = pneg %p123
        %p261 = pneg %p147
        %p262 = pneg %p144
        %p263 = pneg %p168
        %p264 = pneg %p165
        %p265 = pneg %p194
        %p266 = pneg %p191
        %s267 = sand.u32 %s181, 1
        %s268 = scalar_lea.sflag [#allocation5], %s267
        %s269 = sand.u32 %s181, 1
        %s270 = smul.addr %s269, 256
        %s271 = scalar_lea.vmem [#allocation4], %s270
        %p272 = scmp.lt.s32.totalorder %s21, 1
        %s273 = scalar_select %p272, %s21, 1
        %s274 = smul.addr %s273, 32
        %s275 = smul.addr %s274, 8
        %s276 = scalar_lea.vmem %s0, %s275
        %vm278 = vcmask 523264
        %279 = vst.msk [vmem:[#allocation2] sm:$0xff] %vm278, 0.0
        %280 = vst.msk [vmem:[#allocation2 + $0x8] sm:$0xff] %vm278, 0.0
        %281 = vst.msk [vmem:[#allocation2 + $0x10] sm:$0xff] %vm278, 0.0
        %282 = vst.msk [vmem:[#allocation2 + $0x18] sm:$0xff] %vm278, 0.0
        %283 = vst.msk [vmem:[#allocation2 + $0x20] sm:$0xff] %vm278, 0.0
        %284 = vst.msk [vmem:[#allocation2 + $0x28] sm:$0xff] %vm278, 0.0
        %285 = vst.msk [vmem:[#allocation2 + $0x30] sm:$0xff] %vm278, 0.0
        %286 = vst.msk [vmem:[#allocation2 + $0x38] sm:$0xff] %vm278, 0.0
        %287 = vst.msk [vmem:[#allocation2 + $0x40] sm:$0xff] %vm278, 0.0
        %288 = vst.msk [vmem:[#allocation2 + $0x48] sm:$0xff] %vm278, 0.0
        %289 = vst.msk [vmem:[#allocation2 + $0x50] sm:$0xff] %vm278, 0.0
        %290 = vst.msk [vmem:[#allocation2 + $0x58] sm:$0xff] %vm278, 0.0
        %291 = vst.msk [vmem:[#allocation2 + $0x60] sm:$0xff] %vm278, 0.0
        %292 = vst.msk [vmem:[#allocation2 + $0x68] sm:$0xff] %vm278, 0.0
        %293 = vst.msk [vmem:[#allocation2 + $0x70] sm:$0xff] %vm278, 0.0
        %294 = vst.msk [vmem:[#allocation2 + $0x78] sm:$0xff] %vm278, 0.0
        %295 = vst.msk [vmem:[#allocation2 + $0x80] sm:$0xff] %vm278, 0.0
        %296 = vst.msk [vmem:[#allocation2 + $0x88] sm:$0xff] %vm278, 0.0
        %297 = vst.msk [vmem:[#allocation2 + $0x90] sm:$0xff] %vm278, 0.0
        %298 = vst.msk [vmem:[#allocation2 + $0x98] sm:$0xff] %vm278, 0.0
        %299 = vst.msk [vmem:[#allocation2 + $0xa0] sm:$0xff] %vm278, 0.0
        %300 = vst.msk [vmem:[#allocation2 + $0xa8] sm:$0xff] %vm278, 0.0
        %301 = vst.msk [vmem:[#allocation2 + $0xb0] sm:$0xff] %vm278, 0.0
        %302 = vst.msk [vmem:[#allocation2 + $0xb8] sm:$0xff] %vm278, 0.0
        %303 = vst.msk [vmem:[#allocation2 + $0xc0] sm:$0xff] %vm278, 0.0
        %304 = vst.msk [vmem:[#allocation2 + $0xc8] sm:$0xff] %vm278, 0.0
        %305 = vst.msk [vmem:[#allocation2 + $0xd0] sm:$0xff] %vm278, 0.0
        %306 = vst.msk [vmem:[#allocation2 + $0xd8] sm:$0xff] %vm278, 0.0
        %307 = vst.msk [vmem:[#allocation2 + $0xe0] sm:$0xff] %vm278, 0.0
        %308 = vst.msk [vmem:[#allocation2 + $0xe8] sm:$0xff] %vm278, 0.0
        %309 = vst.msk [vmem:[#allocation2 + $0xf0] sm:$0xff] %vm278, 0.0
        %310 = vst.msk [vmem:[#allocation2 + $0xf8] sm:$0xff] %vm278, 0.0
        %311 = vst.msk [vmem:[#allocation2 + $0x100] sm:$0xff] %vm278, 0.0
        %312 = vst.msk [vmem:[#allocation2 + $0x108] sm:$0xff] %vm278, 0.0
        %313 = vst.msk [vmem:[#allocation2 + $0x110] sm:$0xff] %vm278, 0.0
        %314 = vst.msk [vmem:[#allocation2 + $0x118] sm:$0xff] %vm278, 0.0
        %315 = vst.msk [vmem:[#allocation2 + $0x120] sm:$0xff] %vm278, 0.0
        %316 = vst.msk [vmem:[#allocation2 + $0x128] sm:$0xff] %vm278, 0.0
        %317 = vst.msk [vmem:[#allocation2 + $0x130] sm:$0xff] %vm278, 0.0
        %318 = vst.msk [vmem:[#allocation2 + $0x138] sm:$0xff] %vm278, 0.0
        %319 = vst.msk [vmem:[#allocation2 + $0x140] sm:$0xff] %vm278, 0.0
        %320 = vst.msk [vmem:[#allocation2 + $0x148] sm:$0xff] %vm278, 0.0
        %321 = vst.msk [vmem:[#allocation2 + $0x150] sm:$0xff] %vm278, 0.0
        %322 = vst.msk [vmem:[#allocation2 + $0x158] sm:$0xff] %vm278, 0.0
        %323 = vst.msk [vmem:[#allocation2 + $0x160] sm:$0xff] %vm278, 0.0
        %324 = vst.msk [vmem:[#allocation2 + $0x168] sm:$0xff] %vm278, 0.0
        %325 = vst.msk [vmem:[#allocation2 + $0x170] sm:$0xff] %vm278, 0.0
        %326 = vst.msk [vmem:[#allocation2 + $0x178] sm:$0xff] %vm278, 0.0
        %327 = vst.msk [vmem:[#allocation2 + $0x180] sm:$0xff] %vm278, 0.0
        %328 = vst.msk [vmem:[#allocation2 + $0x188] sm:$0xff] %vm278, 0.0
        %329 = vst.msk [vmem:[#allocation2 + $0x190] sm:$0xff] %vm278, 0.0
        %330 = vst.msk [vmem:[#allocation2 + $0x198] sm:$0xff] %vm278, 0.0
        %331 = vst.msk [vmem:[#allocation2 + $0x1a0] sm:$0xff] %vm278, 0.0
        %332 = vst.msk [vmem:[#allocation2 + $0x1a8] sm:$0xff] %vm278, 0.0
        %333 = vst.msk [vmem:[#allocation2 + $0x1b0] sm:$0xff] %vm278, 0.0
        %334 = vst.msk [vmem:[#allocation2 + $0x1b8] sm:$0xff] %vm278, 0.0
        %335 = vst.msk [vmem:[#allocation2 + $0x1c0] sm:$0xff] %vm278, 0.0
        %336 = vst.msk [vmem:[#allocation2 + $0x1c8] sm:$0xff] %vm278, 0.0
        %337 = vst.msk [vmem:[#allocation2 + $0x1d0] sm:$0xff] %vm278, 0.0
        %338 = vst.msk [vmem:[#allocation2 + $0x1d8] sm:$0xff] %vm278, 0.0
        %339 = vst.msk [vmem:[#allocation2 + $0x1e0] sm:$0xff] %vm278, 0.0
        %340 = vst.msk [vmem:[#allocation2 + $0x1e8] sm:$0xff] %vm278, 0.0
        %341 = vst.msk [vmem:[#allocation2 + $0x1f0] sm:$0xff] %vm278, 0.0
        %342 = vst.msk [vmem:[#allocation2 + $0x1f8] sm:$0xff] %vm278, 0.0
        %343 = vst.msk [vmem:[#allocation2 + $0x200] sm:$0xff] %vm278, 0.0
        %344 = vst.msk [vmem:[#allocation2 + $0x208] sm:$0xff] %vm278, 0.0
        %345 = vst.msk [vmem:[#allocation2 + $0x210] sm:$0xff] %vm278, 0.0
        %346 = vst.msk [vmem:[#allocation2 + $0x218] sm:$0xff] %vm278, 0.0
        %347 = vst.msk [vmem:[#allocation2 + $0x220] sm:$0xff] %vm278, 0.0
        %348 = vst.msk [vmem:[#allocation2 + $0x228] sm:$0xff] %vm278, 0.0
        %349 = vst.msk [vmem:[#allocation2 + $0x230] sm:$0xff] %vm278, 0.0
        %350 = vst.msk [vmem:[#allocation2 + $0x238] sm:$0xff] %vm278, 0.0
        %v351 = vld [vmem:[%s276] sm:$0xff]
        %v352 = vld [vmem:[%s276 + $0x8] sm:$0xff]
        %v353 = vld [vmem:[%s276 + $0x10] sm:$0xff]
        %v354 = vld [vmem:[%s276 + $0x18] sm:$0xff]
        %v355 = vld [vmem:[%s276 + $0x20] sm:$0xff]
        %v356 = vld [vmem:[%s276 + $0x28] sm:$0xff]
        %v357 = vld [vmem:[%s276 + $0x30] sm:$0xff]
        %v358 = vld [vmem:[%s276 + $0x38] sm:$0xff]
        %v359 = vld [vmem:[%s276 + $0x40] sm:$0xff]
        %v360 = vld [vmem:[%s276 + $0x48] sm:$0xff]
        %v361 = vld [vmem:[%s276 + $0x50] sm:$0xff]
        %v362 = vld [vmem:[%s276 + $0x58] sm:$0xff]
        %v363 = vld [vmem:[%s276 + $0x60] sm:$0xff]
        %v364 = vld [vmem:[%s276 + $0x68] sm:$0xff]
        %v365 = vld [vmem:[%s276 + $0x70] sm:$0xff]
        %v366 = vld [vmem:[%s276 + $0x78] sm:$0xff]
        %v367 = vld [vmem:[%s276 + $0x80] sm:$0xff]
        %v368 = vld [vmem:[%s276 + $0x88] sm:$0xff]
        %v369 = vld [vmem:[%s276 + $0x90] sm:$0xff]
        %v370 = vld [vmem:[%s276 + $0x98] sm:$0xff]
        %v371 = vld [vmem:[%s276 + $0xa0] sm:$0xff]
        %v372 = vld [vmem:[%s276 + $0xa8] sm:$0xff]
        %v373 = vld [vmem:[%s276 + $0xb0] sm:$0xff]
        %v374 = vld [vmem:[%s276 + $0xb8] sm:$0xff]
        %v375 = vld [vmem:[%s276 + $0xc0] sm:$0xff]
        %v376 = vld [vmem:[%s276 + $0xc8] sm:$0xff]
        %v377 = vld [vmem:[%s276 + $0xd0] sm:$0xff]
        %v378 = vld [vmem:[%s276 + $0xd8] sm:$0xff]
        %v379 = vld [vmem:[%s276 + $0xe0] sm:$0xff]
        %v380 = vld [vmem:[%s276 + $0xe8] sm:$0xff]
        %v381 = vld [vmem:[%s276 + $0xf0] sm:$0xff]
        %v382 = vld [vmem:[%s276 + $0xf8] sm:$0xff]
        %s383 = scalar_lea.vmem [#allocation2], 24
        %384 = vst.msk [vmem:[%s383 + $0x1] sm:$0xff] %vm278, %v351
        %385 = vst.msk [vmem:[%s383 + $0x9] sm:$0xff] %vm278, %v352
        %386 = vst.msk [vmem:[%s383 + $0x19] sm:$0xff] %vm278, %v353
        %387 = vst.msk [vmem:[%s383 + $0x21] sm:$0xff] %vm278, %v354
        %388 = vst.msk [vmem:[%s383 + $0x31] sm:$0xff] %vm278, %v355
        %389 = vst.msk [vmem:[%s383 + $0x39] sm:$0xff] %vm278, %v356
        %390 = vst.msk [vmem:[%s383 + $0x49] sm:$0xff] %vm278, %v357
        %391 = vst.msk [vmem:[%s383 + $0x51] sm:$0xff] %vm278, %v358
        %392 = vst.msk [vmem:[%s383 + $0x61] sm:$0xff] %vm278, %v359
        %393 = vst.msk [vmem:[%s383 + $0x69] sm:$0xff] %vm278, %v360
        %394 = vst.msk [vmem:[%s383 + $0x79] sm:$0xff] %vm278, %v361
        %395 = vst.msk [vmem:[%s383 + $0x81] sm:$0xff] %vm278, %v362
        %396 = vst.msk [vmem:[%s383 + $0x91] sm:$0xff] %vm278, %v363
        %397 = vst.msk [vmem:[%s383 + $0x99] sm:$0xff] %vm278, %v364
        %398 = vst.msk [vmem:[%s383 + $0xa9] sm:$0xff] %vm278, %v365
        %399 = vst.msk [vmem:[%s383 + $0xb1] sm:$0xff] %vm278, %v366
        %400 = vst.msk [vmem:[%s383 + $0xc1] sm:$0xff] %vm278, %v367
        %401 = vst.msk [vmem:[%s383 + $0xc9] sm:$0xff] %vm278, %v368
        %402 = vst.msk [vmem:[%s383 + $0xd9] sm:$0xff] %vm278, %v369
        %403 = vst.msk [vmem:[%s383 + $0xe1] sm:$0xff] %vm278, %v370
        %404 = vst.msk [vmem:[%s383 + $0xf1] sm:$0xff] %vm278, %v371
        %405 = vst.msk [vmem:[%s383 + $0xf9] sm:$0xff] %vm278, %v372
        %406 = vst.msk [vmem:[%s383 + $0x109] sm:$0xff] %vm278, %v373
        %407 = vst.msk [vmem:[%s383 + $0x111] sm:$0xff] %vm278, %v374
        %408 = vst.msk [vmem:[%s383 + $0x121] sm:$0xff] %vm278, %v375
        %409 = vst.msk [vmem:[%s383 + $0x129] sm:$0xff] %vm278, %v376
        %410 = vst.msk [vmem:[%s383 + $0x139] sm:$0xff] %vm278, %v377
        %411 = vst.msk [vmem:[%s383 + $0x141] sm:$0xff] %vm278, %v378
        %412 = vst.msk [vmem:[%s383 + $0x151] sm:$0xff] %vm278, %v379
        %413 = vst.msk [vmem:[%s383 + $0x159] sm:$0xff] %vm278, %v380
        %414 = vst.msk [vmem:[%s383 + $0x169] sm:$0xff] %vm278, %v381
        %415 = vst.msk [vmem:[%s383 + $0x171] sm:$0xff] %vm278, %v382
        %v416 = vld [vmem:[#allocation2] sm:$0xff]
        %v417 = vld [vmem:[#allocation2 + $0x8] sm:$0xff]
        %v418 = vld [vmem:[#allocation2 + $0x10] sm:$0xff]
        %v419 = vld [vmem:[#allocation2 + $0x18] sm:$0xff]
        %v420 = vld [vmem:[#allocation2 + $0x20] sm:$0xff]
        %v421 = vld [vmem:[#allocation2 + $0x28] sm:$0xff]
        %v422 = vld [vmem:[#allocation2 + $0x30] sm:$0xff]
        %v423 = vld [vmem:[#allocation2 + $0x38] sm:$0xff]
        %v424 = vld [vmem:[#allocation2 + $0x40] sm:$0xff]
        %v425 = vld [vmem:[#allocation2 + $0x48] sm:$0xff]
        %v426 = vld [vmem:[#allocation2 + $0x50] sm:$0xff]
        %v427 = vld [vmem:[#allocation2 + $0x58] sm:$0xff]
        %v428 = vld [vmem:[#allocation2 + $0x60] sm:$0xff]
        %v429 = vld [vmem:[#allocation2 + $0x68] sm:$0xff]
        %v430 = vld [vmem:[#allocation2 + $0x70] sm:$0xff]
        %v431 = vld [vmem:[#allocation2 + $0x78] sm:$0xff]
        %v432 = vld [vmem:[#allocation2 + $0x80] sm:$0xff]
        %v433 = vld [vmem:[#allocation2 + $0x88] sm:$0xff]
        %v434 = vld [vmem:[#allocation2 + $0x90] sm:$0xff]
        %v435 = vld [vmem:[#allocation2 + $0x98] sm:$0xff]
        %v436 = vld [vmem:[#allocation2 + $0xa0] sm:$0xff]
        %v437 = vld [vmem:[#allocation2 + $0xa8] sm:$0xff]
        %v438 = vld [vmem:[#allocation2 + $0xb0] sm:$0xff]
        %v439 = vld [vmem:[#allocation2 + $0xb8] sm:$0xff]
        %v440 = vld [vmem:[#allocation2 + $0xc0] sm:$0xff]
        %v441 = vld [vmem:[#allocation2 + $0xc8] sm:$0xff]
        %v442 = vld [vmem:[#allocation2 + $0xd0] sm:$0xff]
        %v443 = vld [vmem:[#allocation2 + $0xd8] sm:$0xff]
        %v444 = vld [vmem:[#allocation2 + $0xe0] sm:$0xff]
        %v445 = vld [vmem:[#allocation2 + $0xe8] sm:$0xff]
        %v446 = vld [vmem:[#allocation2 + $0xf0] sm:$0xff]
        %v447 = vld [vmem:[#allocation2 + $0xf8] sm:$0xff]
        %v448 = vld [vmem:[#allocation2 + $0x100] sm:$0xff]
        %v449 = vld [vmem:[#allocation2 + $0x108] sm:$0xff]
        %v450 = vld [vmem:[#allocation2 + $0x110] sm:$0xff]
        %v451 = vld [vmem:[#allocation2 + $0x118] sm:$0xff]
        %v452 = vld [vmem:[#allocation2 + $0x120] sm:$0xff]
        %v453 = vld [vmem:[#allocation2 + $0x128] sm:$0xff]
        %v454 = vld [vmem:[#allocation2 + $0x130] sm:$0xff]
        %v455 = vld [vmem:[#allocation2 + $0x138] sm:$0xff]
        %v456 = vld [vmem:[#allocation2 + $0x140] sm:$0xff]
        %v457 = vld [vmem:[#allocation2 + $0x148] sm:$0xff]
        %v458 = vld [vmem:[#allocation2 + $0x150] sm:$0xff]
        %v459 = vld [vmem:[#allocation2 + $0x158] sm:$0xff]
        %v460 = vld [vmem:[#allocation2 + $0x160] sm:$0xff]
        %v461 = vld [vmem:[#allocation2 + $0x168] sm:$0xff]
        %v462 = vld [vmem:[#allocation2 + $0x170] sm:$0xff]
        %v463 = vld [vmem:[#allocation2 + $0x178] sm:$0xff]
        %v464 = vld [vmem:[#allocation2 + $0x180] sm:$0xff]
        %v465 = vld [vmem:[#allocation2 + $0x188] sm:$0xff]
        %v466 = vld [vmem:[#allocation2 + $0x190] sm:$0xff]
        %v467 = vld [vmem:[#allocation2 + $0x198] sm:$0xff]
        %v468 = vld [vmem:[#allocation2 + $0x1a0] sm:$0xff]
        %v469 = vld [vmem:[#allocation2 + $0x1a8] sm:$0xff]
        %v470 = vld [vmem:[#allocation2 + $0x1b0] sm:$0xff]
        %v471 = vld [vmem:[#allocation2 + $0x1b8] sm:$0xff]
        %v472 = vpack.c.bf16 %v417, %v416
        %v473 = vpack.c.bf16 %v418, %v418
        %v474 = vpack.c.bf16 %v420, %v419
        %v475 = vpack.c.bf16 %v421, %v421
        %v476 = vpack.c.bf16 %v423, %v422
        %v477 = vpack.c.bf16 %v424, %v424
        %v478 = vpack.c.bf16 %v426, %v425
        %v479 = vpack.c.bf16 %v427, %v427
        %v480 = vpack.c.bf16 %v429, %v428
        %v481 = vpack.c.bf16 %v430, %v430
        %v482 = vpack.c.bf16 %v432, %v431
        %v483 = vpack.c.bf16 %v433, %v433
        %v484 = vpack.c.bf16 %v435, %v434
        %v485 = vpack.c.bf16 %v436, %v436
        %v486 = vpack.c.bf16 %v438, %v437
        %v487 = vpack.c.bf16 %v439, %v439
        %v488 = vpack.c.bf16 %v441, %v440
        %v489 = vpack.c.bf16 %v442, %v442
        %v490 = vpack.c.bf16 %v444, %v443
        %v491 = vpack.c.bf16 %v445, %v445
        %v492 = vpack.c.bf16 %v447, %v446
        %v493 = vpack.c.bf16 %v448, %v448
        %v494 = vpack.c.bf16 %v450, %v449
        %v495 = vpack.c.bf16 %v451, %v451
        %v496 = vpack.c.bf16 %v453, %v452
        %v497 = vpack.c.bf16 %v454, %v454
        %v498 = vpack.c.bf16 %v456, %v455
        %v499 = vpack.c.bf16 %v457, %v457
        %v500 = vpack.c.bf16 %v459, %v458
        %v501 = vpack.c.bf16 %v460, %v460
        %v502 = vpack.c.bf16 %v462, %v461
        %v503 = vpack.c.bf16 %v463, %v463
        %v504 = vpack.c.bf16 %v465, %v464
        %v505 = vpack.c.bf16 %v466, %v466
        %v506 = vpack.c.bf16 %v468, %v467
        %v507 = vpack.c.bf16 %v469, %v469
        %v508 = vpack.c.bf16 %v471, %v470
        %v546 = vunpack.c.l.b16 %v472
        %v547 = vunpack.c.h.b16 %v472
        %v548 = vunpack.c.l.b16 %v473
        %v549 = vunpack.c.l.b16 %v474
        %v550 = vunpack.c.h.b16 %v474
        %v551 = vunpack.c.l.b16 %v475
        %v552 = vunpack.c.l.b16 %v476
        %v553 = vunpack.c.h.b16 %v476
        %v554 = vunpack.c.l.b16 %v477
        %v555 = vunpack.c.l.b16 %v478
        %v556 = vunpack.c.h.b16 %v478
        %v557 = vunpack.c.l.b16 %v479
        %v558 = vunpack.c.l.b16 %v480
        %v559 = vunpack.c.h.b16 %v480
        %v560 = vunpack.c.l.b16 %v481
        %v561 = vunpack.c.l.b16 %v482
        %v562 = vunpack.c.h.b16 %v482
        %v563 = vunpack.c.l.b16 %v483
        %v564 = vunpack.c.l.b16 %v484
        %v565 = vunpack.c.h.b16 %v484
        %v566 = vunpack.c.l.b16 %v485
        %v567 = vunpack.c.l.b16 %v486
        %v568 = vunpack.c.h.b16 %v486
        %v569 = vunpack.c.l.b16 %v487
        %v570 = vunpack.c.l.b16 %v488
        %v571 = vunpack.c.h.b16 %v488
        %v572 = vunpack.c.l.b16 %v489
        %v573 = vunpack.c.l.b16 %v490
        %v574 = vunpack.c.h.b16 %v490
        %v575 = vunpack.c.l.b16 %v491
        %v576 = vunpack.c.l.b16 %v492
        %v577 = vunpack.c.h.b16 %v492
        %v578 = vunpack.c.l.b16 %v493
        %v579 = vunpack.c.l.b16 %v494
        %v580 = vunpack.c.h.b16 %v494
        %v581 = vunpack.c.l.b16 %v495
        %v582 = vunpack.c.l.b16 %v496
        %v583 = vunpack.c.h.b16 %v496
        %v584 = vunpack.c.l.b16 %v497
        %v585 = vunpack.c.l.b16 %v498
        %v586 = vunpack.c.h.b16 %v498
        %v587 = vunpack.c.l.b16 %v499
        %v588 = vunpack.c.l.b16 %v500
        %v589 = vunpack.c.h.b16 %v500
        %v590 = vunpack.c.l.b16 %v501
        %v591 = vunpack.c.l.b16 %v502
        %v592 = vunpack.c.h.b16 %v502
        %v593 = vunpack.c.l.b16 %v503
        %v594 = vunpack.c.l.b16 %v504
        %v595 = vunpack.c.h.b16 %v504
        %v596 = vunpack.c.l.b16 %v505
        %v597 = vunpack.c.l.b16 %v506
        %v598 = vunpack.c.h.b16 %v506
        %v599 = vunpack.c.l.b16 %v507
        %v600 = vunpack.c.l.b16 %v508
        %v601 = vld [vmem:[%s1] sm:$0xf]
        %v602 = vld [vmem:[%s1 + $0x4] sm:$0xf]
        %v603 = vld [vmem:[%s1 + $0x8] sm:$0xf]
        %v604 = vld [vmem:[%s1 + $0xc] sm:$0xf]
        %v605 = vld [vmem:[%s1 + $0x10] sm:$0xf]
        %v606 = vld [vmem:[%s1 + $0x14] sm:$0xf]
        %v607 = vld [vmem:[%s1 + $0x18] sm:$0xf]
        %v608 = vld [vmem:[%s1 + $0x1c] sm:$0xf]
        %s609 = scalar_lea.vmem %s1, 32
        %v610 = vld [vmem:[%s609] sm:$0xf]
        %v611 = vld [vmem:[%s609 + $0x4] sm:$0xf]
        %v612 = vld [vmem:[%s609 + $0x8] sm:$0xf]
        %v613 = vld [vmem:[%s609 + $0xc] sm:$0xf]
        %v614 = vld [vmem:[%s609 + $0x10] sm:$0xf]
        %v615 = vld [vmem:[%s609 + $0x14] sm:$0xf]
        %v616 = vld [vmem:[%s609 + $0x18] sm:$0xf]
        %v617 = vld [vmem:[%s609 + $0x1c] sm:$0xf]
        %v618 = vpack.c.b16 %v547, %v546
        %v619 = vpack.c.b16 %v549, %v548
        %v620 = vpack.c.b16 %v551, %v550
        %v621 = vpack.c.b16 %v553, %v552
        %v622 = vpack.c.b16 %v555, %v554
        %v623 = vpack.c.b16 %v557, %v556
        %v624 = vpack.c.b16 %v559, %v558
        %v625 = vpack.c.b16 %v561, %v560
        %v626 = vpack.c.b16 %v563, %v562
        %v627 = vpack.c.b16 %v565, %v564
        %v628 = vpack.c.b16 %v567, %v566
        %v629 = vpack.c.b16 %v569, %v568
        %v630 = vpack.c.b16 %v571, %v570
        %v631 = vpack.c.b16 %v573, %v572
        %v632 = vpack.c.b16 %v575, %v574
        %v633 = vpack.c.b16 %v577, %v576
        %v634 = vpack.c.b16 %v579, %v578
        %v635 = vpack.c.b16 %v581, %v580
        %v636 = vpack.c.b16 %v583, %v582
        %v637 = vpack.c.b16 %v585, %v584
        %v638 = vpack.c.b16 %v587, %v586
        %v639 = vpack.c.b16 %v589, %v588
        %v640 = vpack.c.b16 %v591, %v590
        %v641 = vpack.c.b16 %v593, %v592
        %v642 = vpack.c.b16 %v594, %v594
        %vm643 = vsmask.f32 7424
        %v645 = vshrl.u32 %v618, 16
        %v647 = vshll.u32 %v618, 16
        %v649 = vrot.slane %v647, 1
        %v650 = vor.u32 %v645, %v649
        %v652 = vshll.u32 %v619, 16
        %v654 = vrot.slane %v652, 1
        %v655 = vsel %vm643, %v650, %v654
        %v656 = vshrl.u32 %v619, 16
        %v658 = vor.u32 %v656, %v654
        %v660 = vshll.u32 %v620, 16
        %v662 = vrot.slane %v660, 1
        %v663 = vsel %vm643, %v658, %v662
        %v664 = vshrl.u32 %v620, 16
        %v666 = vor.u32 %v664, %v662
        %v668 = vshll.u32 %v621, 16
        %v670 = vrot.slane %v668, 1
        %v671 = vsel %vm643, %v666, %v670
        %v672 = vshrl.u32 %v621, 16
        %v674 = vor.u32 %v672, %v670
        %v676 = vshll.u32 %v622, 16
        %v678 = vrot.slane %v676, 1
        %v679 = vsel %vm643, %v674, %v678
        %v680 = vshrl.u32 %v622, 16
        %v682 = vor.u32 %v680, %v678
        %v684 = vshll.u32 %v623, 16
        %v686 = vrot.slane %v684, 1
        %v687 = vsel %vm643, %v682, %v686
        %v688 = vshrl.u32 %v623, 16
        %v690 = vor.u32 %v688, %v686
        %v692 = vshll.u32 %v624, 16
        %v694 = vrot.slane %v692, 1
        %v695 = vsel %vm643, %v690, %v694
        %v696 = vshrl.u32 %v624, 16
        %v698 = vor.u32 %v696, %v694
        %v700 = vshll.u32 %v625, 16
        %v702 = vrot.slane %v700, 1
        %v703 = vsel %vm643, %v698, %v702
        %v704 = vshrl.u32 %v625, 16
        %v706 = vor.u32 %v704, %v702
        %v708 = vshll.u32 %v626, 16
        %v710 = vrot.slane %v708, 1
        %v711 = vsel %vm643, %v706, %v710
        %v712 = vshrl.u32 %v626, 16
        %v714 = vor.u32 %v712, %v710
        %v716 = vshll.u32 %v627, 16
        %v718 = vrot.slane %v716, 1
        %v719 = vsel %vm643, %v714, %v718
        %v720 = vshrl.u32 %v627, 16
        %v722 = vor.u32 %v720, %v718
        %v724 = vshll.u32 %v628, 16
        %v726 = vrot.slane %v724, 1
        %v727 = vsel %vm643, %v722, %v726
        %v728 = vshrl.u32 %v628, 16
        %v730 = vor.u32 %v728, %v726
        %v732 = vshll.u32 %v629, 16
        %v734 = vrot.slane %v732, 1
        %v735 = vsel %vm643, %v730, %v734
        %v736 = vshrl.u32 %v629, 16
        %v738 = vor.u32 %v736, %v734
        %v740 = vshll.u32 %v630, 16
        %v742 = vrot.slane %v740, 1
        %v743 = vsel %vm643, %v738, %v742
        %v744 = vshrl.u32 %v630, 16
        %v746 = vor.u32 %v744, %v742
        %v748 = vshll.u32 %v631, 16
        %v750 = vrot.slane %v748, 1
        %v751 = vsel %vm643, %v746, %v750
        %v752 = vshrl.u32 %v631, 16
        %v754 = vor.u32 %v752, %v750
        %v756 = vshll.u32 %v632, 16
        %v758 = vrot.slane %v756, 1
        %v759 = vsel %vm643, %v754, %v758
        %v760 = vshrl.u32 %v632, 16
        %v762 = vor.u32 %v760, %v758
        %v764 = vshll.u32 %v633, 16
        %v766 = vrot.slane %v764, 1
        %v767 = vsel %vm643, %v762, %v766
        %v768 = vshrl.u32 %v633, 16
        %v770 = vor.u32 %v768, %v766
        %v772 = vshll.u32 %v634, 16
        %v774 = vrot.slane %v772, 1
        %v775 = vsel %vm643, %v770, %v774
        %v776 = vshrl.u32 %v634, 16
        %v778 = vor.u32 %v776, %v774
        %v780 = vshll.u32 %v635, 16
        %v782 = vrot.slane %v780, 1
        %v783 = vsel %vm643, %v778, %v782
        %v784 = vshrl.u32 %v635, 16
        %v786 = vor.u32 %v784, %v782
        %v788 = vshll.u32 %v636, 16
        %v790 = vrot.slane %v788, 1
        %v791 = vsel %vm643, %v786, %v790
        %v792 = vshrl.u32 %v636, 16
        %v794 = vor.u32 %v792, %v790
        %v796 = vshll.u32 %v637, 16
        %v798 = vrot.slane %v796, 1
        %v799 = vsel %vm643, %v794, %v798
        %v800 = vshrl.u32 %v637, 16
        %v802 = vor.u32 %v800, %v798
        %v804 = vshll.u32 %v638, 16
        %v806 = vrot.slane %v804, 1
        %v807 = vsel %vm643, %v802, %v806
        %v808 = vshrl.u32 %v638, 16
        %v810 = vor.u32 %v808, %v806
        %v812 = vshll.u32 %v639, 16
        %v814 = vrot.slane %v812, 1
        %v815 = vsel %vm643, %v810, %v814
        %v816 = vshrl.u32 %v639, 16
        %v818 = vor.u32 %v816, %v814
        %v820 = vshll.u32 %v640, 16
        %v822 = vrot.slane %v820, 1
        %v823 = vsel %vm643, %v818, %v822
        %v824 = vshrl.u32 %v640, 16
        %v826 = vor.u32 %v824, %v822
        %v828 = vshll.u32 %v641, 16
        %v830 = vrot.slane %v828, 1
        %v831 = vsel %vm643, %v826, %v830
        %v832 = vshrl.u32 %v641, 16
        %v834 = vor.u32 %v832, %v830
        %v836 = vshll.u32 %v642, 16
        %v838 = vrot.slane %v836, 1
        %v839 = vsel %vm643, %v834, %v838
        %v848 = vunpack.c.l.b16 %v610
        %v849 = vunpack.c.l.b16 %v611
        %v850 = vunpack.c.l.b16 %v612
        %v851 = vunpack.c.l.b16 %v613
        %v852 = vunpack.c.l.b16 %v614
        %v853 = vunpack.c.l.b16 %v615
        %v854 = vunpack.c.l.b16 %v616
        %v855 = vunpack.c.l.b16 %v617
        %v856 = vpack.c.b16 %v849, %v848
        %v857 = vpack.c.b16 %v851, %v850
        %v858 = vpack.c.b16 %v853, %v852
        %v859 = vpack.c.b16 %v855, %v854
        %v865 = vsel %vm278, %v655, 0
        %v868 = vsel %vm278, %v663, 0
        %v871 = vsel %vm278, %v671, 0
        %v874 = vsel %vm278, %v679, 0
        %v877 = vsel %vm278, %v687, 0
        %v880 = vsel %vm278, %v695, 0
        %v883 = vsel %vm278, %v703, 0
        %v886 = vsel %vm278, %v711, 0
        %v889 = vsel %vm278, %v719, 0
        %v892 = vsel %vm278, %v727, 0
        %v895 = vsel %vm278, %v735, 0
        %v898 = vsel %vm278, %v743, 0
        %v901 = vsel %vm278, %v751, 0
        %v904 = vsel %vm278, %v759, 0
        %v907 = vsel %vm278, %v767, 0
        %v910 = vsel %vm278, %v775, 0
        %v913 = vsel %vm278, %v783, 0
        %v916 = vsel %vm278, %v791, 0
        %v919 = vsel %vm278, %v799, 0
        %v922 = vsel %vm278, %v807, 0
        %v925 = vsel %vm278, %v815, 0
        %v928 = vsel %vm278, %v823, 0
        %v931 = vsel %vm278, %v831, 0
        %v934 = vsel %vm278, %v839, 0
        %936 = vmatprep.subr.bf16.mxu0 0
        %937 = vmatpush1.bf16.msra.mxu0 0
        %938 = vmatprep.subr.bf16.mxu0 0
        %939 = vmatpush1.bf16.msra.mxu0 0
        %940 = vmatprep.subr.bf16.mxu0 0
        %941 = vmatpush1.bf16.msra.mxu0 0
        %942 = vmatprep.subr.bf16.mxu0 0
        %943 = vmatpush1.bf16.msra.mxu0 0
        %944 = vmatprep.subr.bf16.mxu0 0
        %945 = vmatpush1.bf16.msra.mxu0 %v859
        %946 = vmatprep.subr.bf16.mxu0 0
        %947 = vmatpush1.bf16.msra.mxu0 %v858
        %948 = vmatprep.subr.bf16.mxu0 0
        %949 = vmatpush1.bf16.msra.mxu0 %v857
        %950 = vmatprep.subr.bf16.mxu0 0
        %951 = vmatpush1.bf16.msra.mxu0 %v856
        %952 = vmatprep.subr.bf16.mxu0 0
        %953 = vmatpush2.bf16.msra.mxu0 0
        %954 = vmatprep.subr.bf16.mxu0 0
        %955 = vmatpush2.bf16.msra.mxu0 0
        %956 = vmatprep.subr.bf16.mxu0 0
        %957 = vmatpush2.bf16.msra.mxu0 0
        %958 = vmatprep.subr.bf16.mxu0 0
        %959 = vmatpush2.bf16.msra.mxu0 0
        %960 = vmatprep.subr.bf16.mxu0 0
        %961 = vmatpush2.bf16.msra.mxu0 0
        %962 = vmatprep.subr.bf16.mxu0 0
        %963 = vmatpush2.bf16.msra.mxu0 0
        %964 = vmatprep.subr.bf16.mxu0 0
        %965 = vmatpush2.bf16.msra.mxu0 0
        %966 = vmatprep.subr.bf16.mxu0 0
        %967 = vmatpush2.bf16.msra.mxu0 0
        %968 = vmatprep.mubr.bf16.mxu0 0
        %969 = vmatmul.mubr.bf16.gmra.mxu0 %v865
        %v970 = vpop.f32.mrf.mxu0
        %v971 = vadd.f32 0.0, %v970
        %v972 = vpop.f32.mrf.mxu0
        %v973 = vpop.f32.mrf.mxu0
        %v974 = vadd.f32 0.0, %v973
        %v975 = vpop.f32.mrf.mxu0
        %976 = vmatprep.mubr.bf16.mxu0 0
        %977 = vmatmul.mubr.bf16.gmra.mxu0 %v868
        %v978 = vpop.f32.mrf.mxu0
        %v979 = vpop.f32.mrf.mxu0
        %v980 = vpop.f32.mrf.mxu0
        %v981 = vadd.f32 0.0, %v980
        %v982 = vpop.f32.mrf.mxu0
        %983 = vmatprep.mubr.bf16.mxu0 0
        %984 = vmatmul.mubr.bf16.gmra.mxu0 %v871
        %v985 = vpop.f32.mrf.mxu0
        %v986 = vadd.f32 0.0, %v985
        %v987 = vpop.f32.mrf.mxu0
        %v988 = vpop.f32.mrf.mxu0
        %v989 = vpop.f32.mrf.mxu0
        %990 = vmatprep.mubr.bf16.mxu0 0
        %991 = vmatmul.mubr.bf16.gmra.mxu0 %v874
        %v992 = vpop.f32.mrf.mxu0
        %v993 = vadd.f32 0.0, %v992
        %v994 = vpop.f32.mrf.mxu0
        %v995 = vpop.f32.mrf.mxu0
        %v996 = vadd.f32 0.0, %v995
        %v997 = vpop.f32.mrf.mxu0
        %998 = vmatprep.mubr.bf16.mxu0 0
        %999 = vmatmul.mubr.bf16.gmra.mxu0 %v877
        %v1000 = vpop.f32.mrf.mxu0
        %v1001 = vpop.f32.mrf.mxu0
        %v1002 = vpop.f32.mrf.mxu0
        %v1003 = vadd.f32 0.0, %v1002
        %v1004 = vpop.f32.mrf.mxu0
        %1005 = vmatprep.mubr.bf16.mxu0 0
        %1006 = vmatmul.mubr.bf16.gmra.mxu0 %v880
        %v1007 = vpop.f32.mrf.mxu0
        %v1008 = vadd.f32 0.0, %v1007
        %v1009 = vpop.f32.mrf.mxu0
        %v1010 = vpop.f32.mrf.mxu0
        %v1011 = vpop.f32.mrf.mxu0
        %1012 = vmatprep.mubr.bf16.mxu0 0
        %1013 = vmatmul.mubr.bf16.gmra.mxu0 %v883
        %v1014 = vpop.f32.mrf.mxu0
        %v1015 = vadd.f32 0.0, %v1014
        %v1016 = vpop.f32.mrf.mxu0
        %v1017 = vpop.f32.mrf.mxu0
        %v1018 = vadd.f32 0.0, %v1017
        %v1019 = vpop.f32.mrf.mxu0
        %1020 = vmatprep.mubr.bf16.mxu0 0
        %1021 = vmatmul.mubr.bf16.gmra.mxu0 %v886
        %v1022 = vpop.f32.mrf.mxu0
        %v1023 = vpop.f32.mrf.mxu0
        %v1024 = vpop.f32.mrf.mxu0
        %v1025 = vadd.f32 0.0, %v1024
        %v1026 = vpop.f32.mrf.mxu0
        %1027 = vmatprep.mubr.bf16.mxu0 0
        %1028 = vmatmul.mubr.bf16.gmra.mxu0 %v889
        %v1029 = vpop.f32.mrf.mxu0
        %v1030 = vadd.f32 0.0, %v1029
        %v1031 = vpop.f32.mrf.mxu0
        %v1032 = vpop.f32.mrf.mxu0
        %v1033 = vpop.f32.mrf.mxu0
        %1034 = vmatprep.mubr.bf16.mxu0 0
        %1035 = vmatmul.mubr.bf16.gmra.mxu0 %v892
        %v1036 = vpop.f32.mrf.mxu0
        %v1037 = vadd.f32 0.0, %v1036
        %v1038 = vpop.f32.mrf.mxu0
        %v1039 = vpop.f32.mrf.mxu0
        %v1040 = vadd.f32 0.0, %v1039
        %v1041 = vpop.f32.mrf.mxu0
        %1042 = vmatprep.mubr.bf16.mxu0 0
        %1043 = vmatmul.mubr.bf16.gmra.mxu0 %v895
        %v1044 = vpop.f32.mrf.mxu0
        %v1045 = vpop.f32.mrf.mxu0
        %v1046 = vpop.f32.mrf.mxu0
        %v1047 = vadd.f32 0.0, %v1046
        %v1048 = vpop.f32.mrf.mxu0
        %1049 = vmatprep.mubr.bf16.mxu0 0
        %1050 = vmatmul.mubr.bf16.gmra.mxu0 %v898
        %v1051 = vpop.f32.mrf.mxu0
        %v1052 = vadd.f32 0.0, %v1051
        %v1053 = vpop.f32.mrf.mxu0
        %v1054 = vpop.f32.mrf.mxu0
        %v1055 = vpop.f32.mrf.mxu0
        %1056 = vmatprep.mubr.bf16.mxu0 0
        %1057 = vmatmul.mubr.bf16.gmra.mxu0 %v901
        %v1058 = vpop.f32.mrf.mxu0
        %v1059 = vadd.f32 0.0, %v1058
        %v1060 = vpop.f32.mrf.mxu0
        %v1061 = vpop.f32.mrf.mxu0
        %v1062 = vadd.f32 0.0, %v1061
        %v1063 = vpop.f32.mrf.mxu0
        %1064 = vmatprep.mubr.bf16.mxu0 0
        %1065 = vmatmul.mubr.bf16.gmra.mxu0 %v904
        %v1066 = vpop.f32.mrf.mxu0
        %v1067 = vpop.f32.mrf.mxu0
        %v1068 = vpop.f32.mrf.mxu0
        %v1069 = vadd.f32 0.0, %v1068
        %v1070 = vpop.f32.mrf.mxu0
        %1071 = vmatprep.mubr.bf16.mxu0 0
        %1072 = vmatmul.mubr.bf16.gmra.mxu0 %v907
        %v1073 = vpop.f32.mrf.mxu0
        %v1074 = vadd.f32 0.0, %v1073
        %v1075 = vpop.f32.mrf.mxu0
        %v1076 = vpop.f32.mrf.mxu0
        %v1077 = vpop.f32.mrf.mxu0
        %1078 = vmatprep.mubr.bf16.mxu0 0
        %1079 = vmatmul.mubr.bf16.gmra.mxu0 %v910
        %v1080 = vpop.f32.mrf.mxu0
        %v1081 = vadd.f32 0.0, %v1080
        %v1082 = vpop.f32.mrf.mxu0
        %v1083 = vpop.f32.mrf.mxu0
        %v1084 = vadd.f32 0.0, %v1083
        %v1085 = vpop.f32.mrf.mxu0
        %1086 = vmatprep.mubr.bf16.mxu0 0
        %1087 = vmatmul.mubr.bf16.gmra.mxu0 %v913
        %v1088 = vpop.f32.mrf.mxu0
        %v1089 = vpop.f32.mrf.mxu0
        %v1090 = vpop.f32.mrf.mxu0
        %v1091 = vadd.f32 0.0, %v1090
        %v1092 = vpop.f32.mrf.mxu0
        %1093 = vmatprep.mubr.bf16.mxu0 0
        %1094 = vmatmul.mubr.bf16.gmra.mxu0 %v916
        %v1095 = vpop.f32.mrf.mxu0
        %v1096 = vadd.f32 0.0, %v1095
        %v1097 = vpop.f32.mrf.mxu0
        %v1098 = vpop.f32.mrf.mxu0
        %v1099 = vpop.f32.mrf.mxu0
        %1100 = vmatprep.mubr.bf16.mxu0 0
        %1101 = vmatmul.mubr.bf16.gmra.mxu0 %v919
        %v1102 = vpop.f32.mrf.mxu0
        %v1103 = vadd.f32 0.0, %v1102
        %v1104 = vpop.f32.mrf.mxu0
        %v1105 = vpop.f32.mrf.mxu0
        %v1106 = vadd.f32 0.0, %v1105
        %v1107 = vpop.f32.mrf.mxu0
        %1108 = vmatprep.mubr.bf16.mxu0 0
        %1109 = vmatmul.mubr.bf16.gmra.mxu0 %v922
        %v1110 = vpop.f32.mrf.mxu0
        %v1111 = vpop.f32.mrf.mxu0
        %v1112 = vpop.f32.mrf.mxu0
        %v1113 = vadd.f32 0.0, %v1112
        %v1114 = vpop.f32.mrf.mxu0
        %1115 = vmatprep.mubr.bf16.mxu0 0
        %1116 = vmatmul.mubr.bf16.gmra.mxu0 %v925
        %v1117 = vpop.f32.mrf.mxu0
        %v1118 = vadd.f32 0.0, %v1117
        %v1119 = vpop.f32.mrf.mxu0
        %v1120 = vpop.f32.mrf.mxu0
        %v1121 = vpop.f32.mrf.mxu0
        %1122 = vmatprep.mubr.bf16.mxu0 0
        %1123 = vmatmul.mubr.bf16.gmra.mxu0 %v928
        %v1124 = vpop.f32.mrf.mxu0
        %v1125 = vadd.f32 0.0, %v1124
        %v1126 = vpop.f32.mrf.mxu0
        %v1127 = vpop.f32.mrf.mxu0
        %v1128 = vadd.f32 0.0, %v1127
        %v1129 = vpop.f32.mrf.mxu0
        %1130 = vmatprep.mubr.bf16.mxu0 0
        %1131 = vmatmul.mubr.bf16.gmra.mxu0 %v931
        %v1132 = vpop.f32.mrf.mxu0
        %v1133 = vpop.f32.mrf.mxu0
        %v1134 = vpop.f32.mrf.mxu0
        %v1135 = vadd.f32 0.0, %v1134
        %v1136 = vpop.f32.mrf.mxu0
        %1137 = vmatprep.mubr.bf16.mxu0 0
        %1138 = vmatmul.mubr.bf16.gmra.mxu0 %v934
        %v1139 = vpop.f32.mrf.mxu0
        %v1140 = vadd.f32 0.0, %v1139
        %v1141 = vpop.f32.mrf.mxu0
        %v1142 = vpop.f32.mrf.mxu0
        %v1143 = vpop.f32.mrf.mxu0
        %1144 = vdwg.mxu0
        %v1153 = vunpack.c.l.b16 %v601
        %v1154 = vunpack.c.l.b16 %v602
        %v1155 = vunpack.c.l.b16 %v603
        %v1156 = vunpack.c.l.b16 %v604
        %v1157 = vunpack.c.l.b16 %v605
        %v1158 = vunpack.c.l.b16 %v606
        %v1159 = vunpack.c.l.b16 %v607
        %v1160 = vunpack.c.l.b16 %v608
        %v1161 = vpack.c.b16 %v1154, %v1153
        %v1162 = vpack.c.b16 %v1156, %v1155
        %v1163 = vpack.c.b16 %v1158, %v1157
        %v1164 = vpack.c.b16 %v1160, %v1159
        %v1169 = vsel %vm278, %v618, 0
        %v1171 = vsel %vm278, %v619, 0
        %v1173 = vsel %vm278, %v620, 0
        %v1175 = vsel %vm278, %v621, 0
        %v1177 = vsel %vm278, %v622, 0
        %v1179 = vsel %vm278, %v623, 0
        %v1181 = vsel %vm278, %v624, 0
        %v1183 = vsel %vm278, %v625, 0
        %v1185 = vsel %vm278, %v626, 0
        %v1187 = vsel %vm278, %v627, 0
        %v1189 = vsel %vm278, %v628, 0
        %v1191 = vsel %vm278, %v629, 0
        %v1193 = vsel %vm278, %v630, 0
        %v1195 = vsel %vm278, %v631, 0
        %v1197 = vsel %vm278, %v632, 0
        %v1199 = vsel %vm278, %v633, 0
        %v1201 = vsel %vm278, %v634, 0
        %v1203 = vsel %vm278, %v635, 0
        %v1205 = vsel %vm278, %v636, 0
        %v1207 = vsel %vm278, %v637, 0
        %v1209 = vsel %vm278, %v638, 0
        %v1211 = vsel %vm278, %v639, 0
        %v1213 = vsel %vm278, %v640, 0
        %v1215 = vsel %vm278, %v641, 0
        %1217 = vmatprep.subr.bf16.mxu0 0
        %1218 = vmatpush1.bf16.msra.mxu0 0
        %1219 = vmatprep.subr.bf16.mxu0 0
        %1220 = vmatpush1.bf16.msra.mxu0 0
        %1221 = vmatprep.subr.bf16.mxu0 0
        %1222 = vmatpush1.bf16.msra.mxu0 0
        %1223 = vmatprep.subr.bf16.mxu0 0
        %1224 = vmatpush1.bf16.msra.mxu0 0
        %1225 = vmatprep.subr.bf16.mxu0 0
        %1226 = vmatpush1.bf16.msra.mxu0 %v1164
        %1227 = vmatprep.subr.bf16.mxu0 0
        %1228 = vmatpush1.bf16.msra.mxu0 %v1163
        %1229 = vmatprep.subr.bf16.mxu0 0
        %1230 = vmatpush1.bf16.msra.mxu0 %v1162
        %1231 = vmatprep.subr.bf16.mxu0 0
        %1232 = vmatpush1.bf16.msra.mxu0 %v1161
        %1233 = vmatprep.subr.bf16.mxu0 0
        %1234 = vmatpush2.bf16.msra.mxu0 0
        %1235 = vmatprep.subr.bf16.mxu0 0
        %1236 = vmatpush2.bf16.msra.mxu0 0
        %1237 = vmatprep.subr.bf16.mxu0 0
        %1238 = vmatpush2.bf16.msra.mxu0 0
        %1239 = vmatprep.subr.bf16.mxu0 0
        %1240 = vmatpush2.bf16.msra.mxu0 0
        %1241 = vmatprep.subr.bf16.mxu0 0
        %1242 = vmatpush2.bf16.msra.mxu0 0
        %1243 = vmatprep.subr.bf16.mxu0 0
        %1244 = vmatpush2.bf16.msra.mxu0 0
        %1245 = vmatprep.subr.bf16.mxu0 0
        %1246 = vmatpush2.bf16.msra.mxu0 0
        %1247 = vmatprep.subr.bf16.mxu0 0
        %1248 = vmatpush2.bf16.msra.mxu0 0
        %1249 = vmatprep.mubr.bf16.mxu0 0
        %1250 = vmatmul.mubr.bf16.gmra.mxu0 %v1169
        %v1251 = vpop.f32.mrf.mxu0
        %v1252 = vadd.f32 %v971, %v1251
        %v1253 = vpop.f32.mrf.mxu0
        %v1254 = vpop.f32.mrf.mxu0
        %v1255 = vadd.f32 %v974, %v1254
        %v1256 = vpop.f32.mrf.mxu0
        %1257 = vmatprep.mubr.bf16.mxu0 0
        %1258 = vmatmul.mubr.bf16.gmra.mxu0 %v1171
        %v1259 = vpop.f32.mrf.mxu0
        %v1260 = vpop.f32.mrf.mxu0
        %v1261 = vpop.f32.mrf.mxu0
        %v1262 = vadd.f32 %v981, %v1261
        %v1263 = vpop.f32.mrf.mxu0
        %1264 = vmatprep.mubr.bf16.mxu0 0
        %1265 = vmatmul.mubr.bf16.gmra.mxu0 %v1173
        %v1266 = vpop.f32.mrf.mxu0
        %v1267 = vadd.f32 %v986, %v1266
        %v1268 = vpop.f32.mrf.mxu0
        %v1269 = vpop.f32.mrf.mxu0
        %v1270 = vpop.f32.mrf.mxu0
        %1271 = vmatprep.mubr.bf16.mxu0 0
        %1272 = vmatmul.mubr.bf16.gmra.mxu0 %v1175
        %v1273 = vpop.f32.mrf.mxu0
        %v1274 = vadd.f32 %v993, %v1273
        %v1275 = vpop.f32.mrf.mxu0
        %v1276 = vpop.f32.mrf.mxu0
        %v1277 = vadd.f32 %v996, %v1276
        %v1278 = vpop.f32.mrf.mxu0
        %1279 = vmatprep.mubr.bf16.mxu0 0
        %1280 = vmatmul.mubr.bf16.gmra.mxu0 %v1177
        %v1281 = vpop.f32.mrf.mxu0
        %v1282 = vpop.f32.mrf.mxu0
        %v1283 = vpop.f32.mrf.mxu0
        %v1284 = vadd.f32 %v1003, %v1283
        %v1285 = vpop.f32.mrf.mxu0
        %1286 = vmatprep.mubr.bf16.mxu0 0
        %1287 = vmatmul.mubr.bf16.gmra.mxu0 %v1179
        %v1288 = vpop.f32.mrf.mxu0
        %v1289 = vadd.f32 %v1008, %v1288
        %v1290 = vpop.f32.mrf.mxu0
        %v1291 = vpop.f32.mrf.mxu0
        %v1292 = vpop.f32.mrf.mxu0
        %1293 = vmatprep.mubr.bf16.mxu0 0
        %1294 = vmatmul.mubr.bf16.gmra.mxu0 %v1181
        %v1295 = vpop.f32.mrf.mxu0
        %v1296 = vadd.f32 %v1015, %v1295
        %v1297 = vpop.f32.mrf.mxu0
        %v1298 = vpop.f32.mrf.mxu0
        %v1299 = vadd.f32 %v1018, %v1298
        %v1300 = vpop.f32.mrf.mxu0
        %1301 = vmatprep.mubr.bf16.mxu0 0
        %1302 = vmatmul.mubr.bf16.gmra.mxu0 %v1183
        %v1303 = vpop.f32.mrf.mxu0
        %v1304 = vpop.f32.mrf.mxu0
        %v1305 = vpop.f32.mrf.mxu0
        %v1306 = vadd.f32 %v1025, %v1305
        %v1307 = vpop.f32.mrf.mxu0
        %1308 = vmatprep.mubr.bf16.mxu0 0
        %1309 = vmatmul.mubr.bf16.gmra.mxu0 %v1185
        %v1310 = vpop.f32.mrf.mxu0
        %v1311 = vadd.f32 %v1030, %v1310
        %v1312 = vpop.f32.mrf.mxu0
        %v1313 = vpop.f32.mrf.mxu0
        %v1314 = vpop.f32.mrf.mxu0
        %1315 = vmatprep.mubr.bf16.mxu0 0
        %1316 = vmatmul.mubr.bf16.gmra.mxu0 %v1187
        %v1317 = vpop.f32.mrf.mxu0
        %v1318 = vadd.f32 %v1037, %v1317
        %v1319 = vpop.f32.mrf.mxu0
        %v1320 = vpop.f32.mrf.mxu0
        %v1321 = vadd.f32 %v1040, %v1320
        %v1322 = vpop.f32.mrf.mxu0
        %1323 = vmatprep.mubr.bf16.mxu0 0
        %1324 = vmatmul.mubr.bf16.gmra.mxu0 %v1189
        %v1325 = vpop.f32.mrf.mxu0
        %v1326 = vpop.f32.mrf.mxu0
        %v1327 = vpop.f32.mrf.mxu0
        %v1328 = vadd.f32 %v1047, %v1327
        %v1329 = vpop.f32.mrf.mxu0
        %1330 = vmatprep.mubr.bf16.mxu0 0
        %1331 = vmatmul.mubr.bf16.gmra.mxu0 %v1191
        %v1332 = vpop.f32.mrf.mxu0
        %v1333 = vadd.f32 %v1052, %v1332
        %v1334 = vpop.f32.mrf.mxu0
        %v1335 = vpop.f32.mrf.mxu0
        %v1336 = vpop.f32.mrf.mxu0
        %1337 = vmatprep.mubr.bf16.mxu0 0
        %1338 = vmatmul.mubr.bf16.gmra.mxu0 %v1193
        %v1339 = vpop.f32.mrf.mxu0
        %v1340 = vadd.f32 %v1059, %v1339
        %v1341 = vpop.f32.mrf.mxu0
        %v1342 = vpop.f32.mrf.mxu0
        %v1343 = vadd.f32 %v1062, %v1342
        %v1344 = vpop.f32.mrf.mxu0
        %1345 = vmatprep.mubr.bf16.mxu0 0
        %1346 = vmatmul.mubr.bf16.gmra.mxu0 %v1195
        %v1347 = vpop.f32.mrf.mxu0
        %v1348 = vpop.f32.mrf.mxu0
        %v1349 = vpop.f32.mrf.mxu0
        %v1350 = vadd.f32 %v1069, %v1349
        %v1351 = vpop.f32.mrf.mxu0
        %1352 = vmatprep.mubr.bf16.mxu0 0
        %1353 = vmatmul.mubr.bf16.gmra.mxu0 %v1197
        %v1354 = vpop.f32.mrf.mxu0
        %v1355 = vadd.f32 %v1074, %v1354
        %v1356 = vpop.f32.mrf.mxu0
        %v1357 = vpop.f32.mrf.mxu0
        %v1358 = vpop.f32.mrf.mxu0
        %1359 = vmatprep.mubr.bf16.mxu0 0
        %1360 = vmatmul.mubr.bf16.gmra.mxu0 %v1199
        %v1361 = vpop.f32.mrf.mxu0
        %v1362 = vadd.f32 %v1081, %v1361
        %v1363 = vpop.f32.mrf.mxu0
        %v1364 = vpop.f32.mrf.mxu0
        %v1365 = vadd.f32 %v1084, %v1364
        %v1366 = vpop.f32.mrf.mxu0
        %1367 = vmatprep.mubr.bf16.mxu0 0
        %1368 = vmatmul.mubr.bf16.gmra.mxu0 %v1201
        %v1369 = vpop.f32.mrf.mxu0
        %v1370 = vpop.f32.mrf.mxu0
        %v1371 = vpop.f32.mrf.mxu0
        %v1372 = vadd.f32 %v1091, %v1371
        %v1373 = vpop.f32.mrf.mxu0
        %1374 = vmatprep.mubr.bf16.mxu0 0
        %1375 = vmatmul.mubr.bf16.gmra.mxu0 %v1203
        %v1376 = vpop.f32.mrf.mxu0
        %v1377 = vadd.f32 %v1096, %v1376
        %v1378 = vpop.f32.mrf.mxu0
        %v1379 = vpop.f32.mrf.mxu0
        %v1380 = vpop.f32.mrf.mxu0
        %1381 = vmatprep.mubr.bf16.mxu0 0
        %1382 = vmatmul.mubr.bf16.gmra.mxu0 %v1205
        %v1383 = vpop.f32.mrf.mxu0
        %v1384 = vadd.f32 %v1103, %v1383
        %v1385 = vpop.f32.mrf.mxu0
        %v1386 = vpop.f32.mrf.mxu0
        %v1387 = vadd.f32 %v1106, %v1386
        %v1388 = vpop.f32.mrf.mxu0
        %1389 = vmatprep.mubr.bf16.mxu0 0
        %1390 = vmatmul.mubr.bf16.gmra.mxu0 %v1207
        %v1391 = vpop.f32.mrf.mxu0
        %v1392 = vpop.f32.mrf.mxu0
        %v1393 = vpop.f32.mrf.mxu0
        %v1394 = vadd.f32 %v1113, %v1393
        %v1395 = vpop.f32.mrf.mxu0
        %1396 = vmatprep.mubr.bf16.mxu0 0
        %1397 = vmatmul.mubr.bf16.gmra.mxu0 %v1209
        %v1398 = vpop.f32.mrf.mxu0
        %v1399 = vadd.f32 %v1118, %v1398
        %v1400 = vpop.f32.mrf.mxu0
        %v1401 = vpop.f32.mrf.mxu0
        %v1402 = vpop.f32.mrf.mxu0
        %1403 = vmatprep.mubr.bf16.mxu0 0
        %1404 = vmatmul.mubr.bf16.gmra.mxu0 %v1211
        %v1405 = vpop.f32.mrf.mxu0
        %v1406 = vadd.f32 %v1125, %v1405
        %v1407 = vpop.f32.mrf.mxu0
        %v1408 = vpop.f32.mrf.mxu0
        %v1409 = vadd.f32 %v1128, %v1408
        %v1410 = vpop.f32.mrf.mxu0
        %1411 = vmatprep.mubr.bf16.mxu0 0
        %1412 = vmatmul.mubr.bf16.gmra.mxu0 %v1213
        %v1413 = vpop.f32.mrf.mxu0
        %v1414 = vpop.f32.mrf.mxu0
        %v1415 = vpop.f32.mrf.mxu0
        %v1416 = vadd.f32 %v1135, %v1415
        %v1417 = vpop.f32.mrf.mxu0
        %1418 = vmatprep.mubr.bf16.mxu0 0
        %1419 = vmatmul.mubr.bf16.gmra.mxu0 %v1215
        %v1420 = vpop.f32.mrf.mxu0
        %v1421 = vadd.f32 %v1140, %v1420
        %v1422 = vpop.f32.mrf.mxu0
        %v1423 = vpop.f32.mrf.mxu0
        %v1424 = vpop.f32.mrf.mxu0
        %1425 = vdwg.mxu0
        %s1426 = scalar_lea.vmem %s1, 64
        %v1427 = vld [vmem:[%s1426] sm:$0xf]
        %v1428 = vld [vmem:[%s1426 + $0x4] sm:$0xf]
        %v1429 = vld [vmem:[%s1426 + $0x8] sm:$0xf]
        %v1430 = vld [vmem:[%s1426 + $0xc] sm:$0xf]
        %v1431 = vld [vmem:[%s1426 + $0x10] sm:$0xf]
        %v1432 = vld [vmem:[%s1426 + $0x14] sm:$0xf]
        %v1433 = vld [vmem:[%s1426 + $0x18] sm:$0xf]
        %v1434 = vld [vmem:[%s1426 + $0x1c] sm:$0xf]
        %vm1435 = vcmask 1046528
        %v1436 = vrot.slane %v618, 1
        %v1437 = vrot.slane %v619, 1
        %v1438 = vsel %vm1435, %v1436, %v1437
        %v1439 = vrot.slane %v620, 1
        %v1440 = vsel %vm1435, %v1437, %v1439
        %v1441 = vrot.slane %v621, 1
        %v1442 = vsel %vm1435, %v1439, %v1441
        %v1443 = vrot.slane %v622, 1
        %v1444 = vsel %vm1435, %v1441, %v1443
        %v1445 = vrot.slane %v623, 1
        %v1446 = vsel %vm1435, %v1443, %v1445
        %v1447 = vrot.slane %v624, 1
        %v1448 = vsel %vm1435, %v1445, %v1447
        %v1449 = vrot.slane %v625, 1
        %v1450 = vsel %vm1435, %v1447, %v1449
        %v1451 = vrot.slane %v626, 1
        %v1452 = vsel %vm1435, %v1449, %v1451
        %v1453 = vrot.slane %v627, 1
        %v1454 = vsel %vm1435, %v1451, %v1453
        %v1455 = vrot.slane %v628, 1
        %v1456 = vsel %vm1435, %v1453, %v1455
        %v1457 = vrot.slane %v629, 1
        %v1458 = vsel %vm1435, %v1455, %v1457
        %v1459 = vrot.slane %v630, 1
        %v1460 = vsel %vm1435, %v1457, %v1459
        %v1461 = vrot.slane %v631, 1
        %v1462 = vsel %vm1435, %v1459, %v1461
        %v1463 = vrot.slane %v632, 1
        %v1464 = vsel %vm1435, %v1461, %v1463
        %v1465 = vrot.slane %v633, 1
        %v1466 = vsel %vm1435, %v1463, %v1465
        %v1467 = vrot.slane %v634, 1
        %v1468 = vsel %vm1435, %v1465, %v1467
        %v1469 = vrot.slane %v635, 1
        %v1470 = vsel %vm1435, %v1467, %v1469
        %v1471 = vrot.slane %v636, 1
        %v1472 = vsel %vm1435, %v1469, %v1471
        %v1473 = vrot.slane %v637, 1
        %v1474 = vsel %vm1435, %v1471, %v1473
        %v1475 = vrot.slane %v638, 1
        %v1476 = vsel %vm1435, %v1473, %v1475
        %v1477 = vrot.slane %v639, 1
        %v1478 = vsel %vm1435, %v1475, %v1477
        %v1479 = vrot.slane %v640, 1
        %v1480 = vsel %vm1435, %v1477, %v1479
        %v1481 = vrot.slane %v641, 1
        %v1482 = vsel %vm1435, %v1479, %v1481
        %v1483 = vrot.slane %v642, 1
        %v1484 = vsel %vm1435, %v1481, %v1483
        %v1493 = vunpack.c.l.b16 %v1427
        %v1494 = vunpack.c.l.b16 %v1428
        %v1495 = vunpack.c.l.b16 %v1429
        %v1496 = vunpack.c.l.b16 %v1430
        %v1497 = vunpack.c.l.b16 %v1431
        %v1498 = vunpack.c.l.b16 %v1432
        %v1499 = vunpack.c.l.b16 %v1433
        %v1500 = vunpack.c.l.b16 %v1434
        %v1501 = vpack.c.b16 %v1494, %v1493
        %v1502 = vpack.c.b16 %v1496, %v1495
        %v1503 = vpack.c.b16 %v1498, %v1497
        %v1504 = vpack.c.b16 %v1500, %v1499
        %v1510 = vsel %vm278, %v1438, 0
        %v1513 = vsel %vm278, %v1440, 0
        %v1516 = vsel %vm278, %v1442, 0
        %v1519 = vsel %vm278, %v1444, 0
        %v1522 = vsel %vm278, %v1446, 0
        %v1525 = vsel %vm278, %v1448, 0
        %v1528 = vsel %vm278, %v1450, 0
        %v1531 = vsel %vm278, %v1452, 0
        %v1534 = vsel %vm278, %v1454, 0
        %v1537 = vsel %vm278, %v1456, 0
        %v1540 = vsel %vm278, %v1458, 0
        %v1543 = vsel %vm278, %v1460, 0
        %v1546 = vsel %vm278, %v1462, 0
        %v1549 = vsel %vm278, %v1464, 0
        %v1552 = vsel %vm278, %v1466, 0
        %v1555 = vsel %vm278, %v1468, 0
        %v1558 = vsel %vm278, %v1470, 0
        %v1561 = vsel %vm278, %v1472, 0
        %v1564 = vsel %vm278, %v1474, 0
        %v1567 = vsel %vm278, %v1476, 0
        %v1570 = vsel %vm278, %v1478, 0
        %v1573 = vsel %vm278, %v1480, 0
        %v1576 = vsel %vm278, %v1482, 0
        %v1579 = vsel %vm278, %v1484, 0
        %1581 = vmatprep.subr.bf16.mxu0 0
        %1582 = vmatpush1.bf16.msra.mxu0 0
        %1583 = vmatprep.subr.bf16.mxu0 0
        %1584 = vmatpush1.bf16.msra.mxu0 0
        %1585 = vmatprep.subr.bf16.mxu0 0
        %1586 = vmatpush1.bf16.msra.mxu0 0
        %1587 = vmatprep.subr.bf16.mxu0 0
        %1588 = vmatpush1.bf16.msra.mxu0 0
        %1589 = vmatprep.subr.bf16.mxu0 0
        %1590 = vmatpush1.bf16.msra.mxu0 %v1504
        %1591 = vmatprep.subr.bf16.mxu0 0
        %1592 = vmatpush1.bf16.msra.mxu0 %v1503
        %1593 = vmatprep.subr.bf16.mxu0 0
        %1594 = vmatpush1.bf16.msra.mxu0 %v1502
        %1595 = vmatprep.subr.bf16.mxu0 0
        %1596 = vmatpush1.bf16.msra.mxu0 %v1501
        %1597 = vmatprep.subr.bf16.mxu0 0
        %1598 = vmatpush2.bf16.msra.mxu0 0
        %1599 = vmatprep.subr.bf16.mxu0 0
        %1600 = vmatpush2.bf16.msra.mxu0 0
        %1601 = vmatprep.subr.bf16.mxu0 0
        %1602 = vmatpush2.bf16.msra.mxu0 0
        %1603 = vmatprep.subr.bf16.mxu0 0
        %1604 = vmatpush2.bf16.msra.mxu0 0
        %1605 = vmatprep.subr.bf16.mxu0 0
        %1606 = vmatpush2.bf16.msra.mxu0 0
        %1607 = vmatprep.subr.bf16.mxu0 0
        %1608 = vmatpush2.bf16.msra.mxu0 0
        %1609 = vmatprep.subr.bf16.mxu0 0
        %1610 = vmatpush2.bf16.msra.mxu0 0
        %1611 = vmatprep.subr.bf16.mxu0 0
        %1612 = vmatpush2.bf16.msra.mxu0 0
        %1613 = vmatprep.mubr.bf16.mxu0 0
        %1614 = vmatmul.mubr.bf16.gmra.mxu0 %v1510
        %v1615 = vpop.f32.mrf.mxu0
        %v1616 = vadd.f32 0.0, %v1615
        %v1617 = vpop.f32.mrf.mxu0
        %v1618 = vpop.f32.mrf.mxu0
        %v1619 = vadd.f32 0.0, %v1618
        %v1620 = vpop.f32.mrf.mxu0
        %1621 = vmatprep.mubr.bf16.mxu0 0
        %1622 = vmatmul.mubr.bf16.gmra.mxu0 %v1513
        %v1623 = vpop.f32.mrf.mxu0
        %v1624 = vpop.f32.mrf.mxu0
        %v1625 = vpop.f32.mrf.mxu0
        %v1626 = vadd.f32 0.0, %v1625
        %v1627 = vpop.f32.mrf.mxu0
        %1628 = vmatprep.mubr.bf16.mxu0 0
        %1629 = vmatmul.mubr.bf16.gmra.mxu0 %v1516
        %v1630 = vpop.f32.mrf.mxu0
        %v1631 = vadd.f32 0.0, %v1630
        %v1632 = vpop.f32.mrf.mxu0
        %v1633 = vpop.f32.mrf.mxu0
        %v1634 = vpop.f32.mrf.mxu0
        %1635 = vmatprep.mubr.bf16.mxu0 0
        %1636 = vmatmul.mubr.bf16.gmra.mxu0 %v1519
        %v1637 = vpop.f32.mrf.mxu0
        %v1638 = vadd.f32 0.0, %v1637
        %v1639 = vpop.f32.mrf.mxu0
        %v1640 = vpop.f32.mrf.mxu0
        %v1641 = vadd.f32 0.0, %v1640
        %v1642 = vpop.f32.mrf.mxu0
        %1643 = vmatprep.mubr.bf16.mxu0 0
        %1644 = vmatmul.mubr.bf16.gmra.mxu0 %v1522
        %v1645 = vpop.f32.mrf.mxu0
        %v1646 = vpop.f32.mrf.mxu0
        %v1647 = vpop.f32.mrf.mxu0
        %v1648 = vadd.f32 0.0, %v1647
        %v1649 = vpop.f32.mrf.mxu0
        %1650 = vmatprep.mubr.bf16.mxu0 0
        %1651 = vmatmul.mubr.bf16.gmra.mxu0 %v1525
        %v1652 = vpop.f32.mrf.mxu0
        %v1653 = vadd.f32 0.0, %v1652
        %v1654 = vpop.f32.mrf.mxu0
        %v1655 = vpop.f32.mrf.mxu0
        %v1656 = vpop.f32.mrf.mxu0
        %1657 = vmatprep.mubr.bf16.mxu0 0
        %1658 = vmatmul.mubr.bf16.gmra.mxu0 %v1528
        %v1659 = vpop.f32.mrf.mxu0
        %v1660 = vadd.f32 0.0, %v1659
        %v1661 = vpop.f32.mrf.mxu0
        %v1662 = vpop.f32.mrf.mxu0
        %v1663 = vadd.f32 0.0, %v1662
        %v1664 = vpop.f32.mrf.mxu0
        %1665 = vmatprep.mubr.bf16.mxu0 0
        %1666 = vmatmul.mubr.bf16.gmra.mxu0 %v1531
        %v1667 = vpop.f32.mrf.mxu0
        %v1668 = vpop.f32.mrf.mxu0
        %v1669 = vpop.f32.mrf.mxu0
        %v1670 = vadd.f32 0.0, %v1669
        %v1671 = vpop.f32.mrf.mxu0
        %1672 = vmatprep.mubr.bf16.mxu0 0
        %1673 = vmatmul.mubr.bf16.gmra.mxu0 %v1534
        %v1674 = vpop.f32.mrf.mxu0
        %v1675 = vadd.f32 0.0, %v1674
        %v1676 = vpop.f32.mrf.mxu0
        %v1677 = vpop.f32.mrf.mxu0
        %v1678 = vpop.f32.mrf.mxu0
        %1679 = vmatprep.mubr.bf16.mxu0 0
        %1680 = vmatmul.mubr.bf16.gmra.mxu0 %v1537
        %v1681 = vpop.f32.mrf.mxu0
        %v1682 = vadd.f32 0.0, %v1681
        %v1683 = vpop.f32.mrf.mxu0
        %v1684 = vpop.f32.mrf.mxu0
        %v1685 = vadd.f32 0.0, %v1684
        %v1686 = vpop.f32.mrf.mxu0
        %1687 = vmatprep.mubr.bf16.mxu0 0
        %1688 = vmatmul.mubr.bf16.gmra.mxu0 %v1540
        %v1689 = vpop.f32.mrf.mxu0
        %v1690 = vpop.f32.mrf.mxu0
        %v1691 = vpop.f32.mrf.mxu0
        %v1692 = vadd.f32 0.0, %v1691
        %v1693 = vpop.f32.mrf.mxu0
        %1694 = vmatprep.mubr.bf16.mxu0 0
        %1695 = vmatmul.mubr.bf16.gmra.mxu0 %v1543
        %v1696 = vpop.f32.mrf.mxu0
        %v1697 = vadd.f32 0.0, %v1696
        %v1698 = vpop.f32.mrf.mxu0
        %v1699 = vpop.f32.mrf.mxu0
        %v1700 = vpop.f32.mrf.mxu0
        %1701 = vmatprep.mubr.bf16.mxu0 0
        %1702 = vmatmul.mubr.bf16.gmra.mxu0 %v1546
        %v1703 = vpop.f32.mrf.mxu0
        %v1704 = vadd.f32 0.0, %v1703
        %v1705 = vpop.f32.mrf.mxu0
        %v1706 = vpop.f32.mrf.mxu0
        %v1707 = vadd.f32 0.0, %v1706
        %v1708 = vpop.f32.mrf.mxu0
        %1709 = vmatprep.mubr.bf16.mxu0 0
        %1710 = vmatmul.mubr.bf16.gmra.mxu0 %v1549
        %v1711 = vpop.f32.mrf.mxu0
        %v1712 = vpop.f32.mrf.mxu0
        %v1713 = vpop.f32.mrf.mxu0
        %v1714 = vadd.f32 0.0, %v1713
        %v1715 = vpop.f32.mrf.mxu0
        %1716 = vmatprep.mubr.bf16.mxu0 0
        %1717 = vmatmul.mubr.bf16.gmra.mxu0 %v1552
        %v1718 = vpop.f32.mrf.mxu0
        %v1719 = vadd.f32 0.0, %v1718
        %v1720 = vpop.f32.mrf.mxu0
        %v1721 = vpop.f32.mrf.mxu0
        %v1722 = vpop.f32.mrf.mxu0
        %1723 = vmatprep.mubr.bf16.mxu0 0
        %1724 = vmatmul.mubr.bf16.gmra.mxu0 %v1555
        %v1725 = vpop.f32.mrf.mxu0
        %v1726 = vadd.f32 0.0, %v1725
        %v1727 = vpop.f32.mrf.mxu0
        %v1728 = vpop.f32.mrf.mxu0
        %v1729 = vadd.f32 0.0, %v1728
        %v1730 = vpop.f32.mrf.mxu0
        %1731 = vmatprep.mubr.bf16.mxu0 0
        %1732 = vmatmul.mubr.bf16.gmra.mxu0 %v1558
        %v1733 = vpop.f32.mrf.mxu0
        %v1734 = vpop.f32.mrf.mxu0
        %v1735 = vpop.f32.mrf.mxu0
        %v1736 = vadd.f32 0.0, %v1735
        %v1737 = vpop.f32.mrf.mxu0
        %1738 = vmatprep.mubr.bf16.mxu0 0
        %1739 = vmatmul.mubr.bf16.gmra.mxu0 %v1561
        %v1740 = vpop.f32.mrf.mxu0
        %v1741 = vadd.f32 0.0, %v1740
        %v1742 = vpop.f32.mrf.mxu0
        %v1743 = vpop.f32.mrf.mxu0
        %v1744 = vpop.f32.mrf.mxu0
        %1745 = vmatprep.mubr.bf16.mxu0 0
        %1746 = vmatmul.mubr.bf16.gmra.mxu0 %v1564
        %v1747 = vpop.f32.mrf.mxu0
        %v1748 = vadd.f32 0.0, %v1747
        %v1749 = vpop.f32.mrf.mxu0
        %v1750 = vpop.f32.mrf.mxu0
        %v1751 = vadd.f32 0.0, %v1750
        %v1752 = vpop.f32.mrf.mxu0
        %1753 = vmatprep.mubr.bf16.mxu0 0
        %1754 = vmatmul.mubr.bf16.gmra.mxu0 %v1567
        %v1755 = vpop.f32.mrf.mxu0
        %v1756 = vpop.f32.mrf.mxu0
        %v1757 = vpop.f32.mrf.mxu0
        %v1758 = vadd.f32 0.0, %v1757
        %v1759 = vpop.f32.mrf.mxu0
        %1760 = vmatprep.mubr.bf16.mxu0 0
        %1761 = vmatmul.mubr.bf16.gmra.mxu0 %v1570
        %v1762 = vpop.f32.mrf.mxu0
        %v1763 = vadd.f32 0.0, %v1762
        %v1764 = vpop.f32.mrf.mxu0
        %v1765 = vpop.f32.mrf.mxu0
        %v1766 = vpop.f32.mrf.mxu0
        %1767 = vmatprep.mubr.bf16.mxu0 0
        %1768 = vmatmul.mubr.bf16.gmra.mxu0 %v1573
        %v1769 = vpop.f32.mrf.mxu0
        %v1770 = vadd.f32 0.0, %v1769
        %v1771 = vpop.f32.mrf.mxu0
        %v1772 = vpop.f32.mrf.mxu0
        %v1773 = vadd.f32 0.0, %v1772
        %v1774 = vpop.f32.mrf.mxu0
        %1775 = vmatprep.mubr.bf16.mxu0 0
        %1776 = vmatmul.mubr.bf16.gmra.mxu0 %v1576
        %v1777 = vpop.f32.mrf.mxu0
        %v1778 = vpop.f32.mrf.mxu0
        %v1779 = vpop.f32.mrf.mxu0
        %v1780 = vadd.f32 0.0, %v1779
        %v1781 = vpop.f32.mrf.mxu0
        %1782 = vmatprep.mubr.bf16.mxu0 0
        %1783 = vmatmul.mubr.bf16.gmra.mxu0 %v1579
        %v1784 = vpop.f32.mrf.mxu0
        %v1785 = vadd.f32 0.0, %v1784
        %v1786 = vpop.f32.mrf.mxu0
        %v1787 = vpop.f32.mrf.mxu0
        %v1788 = vpop.f32.mrf.mxu0
        %1789 = vdwg.mxu0
        %v1790 = vadd.f32 %v1252, %v1616
        %v1791 = vadd.f32 %v1255, %v1619
        %v1792 = vadd.f32 %v1262, %v1626
        %v1793 = vadd.f32 %v1267, %v1631
        %v1794 = vadd.f32 %v1274, %v1638
        %v1795 = vadd.f32 %v1277, %v1641
        %v1796 = vadd.f32 %v1284, %v1648
        %v1797 = vadd.f32 %v1289, %v1653
        %v1798 = vadd.f32 %v1296, %v1660
        %v1799 = vadd.f32 %v1299, %v1663
        %v1800 = vadd.f32 %v1306, %v1670
        %v1801 = vadd.f32 %v1311, %v1675
        %v1802 = vadd.f32 %v1318, %v1682
        %v1803 = vadd.f32 %v1321, %v1685
        %v1804 = vadd.f32 %v1328, %v1692
        %v1805 = vadd.f32 %v1333, %v1697
        %v1806 = vadd.f32 %v1340, %v1704
        %v1807 = vadd.f32 %v1343, %v1707
        %v1808 = vadd.f32 %v1350, %v1714
        %v1809 = vadd.f32 %v1355, %v1719
        %v1810 = vadd.f32 %v1362, %v1726
        %v1811 = vadd.f32 %v1365, %v1729
        %v1812 = vadd.f32 %v1372, %v1736
        %v1813 = vadd.f32 %v1377, %v1741
        %v1814 = vadd.f32 %v1384, %v1748
        %v1815 = vadd.f32 %v1387, %v1751
        %v1816 = vadd.f32 %v1394, %v1758
        %v1817 = vadd.f32 %v1399, %v1763
        %v1818 = vadd.f32 %v1406, %v1770
        %v1819 = vadd.f32 %v1409, %v1773
        %v1820 = vadd.f32 %v1416, %v1780
        %v1821 = vadd.f32 %v1421, %v1785
        %s1822 = scalar_lea.vmem %s1, 96
        %v1823 = vld [vmem:[%s1822] sm:$0xf]
        %v1824 = vld [vmem:[%s1822 + $0x4] sm:$0xf]
        %v1825 = vld [vmem:[%s1822 + $0x8] sm:$0xf]
        %v1826 = vld [vmem:[%s1822 + $0xc] sm:$0xf]
        %v1827 = vld [vmem:[%s1822 + $0x10] sm:$0xf]
        %v1828 = vld [vmem:[%s1822 + $0x14] sm:$0xf]
        %v1829 = vld [vmem:[%s1822 + $0x18] sm:$0xf]
        %v1830 = vld [vmem:[%s1822 + $0x1c] sm:$0xf]
        %v1831 = vpack.c.b16 %v550, %v549
        %v1832 = vpack.c.b16 %v552, %v551
        %v1833 = vpack.c.b16 %v554, %v553
        %v1834 = vpack.c.b16 %v556, %v555
        %v1835 = vpack.c.b16 %v558, %v557
        %v1836 = vpack.c.b16 %v560, %v559
        %v1837 = vpack.c.b16 %v562, %v561
        %v1838 = vpack.c.b16 %v564, %v563
        %v1839 = vpack.c.b16 %v566, %v565
        %v1840 = vpack.c.b16 %v568, %v567
        %v1841 = vpack.c.b16 %v570, %v569
        %v1842 = vpack.c.b16 %v572, %v571
        %v1843 = vpack.c.b16 %v574, %v573
        %v1844 = vpack.c.b16 %v576, %v575
        %v1845 = vpack.c.b16 %v578, %v577
        %v1846 = vpack.c.b16 %v580, %v579
        %v1847 = vpack.c.b16 %v582, %v581
        %v1848 = vpack.c.b16 %v584, %v583
        %v1849 = vpack.c.b16 %v586, %v585
        %v1850 = vpack.c.b16 %v588, %v587
        %v1851 = vpack.c.b16 %v590, %v589
        %v1852 = vpack.c.b16 %v592, %v591
        %v1853 = vpack.c.b16 %v594, %v593
        %v1854 = vpack.c.b16 %v596, %v595
        %v1863 = vunpack.c.l.b16 %v1823
        %v1864 = vunpack.c.l.b16 %v1824
        %v1865 = vunpack.c.l.b16 %v1825
        %v1866 = vunpack.c.l.b16 %v1826
        %v1867 = vunpack.c.l.b16 %v1827
        %v1868 = vunpack.c.l.b16 %v1828
        %v1869 = vunpack.c.l.b16 %v1829
        %v1870 = vunpack.c.l.b16 %v1830
        %v1871 = vpack.c.b16 %v1864, %v1863
        %v1872 = vpack.c.b16 %v1866, %v1865
        %v1873 = vpack.c.b16 %v1868, %v1867
        %v1874 = vpack.c.b16 %v1870, %v1869
        %v1880 = vsel %vm278, %v1831, 0
        %v1883 = vsel %vm278, %v1832, 0
        %v1886 = vsel %vm278, %v1833, 0
        %v1889 = vsel %vm278, %v1834, 0
        %v1892 = vsel %vm278, %v1835, 0
        %v1895 = vsel %vm278, %v1836, 0
        %v1898 = vsel %vm278, %v1837, 0
        %v1901 = vsel %vm278, %v1838, 0
        %v1904 = vsel %vm278, %v1839, 0
        %v1907 = vsel %vm278, %v1840, 0
        %v1910 = vsel %vm278, %v1841, 0
        %v1913 = vsel %vm278, %v1842, 0
        %v1916 = vsel %vm278, %v1843, 0
        %v1919 = vsel %vm278, %v1844, 0
        %v1922 = vsel %vm278, %v1845, 0
        %v1925 = vsel %vm278, %v1846, 0
        %v1928 = vsel %vm278, %v1847, 0
        %v1931 = vsel %vm278, %v1848, 0
        %v1934 = vsel %vm278, %v1849, 0
        %v1937 = vsel %vm278, %v1850, 0
        %v1940 = vsel %vm278, %v1851, 0
        %v1943 = vsel %vm278, %v1852, 0
        %v1946 = vsel %vm278, %v1853, 0
        %v1949 = vsel %vm278, %v1854, 0
        %1951 = vmatprep.subr.bf16.mxu0 0
        %1952 = vmatpush1.bf16.msra.mxu0 0
        %1953 = vmatprep.subr.bf16.mxu0 0
        %1954 = vmatpush1.bf16.msra.mxu0 0
        %1955 = vmatprep.subr.bf16.mxu0 0
        %1956 = vmatpush1.bf16.msra.mxu0 0
        %1957 = vmatprep.subr.bf16.mxu0 0
        %1958 = vmatpush1.bf16.msra.mxu0 0
        %1959 = vmatprep.subr.bf16.mxu0 0
        %1960 = vmatpush1.bf16.msra.mxu0 %v1874
        %1961 = vmatprep.subr.bf16.mxu0 0
        %1962 = vmatpush1.bf16.msra.mxu0 %v1873
        %1963 = vmatprep.subr.bf16.mxu0 0
        %1964 = vmatpush1.bf16.msra.mxu0 %v1872
        %1965 = vmatprep.subr.bf16.mxu0 0
        %1966 = vmatpush1.bf16.msra.mxu0 %v1871
        %1967 = vmatprep.subr.bf16.mxu0 0
        %1968 = vmatpush2.bf16.msra.mxu0 0
        %1969 = vmatprep.subr.bf16.mxu0 0
        %1970 = vmatpush2.bf16.msra.mxu0 0
        %1971 = vmatprep.subr.bf16.mxu0 0
        %1972 = vmatpush2.bf16.msra.mxu0 0
        %1973 = vmatprep.subr.bf16.mxu0 0
        %1974 = vmatpush2.bf16.msra.mxu0 0
        %1975 = vmatprep.subr.bf16.mxu0 0
        %1976 = vmatpush2.bf16.msra.mxu0 0
        %1977 = vmatprep.subr.bf16.mxu0 0
        %1978 = vmatpush2.bf16.msra.mxu0 0
        %1979 = vmatprep.subr.bf16.mxu0 0
        %1980 = vmatpush2.bf16.msra.mxu0 0
        %1981 = vmatprep.subr.bf16.mxu0 0
        %1982 = vmatpush2.bf16.msra.mxu0 0
        %1983 = vmatprep.mubr.bf16.mxu0 0
        %1984 = vmatmul.mubr.bf16.gmra.mxu0 %v1880
        %v1985 = vpop.f32.mrf.mxu0
        %v1986 = vadd.f32 0.0, %v1985
        %v1987 = vpop.f32.mrf.mxu0
        %v1988 = vpop.f32.mrf.mxu0
        %v1989 = vadd.f32 0.0, %v1988
        %v1990 = vpop.f32.mrf.mxu0
        %1991 = vmatprep.mubr.bf16.mxu0 0
        %1992 = vmatmul.mubr.bf16.gmra.mxu0 %v1883
        %v1993 = vpop.f32.mrf.mxu0
        %v1994 = vpop.f32.mrf.mxu0
        %v1995 = vpop.f32.mrf.mxu0
        %v1996 = vadd.f32 0.0, %v1995
        %v1997 = vpop.f32.mrf.mxu0
        %1998 = vmatprep.mubr.bf16.mxu0 0
        %1999 = vmatmul.mubr.bf16.gmra.mxu0 %v1886
        %v2000 = vpop.f32.mrf.mxu0
        %v2001 = vadd.f32 0.0, %v2000
        %v2002 = vpop.f32.mrf.mxu0
        %v2003 = vpop.f32.mrf.mxu0
        %v2004 = vpop.f32.mrf.mxu0
        %2005 = vmatprep.mubr.bf16.mxu0 0
        %2006 = vmatmul.mubr.bf16.gmra.mxu0 %v1889
        %v2007 = vpop.f32.mrf.mxu0
        %v2008 = vadd.f32 0.0, %v2007
        %v2009 = vpop.f32.mrf.mxu0
        %v2010 = vpop.f32.mrf.mxu0
        %v2011 = vadd.f32 0.0, %v2010
        %v2012 = vpop.f32.mrf.mxu0
        %2013 = vmatprep.mubr.bf16.mxu0 0
        %2014 = vmatmul.mubr.bf16.gmra.mxu0 %v1892
        %v2015 = vpop.f32.mrf.mxu0
        %v2016 = vpop.f32.mrf.mxu0
        %v2017 = vpop.f32.mrf.mxu0
        %v2018 = vadd.f32 0.0, %v2017
        %v2019 = vpop.f32.mrf.mxu0
        %2020 = vmatprep.mubr.bf16.mxu0 0
        %2021 = vmatmul.mubr.bf16.gmra.mxu0 %v1895
        %v2022 = vpop.f32.mrf.mxu0
        %v2023 = vadd.f32 0.0, %v2022
        %v2024 = vpop.f32.mrf.mxu0
        %v2025 = vpop.f32.mrf.mxu0
        %v2026 = vpop.f32.mrf.mxu0
        %2027 = vmatprep.mubr.bf16.mxu0 0
        %2028 = vmatmul.mubr.bf16.gmra.mxu0 %v1898
        %v2029 = vpop.f32.mrf.mxu0
        %v2030 = vadd.f32 0.0, %v2029
        %v2031 = vpop.f32.mrf.mxu0
        %v2032 = vpop.f32.mrf.mxu0
        %v2033 = vadd.f32 0.0, %v2032
        %v2034 = vpop.f32.mrf.mxu0
        %2035 = vmatprep.mubr.bf16.mxu0 0
        %2036 = vmatmul.mubr.bf16.gmra.mxu0 %v1901
        %v2037 = vpop.f32.mrf.mxu0
        %v2038 = vpop.f32.mrf.mxu0
        %v2039 = vpop.f32.mrf.mxu0
        %v2040 = vadd.f32 0.0, %v2039
        %v2041 = vpop.f32.mrf.mxu0
        %2042 = vmatprep.mubr.bf16.mxu0 0
        %2043 = vmatmul.mubr.bf16.gmra.mxu0 %v1904
        %v2044 = vpop.f32.mrf.mxu0
        %v2045 = vadd.f32 0.0, %v2044
        %v2046 = vpop.f32.mrf.mxu0
        %v2047 = vpop.f32.mrf.mxu0
        %v2048 = vpop.f32.mrf.mxu0
        %2049 = vmatprep.mubr.bf16.mxu0 0
        %2050 = vmatmul.mubr.bf16.gmra.mxu0 %v1907
        %v2051 = vpop.f32.mrf.mxu0
        %v2052 = vadd.f32 0.0, %v2051
        %v2053 = vpop.f32.mrf.mxu0
        %v2054 = vpop.f32.mrf.mxu0
        %v2055 = vadd.f32 0.0, %v2054
        %v2056 = vpop.f32.mrf.mxu0
        %2057 = vmatprep.mubr.bf16.mxu0 0
        %2058 = vmatmul.mubr.bf16.gmra.mxu0 %v1910
        %v2059 = vpop.f32.mrf.mxu0
        %v2060 = vpop.f32.mrf.mxu0
        %v2061 = vpop.f32.mrf.mxu0
        %v2062 = vadd.f32 0.0, %v2061
        %v2063 = vpop.f32.mrf.mxu0
        %2064 = vmatprep.mubr.bf16.mxu0 0
        %2065 = vmatmul.mubr.bf16.gmra.mxu0 %v1913
        %v2066 = vpop.f32.mrf.mxu0
        %v2067 = vadd.f32 0.0, %v2066
        %v2068 = vpop.f32.mrf.mxu0
        %v2069 = vpop.f32.mrf.mxu0
        %v2070 = vpop.f32.mrf.mxu0
        %2071 = vmatprep.mubr.bf16.mxu0 0
        %2072 = vmatmul.mubr.bf16.gmra.mxu0 %v1916
        %v2073 = vpop.f32.mrf.mxu0
        %v2074 = vadd.f32 0.0, %v2073
        %v2075 = vpop.f32.mrf.mxu0
        %v2076 = vpop.f32.mrf.mxu0
        %v2077 = vadd.f32 0.0, %v2076
        %v2078 = vpop.f32.mrf.mxu0
        %2079 = vmatprep.mubr.bf16.mxu0 0
        %2080 = vmatmul.mubr.bf16.gmra.mxu0 %v1919
        %v2081 = vpop.f32.mrf.mxu0
        %v2082 = vpop.f32.mrf.mxu0
        %v2083 = vpop.f32.mrf.mxu0
        %v2084 = vadd.f32 0.0, %v2083
        %v2085 = vpop.f32.mrf.mxu0
        %2086 = vmatprep.mubr.bf16.mxu0 0
        %2087 = vmatmul.mubr.bf16.gmra.mxu0 %v1922
        %v2088 = vpop.f32.mrf.mxu0
        %v2089 = vadd.f32 0.0, %v2088
        %v2090 = vpop.f32.mrf.mxu0
        %v2091 = vpop.f32.mrf.mxu0
        %v2092 = vpop.f32.mrf.mxu0
        %2093 = vmatprep.mubr.bf16.mxu0 0
        %2094 = vmatmul.mubr.bf16.gmra.mxu0 %v1925
        %v2095 = vpop.f32.mrf.mxu0
        %v2096 = vadd.f32 0.0, %v2095
        %v2097 = vpop.f32.mrf.mxu0
        %v2098 = vpop.f32.mrf.mxu0
        %v2099 = vadd.f32 0.0, %v2098
        %v2100 = vpop.f32.mrf.mxu0
        %2101 = vmatprep.mubr.bf16.mxu0 0
        %2102 = vmatmul.mubr.bf16.gmra.mxu0 %v1928
        %v2103 = vpop.f32.mrf.mxu0
        %v2104 = vpop.f32.mrf.mxu0
        %v2105 = vpop.f32.mrf.mxu0
        %v2106 = vadd.f32 0.0, %v2105
        %v2107 = vpop.f32.mrf.mxu0
        %2108 = vmatprep.mubr.bf16.mxu0 0
        %2109 = vmatmul.mubr.bf16.gmra.mxu0 %v1931
        %v2110 = vpop.f32.mrf.mxu0
        %v2111 = vadd.f32 0.0, %v2110
        %v2112 = vpop.f32.mrf.mxu0
        %v2113 = vpop.f32.mrf.mxu0
        %v2114 = vpop.f32.mrf.mxu0
        %2115 = vmatprep.mubr.bf16.mxu0 0
        %2116 = vmatmul.mubr.bf16.gmra.mxu0 %v1934
        %v2117 = vpop.f32.mrf.mxu0
        %v2118 = vadd.f32 0.0, %v2117
        %v2119 = vpop.f32.mrf.mxu0
        %v2120 = vpop.f32.mrf.mxu0
        %v2121 = vadd.f32 0.0, %v2120
        %v2122 = vpop.f32.mrf.mxu0
        %2123 = vmatprep.mubr.bf16.mxu0 0
        %2124 = vmatmul.mubr.bf16.gmra.mxu0 %v1937
        %v2125 = vpop.f32.mrf.mxu0
        %v2126 = vpop.f32.mrf.mxu0
        %v2127 = vpop.f32.mrf.mxu0
        %v2128 = vadd.f32 0.0, %v2127
        %v2129 = vpop.f32.mrf.mxu0
        %2130 = vmatprep.mubr.bf16.mxu0 0
        %2131 = vmatmul.mubr.bf16.gmra.mxu0 %v1940
        %v2132 = vpop.f32.mrf.mxu0
        %v2133 = vadd.f32 0.0, %v2132
        %v2134 = vpop.f32.mrf.mxu0
        %v2135 = vpop.f32.mrf.mxu0
        %v2136 = vpop.f32.mrf.mxu0
        %2137 = vmatprep.mubr.bf16.mxu0 0
        %2138 = vmatmul.mubr.bf16.gmra.mxu0 %v1943
        %v2139 = vpop.f32.mrf.mxu0
        %v2140 = vadd.f32 0.0, %v2139
        %v2141 = vpop.f32.mrf.mxu0
        %v2142 = vpop.f32.mrf.mxu0
        %v2143 = vadd.f32 0.0, %v2142
        %v2144 = vpop.f32.mrf.mxu0
        %2145 = vmatprep.mubr.bf16.mxu0 0
        %2146 = vmatmul.mubr.bf16.gmra.mxu0 %v1946
        %v2147 = vpop.f32.mrf.mxu0
        %v2148 = vpop.f32.mrf.mxu0
        %v2149 = vpop.f32.mrf.mxu0
        %v2150 = vadd.f32 0.0, %v2149
        %v2151 = vpop.f32.mrf.mxu0
        %2152 = vmatprep.mubr.bf16.mxu0 0
        %2153 = vmatmul.mubr.bf16.gmra.mxu0 %v1949
        %v2154 = vpop.f32.mrf.mxu0
        %v2155 = vadd.f32 0.0, %v2154
        %v2156 = vpop.f32.mrf.mxu0
        %v2157 = vpop.f32.mrf.mxu0
        %v2158 = vpop.f32.mrf.mxu0
        %2159 = vdwg.mxu0
        %v2160 = vadd.f32 %v1790, %v1986
        %v2161 = vadd.f32 %v1791, %v1989
        %v2162 = vadd.f32 %v1792, %v1996
        %v2163 = vadd.f32 %v1793, %v2001
        %v2164 = vadd.f32 %v1794, %v2008
        %v2165 = vadd.f32 %v1795, %v2011
        %v2166 = vadd.f32 %v1796, %v2018
        %v2167 = vadd.f32 %v1797, %v2023
        %v2168 = vadd.f32 %v1798, %v2030
        %v2169 = vadd.f32 %v1799, %v2033
        %v2170 = vadd.f32 %v1800, %v2040
        %v2171 = vadd.f32 %v1801, %v2045
        %v2172 = vadd.f32 %v1802, %v2052
        %v2173 = vadd.f32 %v1803, %v2055
        %v2174 = vadd.f32 %v1804, %v2062
        %v2175 = vadd.f32 %v1805, %v2067
        %v2176 = vadd.f32 %v1806, %v2074
        %v2177 = vadd.f32 %v1807, %v2077
        %v2178 = vadd.f32 %v1808, %v2084
        %v2179 = vadd.f32 %v1809, %v2089
        %v2180 = vadd.f32 %v1810, %v2096
        %v2181 = vadd.f32 %v1811, %v2099
        %v2182 = vadd.f32 %v1812, %v2106
        %v2183 = vadd.f32 %v1813, %v2111
        %v2184 = vadd.f32 %v1814, %v2118
        %v2185 = vadd.f32 %v1815, %v2121
        %v2186 = vadd.f32 %v1816, %v2128
        %v2187 = vadd.f32 %v1817, %v2133
        %v2188 = vadd.f32 %v1818, %v2140
        %v2189 = vadd.f32 %v1819, %v2143
        %v2190 = vadd.f32 %v1820, %v2150
        %v2191 = vadd.f32 %v1821, %v2155
        %s2192 = scalar_lea.vmem %s1, 128
        %v2193 = vld [vmem:[%s2192] sm:$0xf]
        %v2194 = vld [vmem:[%s2192 + $0x4] sm:$0xf]
        %v2195 = vld [vmem:[%s2192 + $0x8] sm:$0xf]
        %v2196 = vld [vmem:[%s2192 + $0xc] sm:$0xf]
        %v2197 = vld [vmem:[%s2192 + $0x10] sm:$0xf]
        %v2198 = vld [vmem:[%s2192 + $0x14] sm:$0xf]
        %v2199 = vld [vmem:[%s2192 + $0x18] sm:$0xf]
        %v2200 = vld [vmem:[%s2192 + $0x1c] sm:$0xf]
        %v2201 = vpack.c.b16 %v597, %v597
        %v2202 = vshrl.u32 %v1831, 16
        %v2204 = vshll.u32 %v1831, 16
        %v2206 = vrot.slane %v2204, 1
        %v2207 = vor.u32 %v2202, %v2206
        %v2208 = vshll.u32 %v1832, 16
        %v2210 = vrot.slane %v2208, 1
        %v2211 = vsel %vm643, %v2207, %v2210
        %v2212 = vshrl.u32 %v1832, 16
        %v2214 = vor.u32 %v2212, %v2210
        %v2215 = vshll.u32 %v1833, 16
        %v2217 = vrot.slane %v2215, 1
        %v2218 = vsel %vm643, %v2214, %v2217
        %v2219 = vshrl.u32 %v1833, 16
        %v2221 = vor.u32 %v2219, %v2217
        %v2222 = vshll.u32 %v1834, 16
        %v2224 = vrot.slane %v2222, 1
        %v2225 = vsel %vm643, %v2221, %v2224
        %v2226 = vshrl.u32 %v1834, 16
        %v2228 = vor.u32 %v2226, %v2224
        %v2229 = vshll.u32 %v1835, 16
        %v2231 = vrot.slane %v2229, 1
        %v2232 = vsel %vm643, %v2228, %v2231
        %v2233 = vshrl.u32 %v1835, 16
        %v2235 = vor.u32 %v2233, %v2231
        %v2236 = vshll.u32 %v1836, 16
        %v2238 = vrot.slane %v2236, 1
        %v2239 = vsel %vm643, %v2235, %v2238
        %v2240 = vshrl.u32 %v1836, 16
        %v2242 = vor.u32 %v2240, %v2238
        %v2243 = vshll.u32 %v1837, 16
        %v2245 = vrot.slane %v2243, 1
        %v2246 = vsel %vm643, %v2242, %v2245
        %v2247 = vshrl.u32 %v1837, 16
        %v2249 = vor.u32 %v2247, %v2245
        %v2250 = vshll.u32 %v1838, 16
        %v2252 = vrot.slane %v2250, 1
        %v2253 = vsel %vm643, %v2249, %v2252
        %v2254 = vshrl.u32 %v1838, 16
        %v2256 = vor.u32 %v2254, %v2252
        %v2257 = vshll.u32 %v1839, 16
        %v2259 = vrot.slane %v2257, 1
        %v2260 = vsel %vm643, %v2256, %v2259
        %v2261 = vshrl.u32 %v1839, 16
        %v2263 = vor.u32 %v2261, %v2259
        %v2264 = vshll.u32 %v1840, 16
        %v2266 = vrot.slane %v2264, 1
        %v2267 = vsel %vm643, %v2263, %v2266
        %v2268 = vshrl.u32 %v1840, 16
        %v2270 = vor.u32 %v2268, %v2266
        %v2271 = vshll.u32 %v1841, 16
        %v2273 = vrot.slane %v2271, 1
        %v2274 = vsel %vm643, %v2270, %v2273
        %v2275 = vshrl.u32 %v1841, 16
        %v2277 = vor.u32 %v2275, %v2273
        %v2278 = vshll.u32 %v1842, 16
        %v2280 = vrot.slane %v2278, 1
        %v2281 = vsel %vm643, %v2277, %v2280
        %v2282 = vshrl.u32 %v1842, 16
        %v2284 = vor.u32 %v2282, %v2280
        %v2285 = vshll.u32 %v1843, 16
        %v2287 = vrot.slane %v2285, 1
        %v2288 = vsel %vm643, %v2284, %v2287
        %v2289 = vshrl.u32 %v1843, 16
        %v2291 = vor.u32 %v2289, %v2287
        %v2292 = vshll.u32 %v1844, 16
        %v2294 = vrot.slane %v2292, 1
        %v2295 = vsel %vm643, %v2291, %v2294
        %v2296 = vshrl.u32 %v1844, 16
        %v2298 = vor.u32 %v2296, %v2294
        %v2299 = vshll.u32 %v1845, 16
        %v2301 = vrot.slane %v2299, 1
        %v2302 = vsel %vm643, %v2298, %v2301
        %v2303 = vshrl.u32 %v1845, 16
        %v2305 = vor.u32 %v2303, %v2301
        %v2306 = vshll.u32 %v1846, 16
        %v2308 = vrot.slane %v2306, 1
        %v2309 = vsel %vm643, %v2305, %v2308
        %v2310 = vshrl.u32 %v1846, 16
        %v2312 = vor.u32 %v2310, %v2308
        %v2313 = vshll.u32 %v1847, 16
        %v2315 = vrot.slane %v2313, 1
        %v2316 = vsel %vm643, %v2312, %v2315
        %v2317 = vshrl.u32 %v1847, 16
        %v2319 = vor.u32 %v2317, %v2315
        %v2320 = vshll.u32 %v1848, 16
        %v2322 = vrot.slane %v2320, 1
        %v2323 = vsel %vm643, %v2319, %v2322
        %v2324 = vshrl.u32 %v1848, 16
        %v2326 = vor.u32 %v2324, %v2322
        %v2327 = vshll.u32 %v1849, 16
        %v2329 = vrot.slane %v2327, 1
        %v2330 = vsel %vm643, %v2326, %v2329
        %v2331 = vshrl.u32 %v1849, 16
        %v2333 = vor.u32 %v2331, %v2329
        %v2334 = vshll.u32 %v1850, 16
        %v2336 = vrot.slane %v2334, 1
        %v2337 = vsel %vm643, %v2333, %v2336
        %v2338 = vshrl.u32 %v1850, 16
        %v2340 = vor.u32 %v2338, %v2336
        %v2341 = vshll.u32 %v1851, 16
        %v2343 = vrot.slane %v2341, 1
        %v2344 = vsel %vm643, %v2340, %v2343
        %v2345 = vshrl.u32 %v1851, 16
        %v2347 = vor.u32 %v2345, %v2343
        %v2348 = vshll.u32 %v1852, 16
        %v2350 = vrot.slane %v2348, 1
        %v2351 = vsel %vm643, %v2347, %v2350
        %v2352 = vshrl.u32 %v1852, 16
        %v2354 = vor.u32 %v2352, %v2350
        %v2355 = vshll.u32 %v1853, 16
        %v2357 = vrot.slane %v2355, 1
        %v2358 = vsel %vm643, %v2354, %v2357
        %v2359 = vshrl.u32 %v1853, 16
        %v2361 = vor.u32 %v2359, %v2357
        %v2362 = vshll.u32 %v1854, 16
        %v2364 = vrot.slane %v2362, 1
        %v2365 = vsel %vm643, %v2361, %v2364
        %v2366 = vshrl.u32 %v1854, 16
        %v2368 = vor.u32 %v2366, %v2364
        %v2370 = vshll.u32 %v2201, 16
        %v2372 = vrot.slane %v2370, 1
        %v2373 = vsel %vm643, %v2368, %v2372
        %v2382 = vunpack.c.l.b16 %v2193
        %v2383 = vunpack.c.l.b16 %v2194
        %v2384 = vunpack.c.l.b16 %v2195
        %v2385 = vunpack.c.l.b16 %v2196
        %v2386 = vunpack.c.l.b16 %v2197
        %v2387 = vunpack.c.l.b16 %v2198
        %v2388 = vunpack.c.l.b16 %v2199
        %v2389 = vunpack.c.l.b16 %v2200
        %v2390 = vpack.c.b16 %v2383, %v2382
        %v2391 = vpack.c.b16 %v2385, %v2384
        %v2392 = vpack.c.b16 %v2387, %v2386
        %v2393 = vpack.c.b16 %v2389, %v2388
        %v2399 = vsel %vm278, %v2211, 0
        %v2402 = vsel %vm278, %v2218, 0
        %v2405 = vsel %vm278, %v2225, 0
        %v2408 = vsel %vm278, %v2232, 0
        %v2411 = vsel %vm278, %v2239, 0
        %v2414 = vsel %vm278, %v2246, 0
        %v2417 = vsel %vm278, %v2253, 0
        %v2420 = vsel %vm278, %v2260, 0
        %v2423 = vsel %vm278, %v2267, 0
        %v2426 = vsel %vm278, %v2274, 0
        %v2429 = vsel %vm278, %v2281, 0
        %v2432 = vsel %vm278, %v2288, 0
        %v2435 = vsel %vm278, %v2295, 0
        %v2438 = vsel %vm278, %v2302, 0
        %v2441 = vsel %vm278, %v2309, 0
        %v2444 = vsel %vm278, %v2316, 0
        %v2447 = vsel %vm278, %v2323, 0
        %v2450 = vsel %vm278, %v2330, 0
        %v2453 = vsel %vm278, %v2337, 0
        %v2456 = vsel %vm278, %v2344, 0
        %v2459 = vsel %vm278, %v2351, 0
        %v2462 = vsel %vm278, %v2358, 0
        %v2465 = vsel %vm278, %v2365, 0
        %v2468 = vsel %vm278, %v2373, 0
        %2470 = vmatprep.subr.bf16.mxu0 0
        %2471 = vmatpush1.bf16.msra.mxu0 0
        %2472 = vmatprep.subr.bf16.mxu0 0
        %2473 = vmatpush1.bf16.msra.mxu0 0
        %2474 = vmatprep.subr.bf16.mxu0 0
        %2475 = vmatpush1.bf16.msra.mxu0 0
        %2476 = vmatprep.subr.bf16.mxu0 0
        %2477 = vmatpush1.bf16.msra.mxu0 0
        %2478 = vmatprep.subr.bf16.mxu0 0
        %2479 = vmatpush1.bf16.msra.mxu0 %v2393
        %2480 = vmatprep.subr.bf16.mxu0 0
        %2481 = vmatpush1.bf16.msra.mxu0 %v2392
        %2482 = vmatprep.subr.bf16.mxu0 0
        %2483 = vmatpush1.bf16.msra.mxu0 %v2391
        %2484 = vmatprep.subr.bf16.mxu0 0
        %2485 = vmatpush1.bf16.msra.mxu0 %v2390
        %2486 = vmatprep.subr.bf16.mxu0 0
        %2487 = vmatpush2.bf16.msra.mxu0 0
        %2488 = vmatprep.subr.bf16.mxu0 0
        %2489 = vmatpush2.bf16.msra.mxu0 0
        %2490 = vmatprep.subr.bf16.mxu0 0
        %2491 = vmatpush2.bf16.msra.mxu0 0
        %2492 = vmatprep.subr.bf16.mxu0 0
        %2493 = vmatpush2.bf16.msra.mxu0 0
        %2494 = vmatprep.subr.bf16.mxu0 0
        %2495 = vmatpush2.bf16.msra.mxu0 0
        %2496 = vmatprep.subr.bf16.mxu0 0
        %2497 = vmatpush2.bf16.msra.mxu0 0
        %2498 = vmatprep.subr.bf16.mxu0 0
        %2499 = vmatpush2.bf16.msra.mxu0 0
        %2500 = vmatprep.subr.bf16.mxu0 0
        %2501 = vmatpush2.bf16.msra.mxu0 0
        %2502 = vmatprep.mubr.bf16.mxu0 0
        %2503 = vmatmul.mubr.bf16.gmra.mxu0 %v2399
        %v2504 = vpop.f32.mrf.mxu0
        %v2505 = vadd.f32 0.0, %v2504
        %v2506 = vpop.f32.mrf.mxu0
        %v2507 = vpop.f32.mrf.mxu0
        %v2508 = vadd.f32 0.0, %v2507
        %v2509 = vpop.f32.mrf.mxu0
        %2510 = vmatprep.mubr.bf16.mxu0 0
        %2511 = vmatmul.mubr.bf16.gmra.mxu0 %v2402
        %v2512 = vpop.f32.mrf.mxu0
        %v2513 = vpop.f32.mrf.mxu0
        %v2514 = vpop.f32.mrf.mxu0
        %v2515 = vadd.f32 0.0, %v2514
        %v2516 = vpop.f32.mrf.mxu0
        %2517 = vmatprep.mubr.bf16.mxu0 0
        %2518 = vmatmul.mubr.bf16.gmra.mxu0 %v2405
        %v2519 = vpop.f32.mrf.mxu0
        %v2520 = vadd.f32 0.0, %v2519
        %v2521 = vpop.f32.mrf.mxu0
        %v2522 = vpop.f32.mrf.mxu0
        %v2523 = vpop.f32.mrf.mxu0
        %2524 = vmatprep.mubr.bf16.mxu0 0
        %2525 = vmatmul.mubr.bf16.gmra.mxu0 %v2408
        %v2526 = vpop.f32.mrf.mxu0
        %v2527 = vadd.f32 0.0, %v2526
        %v2528 = vpop.f32.mrf.mxu0
        %v2529 = vpop.f32.mrf.mxu0
        %v2530 = vadd.f32 0.0, %v2529
        %v2531 = vpop.f32.mrf.mxu0
        %2532 = vmatprep.mubr.bf16.mxu0 0
        %2533 = vmatmul.mubr.bf16.gmra.mxu0 %v2411
        %v2534 = vpop.f32.mrf.mxu0
        %v2535 = vpop.f32.mrf.mxu0
        %v2536 = vpop.f32.mrf.mxu0
        %v2537 = vadd.f32 0.0, %v2536
        %v2538 = vpop.f32.mrf.mxu0
        %2539 = vmatprep.mubr.bf16.mxu0 0
        %2540 = vmatmul.mubr.bf16.gmra.mxu0 %v2414
        %v2541 = vpop.f32.mrf.mxu0
        %v2542 = vadd.f32 0.0, %v2541
        %v2543 = vpop.f32.mrf.mxu0
        %v2544 = vpop.f32.mrf.mxu0
        %v2545 = vpop.f32.mrf.mxu0
        %2546 = vmatprep.mubr.bf16.mxu0 0
        %2547 = vmatmul.mubr.bf16.gmra.mxu0 %v2417
        %v2548 = vpop.f32.mrf.mxu0
        %v2549 = vadd.f32 0.0, %v2548
        %v2550 = vpop.f32.mrf.mxu0
        %v2551 = vpop.f32.mrf.mxu0
        %v2552 = vadd.f32 0.0, %v2551
        %v2553 = vpop.f32.mrf.mxu0
        %2554 = vmatprep.mubr.bf16.mxu0 0
        %2555 = vmatmul.mubr.bf16.gmra.mxu0 %v2420
        %v2556 = vpop.f32.mrf.mxu0
        %v2557 = vpop.f32.mrf.mxu0
        %v2558 = vpop.f32.mrf.mxu0
        %v2559 = vadd.f32 0.0, %v2558
        %v2560 = vpop.f32.mrf.mxu0
        %2561 = vmatprep.mubr.bf16.mxu0 0
        %2562 = vmatmul.mubr.bf16.gmra.mxu0 %v2423
        %v2563 = vpop.f32.mrf.mxu0
        %v2564 = vadd.f32 0.0, %v2563
        %v2565 = vpop.f32.mrf.mxu0
        %v2566 = vpop.f32.mrf.mxu0
        %v2567 = vpop.f32.mrf.mxu0
        %2568 = vmatprep.mubr.bf16.mxu0 0
        %2569 = vmatmul.mubr.bf16.gmra.mxu0 %v2426
        %v2570 = vpop.f32.mrf.mxu0
        %v2571 = vadd.f32 0.0, %v2570
        %v2572 = vpop.f32.mrf.mxu0
        %v2573 = vpop.f32.mrf.mxu0
        %v2574 = vadd.f32 0.0, %v2573
        %v2575 = vpop.f32.mrf.mxu0
        %2576 = vmatprep.mubr.bf16.mxu0 0
        %2577 = vmatmul.mubr.bf16.gmra.mxu0 %v2429
        %v2578 = vpop.f32.mrf.mxu0
        %v2579 = vpop.f32.mrf.mxu0
        %v2580 = vpop.f32.mrf.mxu0
        %v2581 = vadd.f32 0.0, %v2580
        %v2582 = vpop.f32.mrf.mxu0
        %2583 = vmatprep.mubr.bf16.mxu0 0
        %2584 = vmatmul.mubr.bf16.gmra.mxu0 %v2432
        %v2585 = vpop.f32.mrf.mxu0
        %v2586 = vadd.f32 0.0, %v2585
        %v2587 = vpop.f32.mrf.mxu0
        %v2588 = vpop.f32.mrf.mxu0
        %v2589 = vpop.f32.mrf.mxu0
        %2590 = vmatprep.mubr.bf16.mxu0 0
        %2591 = vmatmul.mubr.bf16.gmra.mxu0 %v2435
        %v2592 = vpop.f32.mrf.mxu0
        %v2593 = vadd.f32 0.0, %v2592
        %v2594 = vpop.f32.mrf.mxu0
        %v2595 = vpop.f32.mrf.mxu0
        %v2596 = vadd.f32 0.0, %v2595
        %v2597 = vpop.f32.mrf.mxu0
        %2598 = vmatprep.mubr.bf16.mxu0 0
        %2599 = vmatmul.mubr.bf16.gmra.mxu0 %v2438
        %v2600 = vpop.f32.mrf.mxu0
        %v2601 = vpop.f32.mrf.mxu0
        %v2602 = vpop.f32.mrf.mxu0
        %v2603 = vadd.f32 0.0, %v2602
        %v2604 = vpop.f32.mrf.mxu0
        %2605 = vmatprep.mubr.bf16.mxu0 0
        %2606 = vmatmul.mubr.bf16.gmra.mxu0 %v2441
        %v2607 = vpop.f32.mrf.mxu0
        %v2608 = vadd.f32 0.0, %v2607
        %v2609 = vpop.f32.mrf.mxu0
        %v2610 = vpop.f32.mrf.mxu0
        %v2611 = vpop.f32.mrf.mxu0
        %2612 = vmatprep.mubr.bf16.mxu0 0
        %2613 = vmatmul.mubr.bf16.gmra.mxu0 %v2444
        %v2614 = vpop.f32.mrf.mxu0
        %v2615 = vadd.f32 0.0, %v2614
        %v2616 = vpop.f32.mrf.mxu0
        %v2617 = vpop.f32.mrf.mxu0
        %v2618 = vadd.f32 0.0, %v2617
        %v2619 = vpop.f32.mrf.mxu0
        %2620 = vmatprep.mubr.bf16.mxu0 0
        %2621 = vmatmul.mubr.bf16.gmra.mxu0 %v2447
        %v2622 = vpop.f32.mrf.mxu0
        %v2623 = vpop.f32.mrf.mxu0
        %v2624 = vpop.f32.mrf.mxu0
        %v2625 = vadd.f32 0.0, %v2624
        %v2626 = vpop.f32.mrf.mxu0
        %2627 = vmatprep.mubr.bf16.mxu0 0
        %2628 = vmatmul.mubr.bf16.gmra.mxu0 %v2450
        %v2629 = vpop.f32.mrf.mxu0
        %v2630 = vadd.f32 0.0, %v2629
        %v2631 = vpop.f32.mrf.mxu0
        %v2632 = vpop.f32.mrf.mxu0
        %v2633 = vpop.f32.mrf.mxu0
        %2634 = vmatprep.mubr.bf16.mxu0 0
        %2635 = vmatmul.mubr.bf16.gmra.mxu0 %v2453
        %v2636 = vpop.f32.mrf.mxu0
        %v2637 = vadd.f32 0.0, %v2636
        %v2638 = vpop.f32.mrf.mxu0
        %v2639 = vpop.f32.mrf.mxu0
        %v2640 = vadd.f32 0.0, %v2639
        %v2641 = vpop.f32.mrf.mxu0
        %2642 = vmatprep.mubr.bf16.mxu0 0
        %2643 = vmatmul.mubr.bf16.gmra.mxu0 %v2456
        %v2644 = vpop.f32.mrf.mxu0
        %v2645 = vpop.f32.mrf.mxu0
        %v2646 = vpop.f32.mrf.mxu0
        %v2647 = vadd.f32 0.0, %v2646
        %v2648 = vpop.f32.mrf.mxu0
        %2649 = vmatprep.mubr.bf16.mxu0 0
        %2650 = vmatmul.mubr.bf16.gmra.mxu0 %v2459
        %v2651 = vpop.f32.mrf.mxu0
        %v2652 = vadd.f32 0.0, %v2651
        %v2653 = vpop.f32.mrf.mxu0
        %v2654 = vpop.f32.mrf.mxu0
        %v2655 = vpop.f32.mrf.mxu0
        %2656 = vmatprep.mubr.bf16.mxu0 0
        %2657 = vmatmul.mubr.bf16.gmra.mxu0 %v2462
        %v2658 = vpop.f32.mrf.mxu0
        %v2659 = vadd.f32 0.0, %v2658
        %v2660 = vpop.f32.mrf.mxu0
        %v2661 = vpop.f32.mrf.mxu0
        %v2662 = vadd.f32 0.0, %v2661
        %v2663 = vpop.f32.mrf.mxu0
        %2664 = vmatprep.mubr.bf16.mxu0 0
        %2665 = vmatmul.mubr.bf16.gmra.mxu0 %v2465
        %v2666 = vpop.f32.mrf.mxu0
        %v2667 = vpop.f32.mrf.mxu0
        %v2668 = vpop.f32.mrf.mxu0
        %v2669 = vadd.f32 0.0, %v2668
        %v2670 = vpop.f32.mrf.mxu0
        %2671 = vmatprep.mubr.bf16.mxu0 0
        %2672 = vmatmul.mubr.bf16.gmra.mxu0 %v2468
        %v2673 = vpop.f32.mrf.mxu0
        %v2674 = vadd.f32 0.0, %v2673
        %v2675 = vpop.f32.mrf.mxu0
        %v2676 = vpop.f32.mrf.mxu0
        %v2677 = vpop.f32.mrf.mxu0
        %2678 = vdwg.mxu0
        %v2679 = vadd.f32 %v2160, %v2505
        %v2680 = vadd.f32 %v2161, %v2508
        %v2681 = vadd.f32 %v2162, %v2515
        %v2682 = vadd.f32 %v2163, %v2520
        %v2683 = vadd.f32 %v2164, %v2527
        %v2684 = vadd.f32 %v2165, %v2530
        %v2685 = vadd.f32 %v2166, %v2537
        %v2686 = vadd.f32 %v2167, %v2542
        %v2687 = vadd.f32 %v2168, %v2549
        %v2688 = vadd.f32 %v2169, %v2552
        %v2689 = vadd.f32 %v2170, %v2559
        %v2690 = vadd.f32 %v2171, %v2564
        %v2691 = vadd.f32 %v2172, %v2571
        %v2692 = vadd.f32 %v2173, %v2574
        %v2693 = vadd.f32 %v2174, %v2581
        %v2694 = vadd.f32 %v2175, %v2586
        %v2695 = vadd.f32 %v2176, %v2593
        %v2696 = vadd.f32 %v2177, %v2596
        %v2697 = vadd.f32 %v2178, %v2603
        %v2698 = vadd.f32 %v2179, %v2608
        %v2699 = vadd.f32 %v2180, %v2615
        %v2700 = vadd.f32 %v2181, %v2618
        %v2701 = vadd.f32 %v2182, %v2625
        %v2702 = vadd.f32 %v2183, %v2630
        %v2703 = vadd.f32 %v2184, %v2637
        %v2704 = vadd.f32 %v2185, %v2640
        %v2705 = vadd.f32 %v2186, %v2647
        %v2706 = vadd.f32 %v2187, %v2652
        %v2707 = vadd.f32 %v2188, %v2659
        %v2708 = vadd.f32 %v2189, %v2662
        %v2709 = vadd.f32 %v2190, %v2669
        %v2710 = vadd.f32 %v2191, %v2674
        %s2711 = scalar_lea.vmem %s1, 160
        %v2712 = vld [vmem:[%s2711] sm:$0xf]
        %v2713 = vld [vmem:[%s2711 + $0x4] sm:$0xf]
        %v2714 = vld [vmem:[%s2711 + $0x8] sm:$0xf]
        %v2715 = vld [vmem:[%s2711 + $0xc] sm:$0xf]
        %v2716 = vld [vmem:[%s2711 + $0x10] sm:$0xf]
        %v2717 = vld [vmem:[%s2711 + $0x14] sm:$0xf]
        %v2718 = vld [vmem:[%s2711 + $0x18] sm:$0xf]
        %v2719 = vld [vmem:[%s2711 + $0x1c] sm:$0xf]
        %v2720 = vrot.slane %v1831, 1
        %v2721 = vrot.slane %v1832, 1
        %v2722 = vsel %vm1435, %v2720, %v2721
        %v2723 = vrot.slane %v1833, 1
        %v2724 = vsel %vm1435, %v2721, %v2723
        %v2725 = vrot.slane %v1834, 1
        %v2726 = vsel %vm1435, %v2723, %v2725
        %v2727 = vrot.slane %v1835, 1
        %v2728 = vsel %vm1435, %v2725, %v2727
        %v2729 = vrot.slane %v1836, 1
        %v2730 = vsel %vm1435, %v2727, %v2729
        %v2731 = vrot.slane %v1837, 1
        %v2732 = vsel %vm1435, %v2729, %v2731
        %v2733 = vrot.slane %v1838, 1
        %v2734 = vsel %vm1435, %v2731, %v2733
        %v2735 = vrot.slane %v1839, 1
        %v2736 = vsel %vm1435, %v2733, %v2735
        %v2737 = vrot.slane %v1840, 1
        %v2738 = vsel %vm1435, %v2735, %v2737
        %v2739 = vrot.slane %v1841, 1
        %v2740 = vsel %vm1435, %v2737, %v2739
        %v2741 = vrot.slane %v1842, 1
        %v2742 = vsel %vm1435, %v2739, %v2741
        %v2743 = vrot.slane %v1843, 1
        %v2744 = vsel %vm1435, %v2741, %v2743
        %v2745 = vrot.slane %v1844, 1
        %v2746 = vsel %vm1435, %v2743, %v2745
        %v2747 = vrot.slane %v1845, 1
        %v2748 = vsel %vm1435, %v2745, %v2747
        %v2749 = vrot.slane %v1846, 1
        %v2750 = vsel %vm1435, %v2747, %v2749
        %v2751 = vrot.slane %v1847, 1
        %v2752 = vsel %vm1435, %v2749, %v2751
        %v2753 = vrot.slane %v1848, 1
        %v2754 = vsel %vm1435, %v2751, %v2753
        %v2755 = vrot.slane %v1849, 1
        %v2756 = vsel %vm1435, %v2753, %v2755
        %v2757 = vrot.slane %v1850, 1
        %v2758 = vsel %vm1435, %v2755, %v2757
        %v2759 = vrot.slane %v1851, 1
        %v2760 = vsel %vm1435, %v2757, %v2759
        %v2761 = vrot.slane %v1852, 1
        %v2762 = vsel %vm1435, %v2759, %v2761
        %v2763 = vrot.slane %v1853, 1
        %v2764 = vsel %vm1435, %v2761, %v2763
        %v2765 = vrot.slane %v1854, 1
        %v2766 = vsel %vm1435, %v2763, %v2765
        %v2767 = vrot.slane %v2201, 1
        %v2768 = vsel %vm1435, %v2765, %v2767
        %v2777 = vunpack.c.l.b16 %v2712
        %v2778 = vunpack.c.l.b16 %v2713
        %v2779 = vunpack.c.l.b16 %v2714
        %v2780 = vunpack.c.l.b16 %v2715
        %v2781 = vunpack.c.l.b16 %v2716
        %v2782 = vunpack.c.l.b16 %v2717
        %v2783 = vunpack.c.l.b16 %v2718
        %v2784 = vunpack.c.l.b16 %v2719
        %v2785 = vpack.c.b16 %v2778, %v2777
        %v2786 = vpack.c.b16 %v2780, %v2779
        %v2787 = vpack.c.b16 %v2782, %v2781
        %v2788 = vpack.c.b16 %v2784, %v2783
        %v2794 = vsel %vm278, %v2722, 0
        %v2797 = vsel %vm278, %v2724, 0
        %v2800 = vsel %vm278, %v2726, 0
        %v2803 = vsel %vm278, %v2728, 0
        %v2806 = vsel %vm278, %v2730, 0
        %v2809 = vsel %vm278, %v2732, 0
        %v2812 = vsel %vm278, %v2734, 0
        %v2815 = vsel %vm278, %v2736, 0
        %v2818 = vsel %vm278, %v2738, 0
        %v2821 = vsel %vm278, %v2740, 0
        %v2824 = vsel %vm278, %v2742, 0
        %v2827 = vsel %vm278, %v2744, 0
        %v2830 = vsel %vm278, %v2746, 0
        %v2833 = vsel %vm278, %v2748, 0
        %v2836 = vsel %vm278, %v2750, 0
        %v2839 = vsel %vm278, %v2752, 0
        %v2842 = vsel %vm278, %v2754, 0
        %v2845 = vsel %vm278, %v2756, 0
        %v2848 = vsel %vm278, %v2758, 0
        %v2851 = vsel %vm278, %v2760, 0
        %v2854 = vsel %vm278, %v2762, 0
        %v2857 = vsel %vm278, %v2764, 0
        %v2860 = vsel %vm278, %v2766, 0
        %v2863 = vsel %vm278, %v2768, 0
        %2865 = vmatprep.subr.bf16.mxu0 0
        %2866 = vmatpush1.bf16.msra.mxu0 0
        %2867 = vmatprep.subr.bf16.mxu0 0
        %2868 = vmatpush1.bf16.msra.mxu0 0
        %2869 = vmatprep.subr.bf16.mxu0 0
        %2870 = vmatpush1.bf16.msra.mxu0 0
        %2871 = vmatprep.subr.bf16.mxu0 0
        %2872 = vmatpush1.bf16.msra.mxu0 0
        %2873 = vmatprep.subr.bf16.mxu0 0
        %2874 = vmatpush1.bf16.msra.mxu0 %v2788
        %2875 = vmatprep.subr.bf16.mxu0 0
        %2876 = vmatpush1.bf16.msra.mxu0 %v2787
        %2877 = vmatprep.subr.bf16.mxu0 0
        %2878 = vmatpush1.bf16.msra.mxu0 %v2786
        %2879 = vmatprep.subr.bf16.mxu0 0
        %2880 = vmatpush1.bf16.msra.mxu0 %v2785
        %2881 = vmatprep.subr.bf16.mxu0 0
        %2882 = vmatpush2.bf16.msra.mxu0 0
        %2883 = vmatprep.subr.bf16.mxu0 0
        %2884 = vmatpush2.bf16.msra.mxu0 0
        %2885 = vmatprep.subr.bf16.mxu0 0
        %2886 = vmatpush2.bf16.msra.mxu0 0
        %2887 = vmatprep.subr.bf16.mxu0 0
        %2888 = vmatpush2.bf16.msra.mxu0 0
        %2889 = vmatprep.subr.bf16.mxu0 0
        %2890 = vmatpush2.bf16.msra.mxu0 0
        %2891 = vmatprep.subr.bf16.mxu0 0
        %2892 = vmatpush2.bf16.msra.mxu0 0
        %2893 = vmatprep.subr.bf16.mxu0 0
        %2894 = vmatpush2.bf16.msra.mxu0 0
        %2895 = vmatprep.subr.bf16.mxu0 0
        %2896 = vmatpush2.bf16.msra.mxu0 0
        %2897 = vmatprep.mubr.bf16.mxu0 0
        %2898 = vmatmul.mubr.bf16.gmra.mxu0 %v2794
        %v2899 = vpop.f32.mrf.mxu0
        %v2900 = vadd.f32 0.0, %v2899
        %v2901 = vpop.f32.mrf.mxu0
        %v2902 = vpop.f32.mrf.mxu0
        %v2903 = vadd.f32 0.0, %v2902
        %v2904 = vpop.f32.mrf.mxu0
        %2905 = vmatprep.mubr.bf16.mxu0 0
        %2906 = vmatmul.mubr.bf16.gmra.mxu0 %v2797
        %v2907 = vpop.f32.mrf.mxu0
        %v2908 = vpop.f32.mrf.mxu0
        %v2909 = vpop.f32.mrf.mxu0
        %v2910 = vadd.f32 0.0, %v2909
        %v2911 = vpop.f32.mrf.mxu0
        %2912 = vmatprep.mubr.bf16.mxu0 0
        %2913 = vmatmul.mubr.bf16.gmra.mxu0 %v2800
        %v2914 = vpop.f32.mrf.mxu0
        %v2915 = vadd.f32 0.0, %v2914
        %v2916 = vpop.f32.mrf.mxu0
        %v2917 = vpop.f32.mrf.mxu0
        %v2918 = vpop.f32.mrf.mxu0
        %2919 = vmatprep.mubr.bf16.mxu0 0
        %2920 = vmatmul.mubr.bf16.gmra.mxu0 %v2803
        %v2921 = vpop.f32.mrf.mxu0
        %v2922 = vadd.f32 0.0, %v2921
        %v2923 = vpop.f32.mrf.mxu0
        %v2924 = vpop.f32.mrf.mxu0
        %v2925 = vadd.f32 0.0, %v2924
        %v2926 = vpop.f32.mrf.mxu0
        %2927 = vmatprep.mubr.bf16.mxu0 0
        %2928 = vmatmul.mubr.bf16.gmra.mxu0 %v2806
        %v2929 = vpop.f32.mrf.mxu0
        %v2930 = vpop.f32.mrf.mxu0
        %v2931 = vpop.f32.mrf.mxu0
        %v2932 = vadd.f32 0.0, %v2931
        %v2933 = vpop.f32.mrf.mxu0
        %2934 = vmatprep.mubr.bf16.mxu0 0
        %2935 = vmatmul.mubr.bf16.gmra.mxu0 %v2809
        %v2936 = vpop.f32.mrf.mxu0
        %v2937 = vadd.f32 0.0, %v2936
        %v2938 = vpop.f32.mrf.mxu0
        %v2939 = vpop.f32.mrf.mxu0
        %v2940 = vpop.f32.mrf.mxu0
        %2941 = vmatprep.mubr.bf16.mxu0 0
        %2942 = vmatmul.mubr.bf16.gmra.mxu0 %v2812
        %v2943 = vpop.f32.mrf.mxu0
        %v2944 = vadd.f32 0.0, %v2943
        %v2945 = vpop.f32.mrf.mxu0
        %v2946 = vpop.f32.mrf.mxu0
        %v2947 = vadd.f32 0.0, %v2946
        %v2948 = vpop.f32.mrf.mxu0
        %2949 = vmatprep.mubr.bf16.mxu0 0
        %2950 = vmatmul.mubr.bf16.gmra.mxu0 %v2815
        %v2951 = vpop.f32.mrf.mxu0
        %v2952 = vpop.f32.mrf.mxu0
        %v2953 = vpop.f32.mrf.mxu0
        %v2954 = vadd.f32 0.0, %v2953
        %v2955 = vpop.f32.mrf.mxu0
        %2956 = vmatprep.mubr.bf16.mxu0 0
        %2957 = vmatmul.mubr.bf16.gmra.mxu0 %v2818
        %v2958 = vpop.f32.mrf.mxu0
        %v2959 = vadd.f32 0.0, %v2958
        %v2960 = vpop.f32.mrf.mxu0
        %v2961 = vpop.f32.mrf.mxu0
        %v2962 = vpop.f32.mrf.mxu0
        %2963 = vmatprep.mubr.bf16.mxu0 0
        %2964 = vmatmul.mubr.bf16.gmra.mxu0 %v2821
        %v2965 = vpop.f32.mrf.mxu0
        %v2966 = vadd.f32 0.0, %v2965
        %v2967 = vpop.f32.mrf.mxu0
        %v2968 = vpop.f32.mrf.mxu0
        %v2969 = vadd.f32 0.0, %v2968
        %v2970 = vpop.f32.mrf.mxu0
        %2971 = vmatprep.mubr.bf16.mxu0 0
        %2972 = vmatmul.mubr.bf16.gmra.mxu0 %v2824
        %v2973 = vpop.f32.mrf.mxu0
        %v2974 = vpop.f32.mrf.mxu0
        %v2975 = vpop.f32.mrf.mxu0
        %v2976 = vadd.f32 0.0, %v2975
        %v2977 = vpop.f32.mrf.mxu0
        %2978 = vmatprep.mubr.bf16.mxu0 0
        %2979 = vmatmul.mubr.bf16.gmra.mxu0 %v2827
        %v2980 = vpop.f32.mrf.mxu0
        %v2981 = vadd.f32 0.0, %v2980
        %v2982 = vpop.f32.mrf.mxu0
        %v2983 = vpop.f32.mrf.mxu0
        %v2984 = vpop.f32.mrf.mxu0
        %2985 = vmatprep.mubr.bf16.mxu0 0
        %2986 = vmatmul.mubr.bf16.gmra.mxu0 %v2830
        %v2987 = vpop.f32.mrf.mxu0
        %v2988 = vadd.f32 0.0, %v2987
        %v2989 = vpop.f32.mrf.mxu0
        %v2990 = vpop.f32.mrf.mxu0
        %v2991 = vadd.f32 0.0, %v2990
        %v2992 = vpop.f32.mrf.mxu0
        %2993 = vmatprep.mubr.bf16.mxu0 0
        %2994 = vmatmul.mubr.bf16.gmra.mxu0 %v2833
        %v2995 = vpop.f32.mrf.mxu0
        %v2996 = vpop.f32.mrf.mxu0
        %v2997 = vpop.f32.mrf.mxu0
        %v2998 = vadd.f32 0.0, %v2997
        %v2999 = vpop.f32.mrf.mxu0
        %3000 = vmatprep.mubr.bf16.mxu0 0
        %3001 = vmatmul.mubr.bf16.gmra.mxu0 %v2836
        %v3002 = vpop.f32.mrf.mxu0
        %v3003 = vadd.f32 0.0, %v3002
        %v3004 = vpop.f32.mrf.mxu0
        %v3005 = vpop.f32.mrf.mxu0
        %v3006 = vpop.f32.mrf.mxu0
        %3007 = vmatprep.mubr.bf16.mxu0 0
        %3008 = vmatmul.mubr.bf16.gmra.mxu0 %v2839
        %v3009 = vpop.f32.mrf.mxu0
        %v3010 = vadd.f32 0.0, %v3009
        %v3011 = vpop.f32.mrf.mxu0
        %v3012 = vpop.f32.mrf.mxu0
        %v3013 = vadd.f32 0.0, %v3012
        %v3014 = vpop.f32.mrf.mxu0
        %3015 = vmatprep.mubr.bf16.mxu0 0
        %3016 = vmatmul.mubr.bf16.gmra.mxu0 %v2842
        %v3017 = vpop.f32.mrf.mxu0
        %v3018 = vpop.f32.mrf.mxu0
        %v3019 = vpop.f32.mrf.mxu0
        %v3020 = vadd.f32 0.0, %v3019
        %v3021 = vpop.f32.mrf.mxu0
        %3022 = vmatprep.mubr.bf16.mxu0 0
        %3023 = vmatmul.mubr.bf16.gmra.mxu0 %v2845
        %v3024 = vpop.f32.mrf.mxu0
        %v3025 = vadd.f32 0.0, %v3024
        %v3026 = vpop.f32.mrf.mxu0
        %v3027 = vpop.f32.mrf.mxu0
        %v3028 = vpop.f32.mrf.mxu0
        %3029 = vmatprep.mubr.bf16.mxu0 0
        %3030 = vmatmul.mubr.bf16.gmra.mxu0 %v2848
        %v3031 = vpop.f32.mrf.mxu0
        %v3032 = vadd.f32 0.0, %v3031
        %v3033 = vpop.f32.mrf.mxu0
        %v3034 = vpop.f32.mrf.mxu0
        %v3035 = vadd.f32 0.0, %v3034
        %v3036 = vpop.f32.mrf.mxu0
        %3037 = vmatprep.mubr.bf16.mxu0 0
        %3038 = vmatmul.mubr.bf16.gmra.mxu0 %v2851
        %v3039 = vpop.f32.mrf.mxu0
        %v3040 = vpop.f32.mrf.mxu0
        %v3041 = vpop.f32.mrf.mxu0
        %v3042 = vadd.f32 0.0, %v3041
        %v3043 = vpop.f32.mrf.mxu0
        %3044 = vmatprep.mubr.bf16.mxu0 0
        %3045 = vmatmul.mubr.bf16.gmra.mxu0 %v2854
        %v3046 = vpop.f32.mrf.mxu0
        %v3047 = vadd.f32 0.0, %v3046
        %v3048 = vpop.f32.mrf.mxu0
        %v3049 = vpop.f32.mrf.mxu0
        %v3050 = vpop.f32.mrf.mxu0
        %3051 = vmatprep.mubr.bf16.mxu0 0
        %3052 = vmatmul.mubr.bf16.gmra.mxu0 %v2857
        %v3053 = vpop.f32.mrf.mxu0
        %v3054 = vadd.f32 0.0, %v3053
        %v3055 = vpop.f32.mrf.mxu0
        %v3056 = vpop.f32.mrf.mxu0
        %v3057 = vadd.f32 0.0, %v3056
        %v3058 = vpop.f32.mrf.mxu0
        %3059 = vmatprep.mubr.bf16.mxu0 0
        %3060 = vmatmul.mubr.bf16.gmra.mxu0 %v2860
        %v3061 = vpop.f32.mrf.mxu0
        %v3062 = vpop.f32.mrf.mxu0
        %v3063 = vpop.f32.mrf.mxu0
        %v3064 = vadd.f32 0.0, %v3063
        %v3065 = vpop.f32.mrf.mxu0
        %3066 = vmatprep.mubr.bf16.mxu0 0
        %3067 = vmatmul.mubr.bf16.gmra.mxu0 %v2863
        %v3068 = vpop.f32.mrf.mxu0
        %v3069 = vadd.f32 0.0, %v3068
        %v3070 = vpop.f32.mrf.mxu0
        %v3071 = vpop.f32.mrf.mxu0
        %v3072 = vpop.f32.mrf.mxu0
        %3073 = vdwg.mxu0
        %v3074 = vadd.f32 %v2679, %v2900
        %v3075 = vadd.f32 %v2680, %v2903
        %v3076 = vadd.f32 %v2681, %v2910
        %v3077 = vadd.f32 %v2682, %v2915
        %v3078 = vadd.f32 %v2683, %v2922
        %v3079 = vadd.f32 %v2684, %v2925
        %v3080 = vadd.f32 %v2685, %v2932
        %v3081 = vadd.f32 %v2686, %v2937
        %v3082 = vadd.f32 %v2687, %v2944
        %v3083 = vadd.f32 %v2688, %v2947
        %v3084 = vadd.f32 %v2689, %v2954
        %v3085 = vadd.f32 %v2690, %v2959
        %v3086 = vadd.f32 %v2691, %v2966
        %v3087 = vadd.f32 %v2692, %v2969
        %v3088 = vadd.f32 %v2693, %v2976
        %v3089 = vadd.f32 %v2694, %v2981
        %v3090 = vadd.f32 %v2695, %v2988
        %v3091 = vadd.f32 %v2696, %v2991
        %v3092 = vadd.f32 %v2697, %v2998
        %v3093 = vadd.f32 %v2698, %v3003
        %v3094 = vadd.f32 %v2699, %v3010
        %v3095 = vadd.f32 %v2700, %v3013
        %v3096 = vadd.f32 %v2701, %v3020
        %v3097 = vadd.f32 %v2702, %v3025
        %v3098 = vadd.f32 %v2703, %v3032
        %v3099 = vadd.f32 %v2704, %v3035
        %v3100 = vadd.f32 %v2705, %v3042
        %v3101 = vadd.f32 %v2706, %v3047
        %v3102 = vadd.f32 %v2707, %v3054
        %v3103 = vadd.f32 %v2708, %v3057
        %v3104 = vadd.f32 %v2709, %v3064
        %v3105 = vadd.f32 %v2710, %v3069
        %s3106 = scalar_lea.vmem %s1, 192
        %v3107 = vld [vmem:[%s3106] sm:$0xf]
        %v3108 = vld [vmem:[%s3106 + $0x4] sm:$0xf]
        %v3109 = vld [vmem:[%s3106 + $0x8] sm:$0xf]
        %v3110 = vld [vmem:[%s3106 + $0xc] sm:$0xf]
        %v3111 = vld [vmem:[%s3106 + $0x10] sm:$0xf]
        %v3112 = vld [vmem:[%s3106 + $0x14] sm:$0xf]
        %v3113 = vld [vmem:[%s3106 + $0x18] sm:$0xf]
        %v3114 = vld [vmem:[%s3106 + $0x1c] sm:$0xf]
        %v3115 = vpack.c.b16 %v595, %v594
        %v3116 = vpack.c.b16 %v597, %v596
        %v3117 = vpack.c.b16 %v599, %v598
        %v3126 = vunpack.c.l.b16 %v3107
        %v3127 = vunpack.c.l.b16 %v3108
        %v3128 = vunpack.c.l.b16 %v3109
        %v3129 = vunpack.c.l.b16 %v3110
        %v3130 = vunpack.c.l.b16 %v3111
        %v3131 = vunpack.c.l.b16 %v3112
        %v3132 = vunpack.c.l.b16 %v3113
        %v3133 = vunpack.c.l.b16 %v3114
        %v3134 = vpack.c.b16 %v3127, %v3126
        %v3135 = vpack.c.b16 %v3129, %v3128
        %v3136 = vpack.c.b16 %v3131, %v3130
        %v3137 = vpack.c.b16 %v3133, %v3132
        %v3143 = vsel %vm278, %v3115, 0
        %v3146 = vsel %vm278, %v3116, 0
        %v3149 = vsel %vm278, %v3117, 0
        %3151 = vmatprep.subr.bf16.mxu0 0
        %3152 = vmatpush1.bf16.msra.mxu0 0
        %3153 = vmatprep.subr.bf16.mxu0 0
        %3154 = vmatpush1.bf16.msra.mxu0 0
        %3155 = vmatprep.subr.bf16.mxu0 0
        %3156 = vmatpush1.bf16.msra.mxu0 0
        %3157 = vmatprep.subr.bf16.mxu0 0
        %3158 = vmatpush1.bf16.msra.mxu0 0
        %3159 = vmatprep.subr.bf16.mxu0 0
        %3160 = vmatpush1.bf16.msra.mxu0 %v3137
        %3161 = vmatprep.subr.bf16.mxu0 0
        %3162 = vmatpush1.bf16.msra.mxu0 %v3136
        %3163 = vmatprep.subr.bf16.mxu0 0
        %3164 = vmatpush1.bf16.msra.mxu0 %v3135
        %3165 = vmatprep.subr.bf16.mxu0 0
        %3166 = vmatpush1.bf16.msra.mxu0 %v3134
        %3167 = vmatprep.subr.bf16.mxu0 0
        %3168 = vmatpush2.bf16.msra.mxu0 0
        %3169 = vmatprep.subr.bf16.mxu0 0
        %3170 = vmatpush2.bf16.msra.mxu0 0
        %3171 = vmatprep.subr.bf16.mxu0 0
        %3172 = vmatpush2.bf16.msra.mxu0 0
        %3173 = vmatprep.subr.bf16.mxu0 0
        %3174 = vmatpush2.bf16.msra.mxu0 0
        %3175 = vmatprep.subr.bf16.mxu0 0
        %3176 = vmatpush2.bf16.msra.mxu0 0
        %3177 = vmatprep.subr.bf16.mxu0 0
        %3178 = vmatpush2.bf16.msra.mxu0 0
        %3179 = vmatprep.subr.bf16.mxu0 0
        %3180 = vmatpush2.bf16.msra.mxu0 0
        %3181 = vmatprep.subr.bf16.mxu0 0
        %3182 = vmatpush2.bf16.msra.mxu0 0
        %3183 = vmatprep.mubr.bf16.mxu0 0
        %3184 = vmatmul.mubr.bf16.gmra.mxu0 %v1175
        %v3185 = vpop.f32.mrf.mxu0
        %v3186 = vadd.f32 0.0, %v3185
        %v3187 = vpop.f32.mrf.mxu0
        %v3188 = vpop.f32.mrf.mxu0
        %v3189 = vadd.f32 0.0, %v3188
        %v3190 = vpop.f32.mrf.mxu0
        %3191 = vmatprep.mubr.bf16.mxu0 0
        %3192 = vmatmul.mubr.bf16.gmra.mxu0 %v1177
        %v3193 = vpop.f32.mrf.mxu0
        %v3194 = vpop.f32.mrf.mxu0
        %v3195 = vpop.f32.mrf.mxu0
        %v3196 = vadd.f32 0.0, %v3195
        %v3197 = vpop.f32.mrf.mxu0
        %3198 = vmatprep.mubr.bf16.mxu0 0
        %3199 = vmatmul.mubr.bf16.gmra.mxu0 %v1179
        %v3200 = vpop.f32.mrf.mxu0
        %v3201 = vadd.f32 0.0, %v3200
        %v3202 = vpop.f32.mrf.mxu0
        %v3203 = vpop.f32.mrf.mxu0
        %v3204 = vpop.f32.mrf.mxu0
        %3205 = vmatprep.mubr.bf16.mxu0 0
        %3206 = vmatmul.mubr.bf16.gmra.mxu0 %v1181
        %v3207 = vpop.f32.mrf.mxu0
        %v3208 = vadd.f32 0.0, %v3207
        %v3209 = vpop.f32.mrf.mxu0
        %v3210 = vpop.f32.mrf.mxu0
        %v3211 = vadd.f32 0.0, %v3210
        %v3212 = vpop.f32.mrf.mxu0
        %3213 = vmatprep.mubr.bf16.mxu0 0
        %3214 = vmatmul.mubr.bf16.gmra.mxu0 %v1183
        %v3215 = vpop.f32.mrf.mxu0
        %v3216 = vpop.f32.mrf.mxu0
        %v3217 = vpop.f32.mrf.mxu0
        %v3218 = vadd.f32 0.0, %v3217
        %v3219 = vpop.f32.mrf.mxu0
        %3220 = vmatprep.mubr.bf16.mxu0 0
        %3221 = vmatmul.mubr.bf16.gmra.mxu0 %v1185
        %v3222 = vpop.f32.mrf.mxu0
        %v3223 = vadd.f32 0.0, %v3222
        %v3224 = vpop.f32.mrf.mxu0
        %v3225 = vpop.f32.mrf.mxu0
        %v3226 = vpop.f32.mrf.mxu0
        %3227 = vmatprep.mubr.bf16.mxu0 0
        %3228 = vmatmul.mubr.bf16.gmra.mxu0 %v1187
        %v3229 = vpop.f32.mrf.mxu0
        %v3230 = vadd.f32 0.0, %v3229
        %v3231 = vpop.f32.mrf.mxu0
        %v3232 = vpop.f32.mrf.mxu0
        %v3233 = vadd.f32 0.0, %v3232
        %v3234 = vpop.f32.mrf.mxu0
        %3235 = vmatprep.mubr.bf16.mxu0 0
        %3236 = vmatmul.mubr.bf16.gmra.mxu0 %v1189
        %v3237 = vpop.f32.mrf.mxu0
        %v3238 = vpop.f32.mrf.mxu0
        %v3239 = vpop.f32.mrf.mxu0
        %v3240 = vadd.f32 0.0, %v3239
        %v3241 = vpop.f32.mrf.mxu0
        %3242 = vmatprep.mubr.bf16.mxu0 0
        %3243 = vmatmul.mubr.bf16.gmra.mxu0 %v1191
        %v3244 = vpop.f32.mrf.mxu0
        %v3245 = vadd.f32 0.0, %v3244
        %v3246 = vpop.f32.mrf.mxu0
        %v3247 = vpop.f32.mrf.mxu0
        %v3248 = vpop.f32.mrf.mxu0
        %3249 = vmatprep.mubr.bf16.mxu0 0
        %3250 = vmatmul.mubr.bf16.gmra.mxu0 %v1193
        %v3251 = vpop.f32.mrf.mxu0
        %v3252 = vadd.f32 0.0, %v3251
        %v3253 = vpop.f32.mrf.mxu0
        %v3254 = vpop.f32.mrf.mxu0
        %v3255 = vadd.f32 0.0, %v3254
        %v3256 = vpop.f32.mrf.mxu0
        %3257 = vmatprep.mubr.bf16.mxu0 0
        %3258 = vmatmul.mubr.bf16.gmra.mxu0 %v1195
        %v3259 = vpop.f32.mrf.mxu0
        %v3260 = vpop.f32.mrf.mxu0
        %v3261 = vpop.f32.mrf.mxu0
        %v3262 = vadd.f32 0.0, %v3261
        %v3263 = vpop.f32.mrf.mxu0
        %3264 = vmatprep.mubr.bf16.mxu0 0
        %3265 = vmatmul.mubr.bf16.gmra.mxu0 %v1197
        %v3266 = vpop.f32.mrf.mxu0
        %v3267 = vadd.f32 0.0, %v3266
        %v3268 = vpop.f32.mrf.mxu0
        %v3269 = vpop.f32.mrf.mxu0
        %v3270 = vpop.f32.mrf.mxu0
        %3271 = vmatprep.mubr.bf16.mxu0 0
        %3272 = vmatmul.mubr.bf16.gmra.mxu0 %v1199
        %v3273 = vpop.f32.mrf.mxu0
        %v3274 = vadd.f32 0.0, %v3273
        %v3275 = vpop.f32.mrf.mxu0
        %v3276 = vpop.f32.mrf.mxu0
        %v3277 = vadd.f32 0.0, %v3276
        %v3278 = vpop.f32.mrf.mxu0
        %3279 = vmatprep.mubr.bf16.mxu0 0
        %3280 = vmatmul.mubr.bf16.gmra.mxu0 %v1201
        %v3281 = vpop.f32.mrf.mxu0
        %v3282 = vpop.f32.mrf.mxu0
        %v3283 = vpop.f32.mrf.mxu0
        %v3284 = vadd.f32 0.0, %v3283
        %v3285 = vpop.f32.mrf.mxu0
        %3286 = vmatprep.mubr.bf16.mxu0 0
        %3287 = vmatmul.mubr.bf16.gmra.mxu0 %v1203
        %v3288 = vpop.f32.mrf.mxu0
        %v3289 = vadd.f32 0.0, %v3288
        %v3290 = vpop.f32.mrf.mxu0
        %v3291 = vpop.f32.mrf.mxu0
        %v3292 = vpop.f32.mrf.mxu0
        %3293 = vmatprep.mubr.bf16.mxu0 0
        %3294 = vmatmul.mubr.bf16.gmra.mxu0 %v1205
        %v3295 = vpop.f32.mrf.mxu0
        %v3296 = vadd.f32 0.0, %v3295
        %v3297 = vpop.f32.mrf.mxu0
        %v3298 = vpop.f32.mrf.mxu0
        %v3299 = vadd.f32 0.0, %v3298
        %v3300 = vpop.f32.mrf.mxu0
        %3301 = vmatprep.mubr.bf16.mxu0 0
        %3302 = vmatmul.mubr.bf16.gmra.mxu0 %v1207
        %v3303 = vpop.f32.mrf.mxu0
        %v3304 = vpop.f32.mrf.mxu0
        %v3305 = vpop.f32.mrf.mxu0
        %v3306 = vadd.f32 0.0, %v3305
        %v3307 = vpop.f32.mrf.mxu0
        %3308 = vmatprep.mubr.bf16.mxu0 0
        %3309 = vmatmul.mubr.bf16.gmra.mxu0 %v1209
        %v3310 = vpop.f32.mrf.mxu0
        %v3311 = vadd.f32 0.0, %v3310
        %v3312 = vpop.f32.mrf.mxu0
        %v3313 = vpop.f32.mrf.mxu0
        %v3314 = vpop.f32.mrf.mxu0
        %3315 = vmatprep.mubr.bf16.mxu0 0
        %3316 = vmatmul.mubr.bf16.gmra.mxu0 %v1211
        %v3317 = vpop.f32.mrf.mxu0
        %v3318 = vadd.f32 0.0, %v3317
        %v3319 = vpop.f32.mrf.mxu0
        %v3320 = vpop.f32.mrf.mxu0
        %v3321 = vadd.f32 0.0, %v3320
        %v3322 = vpop.f32.mrf.mxu0
        %3323 = vmatprep.mubr.bf16.mxu0 0
        %3324 = vmatmul.mubr.bf16.gmra.mxu0 %v1213
        %v3325 = vpop.f32.mrf.mxu0
        %v3326 = vpop.f32.mrf.mxu0
        %v3327 = vpop.f32.mrf.mxu0
        %v3328 = vadd.f32 0.0, %v3327
        %v3329 = vpop.f32.mrf.mxu0
        %3330 = vmatprep.mubr.bf16.mxu0 0
        %3331 = vmatmul.mubr.bf16.gmra.mxu0 %v1215
        %v3332 = vpop.f32.mrf.mxu0
        %v3333 = vadd.f32 0.0, %v3332
        %v3334 = vpop.f32.mrf.mxu0
        %v3335 = vpop.f32.mrf.mxu0
        %v3336 = vpop.f32.mrf.mxu0
        %3337 = vmatprep.mubr.bf16.mxu0 0
        %3338 = vmatmul.mubr.bf16.gmra.mxu0 %v3143
        %v3339 = vpop.f32.mrf.mxu0
        %v3340 = vadd.f32 0.0, %v3339
        %v3341 = vpop.f32.mrf.mxu0
        %v3342 = vpop.f32.mrf.mxu0
        %v3343 = vadd.f32 0.0, %v3342
        %v3344 = vpop.f32.mrf.mxu0
        %3345 = vmatprep.mubr.bf16.mxu0 0
        %3346 = vmatmul.mubr.bf16.gmra.mxu0 %v3146
        %v3347 = vpop.f32.mrf.mxu0
        %v3348 = vpop.f32.mrf.mxu0
        %v3349 = vpop.f32.mrf.mxu0
        %v3350 = vadd.f32 0.0, %v3349
        %v3351 = vpop.f32.mrf.mxu0
        %3352 = vmatprep.mubr.bf16.mxu0 0
        %3353 = vmatmul.mubr.bf16.gmra.mxu0 %v3149
        %v3354 = vpop.f32.mrf.mxu0
        %v3355 = vadd.f32 0.0, %v3354
        %v3356 = vpop.f32.mrf.mxu0
        %v3357 = vpop.f32.mrf.mxu0
        %v3358 = vpop.f32.mrf.mxu0
        %3359 = vdwg.mxu0
        %v3360 = vadd.f32 %v3074, %v3186
        %v3361 = vadd.f32 %v3075, %v3189
        %v3362 = vadd.f32 %v3076, %v3196
        %v3363 = vadd.f32 %v3077, %v3201
        %v3364 = vadd.f32 %v3078, %v3208
        %v3365 = vadd.f32 %v3079, %v3211
        %v3366 = vadd.f32 %v3080, %v3218
        %v3367 = vadd.f32 %v3081, %v3223
        %v3368 = vadd.f32 %v3082, %v3230
        %v3369 = vadd.f32 %v3083, %v3233
        %v3370 = vadd.f32 %v3084, %v3240
        %v3371 = vadd.f32 %v3085, %v3245
        %v3372 = vadd.f32 %v3086, %v3252
        %v3373 = vadd.f32 %v3087, %v3255
        %v3374 = vadd.f32 %v3088, %v3262
        %v3375 = vadd.f32 %v3089, %v3267
        %v3376 = vadd.f32 %v3090, %v3274
        %v3377 = vadd.f32 %v3091, %v3277
        %v3378 = vadd.f32 %v3092, %v3284
        %v3379 = vadd.f32 %v3093, %v3289
        %v3380 = vadd.f32 %v3094, %v3296
        %v3381 = vadd.f32 %v3095, %v3299
        %v3382 = vadd.f32 %v3096, %v3306
        %v3383 = vadd.f32 %v3097, %v3311
        %v3384 = vadd.f32 %v3098, %v3318
        %v3385 = vadd.f32 %v3099, %v3321
        %v3386 = vadd.f32 %v3100, %v3328
        %v3387 = vadd.f32 %v3101, %v3333
        %v3388 = vadd.f32 %v3102, %v3340
        %v3389 = vadd.f32 %v3103, %v3343
        %v3390 = vadd.f32 %v3104, %v3350
        %v3391 = vadd.f32 %v3105, %v3355
        %s3392 = scalar_lea.vmem %s1, 224
        %v3393 = vld [vmem:[%s3392] sm:$0xf]
        %v3394 = vld [vmem:[%s3392 + $0x4] sm:$0xf]
        %v3395 = vld [vmem:[%s3392 + $0x8] sm:$0xf]
        %v3396 = vld [vmem:[%s3392 + $0xc] sm:$0xf]
        %v3397 = vld [vmem:[%s3392 + $0x10] sm:$0xf]
        %v3398 = vld [vmem:[%s3392 + $0x14] sm:$0xf]
        %v3399 = vld [vmem:[%s3392 + $0x18] sm:$0xf]
        %v3400 = vld [vmem:[%s3392 + $0x1c] sm:$0xf]
        %v3401 = vpack.c.b16 %v600, %v600
        %v3402 = vshll.u32 %v3115, 16
        %v3404 = vrot.slane %v3402, 1
        %v3405 = vsel %vm643, %v834, %v3404
        %v3406 = vshrl.u32 %v3115, 16
        %v3408 = vor.u32 %v3406, %v3404
        %v3409 = vshll.u32 %v3116, 16
        %v3411 = vrot.slane %v3409, 1
        %v3412 = vsel %vm643, %v3408, %v3411
        %v3413 = vshrl.u32 %v3116, 16
        %v3415 = vor.u32 %v3413, %v3411
        %v3416 = vshll.u32 %v3117, 16
        %v3418 = vrot.slane %v3416, 1
        %v3419 = vsel %vm643, %v3415, %v3418
        %v3420 = vshrl.u32 %v3117, 16
        %v3422 = vor.u32 %v3420, %v3418
        %v3424 = vshll.u32 %v3401, 16
        %v3426 = vrot.slane %v3424, 1
        %v3427 = vsel %vm643, %v3422, %v3426
        %v3436 = vunpack.c.l.b16 %v3393
        %v3437 = vunpack.c.l.b16 %v3394
        %v3438 = vunpack.c.l.b16 %v3395
        %v3439 = vunpack.c.l.b16 %v3396
        %v3440 = vunpack.c.l.b16 %v3397
        %v3441 = vunpack.c.l.b16 %v3398
        %v3442 = vunpack.c.l.b16 %v3399
        %v3443 = vunpack.c.l.b16 %v3400
        %v3444 = vpack.c.b16 %v3437, %v3436
        %v3445 = vpack.c.b16 %v3439, %v3438
        %v3446 = vpack.c.b16 %v3441, %v3440
        %v3447 = vpack.c.b16 %v3443, %v3442
        %v3453 = vsel %vm278, %v3405, 0
        %v3456 = vsel %vm278, %v3412, 0
        %v3459 = vsel %vm278, %v3419, 0
        %v3462 = vsel %vm278, %v3427, 0
        %3464 = vmatprep.subr.bf16.mxu0 0
        %3465 = vmatpush1.bf16.msra.mxu0 0
        %3466 = vmatprep.subr.bf16.mxu0 0
        %3467 = vmatpush1.bf16.msra.mxu0 0
        %3468 = vmatprep.subr.bf16.mxu0 0
        %3469 = vmatpush1.bf16.msra.mxu0 0
        %3470 = vmatprep.subr.bf16.mxu0 0
        %3471 = vmatpush1.bf16.msra.mxu0 0
        %3472 = vmatprep.subr.bf16.mxu0 0
        %3473 = vmatpush1.bf16.msra.mxu0 %v3447
        %3474 = vmatprep.subr.bf16.mxu0 0
        %3475 = vmatpush1.bf16.msra.mxu0 %v3446
        %3476 = vmatprep.subr.bf16.mxu0 0
        %3477 = vmatpush1.bf16.msra.mxu0 %v3445
        %3478 = vmatprep.subr.bf16.mxu0 0
        %3479 = vmatpush1.bf16.msra.mxu0 %v3444
        %3480 = vmatprep.subr.bf16.mxu0 0
        %3481 = vmatpush2.bf16.msra.mxu0 0
        %3482 = vmatprep.subr.bf16.mxu0 0
        %3483 = vmatpush2.bf16.msra.mxu0 0
        %3484 = vmatprep.subr.bf16.mxu0 0
        %3485 = vmatpush2.bf16.msra.mxu0 0
        %3486 = vmatprep.subr.bf16.mxu0 0
        %3487 = vmatpush2.bf16.msra.mxu0 0
        %3488 = vmatprep.subr.bf16.mxu0 0
        %3489 = vmatpush2.bf16.msra.mxu0 0
        %3490 = vmatprep.subr.bf16.mxu0 0
        %3491 = vmatpush2.bf16.msra.mxu0 0
        %3492 = vmatprep.subr.bf16.mxu0 0
        %3493 = vmatpush2.bf16.msra.mxu0 0
        %3494 = vmatprep.subr.bf16.mxu0 0
        %3495 = vmatpush2.bf16.msra.mxu0 0
        %3496 = vmatprep.mubr.bf16.mxu0 0
        %3497 = vmatmul.mubr.bf16.gmra.mxu0 %v874
        %v3498 = vpop.f32.mrf.mxu0
        %v3499 = vadd.f32 0.0, %v3498
        %v3500 = vpop.f32.mrf.mxu0
        %v3501 = vpop.f32.mrf.mxu0
        %v3502 = vadd.f32 0.0, %v3501
        %v3503 = vpop.f32.mrf.mxu0
        %3504 = vmatprep.mubr.bf16.mxu0 0
        %3505 = vmatmul.mubr.bf16.gmra.mxu0 %v877
        %v3506 = vpop.f32.mrf.mxu0
        %v3507 = vpop.f32.mrf.mxu0
        %v3508 = vpop.f32.mrf.mxu0
        %v3509 = vadd.f32 0.0, %v3508
        %v3510 = vpop.f32.mrf.mxu0
        %3511 = vmatprep.mubr.bf16.mxu0 0
        %3512 = vmatmul.mubr.bf16.gmra.mxu0 %v880
        %v3513 = vpop.f32.mrf.mxu0
        %v3514 = vadd.f32 0.0, %v3513
        %v3515 = vpop.f32.mrf.mxu0
        %v3516 = vpop.f32.mrf.mxu0
        %v3517 = vpop.f32.mrf.mxu0
        %3518 = vmatprep.mubr.bf16.mxu0 0
        %3519 = vmatmul.mubr.bf16.gmra.mxu0 %v883
        %v3520 = vpop.f32.mrf.mxu0
        %v3521 = vadd.f32 0.0, %v3520
        %v3522 = vpop.f32.mrf.mxu0
        %v3523 = vpop.f32.mrf.mxu0
        %v3524 = vadd.f32 0.0, %v3523
        %v3525 = vpop.f32.mrf.mxu0
        %3526 = vmatprep.mubr.bf16.mxu0 0
        %3527 = vmatmul.mubr.bf16.gmra.mxu0 %v886
        %v3528 = vpop.f32.mrf.mxu0
        %v3529 = vpop.f32.mrf.mxu0
        %v3530 = vpop.f32.mrf.mxu0
        %v3531 = vadd.f32 0.0, %v3530
        %v3532 = vpop.f32.mrf.mxu0
        %3533 = vmatprep.mubr.bf16.mxu0 0
        %3534 = vmatmul.mubr.bf16.gmra.mxu0 %v889
        %v3535 = vpop.f32.mrf.mxu0
        %v3536 = vadd.f32 0.0, %v3535
        %v3537 = vpop.f32.mrf.mxu0
        %v3538 = vpop.f32.mrf.mxu0
        %v3539 = vpop.f32.mrf.mxu0
        %3540 = vmatprep.mubr.bf16.mxu0 0
        %3541 = vmatmul.mubr.bf16.gmra.mxu0 %v892
        %v3542 = vpop.f32.mrf.mxu0
        %v3543 = vadd.f32 0.0, %v3542
        %v3544 = vpop.f32.mrf.mxu0
        %v3545 = vpop.f32.mrf.mxu0
        %v3546 = vadd.f32 0.0, %v3545
        %v3547 = vpop.f32.mrf.mxu0
        %3548 = vmatprep.mubr.bf16.mxu0 0
        %3549 = vmatmul.mubr.bf16.gmra.mxu0 %v895
        %v3550 = vpop.f32.mrf.mxu0
        %v3551 = vpop.f32.mrf.mxu0
        %v3552 = vpop.f32.mrf.mxu0
        %v3553 = vadd.f32 0.0, %v3552
        %v3554 = vpop.f32.mrf.mxu0
        %3555 = vmatprep.mubr.bf16.mxu0 0
        %3556 = vmatmul.mubr.bf16.gmra.mxu0 %v898
        %v3557 = vpop.f32.mrf.mxu0
        %v3558 = vadd.f32 0.0, %v3557
        %v3559 = vpop.f32.mrf.mxu0
        %v3560 = vpop.f32.mrf.mxu0
        %v3561 = vpop.f32.mrf.mxu0
        %3562 = vmatprep.mubr.bf16.mxu0 0
        %3563 = vmatmul.mubr.bf16.gmra.mxu0 %v901
        %v3564 = vpop.f32.mrf.mxu0
        %v3565 = vadd.f32 0.0, %v3564
        %v3566 = vpop.f32.mrf.mxu0
        %v3567 = vpop.f32.mrf.mxu0
        %v3568 = vadd.f32 0.0, %v3567
        %v3569 = vpop.f32.mrf.mxu0
        %3570 = vmatprep.mubr.bf16.mxu0 0
        %3571 = vmatmul.mubr.bf16.gmra.mxu0 %v904
        %v3572 = vpop.f32.mrf.mxu0
        %v3573 = vpop.f32.mrf.mxu0
        %v3574 = vpop.f32.mrf.mxu0
        %v3575 = vadd.f32 0.0, %v3574
        %v3576 = vpop.f32.mrf.mxu0
        %3577 = vmatprep.mubr.bf16.mxu0 0
        %3578 = vmatmul.mubr.bf16.gmra.mxu0 %v907
        %v3579 = vpop.f32.mrf.mxu0
        %v3580 = vadd.f32 0.0, %v3579
        %v3581 = vpop.f32.mrf.mxu0
        %v3582 = vpop.f32.mrf.mxu0
        %v3583 = vpop.f32.mrf.mxu0
        %3584 = vmatprep.mubr.bf16.mxu0 0
        %3585 = vmatmul.mubr.bf16.gmra.mxu0 %v910
        %v3586 = vpop.f32.mrf.mxu0
        %v3587 = vadd.f32 0.0, %v3586
        %v3588 = vpop.f32.mrf.mxu0
        %v3589 = vpop.f32.mrf.mxu0
        %v3590 = vadd.f32 0.0, %v3589
        %v3591 = vpop.f32.mrf.mxu0
        %3592 = vmatprep.mubr.bf16.mxu0 0
        %3593 = vmatmul.mubr.bf16.gmra.mxu0 %v913
        %v3594 = vpop.f32.mrf.mxu0
        %v3595 = vpop.f32.mrf.mxu0
        %v3596 = vpop.f32.mrf.mxu0
        %v3597 = vadd.f32 0.0, %v3596
        %v3598 = vpop.f32.mrf.mxu0
        %3599 = vmatprep.mubr.bf16.mxu0 0
        %3600 = vmatmul.mubr.bf16.gmra.mxu0 %v916
        %v3601 = vpop.f32.mrf.mxu0
        %v3602 = vadd.f32 0.0, %v3601
        %v3603 = vpop.f32.mrf.mxu0
        %v3604 = vpop.f32.mrf.mxu0
        %v3605 = vpop.f32.mrf.mxu0
        %3606 = vmatprep.mubr.bf16.mxu0 0
        %3607 = vmatmul.mubr.bf16.gmra.mxu0 %v919
        %v3608 = vpop.f32.mrf.mxu0
        %v3609 = vadd.f32 0.0, %v3608
        %v3610 = vpop.f32.mrf.mxu0
        %v3611 = vpop.f32.mrf.mxu0
        %v3612 = vadd.f32 0.0, %v3611
        %v3613 = vpop.f32.mrf.mxu0
        %3614 = vmatprep.mubr.bf16.mxu0 0
        %3615 = vmatmul.mubr.bf16.gmra.mxu0 %v922
        %v3616 = vpop.f32.mrf.mxu0
        %v3617 = vpop.f32.mrf.mxu0
        %v3618 = vpop.f32.mrf.mxu0
        %v3619 = vadd.f32 0.0, %v3618
        %v3620 = vpop.f32.mrf.mxu0
        %3621 = vmatprep.mubr.bf16.mxu0 0
        %3622 = vmatmul.mubr.bf16.gmra.mxu0 %v925
        %v3623 = vpop.f32.mrf.mxu0
        %v3624 = vadd.f32 0.0, %v3623
        %v3625 = vpop.f32.mrf.mxu0
        %v3626 = vpop.f32.mrf.mxu0
        %v3627 = vpop.f32.mrf.mxu0
        %3628 = vmatprep.mubr.bf16.mxu0 0
        %3629 = vmatmul.mubr.bf16.gmra.mxu0 %v928
        %v3630 = vpop.f32.mrf.mxu0
        %v3631 = vadd.f32 0.0, %v3630
        %v3632 = vpop.f32.mrf.mxu0
        %v3633 = vpop.f32.mrf.mxu0
        %v3634 = vadd.f32 0.0, %v3633
        %v3635 = vpop.f32.mrf.mxu0
        %3636 = vmatprep.mubr.bf16.mxu0 0
        %3637 = vmatmul.mubr.bf16.gmra.mxu0 %v931
        %v3638 = vpop.f32.mrf.mxu0
        %v3639 = vpop.f32.mrf.mxu0
        %v3640 = vpop.f32.mrf.mxu0
        %v3641 = vadd.f32 0.0, %v3640
        %v3642 = vpop.f32.mrf.mxu0
        %3643 = vmatprep.mubr.bf16.mxu0 0
        %3644 = vmatmul.mubr.bf16.gmra.mxu0 %v3453
        %v3645 = vpop.f32.mrf.mxu0
        %v3646 = vadd.f32 0.0, %v3645
        %v3647 = vpop.f32.mrf.mxu0
        %v3648 = vpop.f32.mrf.mxu0
        %v3649 = vpop.f32.mrf.mxu0
        %3650 = vmatprep.mubr.bf16.mxu0 0
        %3651 = vmatmul.mubr.bf16.gmra.mxu0 %v3456
        %v3652 = vpop.f32.mrf.mxu0
        %v3653 = vadd.f32 0.0, %v3652
        %v3654 = vpop.f32.mrf.mxu0
        %v3655 = vpop.f32.mrf.mxu0
        %v3656 = vadd.f32 0.0, %v3655
        %v3657 = vpop.f32.mrf.mxu0
        %3658 = vmatprep.mubr.bf16.mxu0 0
        %3659 = vmatmul.mubr.bf16.gmra.mxu0 %v3459
        %v3660 = vpop.f32.mrf.mxu0
        %v3661 = vpop.f32.mrf.mxu0
        %v3662 = vpop.f32.mrf.mxu0
        %v3663 = vadd.f32 0.0, %v3662
        %v3664 = vpop.f32.mrf.mxu0
        %3665 = vmatprep.mubr.bf16.mxu0 0
        %3666 = vmatmul.mubr.bf16.gmra.mxu0 %v3462
        %v3667 = vpop.f32.mrf.mxu0
        %v3668 = vadd.f32 0.0, %v3667
        %v3669 = vpop.f32.mrf.mxu0
        %v3670 = vpop.f32.mrf.mxu0
        %v3671 = vpop.f32.mrf.mxu0
        %3672 = vdwg.mxu0
        %v3673 = vadd.f32 %v3360, %v3499
        %v3674 = vadd.f32 %v3361, %v3502
        %v3675 = vadd.f32 %v3362, %v3509
        %v3676 = vadd.f32 %v3363, %v3514
        %v3677 = vadd.f32 %v3364, %v3521
        %v3678 = vadd.f32 %v3365, %v3524
        %v3679 = vadd.f32 %v3366, %v3531
        %v3680 = vadd.f32 %v3367, %v3536
        %v3681 = vadd.f32 %v3368, %v3543
        %v3682 = vadd.f32 %v3369, %v3546
        %v3683 = vadd.f32 %v3370, %v3553
        %v3684 = vadd.f32 %v3371, %v3558
        %v3685 = vadd.f32 %v3372, %v3565
        %v3686 = vadd.f32 %v3373, %v3568
        %v3687 = vadd.f32 %v3374, %v3575
        %v3688 = vadd.f32 %v3375, %v3580
        %v3689 = vadd.f32 %v3376, %v3587
        %v3690 = vadd.f32 %v3377, %v3590
        %v3691 = vadd.f32 %v3378, %v3597
        %v3692 = vadd.f32 %v3379, %v3602
        %v3693 = vadd.f32 %v3380, %v3609
        %v3694 = vadd.f32 %v3381, %v3612
        %v3695 = vadd.f32 %v3382, %v3619
        %v3696 = vadd.f32 %v3383, %v3624
        %v3697 = vadd.f32 %v3384, %v3631
        %v3698 = vadd.f32 %v3385, %v3634
        %v3699 = vadd.f32 %v3386, %v3641
        %v3700 = vadd.f32 %v3387, %v3646
        %v3701 = vadd.f32 %v3388, %v3653
        %v3702 = vadd.f32 %v3389, %v3656
        %v3703 = vadd.f32 %v3390, %v3663
        %v3704 = vadd.f32 %v3391, %v3668
        %s3705 = scalar_lea.vmem %s1, 256
        %v3706 = vld [vmem:[%s3705] sm:$0xf]
        %v3707 = vld [vmem:[%s3705 + $0x4] sm:$0xf]
        %v3708 = vld [vmem:[%s3705 + $0x8] sm:$0xf]
        %v3709 = vld [vmem:[%s3705 + $0xc] sm:$0xf]
        %v3710 = vld [vmem:[%s3705 + $0x10] sm:$0xf]
        %v3711 = vld [vmem:[%s3705 + $0x14] sm:$0xf]
        %v3712 = vld [vmem:[%s3705 + $0x18] sm:$0xf]
        %v3713 = vld [vmem:[%s3705 + $0x1c] sm:$0xf]
        %v3714 = vrot.slane %v3115, 1
        %v3715 = vsel %vm1435, %v1481, %v3714
        %v3716 = vrot.slane %v3116, 1
        %v3717 = vsel %vm1435, %v3714, %v3716
        %v3718 = vrot.slane %v3117, 1
        %v3719 = vsel %vm1435, %v3716, %v3718
        %v3720 = vrot.slane %v3401, 1
        %v3721 = vsel %vm1435, %v3718, %v3720
        %v3730 = vunpack.c.l.b16 %v3706
        %v3731 = vunpack.c.l.b16 %v3707
        %v3732 = vunpack.c.l.b16 %v3708
        %v3733 = vunpack.c.l.b16 %v3709
        %v3734 = vunpack.c.l.b16 %v3710
        %v3735 = vunpack.c.l.b16 %v3711
        %v3736 = vunpack.c.l.b16 %v3712
        %v3737 = vunpack.c.l.b16 %v3713
        %v3738 = vpack.c.b16 %v3731, %v3730
        %v3739 = vpack.c.b16 %v3733, %v3732
        %v3740 = vpack.c.b16 %v3735, %v3734
        %v3741 = vpack.c.b16 %v3737, %v3736
        %v3747 = vsel %vm278, %v3715, 0
        %v3750 = vsel %vm278, %v3717, 0
        %v3753 = vsel %vm278, %v3719, 0
        %v3756 = vsel %vm278, %v3721, 0
        %3758 = vmatprep.subr.bf16.mxu0 0
        %3759 = vmatpush1.bf16.msra.mxu0 0
        %3760 = vmatprep.subr.bf16.mxu0 0
        %3761 = vmatpush1.bf16.msra.mxu0 0
        %3762 = vmatprep.subr.bf16.mxu0 0
        %3763 = vmatpush1.bf16.msra.mxu0 0
        %3764 = vmatprep.subr.bf16.mxu0 0
        %3765 = vmatpush1.bf16.msra.mxu0 0
        %3766 = vmatprep.subr.bf16.mxu0 0
        %3767 = vmatpush1.bf16.msra.mxu0 %v3741
        %3768 = vmatprep.subr.bf16.mxu0 0
        %3769 = vmatpush1.bf16.msra.mxu0 %v3740
        %3770 = vmatprep.subr.bf16.mxu0 0
        %3771 = vmatpush1.bf16.msra.mxu0 %v3739
        %3772 = vmatprep.subr.bf16.mxu0 0
        %3773 = vmatpush1.bf16.msra.mxu0 %v3738
        %3774 = vmatprep.subr.bf16.mxu0 0
        %3775 = vmatpush2.bf16.msra.mxu0 0
        %3776 = vmatprep.subr.bf16.mxu0 0
        %3777 = vmatpush2.bf16.msra.mxu0 0
        %3778 = vmatprep.subr.bf16.mxu0 0
        %3779 = vmatpush2.bf16.msra.mxu0 0
        %3780 = vmatprep.subr.bf16.mxu0 0
        %3781 = vmatpush2.bf16.msra.mxu0 0
        %3782 = vmatprep.subr.bf16.mxu0 0
        %3783 = vmatpush2.bf16.msra.mxu0 0
        %3784 = vmatprep.subr.bf16.mxu0 0
        %3785 = vmatpush2.bf16.msra.mxu0 0
        %3786 = vmatprep.subr.bf16.mxu0 0
        %3787 = vmatpush2.bf16.msra.mxu0 0
        %3788 = vmatprep.subr.bf16.mxu0 0
        %3789 = vmatpush2.bf16.msra.mxu0 0
        %3790 = vmatprep.mubr.bf16.mxu0 0
        %3791 = vmatmul.mubr.bf16.gmra.mxu0 %v1519
        %v3792 = vpop.f32.mrf.mxu0
        %v3793 = vadd.f32 0.0, %v3792
        %v3794 = vpop.f32.mrf.mxu0
        %v3795 = vpop.f32.mrf.mxu0
        %v3796 = vadd.f32 0.0, %v3795
        %v3797 = vpop.f32.mrf.mxu0
        %3798 = vmatprep.mubr.bf16.mxu0 0
        %3799 = vmatmul.mubr.bf16.gmra.mxu0 %v1522
        %v3800 = vpop.f32.mrf.mxu0
        %v3801 = vpop.f32.mrf.mxu0
        %v3802 = vpop.f32.mrf.mxu0
        %v3803 = vadd.f32 0.0, %v3802
        %v3804 = vpop.f32.mrf.mxu0
        %3805 = vmatprep.mubr.bf16.mxu0 0
        %3806 = vmatmul.mubr.bf16.gmra.mxu0 %v1525
        %v3807 = vpop.f32.mrf.mxu0
        %v3808 = vadd.f32 0.0, %v3807
        %v3809 = vpop.f32.mrf.mxu0
        %v3810 = vpop.f32.mrf.mxu0
        %v3811 = vpop.f32.mrf.mxu0
        %3812 = vmatprep.mubr.bf16.mxu0 0
        %3813 = vmatmul.mubr.bf16.gmra.mxu0 %v1528
        %v3814 = vpop.f32.mrf.mxu0
        %v3815 = vadd.f32 0.0, %v3814
        %v3816 = vpop.f32.mrf.mxu0
        %v3817 = vpop.f32.mrf.mxu0
        %v3818 = vadd.f32 0.0, %v3817
        %v3819 = vpop.f32.mrf.mxu0
        %3820 = vmatprep.mubr.bf16.mxu0 0
        %3821 = vmatmul.mubr.bf16.gmra.mxu0 %v1531
        %v3822 = vpop.f32.mrf.mxu0
        %v3823 = vpop.f32.mrf.mxu0
        %v3824 = vpop.f32.mrf.mxu0
        %v3825 = vadd.f32 0.0, %v3824
        %v3826 = vpop.f32.mrf.mxu0
        %3827 = vmatprep.mubr.bf16.mxu0 0
        %3828 = vmatmul.mubr.bf16.gmra.mxu0 %v1534
        %v3829 = vpop.f32.mrf.mxu0
        %v3830 = vadd.f32 0.0, %v3829
        %v3831 = vpop.f32.mrf.mxu0
        %v3832 = vpop.f32.mrf.mxu0
        %v3833 = vpop.f32.mrf.mxu0
        %3834 = vmatprep.mubr.bf16.mxu0 0
        %3835 = vmatmul.mubr.bf16.gmra.mxu0 %v1537
        %v3836 = vpop.f32.mrf.mxu0
        %v3837 = vadd.f32 0.0, %v3836
        %v3838 = vpop.f32.mrf.mxu0
        %v3839 = vpop.f32.mrf.mxu0
        %v3840 = vadd.f32 0.0, %v3839
        %v3841 = vpop.f32.mrf.mxu0
        %3842 = vmatprep.mubr.bf16.mxu0 0
        %3843 = vmatmul.mubr.bf16.gmra.mxu0 %v1540
        %v3844 = vpop.f32.mrf.mxu0
        %v3845 = vpop.f32.mrf.mxu0
        %v3846 = vpop.f32.mrf.mxu0
        %v3847 = vadd.f32 0.0, %v3846
        %v3848 = vpop.f32.mrf.mxu0
        %3849 = vmatprep.mubr.bf16.mxu0 0
        %3850 = vmatmul.mubr.bf16.gmra.mxu0 %v1543
        %v3851 = vpop.f32.mrf.mxu0
        %v3852 = vadd.f32 0.0, %v3851
        %v3853 = vpop.f32.mrf.mxu0
        %v3854 = vpop.f32.mrf.mxu0
        %v3855 = vpop.f32.mrf.mxu0
        %3856 = vmatprep.mubr.bf16.mxu0 0
        %3857 = vmatmul.mubr.bf16.gmra.mxu0 %v1546
        %v3858 = vpop.f32.mrf.mxu0
        %v3859 = vadd.f32 0.0, %v3858
        %v3860 = vpop.f32.mrf.mxu0
        %v3861 = vpop.f32.mrf.mxu0
        %v3862 = vadd.f32 0.0, %v3861
        %v3863 = vpop.f32.mrf.mxu0
        %3864 = vmatprep.mubr.bf16.mxu0 0
        %3865 = vmatmul.mubr.bf16.gmra.mxu0 %v1549
        %v3866 = vpop.f32.mrf.mxu0
        %v3867 = vpop.f32.mrf.mxu0
        %v3868 = vpop.f32.mrf.mxu0
        %v3869 = vadd.f32 0.0, %v3868
        %v3870 = vpop.f32.mrf.mxu0
        %3871 = vmatprep.mubr.bf16.mxu0 0
        %3872 = vmatmul.mubr.bf16.gmra.mxu0 %v1552
        %v3873 = vpop.f32.mrf.mxu0
        %v3874 = vadd.f32 0.0, %v3873
        %v3875 = vpop.f32.mrf.mxu0
        %v3876 = vpop.f32.mrf.mxu0
        %v3877 = vpop.f32.mrf.mxu0
        %3878 = vmatprep.mubr.bf16.mxu0 0
        %3879 = vmatmul.mubr.bf16.gmra.mxu0 %v1555
        %v3880 = vpop.f32.mrf.mxu0
        %v3881 = vadd.f32 0.0, %v3880
        %v3882 = vpop.f32.mrf.mxu0
        %v3883 = vpop.f32.mrf.mxu0
        %v3884 = vadd.f32 0.0, %v3883
        %v3885 = vpop.f32.mrf.mxu0
        %3886 = vmatprep.mubr.bf16.mxu0 0
        %3887 = vmatmul.mubr.bf16.gmra.mxu0 %v1558
        %v3888 = vpop.f32.mrf.mxu0
        %v3889 = vpop.f32.mrf.mxu0
        %v3890 = vpop.f32.mrf.mxu0
        %v3891 = vadd.f32 0.0, %v3890
        %v3892 = vpop.f32.mrf.mxu0
        %3893 = vmatprep.mubr.bf16.mxu0 0
        %3894 = vmatmul.mubr.bf16.gmra.mxu0 %v1561
        %v3895 = vpop.f32.mrf.mxu0
        %v3896 = vadd.f32 0.0, %v3895
        %v3897 = vpop.f32.mrf.mxu0
        %v3898 = vpop.f32.mrf.mxu0
        %v3899 = vpop.f32.mrf.mxu0
        %3900 = vmatprep.mubr.bf16.mxu0 0
        %3901 = vmatmul.mubr.bf16.gmra.mxu0 %v1564
        %v3902 = vpop.f32.mrf.mxu0
        %v3903 = vadd.f32 0.0, %v3902
        %v3904 = vpop.f32.mrf.mxu0
        %v3905 = vpop.f32.mrf.mxu0
        %v3906 = vadd.f32 0.0, %v3905
        %v3907 = vpop.f32.mrf.mxu0
        %3908 = vmatprep.mubr.bf16.mxu0 0
        %3909 = vmatmul.mubr.bf16.gmra.mxu0 %v1567
        %v3910 = vpop.f32.mrf.mxu0
        %v3911 = vpop.f32.mrf.mxu0
        %v3912 = vpop.f32.mrf.mxu0
        %v3913 = vadd.f32 0.0, %v3912
        %v3914 = vpop.f32.mrf.mxu0
        %3915 = vmatprep.mubr.bf16.mxu0 0
        %3916 = vmatmul.mubr.bf16.gmra.mxu0 %v1570
        %v3917 = vpop.f32.mrf.mxu0
        %v3918 = vadd.f32 0.0, %v3917
        %v3919 = vpop.f32.mrf.mxu0
        %v3920 = vpop.f32.mrf.mxu0
        %v3921 = vpop.f32.mrf.mxu0
        %3922 = vmatprep.mubr.bf16.mxu0 0
        %3923 = vmatmul.mubr.bf16.gmra.mxu0 %v1573
        %v3924 = vpop.f32.mrf.mxu0
        %v3925 = vadd.f32 0.0, %v3924
        %v3926 = vpop.f32.mrf.mxu0
        %v3927 = vpop.f32.mrf.mxu0
        %v3928 = vadd.f32 0.0, %v3927
        %v3929 = vpop.f32.mrf.mxu0
        %3930 = vmatprep.mubr.bf16.mxu0 0
        %3931 = vmatmul.mubr.bf16.gmra.mxu0 %v1576
        %v3932 = vpop.f32.mrf.mxu0
        %v3933 = vpop.f32.mrf.mxu0
        %v3934 = vpop.f32.mrf.mxu0
        %v3935 = vadd.f32 0.0, %v3934
        %v3936 = vpop.f32.mrf.mxu0
        %3937 = vmatprep.mubr.bf16.mxu0 0
        %3938 = vmatmul.mubr.bf16.gmra.mxu0 %v3747
        %v3939 = vpop.f32.mrf.mxu0
        %v3940 = vadd.f32 0.0, %v3939
        %v3941 = vpop.f32.mrf.mxu0
        %v3942 = vpop.f32.mrf.mxu0
        %v3943 = vpop.f32.mrf.mxu0
        %3944 = vmatprep.mubr.bf16.mxu0 0
        %3945 = vmatmul.mubr.bf16.gmra.mxu0 %v3750
        %v3946 = vpop.f32.mrf.mxu0
        %v3947 = vadd.f32 0.0, %v3946
        %v3948 = vpop.f32.mrf.mxu0
        %v3949 = vpop.f32.mrf.mxu0
        %v3950 = vadd.f32 0.0, %v3949
        %v3951 = vpop.f32.mrf.mxu0
        %3952 = vmatprep.mubr.bf16.mxu0 0
        %3953 = vmatmul.mubr.bf16.gmra.mxu0 %v3753
        %v3954 = vpop.f32.mrf.mxu0
        %v3955 = vpop.f32.mrf.mxu0
        %v3956 = vpop.f32.mrf.mxu0
        %v3957 = vadd.f32 0.0, %v3956
        %v3958 = vpop.f32.mrf.mxu0
        %3959 = vmatprep.mubr.bf16.mxu0 0
        %3960 = vmatmul.mubr.bf16.gmra.mxu0 %v3756
        %v3961 = vpop.f32.mrf.mxu0
        %v3962 = vadd.f32 0.0, %v3961
        %v3963 = vpop.f32.mrf.mxu0
        %v3964 = vpop.f32.mrf.mxu0
        %v3965 = vpop.f32.mrf.mxu0
        %3966 = vdwg.mxu0
        %v3967 = vadd.f32 %v3673, %v3793
        %v3968 = vadd.f32 %v3674, %v3796
        %v3969 = vadd.f32 %v3675, %v3803
        %v3970 = vadd.f32 %v3676, %v3808
        %v3971 = vadd.f32 %v3677, %v3815
        %v3972 = vadd.f32 %v3678, %v3818
        %v3973 = vadd.f32 %v3679, %v3825
        %v3974 = vadd.f32 %v3680, %v3830
        %v3975 = vadd.f32 %v3681, %v3837
        %v3976 = vadd.f32 %v3682, %v3840
        %v3977 = vadd.f32 %v3683, %v3847
        %v3978 = vadd.f32 %v3684, %v3852
        %v3979 = vadd.f32 %v3685, %v3859
        %v3980 = vadd.f32 %v3686, %v3862
        %v3981 = vadd.f32 %v3687, %v3869
        %v3982 = vadd.f32 %v3688, %v3874
        %v3983 = vadd.f32 %v3689, %v3881
        %v3984 = vadd.f32 %v3690, %v3884
        %v3985 = vadd.f32 %v3691, %v3891
        %v3986 = vadd.f32 %v3692, %v3896
        %v3987 = vadd.f32 %v3693, %v3903
        %v3988 = vadd.f32 %v3694, %v3906
        %v3989 = vadd.f32 %v3695, %v3913
        %v3990 = vadd.f32 %v3696, %v3918
        %v3991 = vadd.f32 %v3697, %v3925
        %v3992 = vadd.f32 %v3698, %v3928
        %v3993 = vadd.f32 %v3699, %v3935
        %v3994 = vadd.f32 %v3700, %v3940
        %v3995 = vadd.f32 %v3701, %v3947
        %v3996 = vadd.f32 %v3702, %v3950
        %v3997 = vadd.f32 %v3703, %v3957
        %v3998 = vadd.f32 %v3704, %v3962
        %v3999 = vld [vmem:[%s2] sm:$0x1]
        %v4001 = vlaneseq
        %v4002 = vshrl.u32 %v4001, 7
        %v4003 = vsub.s32 0, %v4002
        %v4004 = vrot.slane %v3999, %v4003
        %v4006 = vmul.f32 %v3967, %v4004
        %v4007 = vmul.f32 %v3968, %v4004
        %v4008 = vmul.f32 %v3969, %v4004
        %v4009 = vmul.f32 %v3970, %v4004
        %v4010 = vmul.f32 %v3971, %v4004
        %v4011 = vmul.f32 %v3972, %v4004
        %v4012 = vmul.f32 %v3973, %v4004
        %v4013 = vmul.f32 %v3974, %v4004
        %v4014 = vmul.f32 %v3975, %v4004
        %v4015 = vmul.f32 %v3976, %v4004
        %v4016 = vmul.f32 %v3977, %v4004
        %v4017 = vmul.f32 %v3978, %v4004
        %v4018 = vmul.f32 %v3979, %v4004
        %v4019 = vmul.f32 %v3980, %v4004
        %v4020 = vmul.f32 %v3981, %v4004
        %v4021 = vmul.f32 %v3982, %v4004
        %v4022 = vmul.f32 %v3983, %v4004
        %v4023 = vmul.f32 %v3984, %v4004
        %v4024 = vmul.f32 %v3985, %v4004
        %v4025 = vmul.f32 %v3986, %v4004
        %v4026 = vmul.f32 %v3987, %v4004
        %v4027 = vmul.f32 %v3988, %v4004
        %v4028 = vmul.f32 %v3989, %v4004
        %v4029 = vmul.f32 %v3990, %v4004
        %v4030 = vmul.f32 %v3991, %v4004
        %v4031 = vmul.f32 %v3992, %v4004
        %v4032 = vmul.f32 %v3993, %v4004
        %v4033 = vmul.f32 %v3994, %v4004
        %v4034 = vmul.f32 %v3995, %v4004
        %v4035 = vmul.f32 %v3996, %v4004
        %v4036 = vmul.f32 %v3997, %v4004
        %v4037 = vmul.f32 %v3998, %v4004
        %v4038 = vld [vmem:[%s3] sm:$0x1]
        %v4040 = vlaneseq
        %v4041 = vshrl.u32 %v4040, 7
        %v4042 = vsub.s32 0, %v4041
        %v4043 = vrot.slane %v4038, %v4042
        %v4045 = vadd.f32 %v4006, %v4043
        %v4046 = vadd.f32 %v4007, %v4043
        %v4047 = vadd.f32 %v4008, %v4043
        %v4048 = vadd.f32 %v4009, %v4043
        %v4049 = vadd.f32 %v4010, %v4043
        %v4050 = vadd.f32 %v4011, %v4043
        %v4051 = vadd.f32 %v4012, %v4043
        %v4052 = vadd.f32 %v4013, %v4043
        %v4053 = vadd.f32 %v4014, %v4043
        %v4054 = vadd.f32 %v4015, %v4043
        %v4055 = vadd.f32 %v4016, %v4043
        %v4056 = vadd.f32 %v4017, %v4043
        %v4057 = vadd.f32 %v4018, %v4043
        %v4058 = vadd.f32 %v4019, %v4043
        %v4059 = vadd.f32 %v4020, %v4043
        %v4060 = vadd.f32 %v4021, %v4043
        %v4061 = vadd.f32 %v4022, %v4043
        %v4062 = vadd.f32 %v4023, %v4043
        %v4063 = vadd.f32 %v4024, %v4043
        %v4064 = vadd.f32 %v4025, %v4043
        %v4065 = vadd.f32 %v4026, %v4043
        %v4066 = vadd.f32 %v4027, %v4043
        %v4067 = vadd.f32 %v4028, %v4043
        %v4068 = vadd.f32 %v4029, %v4043
        %v4069 = vadd.f32 %v4030, %v4043
        %v4070 = vadd.f32 %v4031, %v4043
        %v4071 = vadd.f32 %v4032, %v4043
        %v4072 = vadd.f32 %v4033, %v4043
        %v4073 = vadd.f32 %v4034, %v4043
        %v4074 = vadd.f32 %v4035, %v4043
        %v4075 = vadd.f32 %v4036, %v4043
        %v4076 = vadd.f32 %v4037, %v4043
        %v4077 = vmax.f32 %v4045, 0.0
        %v4078 = vmax.f32 %v4046, 0.0
        %v4079 = vmax.f32 %v4047, 0.0
        %v4080 = vmax.f32 %v4048, 0.0
        %v4081 = vmax.f32 %v4049, 0.0
        %v4082 = vmax.f32 %v4050, 0.0
        %v4083 = vmax.f32 %v4051, 0.0
        %v4084 = vmax.f32 %v4052, 0.0
        %v4085 = vmax.f32 %v4053, 0.0
        %v4086 = vmax.f32 %v4054, 0.0
        %v4087 = vmax.f32 %v4055, 0.0
        %v4088 = vmax.f32 %v4056, 0.0
        %v4089 = vmax.f32 %v4057, 0.0
        %v4090 = vmax.f32 %v4058, 0.0
        %v4091 = vmax.f32 %v4059, 0.0
        %v4092 = vmax.f32 %v4060, 0.0
        %v4093 = vmax.f32 %v4061, 0.0
        %v4094 = vmax.f32 %v4062, 0.0
        %v4095 = vmax.f32 %v4063, 0.0
        %v4096 = vmax.f32 %v4064, 0.0
        %v4097 = vmax.f32 %v4065, 0.0
        %v4098 = vmax.f32 %v4066, 0.0
        %v4099 = vmax.f32 %v4067, 0.0
        %v4100 = vmax.f32 %v4068, 0.0
        %v4101 = vmax.f32 %v4069, 0.0
        %v4102 = vmax.f32 %v4070, 0.0
        %v4103 = vmax.f32 %v4071, 0.0
        %v4104 = vmax.f32 %v4072, 0.0
        %v4105 = vmax.f32 %v4073, 0.0
        %v4106 = vmax.f32 %v4074, 0.0
        %v4107 = vmax.f32 %v4075, 0.0
        %v4108 = vmax.f32 %v4076, 0.0
        %4109 = vst.msk [vmem:[#allocation3] sm:$0xff] %vm278, 0.0
        %4110 = vst.msk [vmem:[#allocation3 + $0x8] sm:$0xff] %vm278, 0.0
        %4111 = vst.msk [vmem:[#allocation3 + $0x10] sm:$0xff] %vm278, 0.0
        %4112 = vst.msk [vmem:[#allocation3 + $0x18] sm:$0xff] %vm278, 0.0
        %4113 = vst.msk [vmem:[#allocation3 + $0x20] sm:$0xff] %vm278, 0.0
        %4114 = vst.msk [vmem:[#allocation3 + $0x28] sm:$0xff] %vm278, 0.0
        %4115 = vst.msk [vmem:[#allocation3 + $0x30] sm:$0xff] %vm278, 0.0
        %4116 = vst.msk [vmem:[#allocation3 + $0x38] sm:$0xff] %vm278, 0.0
        %4117 = vst.msk [vmem:[#allocation3 + $0x40] sm:$0xff] %vm278, 0.0
        %4118 = vst.msk [vmem:[#allocation3 + $0x48] sm:$0xff] %vm278, 0.0
        %4119 = vst.msk [vmem:[#allocation3 + $0x50] sm:$0xff] %vm278, 0.0
        %4120 = vst.msk [vmem:[#allocation3 + $0x58] sm:$0xff] %vm278, 0.0
        %4121 = vst.msk [vmem:[#allocation3 + $0x60] sm:$0xff] %vm278, 0.0
        %4122 = vst.msk [vmem:[#allocation3 + $0x68] sm:$0xff] %vm278, 0.0
        %4123 = vst.msk [vmem:[#allocation3 + $0x70] sm:$0xff] %vm278, 0.0
        %4124 = vst.msk [vmem:[#allocation3 + $0x78] sm:$0xff] %vm278, 0.0
        %4125 = vst.msk [vmem:[#allocation3 + $0x80] sm:$0xff] %vm278, 0.0
        %4126 = vst.msk [vmem:[#allocation3 + $0x88] sm:$0xff] %vm278, 0.0
        %4127 = vst.msk [vmem:[#allocation3 + $0x90] sm:$0xff] %vm278, 0.0
        %4128 = vst.msk [vmem:[#allocation3 + $0x98] sm:$0xff] %vm278, 0.0
        %4129 = vst.msk [vmem:[#allocation3 + $0xa0] sm:$0xff] %vm278, 0.0
        %4130 = vst.msk [vmem:[#allocation3 + $0xa8] sm:$0xff] %vm278, 0.0
        %4131 = vst.msk [vmem:[#allocation3 + $0xb0] sm:$0xff] %vm278, 0.0
        %4132 = vst.msk [vmem:[#allocation3 + $0xb8] sm:$0xff] %vm278, 0.0
        %4133 = vst.msk [vmem:[#allocation3 + $0xc0] sm:$0xff] %vm278, 0.0
        %4134 = vst.msk [vmem:[#allocation3 + $0xc8] sm:$0xff] %vm278, 0.0
        %4135 = vst.msk [vmem:[#allocation3 + $0xd0] sm:$0xff] %vm278, 0.0
        %4136 = vst.msk [vmem:[#allocation3 + $0xd8] sm:$0xff] %vm278, 0.0
        %4137 = vst.msk [vmem:[#allocation3 + $0xe0] sm:$0xff] %vm278, 0.0
        %4138 = vst.msk [vmem:[#allocation3 + $0xe8] sm:$0xff] %vm278, 0.0
        %4139 = vst.msk [vmem:[#allocation3 + $0xf0] sm:$0xff] %vm278, 0.0
        %4140 = vst.msk [vmem:[#allocation3 + $0xf8] sm:$0xff] %vm278, 0.0
        %4141 = vst.msk [vmem:[#allocation3 + $0x100] sm:$0xff] %vm278, 0.0
        %4142 = vst.msk [vmem:[#allocation3 + $0x108] sm:$0xff] %vm278, 0.0
        %4143 = vst.msk [vmem:[#allocation3 + $0x110] sm:$0xff] %vm278, 0.0
        %4144 = vst.msk [vmem:[#allocation3 + $0x118] sm:$0xff] %vm278, 0.0
        %4145 = vst.msk [vmem:[#allocation3 + $0x120] sm:$0xff] %vm278, 0.0
        %4146 = vst.msk [vmem:[#allocation3 + $0x128] sm:$0xff] %vm278, 0.0
        %4147 = vst.msk [vmem:[#allocation3 + $0x130] sm:$0xff] %vm278, 0.0
        %4148 = vst.msk [vmem:[#allocation3 + $0x138] sm:$0xff] %vm278, 0.0
        %4149 = vst.msk [vmem:[#allocation3 + $0x140] sm:$0xff] %vm278, 0.0
        %4150 = vst.msk [vmem:[#allocation3 + $0x148] sm:$0xff] %vm278, 0.0
        %4151 = vst.msk [vmem:[#allocation3 + $0x150] sm:$0xff] %vm278, 0.0
        %4152 = vst.msk [vmem:[#allocation3 + $0x158] sm:$0xff] %vm278, 0.0
        %4153 = vst.msk [vmem:[#allocation3 + $0x160] sm:$0xff] %vm278, 0.0
        %4154 = vst.msk [vmem:[#allocation3 + $0x168] sm:$0xff] %vm278, 0.0
        %4155 = vst.msk [vmem:[#allocation3 + $0x170] sm:$0xff] %vm278, 0.0
        %4156 = vst.msk [vmem:[#allocation3 + $0x178] sm:$0xff] %vm278, 0.0
        %4157 = vst.msk [vmem:[#allocation3 + $0x180] sm:$0xff] %vm278, 0.0
        %4158 = vst.msk [vmem:[#allocation3 + $0x188] sm:$0xff] %vm278, 0.0
        %4159 = vst.msk [vmem:[#allocation3 + $0x190] sm:$0xff] %vm278, 0.0
        %4160 = vst.msk [vmem:[#allocation3 + $0x198] sm:$0xff] %vm278, 0.0
        %4161 = vst.msk [vmem:[#allocation3 + $0x1a0] sm:$0xff] %vm278, 0.0
        %4162 = vst.msk [vmem:[#allocation3 + $0x1a8] sm:$0xff] %vm278, 0.0
        %4163 = vst.msk [vmem:[#allocation3 + $0x1b0] sm:$0xff] %vm278, 0.0
        %4164 = vst.msk [vmem:[#allocation3 + $0x1b8] sm:$0xff] %vm278, 0.0
        %4165 = vst.msk [vmem:[#allocation3 + $0x1c0] sm:$0xff] %vm278, 0.0
        %4166 = vst.msk [vmem:[#allocation3 + $0x1c8] sm:$0xff] %vm278, 0.0
        %4167 = vst.msk [vmem:[#allocation3 + $0x1d0] sm:$0xff] %vm278, 0.0
        %4168 = vst.msk [vmem:[#allocation3 + $0x1d8] sm:$0xff] %vm278, 0.0
        %4169 = vst.msk [vmem:[#allocation3 + $0x1e0] sm:$0xff] %vm278, 0.0
        %4170 = vst.msk [vmem:[#allocation3 + $0x1e8] sm:$0xff] %vm278, 0.0
        %4171 = vst.msk [vmem:[#allocation3 + $0x1f0] sm:$0xff] %vm278, 0.0
        %4172 = vst.msk [vmem:[#allocation3 + $0x1f8] sm:$0xff] %vm278, 0.0
        %4173 = vst.msk [vmem:[#allocation3 + $0x200] sm:$0xff] %vm278, 0.0
        %4174 = vst.msk [vmem:[#allocation3 + $0x208] sm:$0xff] %vm278, 0.0
        %4175 = vst.msk [vmem:[#allocation3 + $0x210] sm:$0xff] %vm278, 0.0
        %4176 = vst.msk [vmem:[#allocation3 + $0x218] sm:$0xff] %vm278, 0.0
        %4177 = vst.msk [vmem:[#allocation3 + $0x220] sm:$0xff] %vm278, 0.0
        %4178 = vst.msk [vmem:[#allocation3 + $0x228] sm:$0xff] %vm278, 0.0
        %4179 = vst.msk [vmem:[#allocation3 + $0x230] sm:$0xff] %vm278, 0.0
        %4180 = vst.msk [vmem:[#allocation3 + $0x238] sm:$0xff] %vm278, 0.0
        %s4181 = scalar_lea.vmem [#allocation3], 24
        %4182 = vst.msk [vmem:[%s4181 + $0x1] sm:$0xff] %vm278, %v4077
        %4183 = vst.msk [vmem:[%s4181 + $0x9] sm:$0xff] %vm278, %v4078
        %4184 = vst.msk [vmem:[%s4181 + $0x19] sm:$0xff] %vm278, %v4079
        %4185 = vst.msk [vmem:[%s4181 + $0x21] sm:$0xff] %vm278, %v4080
        %4186 = vst.msk [vmem:[%s4181 + $0x31] sm:$0xff] %vm278, %v4081
        %4187 = vst.msk [vmem:[%s4181 + $0x39] sm:$0xff] %vm278, %v4082
        %4188 = vst.msk [vmem:[%s4181 + $0x49] sm:$0xff] %vm278, %v4083
        %4189 = vst.msk [vmem:[%s4181 + $0x51] sm:$0xff] %vm278, %v4084
        %4190 = vst.msk [vmem:[%s4181 + $0x61] sm:$0xff] %vm278, %v4085
        %4191 = vst.msk [vmem:[%s4181 + $0x69] sm:$0xff] %vm278, %v4086
        %4192 = vst.msk [vmem:[%s4181 + $0x79] sm:$0xff] %vm278, %v4087
        %4193 = vst.msk [vmem:[%s4181 + $0x81] sm:$0xff] %vm278, %v4088
        %4194 = vst.msk [vmem:[%s4181 + $0x91] sm:$0xff] %vm278, %v4089
        %4195 = vst.msk [vmem:[%s4181 + $0x99] sm:$0xff] %vm278, %v4090
        %4196 = vst.msk [vmem:[%s4181 + $0xa9] sm:$0xff] %vm278, %v4091
        %4197 = vst.msk [vmem:[%s4181 + $0xb1] sm:$0xff] %vm278, %v4092
        %4198 = vst.msk [vmem:[%s4181 + $0xc1] sm:$0xff] %vm278, %v4093
        %4199 = vst.msk [vmem:[%s4181 + $0xc9] sm:$0xff] %vm278, %v4094
        %4200 = vst.msk [vmem:[%s4181 + $0xd9] sm:$0xff] %vm278, %v4095
        %4201 = vst.msk [vmem:[%s4181 + $0xe1] sm:$0xff] %vm278, %v4096
        %4202 = vst.msk [vmem:[%s4181 + $0xf1] sm:$0xff] %vm278, %v4097
        %4203 = vst.msk [vmem:[%s4181 + $0xf9] sm:$0xff] %vm278, %v4098
        %4204 = vst.msk [vmem:[%s4181 + $0x109] sm:$0xff] %vm278, %v4099
        %4205 = vst.msk [vmem:[%s4181 + $0x111] sm:$0xff] %vm278, %v4100
        %4206 = vst.msk [vmem:[%s4181 + $0x121] sm:$0xff] %vm278, %v4101
        %4207 = vst.msk [vmem:[%s4181 + $0x129] sm:$0xff] %vm278, %v4102
        %4208 = vst.msk [vmem:[%s4181 + $0x139] sm:$0xff] %vm278, %v4103
        %4209 = vst.msk [vmem:[%s4181 + $0x141] sm:$0xff] %vm278, %v4104
        %4210 = vst.msk [vmem:[%s4181 + $0x151] sm:$0xff] %vm278, %v4105
        %4211 = vst.msk [vmem:[%s4181 + $0x159] sm:$0xff] %vm278, %v4106
        %4212 = vst.msk [vmem:[%s4181 + $0x169] sm:$0xff] %vm278, %v4107
        %4213 = vst.msk [vmem:[%s4181 + $0x171] sm:$0xff] %vm278, %v4108
        %v4214 = vld [vmem:[#allocation3] sm:$0xff]
        %v4215 = vld [vmem:[#allocation3 + $0x8] sm:$0xff]
        %v4216 = vld [vmem:[#allocation3 + $0x10] sm:$0xff]
        %v4217 = vld [vmem:[#allocation3 + $0x18] sm:$0xff]
        %v4218 = vld [vmem:[#allocation3 + $0x20] sm:$0xff]
        %v4219 = vld [vmem:[#allocation3 + $0x28] sm:$0xff]
        %v4220 = vld [vmem:[#allocation3 + $0x30] sm:$0xff]
        %v4221 = vld [vmem:[#allocation3 + $0x38] sm:$0xff]
        %v4222 = vld [vmem:[#allocation3 + $0x40] sm:$0xff]
        %v4223 = vld [vmem:[#allocation3 + $0x48] sm:$0xff]
        %v4224 = vld [vmem:[#allocation3 + $0x50] sm:$0xff]
        %v4225 = vld [vmem:[#allocation3 + $0x58] sm:$0xff]
        %v4226 = vld [vmem:[#allocation3 + $0x60] sm:$0xff]
        %v4227 = vld [vmem:[#allocation3 + $0x68] sm:$0xff]
        %v4228 = vld [vmem:[#allocation3 + $0x70] sm:$0xff]
        %v4229 = vld [vmem:[#allocation3 + $0x78] sm:$0xff]
        %v4230 = vld [vmem:[#allocation3 + $0x80] sm:$0xff]
        %v4231 = vld [vmem:[#allocation3 + $0x88] sm:$0xff]
        %v4232 = vld [vmem:[#allocation3 + $0x90] sm:$0xff]
        %v4233 = vld [vmem:[#allocation3 + $0x98] sm:$0xff]
        %v4234 = vld [vmem:[#allocation3 + $0xa0] sm:$0xff]
        %v4235 = vld [vmem:[#allocation3 + $0xa8] sm:$0xff]
        %v4236 = vld [vmem:[#allocation3 + $0xb0] sm:$0xff]
        %v4237 = vld [vmem:[#allocation3 + $0xb8] sm:$0xff]
        %v4238 = vld [vmem:[#allocation3 + $0xc0] sm:$0xff]
        %v4239 = vld [vmem:[#allocation3 + $0xc8] sm:$0xff]
        %v4240 = vld [vmem:[#allocation3 + $0xd0] sm:$0xff]
        %v4241 = vld [vmem:[#allocation3 + $0xd8] sm:$0xff]
        %v4242 = vld [vmem:[#allocation3 + $0xe0] sm:$0xff]
        %v4243 = vld [vmem:[#allocation3 + $0xe8] sm:$0xff]
        %v4244 = vld [vmem:[#allocation3 + $0xf0] sm:$0xff]
        %v4245 = vld [vmem:[#allocation3 + $0xf8] sm:$0xff]
        %v4246 = vld [vmem:[#allocation3 + $0x100] sm:$0xff]
        %v4247 = vld [vmem:[#allocation3 + $0x108] sm:$0xff]
        %v4248 = vld [vmem:[#allocation3 + $0x110] sm:$0xff]
        %v4249 = vld [vmem:[#allocation3 + $0x118] sm:$0xff]
        %v4250 = vld [vmem:[#allocation3 + $0x120] sm:$0xff]
        %v4251 = vld [vmem:[#allocation3 + $0x128] sm:$0xff]
        %v4252 = vld [vmem:[#allocation3 + $0x130] sm:$0xff]
        %v4253 = vld [vmem:[#allocation3 + $0x138] sm:$0xff]
        %v4254 = vld [vmem:[#allocation3 + $0x140] sm:$0xff]
        %v4255 = vld [vmem:[#allocation3 + $0x148] sm:$0xff]
        %v4256 = vld [vmem:[#allocation3 + $0x150] sm:$0xff]
        %v4257 = vld [vmem:[#allocation3 + $0x158] sm:$0xff]
        %v4258 = vld [vmem:[#allocation3 + $0x160] sm:$0xff]
        %v4259 = vld [vmem:[#allocation3 + $0x168] sm:$0xff]
        %v4260 = vld [vmem:[#allocation3 + $0x170] sm:$0xff]
        %v4261 = vld [vmem:[#allocation3 + $0x178] sm:$0xff]
        %v4262 = vld [vmem:[#allocation3 + $0x180] sm:$0xff]
        %v4263 = vld [vmem:[#allocation3 + $0x188] sm:$0xff]
        %v4264 = vld [vmem:[#allocation3 + $0x190] sm:$0xff]
        %v4265 = vld [vmem:[#allocation3 + $0x198] sm:$0xff]
        %v4266 = vld [vmem:[#allocation3 + $0x1a0] sm:$0xff]
        %v4267 = vld [vmem:[#allocation3 + $0x1a8] sm:$0xff]
        %v4268 = vld [vmem:[#allocation3 + $0x1b0] sm:$0xff]
        %v4269 = vld [vmem:[#allocation3 + $0x1b8] sm:$0xff]
        %v4270 = vpack.c.bf16 %v4215, %v4214
        %v4271 = vpack.c.bf16 %v4216, %v4216
        %v4272 = vpack.c.bf16 %v4218, %v4217
        %v4273 = vpack.c.bf16 %v4219, %v4219
        %v4274 = vpack.c.bf16 %v4221, %v4220
        %v4275 = vpack.c.bf16 %v4222, %v4222
        %v4276 = vpack.c.bf16 %v4224, %v4223
        %v4277 = vpack.c.bf16 %v4225, %v4225
        %v4278 = vpack.c.bf16 %v4227, %v4226
        %v4279 = vpack.c.bf16 %v4228, %v4228
        %v4280 = vpack.c.bf16 %v4230, %v4229
        %v4281 = vpack.c.bf16 %v4231, %v4231
        %v4282 = vpack.c.bf16 %v4233, %v4232
        %v4283 = vpack.c.bf16 %v4234, %v4234
        %v4284 = vpack.c.bf16 %v4236, %v4235
        %v4285 = vpack.c.bf16 %v4237, %v4237
        %v4286 = vpack.c.bf16 %v4239, %v4238
        %v4287 = vpack.c.bf16 %v4240, %v4240
        %v4288 = vpack.c.bf16 %v4242, %v4241
        %v4289 = vpack.c.bf16 %v4243, %v4243
        %v4290 = vpack.c.bf16 %v4245, %v4244
        %v4291 = vpack.c.bf16 %v4246, %v4246
        %v4292 = vpack.c.bf16 %v4248, %v4247
        %v4293 = vpack.c.bf16 %v4249, %v4249
        %v4294 = vpack.c.bf16 %v4251, %v4250
        %v4295 = vpack.c.bf16 %v4252, %v4252
        %v4296 = vpack.c.bf16 %v4254, %v4253
        %v4297 = vpack.c.bf16 %v4255, %v4255
        %v4298 = vpack.c.bf16 %v4257, %v4256
        %v4299 = vpack.c.bf16 %v4258, %v4258
        %v4300 = vpack.c.bf16 %v4260, %v4259
        %v4301 = vpack.c.bf16 %v4261, %v4261
        %v4302 = vpack.c.bf16 %v4263, %v4262
        %v4303 = vpack.c.bf16 %v4264, %v4264
        %v4304 = vpack.c.bf16 %v4266, %v4265
        %v4305 = vpack.c.bf16 %v4267, %v4267
        %v4306 = vpack.c.bf16 %v4269, %v4268
        %v4344 = vunpack.c.l.b16 %v4270
        %v4345 = vunpack.c.h.b16 %v4270
        %v4346 = vunpack.c.l.b16 %v4271
        %v4347 = vunpack.c.l.b16 %v4272
        %v4348 = vunpack.c.h.b16 %v4272
        %v4349 = vunpack.c.l.b16 %v4273
        %v4350 = vunpack.c.l.b16 %v4274
        %v4351 = vunpack.c.h.b16 %v4274
        %v4352 = vunpack.c.l.b16 %v4275
        %v4353 = vunpack.c.l.b16 %v4276
        %v4354 = vunpack.c.h.b16 %v4276
        %v4355 = vunpack.c.l.b16 %v4277
        %v4356 = vunpack.c.l.b16 %v4278
        %v4357 = vunpack.c.h.b16 %v4278
        %v4358 = vunpack.c.l.b16 %v4279
        %v4359 = vunpack.c.l.b16 %v4280
        %v4360 = vunpack.c.h.b16 %v4280
        %v4361 = vunpack.c.l.b16 %v4281
        %v4362 = vunpack.c.l.b16 %v4282
        %v4363 = vunpack.c.h.b16 %v4282
        %v4364 = vunpack.c.l.b16 %v4283
        %v4365 = vunpack.c.l.b16 %v4284
        %v4366 = vunpack.c.h.b16 %v4284
        %v4367 = vunpack.c.l.b16 %v4285
        %v4368 = vunpack.c.l.b16 %v4286
        %v4369 = vunpack.c.h.b16 %v4286
        %v4370 = vunpack.c.l.b16 %v4287
        %v4371 = vunpack.c.l.b16 %v4288
        %v4372 = vunpack.c.h.b16 %v4288
        %v4373 = vunpack.c.l.b16 %v4289
        %v4374 = vunpack.c.l.b16 %v4290
        %v4375 = vunpack.c.h.b16 %v4290
        %v4376 = vunpack.c.l.b16 %v4291
        %v4377 = vunpack.c.l.b16 %v4292
        %v4378 = vunpack.c.h.b16 %v4292
        %v4379 = vunpack.c.l.b16 %v4293
        %v4380 = vunpack.c.l.b16 %v4294
        %v4381 = vunpack.c.h.b16 %v4294
        %v4382 = vunpack.c.l.b16 %v4295
        %v4383 = vunpack.c.l.b16 %v4296
        %v4384 = vunpack.c.h.b16 %v4296
        %v4385 = vunpack.c.l.b16 %v4297
        %v4386 = vunpack.c.l.b16 %v4298
        %v4387 = vunpack.c.h.b16 %v4298
        %v4388 = vunpack.c.l.b16 %v4299
        %v4389 = vunpack.c.l.b16 %v4300
        %v4390 = vunpack.c.h.b16 %v4300
        %v4391 = vunpack.c.l.b16 %v4301
        %v4392 = vunpack.c.l.b16 %v4302
        %v4393 = vunpack.c.h.b16 %v4302
        %v4394 = vunpack.c.l.b16 %v4303
        %v4395 = vunpack.c.l.b16 %v4304
        %v4396 = vunpack.c.h.b16 %v4304
        %v4397 = vunpack.c.l.b16 %v4305
        %v4398 = vunpack.c.l.b16 %v4306
        %v4399 = vld [vmem:[%s4] sm:$0xf]
        %v4400 = vld [vmem:[%s4 + $0x4] sm:$0xf]
        %v4401 = vld [vmem:[%s4 + $0x8] sm:$0xf]
        %v4402 = vld [vmem:[%s4 + $0xc] sm:$0xf]
        %v4403 = vld [vmem:[%s4 + $0x10] sm:$0xf]
        %v4404 = vld [vmem:[%s4 + $0x14] sm:$0xf]
        %v4405 = vld [vmem:[%s4 + $0x18] sm:$0xf]
        %v4406 = vld [vmem:[%s4 + $0x1c] sm:$0xf]
        %s4407 = scalar_lea.vmem %s4, 32
        %v4408 = vld [vmem:[%s4407] sm:$0xf]
        %v4409 = vld [vmem:[%s4407 + $0x4] sm:$0xf]
        %v4410 = vld [vmem:[%s4407 + $0x8] sm:$0xf]
        %v4411 = vld [vmem:[%s4407 + $0xc] sm:$0xf]
        %v4412 = vld [vmem:[%s4407 + $0x10] sm:$0xf]
        %v4413 = vld [vmem:[%s4407 + $0x14] sm:$0xf]
        %v4414 = vld [vmem:[%s4407 + $0x18] sm:$0xf]
        %v4415 = vld [vmem:[%s4407 + $0x1c] sm:$0xf]
        %v4416 = vpack.c.b16 %v4345, %v4344
        %v4417 = vpack.c.b16 %v4347, %v4346
        %v4418 = vpack.c.b16 %v4349, %v4348
        %v4419 = vpack.c.b16 %v4351, %v4350
        %v4420 = vpack.c.b16 %v4353, %v4352
        %v4421 = vpack.c.b16 %v4355, %v4354
        %v4422 = vpack.c.b16 %v4357, %v4356
        %v4423 = vpack.c.b16 %v4359, %v4358
        %v4424 = vpack.c.b16 %v4361, %v4360
        %v4425 = vpack.c.b16 %v4363, %v4362
        %v4426 = vpack.c.b16 %v4365, %v4364
        %v4427 = vpack.c.b16 %v4367, %v4366
        %v4428 = vpack.c.b16 %v4369, %v4368
        %v4429 = vpack.c.b16 %v4371, %v4370
        %v4430 = vpack.c.b16 %v4373, %v4372
        %v4431 = vpack.c.b16 %v4375, %v4374
        %v4432 = vpack.c.b16 %v4377, %v4376
        %v4433 = vpack.c.b16 %v4379, %v4378
        %v4434 = vpack.c.b16 %v4381, %v4380
        %v4435 = vpack.c.b16 %v4383, %v4382
        %v4436 = vpack.c.b16 %v4385, %v4384
        %v4437 = vpack.c.b16 %v4387, %v4386
        %v4438 = vpack.c.b16 %v4389, %v4388
        %v4439 = vpack.c.b16 %v4391, %v4390
        %v4440 = vpack.c.b16 %v4392, %v4392
        %v4442 = vshrl.u32 %v4416, 16
        %v4444 = vshll.u32 %v4416, 16
        %v4446 = vrot.slane %v4444, 1
        %v4447 = vor.u32 %v4442, %v4446
        %v4449 = vshll.u32 %v4417, 16
        %v4451 = vrot.slane %v4449, 1
        %v4452 = vsel %vm643, %v4447, %v4451
        %v4453 = vshrl.u32 %v4417, 16
        %v4455 = vor.u32 %v4453, %v4451
        %v4457 = vshll.u32 %v4418, 16
        %v4459 = vrot.slane %v4457, 1
        %v4460 = vsel %vm643, %v4455, %v4459
        %v4461 = vshrl.u32 %v4418, 16
        %v4463 = vor.u32 %v4461, %v4459
        %v4465 = vshll.u32 %v4419, 16
        %v4467 = vrot.slane %v4465, 1
        %v4468 = vsel %vm643, %v4463, %v4467
        %v4469 = vshrl.u32 %v4419, 16
        %v4471 = vor.u32 %v4469, %v4467
        %v4473 = vshll.u32 %v4420, 16
        %v4475 = vrot.slane %v4473, 1
        %v4476 = vsel %vm643, %v4471, %v4475
        %v4477 = vshrl.u32 %v4420, 16
        %v4479 = vor.u32 %v4477, %v4475
        %v4481 = vshll.u32 %v4421, 16
        %v4483 = vrot.slane %v4481, 1
        %v4484 = vsel %vm643, %v4479, %v4483
        %v4485 = vshrl.u32 %v4421, 16
        %v4487 = vor.u32 %v4485, %v4483
        %v4489 = vshll.u32 %v4422, 16
        %v4491 = vrot.slane %v4489, 1
        %v4492 = vsel %vm643, %v4487, %v4491
        %v4493 = vshrl.u32 %v4422, 16
        %v4495 = vor.u32 %v4493, %v4491
        %v4497 = vshll.u32 %v4423, 16
        %v4499 = vrot.slane %v4497, 1
        %v4500 = vsel %vm643, %v4495, %v4499
        %v4501 = vshrl.u32 %v4423, 16
        %v4503 = vor.u32 %v4501, %v4499
        %v4505 = vshll.u32 %v4424, 16
        %v4507 = vrot.slane %v4505, 1
        %v4508 = vsel %vm643, %v4503, %v4507
        %v4509 = vshrl.u32 %v4424, 16
        %v4511 = vor.u32 %v4509, %v4507
        %v4513 = vshll.u32 %v4425, 16
        %v4515 = vrot.slane %v4513, 1
        %v4516 = vsel %vm643, %v4511, %v4515
        %v4517 = vshrl.u32 %v4425, 16
        %v4519 = vor.u32 %v4517, %v4515
        %v4521 = vshll.u32 %v4426, 16
        %v4523 = vrot.slane %v4521, 1
        %v4524 = vsel %vm643, %v4519, %v4523
        %v4525 = vshrl.u32 %v4426, 16
        %v4527 = vor.u32 %v4525, %v4523
        %v4529 = vshll.u32 %v4427, 16
        %v4531 = vrot.slane %v4529, 1
        %v4532 = vsel %vm643, %v4527, %v4531
        %v4533 = vshrl.u32 %v4427, 16
        %v4535 = vor.u32 %v4533, %v4531
        %v4537 = vshll.u32 %v4428, 16
        %v4539 = vrot.slane %v4537, 1
        %v4540 = vsel %vm643, %v4535, %v4539
        %v4541 = vshrl.u32 %v4428, 16
        %v4543 = vor.u32 %v4541, %v4539
        %v4545 = vshll.u32 %v4429, 16
        %v4547 = vrot.slane %v4545, 1
        %v4548 = vsel %vm643, %v4543, %v4547
        %v4549 = vshrl.u32 %v4429, 16
        %v4551 = vor.u32 %v4549, %v4547
        %v4553 = vshll.u32 %v4430, 16
        %v4555 = vrot.slane %v4553, 1
        %v4556 = vsel %vm643, %v4551, %v4555
        %v4557 = vshrl.u32 %v4430, 16
        %v4559 = vor.u32 %v4557, %v4555
        %v4561 = vshll.u32 %v4431, 16
        %v4563 = vrot.slane %v4561, 1
        %v4564 = vsel %vm643, %v4559, %v4563
        %v4565 = vshrl.u32 %v4431, 16
        %v4567 = vor.u32 %v4565, %v4563
        %v4569 = vshll.u32 %v4432, 16
        %v4571 = vrot.slane %v4569, 1
        %v4572 = vsel %vm643, %v4567, %v4571
        %v4573 = vshrl.u32 %v4432, 16
        %v4575 = vor.u32 %v4573, %v4571
        %v4577 = vshll.u32 %v4433, 16
        %v4579 = vrot.slane %v4577, 1
        %v4580 = vsel %vm643, %v4575, %v4579
        %v4581 = vshrl.u32 %v4433, 16
        %v4583 = vor.u32 %v4581, %v4579
        %v4585 = vshll.u32 %v4434, 16
        %v4587 = vrot.slane %v4585, 1
        %v4588 = vsel %vm643, %v4583, %v4587
        %v4589 = vshrl.u32 %v4434, 16
        %v4591 = vor.u32 %v4589, %v4587
        %v4593 = vshll.u32 %v4435, 16
        %v4595 = vrot.slane %v4593, 1
        %v4596 = vsel %vm643, %v4591, %v4595
        %v4597 = vshrl.u32 %v4435, 16
        %v4599 = vor.u32 %v4597, %v4595
        %v4601 = vshll.u32 %v4436, 16
        %v4603 = vrot.slane %v4601, 1
        %v4604 = vsel %vm643, %v4599, %v4603
        %v4605 = vshrl.u32 %v4436, 16
        %v4607 = vor.u32 %v4605, %v4603
        %v4609 = vshll.u32 %v4437, 16
        %v4611 = vrot.slane %v4609, 1
        %v4612 = vsel %vm643, %v4607, %v4611
        %v4613 = vshrl.u32 %v4437, 16
        %v4615 = vor.u32 %v4613, %v4611
        %v4617 = vshll.u32 %v4438, 16
        %v4619 = vrot.slane %v4617, 1
        %v4620 = vsel %vm643, %v4615, %v4619
        %v4621 = vshrl.u32 %v4438, 16
        %v4623 = vor.u32 %v4621, %v4619
        %v4625 = vshll.u32 %v4439, 16
        %v4627 = vrot.slane %v4625, 1
        %v4628 = vsel %vm643, %v4623, %v4627
        %v4629 = vshrl.u32 %v4439, 16
        %v4631 = vor.u32 %v4629, %v4627
        %v4633 = vshll.u32 %v4440, 16
        %v4635 = vrot.slane %v4633, 1
        %v4636 = vsel %vm643, %v4631, %v4635
        %v4645 = vunpack.c.l.b16 %v4408
        %v4646 = vunpack.c.l.b16 %v4409
        %v4647 = vunpack.c.l.b16 %v4410
        %v4648 = vunpack.c.l.b16 %v4411
        %v4649 = vunpack.c.l.b16 %v4412
        %v4650 = vunpack.c.l.b16 %v4413
        %v4651 = vunpack.c.l.b16 %v4414
        %v4652 = vunpack.c.l.b16 %v4415
        %v4653 = vpack.c.b16 %v4646, %v4645
        %v4654 = vpack.c.b16 %v4648, %v4647
        %v4655 = vpack.c.b16 %v4650, %v4649
        %v4656 = vpack.c.b16 %v4652, %v4651
        %v4662 = vsel %vm278, %v4452, 0
        %v4665 = vsel %vm278, %v4460, 0
        %v4668 = vsel %vm278, %v4468, 0
        %v4671 = vsel %vm278, %v4476, 0
        %v4674 = vsel %vm278, %v4484, 0
        %v4677 = vsel %vm278, %v4492, 0
        %v4680 = vsel %vm278, %v4500, 0
        %v4683 = vsel %vm278, %v4508, 0
        %v4686 = vsel %vm278, %v4516, 0
        %v4689 = vsel %vm278, %v4524, 0
        %v4692 = vsel %vm278, %v4532, 0
        %v4695 = vsel %vm278, %v4540, 0
        %v4698 = vsel %vm278, %v4548, 0
        %v4701 = vsel %vm278, %v4556, 0
        %v4704 = vsel %vm278, %v4564, 0
        %v4707 = vsel %vm278, %v4572, 0
        %v4710 = vsel %vm278, %v4580, 0
        %v4713 = vsel %vm278, %v4588, 0
        %v4716 = vsel %vm278, %v4596, 0
        %v4719 = vsel %vm278, %v4604, 0
        %v4722 = vsel %vm278, %v4612, 0
        %v4725 = vsel %vm278, %v4620, 0
        %v4728 = vsel %vm278, %v4628, 0
        %v4731 = vsel %vm278, %v4636, 0
        %4733 = vmatprep.subr.bf16.mxu0 0
        %4734 = vmatpush1.bf16.msra.mxu0 0
        %4735 = vmatprep.subr.bf16.mxu0 0
        %4736 = vmatpush1.bf16.msra.mxu0 0
        %4737 = vmatprep.subr.bf16.mxu0 0
        %4738 = vmatpush1.bf16.msra.mxu0 0
        %4739 = vmatprep.subr.bf16.mxu0 0
        %4740 = vmatpush1.bf16.msra.mxu0 0
        %4741 = vmatprep.subr.bf16.mxu0 0
        %4742 = vmatpush1.bf16.msra.mxu0 %v4656
        %4743 = vmatprep.subr.bf16.mxu0 0
        %4744 = vmatpush1.bf16.msra.mxu0 %v4655
        %4745 = vmatprep.subr.bf16.mxu0 0
        %4746 = vmatpush1.bf16.msra.mxu0 %v4654
        %4747 = vmatprep.subr.bf16.mxu0 0
        %4748 = vmatpush1.bf16.msra.mxu0 %v4653
        %4749 = vmatprep.subr.bf16.mxu0 0
        %4750 = vmatpush2.bf16.msra.mxu0 0
        %4751 = vmatprep.subr.bf16.mxu0 0
        %4752 = vmatpush2.bf16.msra.mxu0 0
        %4753 = vmatprep.subr.bf16.mxu0 0
        %4754 = vmatpush2.bf16.msra.mxu0 0
        %4755 = vmatprep.subr.bf16.mxu0 0
        %4756 = vmatpush2.bf16.msra.mxu0 0
        %4757 = vmatprep.subr.bf16.mxu0 0
        %4758 = vmatpush2.bf16.msra.mxu0 0
        %4759 = vmatprep.subr.bf16.mxu0 0
        %4760 = vmatpush2.bf16.msra.mxu0 0
        %4761 = vmatprep.subr.bf16.mxu0 0
        %4762 = vmatpush2.bf16.msra.mxu0 0
        %4763 = vmatprep.subr.bf16.mxu0 0
        %4764 = vmatpush2.bf16.msra.mxu0 0
        %4765 = vmatprep.mubr.bf16.mxu0 0
        %4766 = vmatmul.mubr.bf16.gmra.mxu0 %v4662
        %v4767 = vpop.f32.mrf.mxu0
        %v4768 = vadd.f32 0.0, %v4767
        %v4769 = vpop.f32.mrf.mxu0
        %v4770 = vpop.f32.mrf.mxu0
        %v4771 = vadd.f32 0.0, %v4770
        %v4772 = vpop.f32.mrf.mxu0
        %4773 = vmatprep.mubr.bf16.mxu0 0
        %4774 = vmatmul.mubr.bf16.gmra.mxu0 %v4665
        %v4775 = vpop.f32.mrf.mxu0
        %v4776 = vpop.f32.mrf.mxu0
        %v4777 = vpop.f32.mrf.mxu0
        %v4778 = vadd.f32 0.0, %v4777
        %v4779 = vpop.f32.mrf.mxu0
        %4780 = vmatprep.mubr.bf16.mxu0 0
        %4781 = vmatmul.mubr.bf16.gmra.mxu0 %v4668
        %v4782 = vpop.f32.mrf.mxu0
        %v4783 = vadd.f32 0.0, %v4782
        %v4784 = vpop.f32.mrf.mxu0
        %v4785 = vpop.f32.mrf.mxu0
        %v4786 = vpop.f32.mrf.mxu0
        %4787 = vmatprep.mubr.bf16.mxu0 0
        %4788 = vmatmul.mubr.bf16.gmra.mxu0 %v4671
        %v4789 = vpop.f32.mrf.mxu0
        %v4790 = vadd.f32 0.0, %v4789
        %v4791 = vpop.f32.mrf.mxu0
        %v4792 = vpop.f32.mrf.mxu0
        %v4793 = vadd.f32 0.0, %v4792
        %v4794 = vpop.f32.mrf.mxu0
        %4795 = vmatprep.mubr.bf16.mxu0 0
        %4796 = vmatmul.mubr.bf16.gmra.mxu0 %v4674
        %v4797 = vpop.f32.mrf.mxu0
        %v4798 = vpop.f32.mrf.mxu0
        %v4799 = vpop.f32.mrf.mxu0
        %v4800 = vadd.f32 0.0, %v4799
        %v4801 = vpop.f32.mrf.mxu0
        %4802 = vmatprep.mubr.bf16.mxu0 0
        %4803 = vmatmul.mubr.bf16.gmra.mxu0 %v4677
        %v4804 = vpop.f32.mrf.mxu0
        %v4805 = vadd.f32 0.0, %v4804
        %v4806 = vpop.f32.mrf.mxu0
        %v4807 = vpop.f32.mrf.mxu0
        %v4808 = vpop.f32.mrf.mxu0
        %4809 = vmatprep.mubr.bf16.mxu0 0
        %4810 = vmatmul.mubr.bf16.gmra.mxu0 %v4680
        %v4811 = vpop.f32.mrf.mxu0
        %v4812 = vadd.f32 0.0, %v4811
        %v4813 = vpop.f32.mrf.mxu0
        %v4814 = vpop.f32.mrf.mxu0
        %v4815 = vadd.f32 0.0, %v4814
        %v4816 = vpop.f32.mrf.mxu0
        %4817 = vmatprep.mubr.bf16.mxu0 0
        %4818 = vmatmul.mubr.bf16.gmra.mxu0 %v4683
        %v4819 = vpop.f32.mrf.mxu0
        %v4820 = vpop.f32.mrf.mxu0
        %v4821 = vpop.f32.mrf.mxu0
        %v4822 = vadd.f32 0.0, %v4821
        %v4823 = vpop.f32.mrf.mxu0
        %4824 = vmatprep.mubr.bf16.mxu0 0
        %4825 = vmatmul.mubr.bf16.gmra.mxu0 %v4686
        %v4826 = vpop.f32.mrf.mxu0
        %v4827 = vadd.f32 0.0, %v4826
        %v4828 = vpop.f32.mrf.mxu0
        %v4829 = vpop.f32.mrf.mxu0
        %v4830 = vpop.f32.mrf.mxu0
        %4831 = vmatprep.mubr.bf16.mxu0 0
        %4832 = vmatmul.mubr.bf16.gmra.mxu0 %v4689
        %v4833 = vpop.f32.mrf.mxu0
        %v4834 = vadd.f32 0.0, %v4833
        %v4835 = vpop.f32.mrf.mxu0
        %v4836 = vpop.f32.mrf.mxu0
        %v4837 = vadd.f32 0.0, %v4836
        %v4838 = vpop.f32.mrf.mxu0
        %4839 = vmatprep.mubr.bf16.mxu0 0
        %4840 = vmatmul.mubr.bf16.gmra.mxu0 %v4692
        %v4841 = vpop.f32.mrf.mxu0
        %v4842 = vpop.f32.mrf.mxu0
        %v4843 = vpop.f32.mrf.mxu0
        %v4844 = vadd.f32 0.0, %v4843
        %v4845 = vpop.f32.mrf.mxu0
        %4846 = vmatprep.mubr.bf16.mxu0 0
        %4847 = vmatmul.mubr.bf16.gmra.mxu0 %v4695
        %v4848 = vpop.f32.mrf.mxu0
        %v4849 = vadd.f32 0.0, %v4848
        %v4850 = vpop.f32.mrf.mxu0
        %v4851 = vpop.f32.mrf.mxu0
        %v4852 = vpop.f32.mrf.mxu0
        %4853 = vmatprep.mubr.bf16.mxu0 0
        %4854 = vmatmul.mubr.bf16.gmra.mxu0 %v4698
        %v4855 = vpop.f32.mrf.mxu0
        %v4856 = vadd.f32 0.0, %v4855
        %v4857 = vpop.f32.mrf.mxu0
        %v4858 = vpop.f32.mrf.mxu0
        %v4859 = vadd.f32 0.0, %v4858
        %v4860 = vpop.f32.mrf.mxu0
        %4861 = vmatprep.mubr.bf16.mxu0 0
        %4862 = vmatmul.mubr.bf16.gmra.mxu0 %v4701
        %v4863 = vpop.f32.mrf.mxu0
        %v4864 = vpop.f32.mrf.mxu0
        %v4865 = vpop.f32.mrf.mxu0
        %v4866 = vadd.f32 0.0, %v4865
        %v4867 = vpop.f32.mrf.mxu0
        %4868 = vmatprep.mubr.bf16.mxu0 0
        %4869 = vmatmul.mubr.bf16.gmra.mxu0 %v4704
        %v4870 = vpop.f32.mrf.mxu0
        %v4871 = vadd.f32 0.0, %v4870
        %v4872 = vpop.f32.mrf.mxu0
        %v4873 = vpop.f32.mrf.mxu0
        %v4874 = vpop.f32.mrf.mxu0
        %4875 = vmatprep.mubr.bf16.mxu0 0
        %4876 = vmatmul.mubr.bf16.gmra.mxu0 %v4707
        %v4877 = vpop.f32.mrf.mxu0
        %v4878 = vadd.f32 0.0, %v4877
        %v4879 = vpop.f32.mrf.mxu0
        %v4880 = vpop.f32.mrf.mxu0
        %v4881 = vadd.f32 0.0, %v4880
        %v4882 = vpop.f32.mrf.mxu0
        %4883 = vmatprep.mubr.bf16.mxu0 0
        %4884 = vmatmul.mubr.bf16.gmra.mxu0 %v4710
        %v4885 = vpop.f32.mrf.mxu0
        %v4886 = vpop.f32.mrf.mxu0
        %v4887 = vpop.f32.mrf.mxu0
        %v4888 = vadd.f32 0.0, %v4887
        %v4889 = vpop.f32.mrf.mxu0
        %4890 = vmatprep.mubr.bf16.mxu0 0
        %4891 = vmatmul.mubr.bf16.gmra.mxu0 %v4713
        %v4892 = vpop.f32.mrf.mxu0
        %v4893 = vadd.f32 0.0, %v4892
        %v4894 = vpop.f32.mrf.mxu0
        %v4895 = vpop.f32.mrf.mxu0
        %v4896 = vpop.f32.mrf.mxu0
        %4897 = vmatprep.mubr.bf16.mxu0 0
        %4898 = vmatmul.mubr.bf16.gmra.mxu0 %v4716
        %v4899 = vpop.f32.mrf.mxu0
        %v4900 = vadd.f32 0.0, %v4899
        %v4901 = vpop.f32.mrf.mxu0
        %v4902 = vpop.f32.mrf.mxu0
        %v4903 = vadd.f32 0.0, %v4902
        %v4904 = vpop.f32.mrf.mxu0
        %4905 = vmatprep.mubr.bf16.mxu0 0
        %4906 = vmatmul.mubr.bf16.gmra.mxu0 %v4719
        %v4907 = vpop.f32.mrf.mxu0
        %v4908 = vpop.f32.mrf.mxu0
        %v4909 = vpop.f32.mrf.mxu0
        %v4910 = vadd.f32 0.0, %v4909
        %v4911 = vpop.f32.mrf.mxu0
        %4912 = vmatprep.mubr.bf16.mxu0 0
        %4913 = vmatmul.mubr.bf16.gmra.mxu0 %v4722
        %v4914 = vpop.f32.mrf.mxu0
        %v4915 = vadd.f32 0.0, %v4914
        %v4916 = vpop.f32.mrf.mxu0
        %v4917 = vpop.f32.mrf.mxu0
        %v4918 = vpop.f32.mrf.mxu0
        %4919 = vmatprep.mubr.bf16.mxu0 0
        %4920 = vmatmul.mubr.bf16.gmra.mxu0 %v4725
        %v4921 = vpop.f32.mrf.mxu0
        %v4922 = vadd.f32 0.0, %v4921
        %v4923 = vpop.f32.mrf.mxu0
        %v4924 = vpop.f32.mrf.mxu0
        %v4925 = vadd.f32 0.0, %v4924
        %v4926 = vpop.f32.mrf.mxu0
        %4927 = vmatprep.mubr.bf16.mxu0 0
        %4928 = vmatmul.mubr.bf16.gmra.mxu0 %v4728
        %v4929 = vpop.f32.mrf.mxu0
        %v4930 = vpop.f32.mrf.mxu0
        %v4931 = vpop.f32.mrf.mxu0
        %v4932 = vadd.f32 0.0, %v4931
        %v4933 = vpop.f32.mrf.mxu0
        %4934 = vmatprep.mubr.bf16.mxu0 0
        %4935 = vmatmul.mubr.bf16.gmra.mxu0 %v4731
        %v4936 = vpop.f32.mrf.mxu0
        %v4937 = vadd.f32 0.0, %v4936
        %v4938 = vpop.f32.mrf.mxu0
        %v4939 = vpop.f32.mrf.mxu0
        %v4940 = vpop.f32.mrf.mxu0
        %4941 = vdwg.mxu0
        %v4950 = vunpack.c.l.b16 %v4399
        %v4951 = vunpack.c.l.b16 %v4400
        %v4952 = vunpack.c.l.b16 %v4401
        %v4953 = vunpack.c.l.b16 %v4402
        %v4954 = vunpack.c.l.b16 %v4403
        %v4955 = vunpack.c.l.b16 %v4404
        %v4956 = vunpack.c.l.b16 %v4405
        %v4957 = vunpack.c.l.b16 %v4406
        %v4958 = vpack.c.b16 %v4951, %v4950
        %v4959 = vpack.c.b16 %v4953, %v4952
        %v4960 = vpack.c.b16 %v4955, %v4954
        %v4961 = vpack.c.b16 %v4957, %v4956
        %v4966 = vsel %vm278, %v4416, 0
        %v4968 = vsel %vm278, %v4417, 0
        %v4970 = vsel %vm278, %v4418, 0
        %v4972 = vsel %vm278, %v4419, 0
        %v4974 = vsel %vm278, %v4420, 0
        %v4976 = vsel %vm278, %v4421, 0
        %v4978 = vsel %vm278, %v4422, 0
        %v4980 = vsel %vm278, %v4423, 0
        %v4982 = vsel %vm278, %v4424, 0
        %v4984 = vsel %vm278, %v4425, 0
        %v4986 = vsel %vm278, %v4426, 0
        %v4988 = vsel %vm278, %v4427, 0
        %v4990 = vsel %vm278, %v4428, 0
        %v4992 = vsel %vm278, %v4429, 0
        %v4994 = vsel %vm278, %v4430, 0
        %v4996 = vsel %vm278, %v4431, 0
        %v4998 = vsel %vm278, %v4432, 0
        %v5000 = vsel %vm278, %v4433, 0
        %v5002 = vsel %vm278, %v4434, 0
        %v5004 = vsel %vm278, %v4435, 0
        %v5006 = vsel %vm278, %v4436, 0
        %v5008 = vsel %vm278, %v4437, 0
        %v5010 = vsel %vm278, %v4438, 0
        %v5012 = vsel %vm278, %v4439, 0
        %5014 = vmatprep.subr.bf16.mxu0 0
        %5015 = vmatpush1.bf16.msra.mxu0 0
        %5016 = vmatprep.subr.bf16.mxu0 0
        %5017 = vmatpush1.bf16.msra.mxu0 0
        %5018 = vmatprep.subr.bf16.mxu0 0
        %5019 = vmatpush1.bf16.msra.mxu0 0
        %5020 = vmatprep.subr.bf16.mxu0 0
        %5021 = vmatpush1.bf16.msra.mxu0 0
        %5022 = vmatprep.subr.bf16.mxu0 0
        %5023 = vmatpush1.bf16.msra.mxu0 %v4961
        %5024 = vmatprep.subr.bf16.mxu0 0
        %5025 = vmatpush1.bf16.msra.mxu0 %v4960
        %5026 = vmatprep.subr.bf16.mxu0 0
        %5027 = vmatpush1.bf16.msra.mxu0 %v4959
        %5028 = vmatprep.subr.bf16.mxu0 0
        %5029 = vmatpush1.bf16.msra.mxu0 %v4958
        %5030 = vmatprep.subr.bf16.mxu0 0
        %5031 = vmatpush2.bf16.msra.mxu0 0
        %5032 = vmatprep.subr.bf16.mxu0 0
        %5033 = vmatpush2.bf16.msra.mxu0 0
        %5034 = vmatprep.subr.bf16.mxu0 0
        %5035 = vmatpush2.bf16.msra.mxu0 0
        %5036 = vmatprep.subr.bf16.mxu0 0
        %5037 = vmatpush2.bf16.msra.mxu0 0
        %5038 = vmatprep.subr.bf16.mxu0 0
        %5039 = vmatpush2.bf16.msra.mxu0 0
        %5040 = vmatprep.subr.bf16.mxu0 0
        %5041 = vmatpush2.bf16.msra.mxu0 0
        %5042 = vmatprep.subr.bf16.mxu0 0
        %5043 = vmatpush2.bf16.msra.mxu0 0
        %5044 = vmatprep.subr.bf16.mxu0 0
        %5045 = vmatpush2.bf16.msra.mxu0 0
        %5046 = vmatprep.mubr.bf16.mxu0 0
        %5047 = vmatmul.mubr.bf16.gmra.mxu0 %v4966
        %v5048 = vpop.f32.mrf.mxu0
        %v5049 = vadd.f32 %v4768, %v5048
        %v5050 = vpop.f32.mrf.mxu0
        %v5051 = vpop.f32.mrf.mxu0
        %v5052 = vadd.f32 %v4771, %v5051
        %v5053 = vpop.f32.mrf.mxu0
        %5054 = vmatprep.mubr.bf16.mxu0 0
        %5055 = vmatmul.mubr.bf16.gmra.mxu0 %v4968
        %v5056 = vpop.f32.mrf.mxu0
        %v5057 = vpop.f32.mrf.mxu0
        %v5058 = vpop.f32.mrf.mxu0
        %v5059 = vadd.f32 %v4778, %v5058
        %v5060 = vpop.f32.mrf.mxu0
        %5061 = vmatprep.mubr.bf16.mxu0 0
        %5062 = vmatmul.mubr.bf16.gmra.mxu0 %v4970
        %v5063 = vpop.f32.mrf.mxu0
        %v5064 = vadd.f32 %v4783, %v5063
        %v5065 = vpop.f32.mrf.mxu0
        %v5066 = vpop.f32.mrf.mxu0
        %v5067 = vpop.f32.mrf.mxu0
        %5068 = vmatprep.mubr.bf16.mxu0 0
        %5069 = vmatmul.mubr.bf16.gmra.mxu0 %v4972
        %v5070 = vpop.f32.mrf.mxu0
        %v5071 = vadd.f32 %v4790, %v5070
        %v5072 = vpop.f32.mrf.mxu0
        %v5073 = vpop.f32.mrf.mxu0
        %v5074 = vadd.f32 %v4793, %v5073
        %v5075 = vpop.f32.mrf.mxu0
        %5076 = vmatprep.mubr.bf16.mxu0 0
        %5077 = vmatmul.mubr.bf16.gmra.mxu0 %v4974
        %v5078 = vpop.f32.mrf.mxu0
        %v5079 = vpop.f32.mrf.mxu0
        %v5080 = vpop.f32.mrf.mxu0
        %v5081 = vadd.f32 %v4800, %v5080
        %v5082 = vpop.f32.mrf.mxu0
        %5083 = vmatprep.mubr.bf16.mxu0 0
        %5084 = vmatmul.mubr.bf16.gmra.mxu0 %v4976
        %v5085 = vpop.f32.mrf.mxu0
        %v5086 = vadd.f32 %v4805, %v5085
        %v5087 = vpop.f32.mrf.mxu0
        %v5088 = vpop.f32.mrf.mxu0
        %v5089 = vpop.f32.mrf.mxu0
        %5090 = vmatprep.mubr.bf16.mxu0 0
        %5091 = vmatmul.mubr.bf16.gmra.mxu0 %v4978
        %v5092 = vpop.f32.mrf.mxu0
        %v5093 = vadd.f32 %v4812, %v5092
        %v5094 = vpop.f32.mrf.mxu0
        %v5095 = vpop.f32.mrf.mxu0
        %v5096 = vadd.f32 %v4815, %v5095
        %v5097 = vpop.f32.mrf.mxu0
        %5098 = vmatprep.mubr.bf16.mxu0 0
        %5099 = vmatmul.mubr.bf16.gmra.mxu0 %v4980
        %v5100 = vpop.f32.mrf.mxu0
        %v5101 = vpop.f32.mrf.mxu0
        %v5102 = vpop.f32.mrf.mxu0
        %v5103 = vadd.f32 %v4822, %v5102
        %v5104 = vpop.f32.mrf.mxu0
        %5105 = vmatprep.mubr.bf16.mxu0 0
        %5106 = vmatmul.mubr.bf16.gmra.mxu0 %v4982
        %v5107 = vpop.f32.mrf.mxu0
        %v5108 = vadd.f32 %v4827, %v5107
        %v5109 = vpop.f32.mrf.mxu0
        %v5110 = vpop.f32.mrf.mxu0
        %v5111 = vpop.f32.mrf.mxu0
        %5112 = vmatprep.mubr.bf16.mxu0 0
        %5113 = vmatmul.mubr.bf16.gmra.mxu0 %v4984
        %v5114 = vpop.f32.mrf.mxu0
        %v5115 = vadd.f32 %v4834, %v5114
        %v5116 = vpop.f32.mrf.mxu0
        %v5117 = vpop.f32.mrf.mxu0
        %v5118 = vadd.f32 %v4837, %v5117
        %v5119 = vpop.f32.mrf.mxu0
        %5120 = vmatprep.mubr.bf16.mxu0 0
        %5121 = vmatmul.mubr.bf16.gmra.mxu0 %v4986
        %v5122 = vpop.f32.mrf.mxu0
        %v5123 = vpop.f32.mrf.mxu0
        %v5124 = vpop.f32.mrf.mxu0
        %v5125 = vadd.f32 %v4844, %v5124
        %v5126 = vpop.f32.mrf.mxu0
        %5127 = vmatprep.mubr.bf16.mxu0 0
        %5128 = vmatmul.mubr.bf16.gmra.mxu0 %v4988
        %v5129 = vpop.f32.mrf.mxu0
        %v5130 = vadd.f32 %v4849, %v5129
        %v5131 = vpop.f32.mrf.mxu0
        %v5132 = vpop.f32.mrf.mxu0
        %v5133 = vpop.f32.mrf.mxu0
        %5134 = vmatprep.mubr.bf16.mxu0 0
        %5135 = vmatmul.mubr.bf16.gmra.mxu0 %v4990
        %v5136 = vpop.f32.mrf.mxu0
        %v5137 = vadd.f32 %v4856, %v5136
        %v5138 = vpop.f32.mrf.mxu0
        %v5139 = vpop.f32.mrf.mxu0
        %v5140 = vadd.f32 %v4859, %v5139
        %v5141 = vpop.f32.mrf.mxu0
        %5142 = vmatprep.mubr.bf16.mxu0 0
        %5143 = vmatmul.mubr.bf16.gmra.mxu0 %v4992
        %v5144 = vpop.f32.mrf.mxu0
        %v5145 = vpop.f32.mrf.mxu0
        %v5146 = vpop.f32.mrf.mxu0
        %v5147 = vadd.f32 %v4866, %v5146
        %v5148 = vpop.f32.mrf.mxu0
        %5149 = vmatprep.mubr.bf16.mxu0 0
        %5150 = vmatmul.mubr.bf16.gmra.mxu0 %v4994
        %v5151 = vpop.f32.mrf.mxu0
        %v5152 = vadd.f32 %v4871, %v5151
        %v5153 = vpop.f32.mrf.mxu0
        %v5154 = vpop.f32.mrf.mxu0
        %v5155 = vpop.f32.mrf.mxu0
        %5156 = vmatprep.mubr.bf16.mxu0 0
        %5157 = vmatmul.mubr.bf16.gmra.mxu0 %v4996
        %v5158 = vpop.f32.mrf.mxu0
        %v5159 = vadd.f32 %v4878, %v5158
        %v5160 = vpop.f32.mrf.mxu0
        %v5161 = vpop.f32.mrf.mxu0
        %v5162 = vadd.f32 %v4881, %v5161
        %v5163 = vpop.f32.mrf.mxu0
        %5164 = vmatprep.mubr.bf16.mxu0 0
        %5165 = vmatmul.mubr.bf16.gmra.mxu0 %v4998
        %v5166 = vpop.f32.mrf.mxu0
        %v5167 = vpop.f32.mrf.mxu0
        %v5168 = vpop.f32.mrf.mxu0
        %v5169 = vadd.f32 %v4888, %v5168
        %v5170 = vpop.f32.mrf.mxu0
        %5171 = vmatprep.mubr.bf16.mxu0 0
        %5172 = vmatmul.mubr.bf16.gmra.mxu0 %v5000
        %v5173 = vpop.f32.mrf.mxu0
        %v5174 = vadd.f32 %v4893, %v5173
        %v5175 = vpop.f32.mrf.mxu0
        %v5176 = vpop.f32.mrf.mxu0
        %v5177 = vpop.f32.mrf.mxu0
        %5178 = vmatprep.mubr.bf16.mxu0 0
        %5179 = vmatmul.mubr.bf16.gmra.mxu0 %v5002
        %v5180 = vpop.f32.mrf.mxu0
        %v5181 = vadd.f32 %v4900, %v5180
        %v5182 = vpop.f32.mrf.mxu0
        %v5183 = vpop.f32.mrf.mxu0
        %v5184 = vadd.f32 %v4903, %v5183
        %v5185 = vpop.f32.mrf.mxu0
        %5186 = vmatprep.mubr.bf16.mxu0 0
        %5187 = vmatmul.mubr.bf16.gmra.mxu0 %v5004
        %v5188 = vpop.f32.mrf.mxu0
        %v5189 = vpop.f32.mrf.mxu0
        %v5190 = vpop.f32.mrf.mxu0
        %v5191 = vadd.f32 %v4910, %v5190
        %v5192 = vpop.f32.mrf.mxu0
        %5193 = vmatprep.mubr.bf16.mxu0 0
        %5194 = vmatmul.mubr.bf16.gmra.mxu0 %v5006
        %v5195 = vpop.f32.mrf.mxu0
        %v5196 = vadd.f32 %v4915, %v5195
        %v5197 = vpop.f32.mrf.mxu0
        %v5198 = vpop.f32.mrf.mxu0
        %v5199 = vpop.f32.mrf.mxu0
        %5200 = vmatprep.mubr.bf16.mxu0 0
        %5201 = vmatmul.mubr.bf16.gmra.mxu0 %v5008
        %v5202 = vpop.f32.mrf.mxu0
        %v5203 = vadd.f32 %v4922, %v5202
        %v5204 = vpop.f32.mrf.mxu0
        %v5205 = vpop.f32.mrf.mxu0
        %v5206 = vadd.f32 %v4925, %v5205
        %v5207 = vpop.f32.mrf.mxu0
        %5208 = vmatprep.mubr.bf16.mxu0 0
        %5209 = vmatmul.mubr.bf16.gmra.mxu0 %v5010
        %v5210 = vpop.f32.mrf.mxu0
        %v5211 = vpop.f32.mrf.mxu0
        %v5212 = vpop.f32.mrf.mxu0
        %v5213 = vadd.f32 %v4932, %v5212
        %v5214 = vpop.f32.mrf.mxu0
        %5215 = vmatprep.mubr.bf16.mxu0 0
        %5216 = vmatmul.mubr.bf16.gmra.mxu0 %v5012
        %v5217 = vpop.f32.mrf.mxu0
        %v5218 = vadd.f32 %v4937, %v5217
        %v5219 = vpop.f32.mrf.mxu0
        %v5220 = vpop.f32.mrf.mxu0
        %v5221 = vpop.f32.mrf.mxu0
        %5222 = vdwg.mxu0
        %s5223 = scalar_lea.vmem %s4, 64
        %v5224 = vld [vmem:[%s5223] sm:$0xf]
        %v5225 = vld [vmem:[%s5223 + $0x4] sm:$0xf]
        %v5226 = vld [vmem:[%s5223 + $0x8] sm:$0xf]
        %v5227 = vld [vmem:[%s5223 + $0xc] sm:$0xf]
        %v5228 = vld [vmem:[%s5223 + $0x10] sm:$0xf]
        %v5229 = vld [vmem:[%s5223 + $0x14] sm:$0xf]
        %v5230 = vld [vmem:[%s5223 + $0x18] sm:$0xf]
        %v5231 = vld [vmem:[%s5223 + $0x1c] sm:$0xf]
        %v5232 = vrot.slane %v4416, 1
        %v5233 = vrot.slane %v4417, 1
        %v5234 = vsel %vm1435, %v5232, %v5233
        %v5235 = vrot.slane %v4418, 1
        %v5236 = vsel %vm1435, %v5233, %v5235
        %v5237 = vrot.slane %v4419, 1
        %v5238 = vsel %vm1435, %v5235, %v5237
        %v5239 = vrot.slane %v4420, 1
        %v5240 = vsel %vm1435, %v5237, %v5239
        %v5241 = vrot.slane %v4421, 1
        %v5242 = vsel %vm1435, %v5239, %v5241
        %v5243 = vrot.slane %v4422, 1
        %v5244 = vsel %vm1435, %v5241, %v5243
        %v5245 = vrot.slane %v4423, 1
        %v5246 = vsel %vm1435, %v5243, %v5245
        %v5247 = vrot.slane %v4424, 1
        %v5248 = vsel %vm1435, %v5245, %v5247
        %v5249 = vrot.slane %v4425, 1
        %v5250 = vsel %vm1435, %v5247, %v5249
        %v5251 = vrot.slane %v4426, 1
        %v5252 = vsel %vm1435, %v5249, %v5251
        %v5253 = vrot.slane %v4427, 1
        %v5254 = vsel %vm1435, %v5251, %v5253
        %v5255 = vrot.slane %v4428, 1
        %v5256 = vsel %vm1435, %v5253, %v5255
        %v5257 = vrot.slane %v4429, 1
        %v5258 = vsel %vm1435, %v5255, %v5257
        %v5259 = vrot.slane %v4430, 1
        %v5260 = vsel %vm1435, %v5257, %v5259
        %v5261 = vrot.slane %v4431, 1
        %v5262 = vsel %vm1435, %v5259, %v5261
        %v5263 = vrot.slane %v4432, 1
        %v5264 = vsel %vm1435, %v5261, %v5263
        %v5265 = vrot.slane %v4433, 1
        %v5266 = vsel %vm1435, %v5263, %v5265
        %v5267 = vrot.slane %v4434, 1
        %v5268 = vsel %vm1435, %v5265, %v5267
        %v5269 = vrot.slane %v4435, 1
        %v5270 = vsel %vm1435, %v5267, %v5269
        %v5271 = vrot.slane %v4436, 1
        %v5272 = vsel %vm1435, %v5269, %v5271
        %v5273 = vrot.slane %v4437, 1
        %v5274 = vsel %vm1435, %v5271, %v5273
        %v5275 = vrot.slane %v4438, 1
        %v5276 = vsel %vm1435, %v5273, %v5275
        %v5277 = vrot.slane %v4439, 1
        %v5278 = vsel %vm1435, %v5275, %v5277
        %v5279 = vrot.slane %v4440, 1
        %v5280 = vsel %vm1435, %v5277, %v5279
        %v5289 = vunpack.c.l.b16 %v5224
        %v5290 = vunpack.c.l.b16 %v5225
        %v5291 = vunpack.c.l.b16 %v5226
        %v5292 = vunpack.c.l.b16 %v5227
        %v5293 = vunpack.c.l.b16 %v5228
        %v5294 = vunpack.c.l.b16 %v5229
        %v5295 = vunpack.c.l.b16 %v5230
        %v5296 = vunpack.c.l.b16 %v5231
        %v5297 = vpack.c.b16 %v5290, %v5289
        %v5298 = vpack.c.b16 %v5292, %v5291
        %v5299 = vpack.c.b16 %v5294, %v5293
        %v5300 = vpack.c.b16 %v5296, %v5295
        %v5306 = vsel %vm278, %v5234, 0
        %v5309 = vsel %vm278, %v5236, 0
        %v5312 = vsel %vm278, %v5238, 0
        %v5315 = vsel %vm278, %v5240, 0
        %v5318 = vsel %vm278, %v5242, 0
        %v5321 = vsel %vm278, %v5244, 0
        %v5324 = vsel %vm278, %v5246, 0
        %v5327 = vsel %vm278, %v5248, 0
        %v5330 = vsel %vm278, %v5250, 0
        %v5333 = vsel %vm278, %v5252, 0
        %v5336 = vsel %vm278, %v5254, 0
        %v5339 = vsel %vm278, %v5256, 0
        %v5342 = vsel %vm278, %v5258, 0
        %v5345 = vsel %vm278, %v5260, 0
        %v5348 = vsel %vm278, %v5262, 0
        %v5351 = vsel %vm278, %v5264, 0
        %v5354 = vsel %vm278, %v5266, 0
        %v5357 = vsel %vm278, %v5268, 0
        %v5360 = vsel %vm278, %v5270, 0
        %v5363 = vsel %vm278, %v5272, 0
        %v5366 = vsel %vm278, %v5274, 0
        %v5369 = vsel %vm278, %v5276, 0
        %v5372 = vsel %vm278, %v5278, 0
        %v5375 = vsel %vm278, %v5280, 0
        %5377 = vmatprep.subr.bf16.mxu0 0
        %5378 = vmatpush1.bf16.msra.mxu0 0
        %5379 = vmatprep.subr.bf16.mxu0 0
        %5380 = vmatpush1.bf16.msra.mxu0 0
        %5381 = vmatprep.subr.bf16.mxu0 0
        %5382 = vmatpush1.bf16.msra.mxu0 0
        %5383 = vmatprep.subr.bf16.mxu0 0
        %5384 = vmatpush1.bf16.msra.mxu0 0
        %5385 = vmatprep.subr.bf16.mxu0 0
        %5386 = vmatpush1.bf16.msra.mxu0 %v5300
        %5387 = vmatprep.subr.bf16.mxu0 0
        %5388 = vmatpush1.bf16.msra.mxu0 %v5299
        %5389 = vmatprep.subr.bf16.mxu0 0
        %5390 = vmatpush1.bf16.msra.mxu0 %v5298
        %5391 = vmatprep.subr.bf16.mxu0 0
        %5392 = vmatpush1.bf16.msra.mxu0 %v5297
        %5393 = vmatprep.subr.bf16.mxu0 0
        %5394 = vmatpush2.bf16.msra.mxu0 0
        %5395 = vmatprep.subr.bf16.mxu0 0
        %5396 = vmatpush2.bf16.msra.mxu0 0
        %5397 = vmatprep.subr.bf16.mxu0 0
        %5398 = vmatpush2.bf16.msra.mxu0 0
        %5399 = vmatprep.subr.bf16.mxu0 0
        %5400 = vmatpush2.bf16.msra.mxu0 0
        %5401 = vmatprep.subr.bf16.mxu0 0
        %5402 = vmatpush2.bf16.msra.mxu0 0
        %5403 = vmatprep.subr.bf16.mxu0 0
        %5404 = vmatpush2.bf16.msra.mxu0 0
        %5405 = vmatprep.subr.bf16.mxu0 0
        %5406 = vmatpush2.bf16.msra.mxu0 0
        %5407 = vmatprep.subr.bf16.mxu0 0
        %5408 = vmatpush2.bf16.msra.mxu0 0
        %5409 = vmatprep.mubr.bf16.mxu0 0
        %5410 = vmatmul.mubr.bf16.gmra.mxu0 %v5306
        %v5411 = vpop.f32.mrf.mxu0
        %v5412 = vadd.f32 0.0, %v5411
        %v5413 = vpop.f32.mrf.mxu0
        %v5414 = vpop.f32.mrf.mxu0
        %v5415 = vadd.f32 0.0, %v5414
        %v5416 = vpop.f32.mrf.mxu0
        %5417 = vmatprep.mubr.bf16.mxu0 0
        %5418 = vmatmul.mubr.bf16.gmra.mxu0 %v5309
        %v5419 = vpop.f32.mrf.mxu0
        %v5420 = vpop.f32.mrf.mxu0
        %v5421 = vpop.f32.mrf.mxu0
        %v5422 = vadd.f32 0.0, %v5421
        %v5423 = vpop.f32.mrf.mxu0
        %5424 = vmatprep.mubr.bf16.mxu0 0
        %5425 = vmatmul.mubr.bf16.gmra.mxu0 %v5312
        %v5426 = vpop.f32.mrf.mxu0
        %v5427 = vadd.f32 0.0, %v5426
        %v5428 = vpop.f32.mrf.mxu0
        %v5429 = vpop.f32.mrf.mxu0
        %v5430 = vpop.f32.mrf.mxu0
        %5431 = vmatprep.mubr.bf16.mxu0 0
        %5432 = vmatmul.mubr.bf16.gmra.mxu0 %v5315
        %v5433 = vpop.f32.mrf.mxu0
        %v5434 = vadd.f32 0.0, %v5433
        %v5435 = vpop.f32.mrf.mxu0
        %v5436 = vpop.f32.mrf.mxu0
        %v5437 = vadd.f32 0.0, %v5436
        %v5438 = vpop.f32.mrf.mxu0
        %5439 = vmatprep.mubr.bf16.mxu0 0
        %5440 = vmatmul.mubr.bf16.gmra.mxu0 %v5318
        %v5441 = vpop.f32.mrf.mxu0
        %v5442 = vpop.f32.mrf.mxu0
        %v5443 = vpop.f32.mrf.mxu0
        %v5444 = vadd.f32 0.0, %v5443
        %v5445 = vpop.f32.mrf.mxu0
        %5446 = vmatprep.mubr.bf16.mxu0 0
        %5447 = vmatmul.mubr.bf16.gmra.mxu0 %v5321
        %v5448 = vpop.f32.mrf.mxu0
        %v5449 = vadd.f32 0.0, %v5448
        %v5450 = vpop.f32.mrf.mxu0
        %v5451 = vpop.f32.mrf.mxu0
        %v5452 = vpop.f32.mrf.mxu0
        %5453 = vmatprep.mubr.bf16.mxu0 0
        %5454 = vmatmul.mubr.bf16.gmra.mxu0 %v5324
        %v5455 = vpop.f32.mrf.mxu0
        %v5456 = vadd.f32 0.0, %v5455
        %v5457 = vpop.f32.mrf.mxu0
        %v5458 = vpop.f32.mrf.mxu0
        %v5459 = vadd.f32 0.0, %v5458
        %v5460 = vpop.f32.mrf.mxu0
        %5461 = vmatprep.mubr.bf16.mxu0 0
        %5462 = vmatmul.mubr.bf16.gmra.mxu0 %v5327
        %v5463 = vpop.f32.mrf.mxu0
        %v5464 = vpop.f32.mrf.mxu0
        %v5465 = vpop.f32.mrf.mxu0
        %v5466 = vadd.f32 0.0, %v5465
        %v5467 = vpop.f32.mrf.mxu0
        %5468 = vmatprep.mubr.bf16.mxu0 0
        %5469 = vmatmul.mubr.bf16.gmra.mxu0 %v5330
        %v5470 = vpop.f32.mrf.mxu0
        %v5471 = vadd.f32 0.0, %v5470
        %v5472 = vpop.f32.mrf.mxu0
        %v5473 = vpop.f32.mrf.mxu0
        %v5474 = vpop.f32.mrf.mxu0
        %5475 = vmatprep.mubr.bf16.mxu0 0
        %5476 = vmatmul.mubr.bf16.gmra.mxu0 %v5333
        %v5477 = vpop.f32.mrf.mxu0
        %v5478 = vadd.f32 0.0, %v5477
        %v5479 = vpop.f32.mrf.mxu0
        %v5480 = vpop.f32.mrf.mxu0
        %v5481 = vadd.f32 0.0, %v5480
        %v5482 = vpop.f32.mrf.mxu0
        %5483 = vmatprep.mubr.bf16.mxu0 0
        %5484 = vmatmul.mubr.bf16.gmra.mxu0 %v5336
        %v5485 = vpop.f32.mrf.mxu0
        %v5486 = vpop.f32.mrf.mxu0
        %v5487 = vpop.f32.mrf.mxu0
        %v5488 = vadd.f32 0.0, %v5487
        %v5489 = vpop.f32.mrf.mxu0
        %5490 = vmatprep.mubr.bf16.mxu0 0
        %5491 = vmatmul.mubr.bf16.gmra.mxu0 %v5339
        %v5492 = vpop.f32.mrf.mxu0
        %v5493 = vadd.f32 0.0, %v5492
        %v5494 = vpop.f32.mrf.mxu0
        %v5495 = vpop.f32.mrf.mxu0
        %v5496 = vpop.f32.mrf.mxu0
        %5497 = vmatprep.mubr.bf16.mxu0 0
        %5498 = vmatmul.mubr.bf16.gmra.mxu0 %v5342
        %v5499 = vpop.f32.mrf.mxu0
        %v5500 = vadd.f32 0.0, %v5499
        %v5501 = vpop.f32.mrf.mxu0
        %v5502 = vpop.f32.mrf.mxu0
        %v5503 = vadd.f32 0.0, %v5502
        %v5504 = vpop.f32.mrf.mxu0
        %5505 = vmatprep.mubr.bf16.mxu0 0
        %5506 = vmatmul.mubr.bf16.gmra.mxu0 %v5345
        %v5507 = vpop.f32.mrf.mxu0
        %v5508 = vpop.f32.mrf.mxu0
        %v5509 = vpop.f32.mrf.mxu0
        %v5510 = vadd.f32 0.0, %v5509
        %v5511 = vpop.f32.mrf.mxu0
        %5512 = vmatprep.mubr.bf16.mxu0 0
        %5513 = vmatmul.mubr.bf16.gmra.mxu0 %v5348
        %v5514 = vpop.f32.mrf.mxu0
        %v5515 = vadd.f32 0.0, %v5514
        %v5516 = vpop.f32.mrf.mxu0
        %v5517 = vpop.f32.mrf.mxu0
        %v5518 = vpop.f32.mrf.mxu0
        %5519 = vmatprep.mubr.bf16.mxu0 0
        %5520 = vmatmul.mubr.bf16.gmra.mxu0 %v5351
        %v5521 = vpop.f32.mrf.mxu0
        %v5522 = vadd.f32 0.0, %v5521
        %v5523 = vpop.f32.mrf.mxu0
        %v5524 = vpop.f32.mrf.mxu0
        %v5525 = vadd.f32 0.0, %v5524
        %v5526 = vpop.f32.mrf.mxu0
        %5527 = vmatprep.mubr.bf16.mxu0 0
        %5528 = vmatmul.mubr.bf16.gmra.mxu0 %v5354
        %v5529 = vpop.f32.mrf.mxu0
        %v5530 = vpop.f32.mrf.mxu0
        %v5531 = vpop.f32.mrf.mxu0
        %v5532 = vadd.f32 0.0, %v5531
        %v5533 = vpop.f32.mrf.mxu0
        %5534 = vmatprep.mubr.bf16.mxu0 0
        %5535 = vmatmul.mubr.bf16.gmra.mxu0 %v5357
        %v5536 = vpop.f32.mrf.mxu0
        %v5537 = vadd.f32 0.0, %v5536
        %v5538 = vpop.f32.mrf.mxu0
        %v5539 = vpop.f32.mrf.mxu0
        %v5540 = vpop.f32.mrf.mxu0
        %5541 = vmatprep.mubr.bf16.mxu0 0
        %5542 = vmatmul.mubr.bf16.gmra.mxu0 %v5360
        %v5543 = vpop.f32.mrf.mxu0
        %v5544 = vadd.f32 0.0, %v5543
        %v5545 = vpop.f32.mrf.mxu0
        %v5546 = vpop.f32.mrf.mxu0
        %v5547 = vadd.f32 0.0, %v5546
        %v5548 = vpop.f32.mrf.mxu0
        %5549 = vmatprep.mubr.bf16.mxu0 0
        %5550 = vmatmul.mubr.bf16.gmra.mxu0 %v5363
        %v5551 = vpop.f32.mrf.mxu0
        %v5552 = vpop.f32.mrf.mxu0
        %v5553 = vpop.f32.mrf.mxu0
        %v5554 = vadd.f32 0.0, %v5553
        %v5555 = vpop.f32.mrf.mxu0
        %5556 = vmatprep.mubr.bf16.mxu0 0
        %5557 = vmatmul.mubr.bf16.gmra.mxu0 %v5366
        %v5558 = vpop.f32.mrf.mxu0
        %v5559 = vadd.f32 0.0, %v5558
        %v5560 = vpop.f32.mrf.mxu0
        %v5561 = vpop.f32.mrf.mxu0
        %v5562 = vpop.f32.mrf.mxu0
        %5563 = vmatprep.mubr.bf16.mxu0 0
        %5564 = vmatmul.mubr.bf16.gmra.mxu0 %v5369
        %v5565 = vpop.f32.mrf.mxu0
        %v5566 = vadd.f32 0.0, %v5565
        %v5567 = vpop.f32.mrf.mxu0
        %v5568 = vpop.f32.mrf.mxu0
        %v5569 = vadd.f32 0.0, %v5568
        %v5570 = vpop.f32.mrf.mxu0
        %5571 = vmatprep.mubr.bf16.mxu0 0
        %5572 = vmatmul.mubr.bf16.gmra.mxu0 %v5372
        %v5573 = vpop.f32.mrf.mxu0
        %v5574 = vpop.f32.mrf.mxu0
        %v5575 = vpop.f32.mrf.mxu0
        %v5576 = vadd.f32 0.0, %v5575
        %v5577 = vpop.f32.mrf.mxu0
        %5578 = vmatprep.mubr.bf16.mxu0 0
        %5579 = vmatmul.mubr.bf16.gmra.mxu0 %v5375
        %v5580 = vpop.f32.mrf.mxu0
        %v5581 = vadd.f32 0.0, %v5580
        %v5582 = vpop.f32.mrf.mxu0
        %v5583 = vpop.f32.mrf.mxu0
        %v5584 = vpop.f32.mrf.mxu0
        %5585 = vdwg.mxu0
        %v5586 = vadd.f32 %v5049, %v5412
        %v5587 = vadd.f32 %v5052, %v5415
        %v5588 = vadd.f32 %v5059, %v5422
        %v5589 = vadd.f32 %v5064, %v5427
        %v5590 = vadd.f32 %v5071, %v5434
        %v5591 = vadd.f32 %v5074, %v5437
        %v5592 = vadd.f32 %v5081, %v5444
        %v5593 = vadd.f32 %v5086, %v5449
        %v5594 = vadd.f32 %v5093, %v5456
        %v5595 = vadd.f32 %v5096, %v5459
        %v5596 = vadd.f32 %v5103, %v5466
        %v5597 = vadd.f32 %v5108, %v5471
        %v5598 = vadd.f32 %v5115, %v5478
        %v5599 = vadd.f32 %v5118, %v5481
        %v5600 = vadd.f32 %v5125, %v5488
        %v5601 = vadd.f32 %v5130, %v5493
        %v5602 = vadd.f32 %v5137, %v5500
        %v5603 = vadd.f32 %v5140, %v5503
        %v5604 = vadd.f32 %v5147, %v5510
        %v5605 = vadd.f32 %v5152, %v5515
        %v5606 = vadd.f32 %v5159, %v5522
        %v5607 = vadd.f32 %v5162, %v5525
        %v5608 = vadd.f32 %v5169, %v5532
        %v5609 = vadd.f32 %v5174, %v5537
        %v5610 = vadd.f32 %v5181, %v5544
        %v5611 = vadd.f32 %v5184, %v5547
        %v5612 = vadd.f32 %v5191, %v5554
        %v5613 = vadd.f32 %v5196, %v5559
        %v5614 = vadd.f32 %v5203, %v5566
        %v5615 = vadd.f32 %v5206, %v5569
        %v5616 = vadd.f32 %v5213, %v5576
        %v5617 = vadd.f32 %v5218, %v5581
        %s5618 = scalar_lea.vmem %s4, 96
        %v5619 = vld [vmem:[%s5618] sm:$0xf]
        %v5620 = vld [vmem:[%s5618 + $0x4] sm:$0xf]
        %v5621 = vld [vmem:[%s5618 + $0x8] sm:$0xf]
        %v5622 = vld [vmem:[%s5618 + $0xc] sm:$0xf]
        %v5623 = vld [vmem:[%s5618 + $0x10] sm:$0xf]
        %v5624 = vld [vmem:[%s5618 + $0x14] sm:$0xf]
        %v5625 = vld [vmem:[%s5618 + $0x18] sm:$0xf]
        %v5626 = vld [vmem:[%s5618 + $0x1c] sm:$0xf]
        %v5627 = vpack.c.b16 %v4348, %v4347
        %v5628 = vpack.c.b16 %v4350, %v4349
        %v5629 = vpack.c.b16 %v4352, %v4351
        %v5630 = vpack.c.b16 %v4354, %v4353
        %v5631 = vpack.c.b16 %v4356, %v4355
        %v5632 = vpack.c.b16 %v4358, %v4357
        %v5633 = vpack.c.b16 %v4360, %v4359
        %v5634 = vpack.c.b16 %v4362, %v4361
        %v5635 = vpack.c.b16 %v4364, %v4363
        %v5636 = vpack.c.b16 %v4366, %v4365
        %v5637 = vpack.c.b16 %v4368, %v4367
        %v5638 = vpack.c.b16 %v4370, %v4369
        %v5639 = vpack.c.b16 %v4372, %v4371
        %v5640 = vpack.c.b16 %v4374, %v4373
        %v5641 = vpack.c.b16 %v4376, %v4375
        %v5642 = vpack.c.b16 %v4378, %v4377
        %v5643 = vpack.c.b16 %v4380, %v4379
        %v5644 = vpack.c.b16 %v4382, %v4381
        %v5645 = vpack.c.b16 %v4384, %v4383
        %v5646 = vpack.c.b16 %v4386, %v4385
        %v5647 = vpack.c.b16 %v4388, %v4387
        %v5648 = vpack.c.b16 %v4390, %v4389
        %v5649 = vpack.c.b16 %v4392, %v4391
        %v5650 = vpack.c.b16 %v4394, %v4393
        %v5659 = vunpack.c.l.b16 %v5619
        %v5660 = vunpack.c.l.b16 %v5620
        %v5661 = vunpack.c.l.b16 %v5621
        %v5662 = vunpack.c.l.b16 %v5622
        %v5663 = vunpack.c.l.b16 %v5623
        %v5664 = vunpack.c.l.b16 %v5624
        %v5665 = vunpack.c.l.b16 %v5625
        %v5666 = vunpack.c.l.b16 %v5626
        %v5667 = vpack.c.b16 %v5660, %v5659
        %v5668 = vpack.c.b16 %v5662, %v5661
        %v5669 = vpack.c.b16 %v5664, %v5663
        %v5670 = vpack.c.b16 %v5666, %v5665
        %v5676 = vsel %vm278, %v5627, 0
        %v5679 = vsel %vm278, %v5628, 0
        %v5682 = vsel %vm278, %v5629, 0
        %v5685 = vsel %vm278, %v5630, 0
        %v5688 = vsel %vm278, %v5631, 0
        %v5691 = vsel %vm278, %v5632, 0
        %v5694 = vsel %vm278, %v5633, 0
        %v5697 = vsel %vm278, %v5634, 0
        %v5700 = vsel %vm278, %v5635, 0
        %v5703 = vsel %vm278, %v5636, 0
        %v5706 = vsel %vm278, %v5637, 0
        %v5709 = vsel %vm278, %v5638, 0
        %v5712 = vsel %vm278, %v5639, 0
        %v5715 = vsel %vm278, %v5640, 0
        %v5718 = vsel %vm278, %v5641, 0
        %v5721 = vsel %vm278, %v5642, 0
        %v5724 = vsel %vm278, %v5643, 0
        %v5727 = vsel %vm278, %v5644, 0
        %v5730 = vsel %vm278, %v5645, 0
        %v5733 = vsel %vm278, %v5646, 0
        %v5736 = vsel %vm278, %v5647, 0
        %v5739 = vsel %vm278, %v5648, 0
        %v5742 = vsel %vm278, %v5649, 0
        %v5745 = vsel %vm278, %v5650, 0
        %5747 = vmatprep.subr.bf16.mxu0 0
        %5748 = vmatpush1.bf16.msra.mxu0 0
        %5749 = vmatprep.subr.bf16.mxu0 0
        %5750 = vmatpush1.bf16.msra.mxu0 0
        %5751 = vmatprep.subr.bf16.mxu0 0
        %5752 = vmatpush1.bf16.msra.mxu0 0
        %5753 = vmatprep.subr.bf16.mxu0 0
        %5754 = vmatpush1.bf16.msra.mxu0 0
        %5755 = vmatprep.subr.bf16.mxu0 0
        %5756 = vmatpush1.bf16.msra.mxu0 %v5670
        %5757 = vmatprep.subr.bf16.mxu0 0
        %5758 = vmatpush1.bf16.msra.mxu0 %v5669
        %5759 = vmatprep.subr.bf16.mxu0 0
        %5760 = vmatpush1.bf16.msra.mxu0 %v5668
        %5761 = vmatprep.subr.bf16.mxu0 0
        %5762 = vmatpush1.bf16.msra.mxu0 %v5667
        %5763 = vmatprep.subr.bf16.mxu0 0
        %5764 = vmatpush2.bf16.msra.mxu0 0
        %5765 = vmatprep.subr.bf16.mxu0 0
        %5766 = vmatpush2.bf16.msra.mxu0 0
        %5767 = vmatprep.subr.bf16.mxu0 0
        %5768 = vmatpush2.bf16.msra.mxu0 0
        %5769 = vmatprep.subr.bf16.mxu0 0
        %5770 = vmatpush2.bf16.msra.mxu0 0
        %5771 = vmatprep.subr.bf16.mxu0 0
        %5772 = vmatpush2.bf16.msra.mxu0 0
        %5773 = vmatprep.subr.bf16.mxu0 0
        %5774 = vmatpush2.bf16.msra.mxu0 0
        %5775 = vmatprep.subr.bf16.mxu0 0
        %5776 = vmatpush2.bf16.msra.mxu0 0
        %5777 = vmatprep.subr.bf16.mxu0 0
        %5778 = vmatpush2.bf16.msra.mxu0 0
        %5779 = vmatprep.mubr.bf16.mxu0 0
        %5780 = vmatmul.mubr.bf16.gmra.mxu0 %v5676
        %v5781 = vpop.f32.mrf.mxu0
        %v5782 = vadd.f32 0.0, %v5781
        %v5783 = vpop.f32.mrf.mxu0
        %v5784 = vpop.f32.mrf.mxu0
        %v5785 = vadd.f32 0.0, %v5784
        %v5786 = vpop.f32.mrf.mxu0
        %5787 = vmatprep.mubr.bf16.mxu0 0
        %5788 = vmatmul.mubr.bf16.gmra.mxu0 %v5679
        %v5789 = vpop.f32.mrf.mxu0
        %v5790 = vpop.f32.mrf.mxu0
        %v5791 = vpop.f32.mrf.mxu0
        %v5792 = vadd.f32 0.0, %v5791
        %v5793 = vpop.f32.mrf.mxu0
        %5794 = vmatprep.mubr.bf16.mxu0 0
        %5795 = vmatmul.mubr.bf16.gmra.mxu0 %v5682
        %v5796 = vpop.f32.mrf.mxu0
        %v5797 = vadd.f32 0.0, %v5796
        %v5798 = vpop.f32.mrf.mxu0
        %v5799 = vpop.f32.mrf.mxu0
        %v5800 = vpop.f32.mrf.mxu0
        %5801 = vmatprep.mubr.bf16.mxu0 0
        %5802 = vmatmul.mubr.bf16.gmra.mxu0 %v5685
        %v5803 = vpop.f32.mrf.mxu0
        %v5804 = vadd.f32 0.0, %v5803
        %v5805 = vpop.f32.mrf.mxu0
        %v5806 = vpop.f32.mrf.mxu0
        %v5807 = vadd.f32 0.0, %v5806
        %v5808 = vpop.f32.mrf.mxu0
        %5809 = vmatprep.mubr.bf16.mxu0 0
        %5810 = vmatmul.mubr.bf16.gmra.mxu0 %v5688
        %v5811 = vpop.f32.mrf.mxu0
        %v5812 = vpop.f32.mrf.mxu0
        %v5813 = vpop.f32.mrf.mxu0
        %v5814 = vadd.f32 0.0, %v5813
        %v5815 = vpop.f32.mrf.mxu0
        %5816 = vmatprep.mubr.bf16.mxu0 0
        %5817 = vmatmul.mubr.bf16.gmra.mxu0 %v5691
        %v5818 = vpop.f32.mrf.mxu0
        %v5819 = vadd.f32 0.0, %v5818
        %v5820 = vpop.f32.mrf.mxu0
        %v5821 = vpop.f32.mrf.mxu0
        %v5822 = vpop.f32.mrf.mxu0
        %5823 = vmatprep.mubr.bf16.mxu0 0
        %5824 = vmatmul.mubr.bf16.gmra.mxu0 %v5694
        %v5825 = vpop.f32.mrf.mxu0
        %v5826 = vadd.f32 0.0, %v5825
        %v5827 = vpop.f32.mrf.mxu0
        %v5828 = vpop.f32.mrf.mxu0
        %v5829 = vadd.f32 0.0, %v5828
        %v5830 = vpop.f32.mrf.mxu0
        %5831 = vmatprep.mubr.bf16.mxu0 0
        %5832 = vmatmul.mubr.bf16.gmra.mxu0 %v5697
        %v5833 = vpop.f32.mrf.mxu0
        %v5834 = vpop.f32.mrf.mxu0
        %v5835 = vpop.f32.mrf.mxu0
        %v5836 = vadd.f32 0.0, %v5835
        %v5837 = vpop.f32.mrf.mxu0
        %5838 = vmatprep.mubr.bf16.mxu0 0
        %5839 = vmatmul.mubr.bf16.gmra.mxu0 %v5700
        %v5840 = vpop.f32.mrf.mxu0
        %v5841 = vadd.f32 0.0, %v5840
        %v5842 = vpop.f32.mrf.mxu0
        %v5843 = vpop.f32.mrf.mxu0
        %v5844 = vpop.f32.mrf.mxu0
        %5845 = vmatprep.mubr.bf16.mxu0 0
        %5846 = vmatmul.mubr.bf16.gmra.mxu0 %v5703
        %v5847 = vpop.f32.mrf.mxu0
        %v5848 = vadd.f32 0.0, %v5847
        %v5849 = vpop.f32.mrf.mxu0
        %v5850 = vpop.f32.mrf.mxu0
        %v5851 = vadd.f32 0.0, %v5850
        %v5852 = vpop.f32.mrf.mxu0
        %5853 = vmatprep.mubr.bf16.mxu0 0
        %5854 = vmatmul.mubr.bf16.gmra.mxu0 %v5706
        %v5855 = vpop.f32.mrf.mxu0
        %v5856 = vpop.f32.mrf.mxu0
        %v5857 = vpop.f32.mrf.mxu0
        %v5858 = vadd.f32 0.0, %v5857
        %v5859 = vpop.f32.mrf.mxu0
        %5860 = vmatprep.mubr.bf16.mxu0 0
        %5861 = vmatmul.mubr.bf16.gmra.mxu0 %v5709
        %v5862 = vpop.f32.mrf.mxu0
        %v5863 = vadd.f32 0.0, %v5862
        %v5864 = vpop.f32.mrf.mxu0
        %v5865 = vpop.f32.mrf.mxu0
        %v5866 = vpop.f32.mrf.mxu0
        %5867 = vmatprep.mubr.bf16.mxu0 0
        %5868 = vmatmul.mubr.bf16.gmra.mxu0 %v5712
        %v5869 = vpop.f32.mrf.mxu0
        %v5870 = vadd.f32 0.0, %v5869
        %v5871 = vpop.f32.mrf.mxu0
        %v5872 = vpop.f32.mrf.mxu0
        %v5873 = vadd.f32 0.0, %v5872
        %v5874 = vpop.f32.mrf.mxu0
        %5875 = vmatprep.mubr.bf16.mxu0 0
        %5876 = vmatmul.mubr.bf16.gmra.mxu0 %v5715
        %v5877 = vpop.f32.mrf.mxu0
        %v5878 = vpop.f32.mrf.mxu0
        %v5879 = vpop.f32.mrf.mxu0
        %v5880 = vadd.f32 0.0, %v5879
        %v5881 = vpop.f32.mrf.mxu0
        %5882 = vmatprep.mubr.bf16.mxu0 0
        %5883 = vmatmul.mubr.bf16.gmra.mxu0 %v5718
        %v5884 = vpop.f32.mrf.mxu0
        %v5885 = vadd.f32 0.0, %v5884
        %v5886 = vpop.f32.mrf.mxu0
        %v5887 = vpop.f32.mrf.mxu0
        %v5888 = vpop.f32.mrf.mxu0
        %5889 = vmatprep.mubr.bf16.mxu0 0
        %5890 = vmatmul.mubr.bf16.gmra.mxu0 %v5721
        %v5891 = vpop.f32.mrf.mxu0
        %v5892 = vadd.f32 0.0, %v5891
        %v5893 = vpop.f32.mrf.mxu0
        %v5894 = vpop.f32.mrf.mxu0
        %v5895 = vadd.f32 0.0, %v5894
        %v5896 = vpop.f32.mrf.mxu0
        %5897 = vmatprep.mubr.bf16.mxu0 0
        %5898 = vmatmul.mubr.bf16.gmra.mxu0 %v5724
        %v5899 = vpop.f32.mrf.mxu0
        %v5900 = vpop.f32.mrf.mxu0
        %v5901 = vpop.f32.mrf.mxu0
        %v5902 = vadd.f32 0.0, %v5901
        %v5903 = vpop.f32.mrf.mxu0
        %5904 = vmatprep.mubr.bf16.mxu0 0
        %5905 = vmatmul.mubr.bf16.gmra.mxu0 %v5727
        %v5906 = vpop.f32.mrf.mxu0
        %v5907 = vadd.f32 0.0, %v5906
        %v5908 = vpop.f32.mrf.mxu0
        %v5909 = vpop.f32.mrf.mxu0
        %v5910 = vpop.f32.mrf.mxu0
        %5911 = vmatprep.mubr.bf16.mxu0 0
        %5912 = vmatmul.mubr.bf16.gmra.mxu0 %v5730
        %v5913 = vpop.f32.mrf.mxu0
        %v5914 = vadd.f32 0.0, %v5913
        %v5915 = vpop.f32.mrf.mxu0
        %v5916 = vpop.f32.mrf.mxu0
        %v5917 = vadd.f32 0.0, %v5916
        %v5918 = vpop.f32.mrf.mxu0
        %5919 = vmatprep.mubr.bf16.mxu0 0
        %5920 = vmatmul.mubr.bf16.gmra.mxu0 %v5733
        %v5921 = vpop.f32.mrf.mxu0
        %v5922 = vpop.f32.mrf.mxu0
        %v5923 = vpop.f32.mrf.mxu0
        %v5924 = vadd.f32 0.0, %v5923
        %v5925 = vpop.f32.mrf.mxu0
        %5926 = vmatprep.mubr.bf16.mxu0 0
        %5927 = vmatmul.mubr.bf16.gmra.mxu0 %v5736
        %v5928 = vpop.f32.mrf.mxu0
        %v5929 = vadd.f32 0.0, %v5928
        %v5930 = vpop.f32.mrf.mxu0
        %v5931 = vpop.f32.mrf.mxu0
        %v5932 = vpop.f32.mrf.mxu0
        %5933 = vmatprep.mubr.bf16.mxu0 0
        %5934 = vmatmul.mubr.bf16.gmra.mxu0 %v5739
        %v5935 = vpop.f32.mrf.mxu0
        %v5936 = vadd.f32 0.0, %v5935
        %v5937 = vpop.f32.mrf.mxu0
        %v5938 = vpop.f32.mrf.mxu0
        %v5939 = vadd.f32 0.0, %v5938
        %v5940 = vpop.f32.mrf.mxu0
        %5941 = vmatprep.mubr.bf16.mxu0 0
        %5942 = vmatmul.mubr.bf16.gmra.mxu0 %v5742
        %v5943 = vpop.f32.mrf.mxu0
        %v5944 = vpop.f32.mrf.mxu0
        %v5945 = vpop.f32.mrf.mxu0
        %v5946 = vadd.f32 0.0, %v5945
        %v5947 = vpop.f32.mrf.mxu0
        %5948 = vmatprep.mubr.bf16.mxu0 0
        %5949 = vmatmul.mubr.bf16.gmra.mxu0 %v5745
        %v5950 = vpop.f32.mrf.mxu0
        %v5951 = vadd.f32 0.0, %v5950
        %v5952 = vpop.f32.mrf.mxu0
        %v5953 = vpop.f32.mrf.mxu0
        %v5954 = vpop.f32.mrf.mxu0
        %5955 = vdwg.mxu0
        %v5956 = vadd.f32 %v5586, %v5782
        %v5957 = vadd.f32 %v5587, %v5785
        %v5958 = vadd.f32 %v5588, %v5792
        %v5959 = vadd.f32 %v5589, %v5797
        %v5960 = vadd.f32 %v5590, %v5804
        %v5961 = vadd.f32 %v5591, %v5807
        %v5962 = vadd.f32 %v5592, %v5814
        %v5963 = vadd.f32 %v5593, %v5819
        %v5964 = vadd.f32 %v5594, %v5826
        %v5965 = vadd.f32 %v5595, %v5829
        %v5966 = vadd.f32 %v5596, %v5836
        %v5967 = vadd.f32 %v5597, %v5841
        %v5968 = vadd.f32 %v5598, %v5848
        %v5969 = vadd.f32 %v5599, %v5851
        %v5970 = vadd.f32 %v5600, %v5858
        %v5971 = vadd.f32 %v5601, %v5863
        %v5972 = vadd.f32 %v5602, %v5870
        %v5973 = vadd.f32 %v5603, %v5873
        %v5974 = vadd.f32 %v5604, %v5880
        %v5975 = vadd.f32 %v5605, %v5885
        %v5976 = vadd.f32 %v5606, %v5892
        %v5977 = vadd.f32 %v5607, %v5895
        %v5978 = vadd.f32 %v5608, %v5902
        %v5979 = vadd.f32 %v5609, %v5907
        %v5980 = vadd.f32 %v5610, %v5914
        %v5981 = vadd.f32 %v5611, %v5917
        %v5982 = vadd.f32 %v5612, %v5924
        %v5983 = vadd.f32 %v5613, %v5929
        %v5984 = vadd.f32 %v5614, %v5936
        %v5985 = vadd.f32 %v5615, %v5939
        %v5986 = vadd.f32 %v5616, %v5946
        %v5987 = vadd.f32 %v5617, %v5951
        %s5988 = scalar_lea.vmem %s4, 128
        %v5989 = vld [vmem:[%s5988] sm:$0xf]
        %v5990 = vld [vmem:[%s5988 + $0x4] sm:$0xf]
        %v5991 = vld [vmem:[%s5988 + $0x8] sm:$0xf]
        %v5992 = vld [vmem:[%s5988 + $0xc] sm:$0xf]
        %v5993 = vld [vmem:[%s5988 + $0x10] sm:$0xf]
        %v5994 = vld [vmem:[%s5988 + $0x14] sm:$0xf]
        %v5995 = vld [vmem:[%s5988 + $0x18] sm:$0xf]
        %v5996 = vld [vmem:[%s5988 + $0x1c] sm:$0xf]
        %v5997 = vpack.c.b16 %v4395, %v4395
        %v5998 = vshrl.u32 %v5627, 16
        %v6000 = vshll.u32 %v5627, 16
        %v6002 = vrot.slane %v6000, 1
        %v6003 = vor.u32 %v5998, %v6002
        %v6004 = vshll.u32 %v5628, 16
        %v6006 = vrot.slane %v6004, 1
        %v6007 = vsel %vm643, %v6003, %v6006
        %v6008 = vshrl.u32 %v5628, 16
        %v6010 = vor.u32 %v6008, %v6006
        %v6011 = vshll.u32 %v5629, 16
        %v6013 = vrot.slane %v6011, 1
        %v6014 = vsel %vm643, %v6010, %v6013
        %v6015 = vshrl.u32 %v5629, 16
        %v6017 = vor.u32 %v6015, %v6013
        %v6018 = vshll.u32 %v5630, 16
        %v6020 = vrot.slane %v6018, 1
        %v6021 = vsel %vm643, %v6017, %v6020
        %v6022 = vshrl.u32 %v5630, 16
        %v6024 = vor.u32 %v6022, %v6020
        %v6025 = vshll.u32 %v5631, 16
        %v6027 = vrot.slane %v6025, 1
        %v6028 = vsel %vm643, %v6024, %v6027
        %v6029 = vshrl.u32 %v5631, 16
        %v6031 = vor.u32 %v6029, %v6027
        %v6032 = vshll.u32 %v5632, 16
        %v6034 = vrot.slane %v6032, 1
        %v6035 = vsel %vm643, %v6031, %v6034
        %v6036 = vshrl.u32 %v5632, 16
        %v6038 = vor.u32 %v6036, %v6034
        %v6039 = vshll.u32 %v5633, 16
        %v6041 = vrot.slane %v6039, 1
        %v6042 = vsel %vm643, %v6038, %v6041
        %v6043 = vshrl.u32 %v5633, 16
        %v6045 = vor.u32 %v6043, %v6041
        %v6046 = vshll.u32 %v5634, 16
        %v6048 = vrot.slane %v6046, 1
        %v6049 = vsel %vm643, %v6045, %v6048
        %v6050 = vshrl.u32 %v5634, 16
        %v6052 = vor.u32 %v6050, %v6048
        %v6053 = vshll.u32 %v5635, 16
        %v6055 = vrot.slane %v6053, 1
        %v6056 = vsel %vm643, %v6052, %v6055
        %v6057 = vshrl.u32 %v5635, 16
        %v6059 = vor.u32 %v6057, %v6055
        %v6060 = vshll.u32 %v5636, 16
        %v6062 = vrot.slane %v6060, 1
        %v6063 = vsel %vm643, %v6059, %v6062
        %v6064 = vshrl.u32 %v5636, 16
        %v6066 = vor.u32 %v6064, %v6062
        %v6067 = vshll.u32 %v5637, 16
        %v6069 = vrot.slane %v6067, 1
        %v6070 = vsel %vm643, %v6066, %v6069
        %v6071 = vshrl.u32 %v5637, 16
        %v6073 = vor.u32 %v6071, %v6069
        %v6074 = vshll.u32 %v5638, 16
        %v6076 = vrot.slane %v6074, 1
        %v6077 = vsel %vm643, %v6073, %v6076
        %v6078 = vshrl.u32 %v5638, 16
        %v6080 = vor.u32 %v6078, %v6076
        %v6081 = vshll.u32 %v5639, 16
        %v6083 = vrot.slane %v6081, 1
        %v6084 = vsel %vm643, %v6080, %v6083
        %v6085 = vshrl.u32 %v5639, 16
        %v6087 = vor.u32 %v6085, %v6083
        %v6088 = vshll.u32 %v5640, 16
        %v6090 = vrot.slane %v6088, 1
        %v6091 = vsel %vm643, %v6087, %v6090
        %v6092 = vshrl.u32 %v5640, 16
        %v6094 = vor.u32 %v6092, %v6090
        %v6095 = vshll.u32 %v5641, 16
        %v6097 = vrot.slane %v6095, 1
        %v6098 = vsel %vm643, %v6094, %v6097
        %v6099 = vshrl.u32 %v5641, 16
        %v6101 = vor.u32 %v6099, %v6097
        %v6102 = vshll.u32 %v5642, 16
        %v6104 = vrot.slane %v6102, 1
        %v6105 = vsel %vm643, %v6101, %v6104
        %v6106 = vshrl.u32 %v5642, 16
        %v6108 = vor.u32 %v6106, %v6104
        %v6109 = vshll.u32 %v5643, 16
        %v6111 = vrot.slane %v6109, 1
        %v6112 = vsel %vm643, %v6108, %v6111
        %v6113 = vshrl.u32 %v5643, 16
        %v6115 = vor.u32 %v6113, %v6111
        %v6116 = vshll.u32 %v5644, 16
        %v6118 = vrot.slane %v6116, 1
        %v6119 = vsel %vm643, %v6115, %v6118
        %v6120 = vshrl.u32 %v5644, 16
        %v6122 = vor.u32 %v6120, %v6118
        %v6123 = vshll.u32 %v5645, 16
        %v6125 = vrot.slane %v6123, 1
        %v6126 = vsel %vm643, %v6122, %v6125
        %v6127 = vshrl.u32 %v5645, 16
        %v6129 = vor.u32 %v6127, %v6125
        %v6130 = vshll.u32 %v5646, 16
        %v6132 = vrot.slane %v6130, 1
        %v6133 = vsel %vm643, %v6129, %v6132
        %v6134 = vshrl.u32 %v5646, 16
        %v6136 = vor.u32 %v6134, %v6132
        %v6137 = vshll.u32 %v5647, 16
        %v6139 = vrot.slane %v6137, 1
        %v6140 = vsel %vm643, %v6136, %v6139
        %v6141 = vshrl.u32 %v5647, 16
        %v6143 = vor.u32 %v6141, %v6139
        %v6144 = vshll.u32 %v5648, 16
        %v6146 = vrot.slane %v6144, 1
        %v6147 = vsel %vm643, %v6143, %v6146
        %v6148 = vshrl.u32 %v5648, 16
        %v6150 = vor.u32 %v6148, %v6146
        %v6151 = vshll.u32 %v5649, 16
        %v6153 = vrot.slane %v6151, 1
        %v6154 = vsel %vm643, %v6150, %v6153
        %v6155 = vshrl.u32 %v5649, 16
        %v6157 = vor.u32 %v6155, %v6153
        %v6158 = vshll.u32 %v5650, 16
        %v6160 = vrot.slane %v6158, 1
        %v6161 = vsel %vm643, %v6157, %v6160
        %v6162 = vshrl.u32 %v5650, 16
        %v6164 = vor.u32 %v6162, %v6160
        %v6166 = vshll.u32 %v5997, 16
        %v6168 = vrot.slane %v6166, 1
        %v6169 = vsel %vm643, %v6164, %v6168
        %v6178 = vunpack.c.l.b16 %v5989
        %v6179 = vunpack.c.l.b16 %v5990
        %v6180 = vunpack.c.l.b16 %v5991
        %v6181 = vunpack.c.l.b16 %v5992
        %v6182 = vunpack.c.l.b16 %v5993
        %v6183 = vunpack.c.l.b16 %v5994
        %v6184 = vunpack.c.l.b16 %v5995
        %v6185 = vunpack.c.l.b16 %v5996
        %v6186 = vpack.c.b16 %v6179, %v6178
        %v6187 = vpack.c.b16 %v6181, %v6180
        %v6188 = vpack.c.b16 %v6183, %v6182
        %v6189 = vpack.c.b16 %v6185, %v6184
        %v6195 = vsel %vm278, %v6007, 0
        %v6198 = vsel %vm278, %v6014, 0
        %v6201 = vsel %vm278, %v6021, 0
        %v6204 = vsel %vm278, %v6028, 0
        %v6207 = vsel %vm278, %v6035, 0
        %v6210 = vsel %vm278, %v6042, 0
        %v6213 = vsel %vm278, %v6049, 0
        %v6216 = vsel %vm278, %v6056, 0
        %v6219 = vsel %vm278, %v6063, 0
        %v6222 = vsel %vm278, %v6070, 0
        %v6225 = vsel %vm278, %v6077, 0
        %v6228 = vsel %vm278, %v6084, 0
        %v6231 = vsel %vm278, %v6091, 0
        %v6234 = vsel %vm278, %v6098, 0
        %v6237 = vsel %vm278, %v6105, 0
        %v6240 = vsel %vm278, %v6112, 0
        %v6243 = vsel %vm278, %v6119, 0
        %v6246 = vsel %vm278, %v6126, 0
        %v6249 = vsel %vm278, %v6133, 0
        %v6252 = vsel %vm278, %v6140, 0
        %v6255 = vsel %vm278, %v6147, 0
        %v6258 = vsel %vm278, %v6154, 0
        %v6261 = vsel %vm278, %v6161, 0
        %v6264 = vsel %vm278, %v6169, 0
        %6266 = vmatprep.subr.bf16.mxu0 0
        %6267 = vmatpush1.bf16.msra.mxu0 0
        %6268 = vmatprep.subr.bf16.mxu0 0
        %6269 = vmatpush1.bf16.msra.mxu0 0
        %6270 = vmatprep.subr.bf16.mxu0 0
        %6271 = vmatpush1.bf16.msra.mxu0 0
        %6272 = vmatprep.subr.bf16.mxu0 0
        %6273 = vmatpush1.bf16.msra.mxu0 0
        %6274 = vmatprep.subr.bf16.mxu0 0
        %6275 = vmatpush1.bf16.msra.mxu0 %v6189
        %6276 = vmatprep.subr.bf16.mxu0 0
        %6277 = vmatpush1.bf16.msra.mxu0 %v6188
        %6278 = vmatprep.subr.bf16.mxu0 0
        %6279 = vmatpush1.bf16.msra.mxu0 %v6187
        %6280 = vmatprep.subr.bf16.mxu0 0
        %6281 = vmatpush1.bf16.msra.mxu0 %v6186
        %6282 = vmatprep.subr.bf16.mxu0 0
        %6283 = vmatpush2.bf16.msra.mxu0 0
        %6284 = vmatprep.subr.bf16.mxu0 0
        %6285 = vmatpush2.bf16.msra.mxu0 0
        %6286 = vmatprep.subr.bf16.mxu0 0
        %6287 = vmatpush2.bf16.msra.mxu0 0
        %6288 = vmatprep.subr.bf16.mxu0 0
        %6289 = vmatpush2.bf16.msra.mxu0 0
        %6290 = vmatprep.subr.bf16.mxu0 0
        %6291 = vmatpush2.bf16.msra.mxu0 0
        %6292 = vmatprep.subr.bf16.mxu0 0
        %6293 = vmatpush2.bf16.msra.mxu0 0
        %6294 = vmatprep.subr.bf16.mxu0 0
        %6295 = vmatpush2.bf16.msra.mxu0 0
        %6296 = vmatprep.subr.bf16.mxu0 0
        %6297 = vmatpush2.bf16.msra.mxu0 0
        %6298 = vmatprep.mubr.bf16.mxu0 0
        %6299 = vmatmul.mubr.bf16.gmra.mxu0 %v6195
        %v6300 = vpop.f32.mrf.mxu0
        %v6301 = vadd.f32 0.0, %v6300
        %v6302 = vpop.f32.mrf.mxu0
        %v6303 = vpop.f32.mrf.mxu0
        %v6304 = vadd.f32 0.0, %v6303
        %v6305 = vpop.f32.mrf.mxu0
        %6306 = vmatprep.mubr.bf16.mxu0 0
        %6307 = vmatmul.mubr.bf16.gmra.mxu0 %v6198
        %v6308 = vpop.f32.mrf.mxu0
        %v6309 = vpop.f32.mrf.mxu0
        %v6310 = vpop.f32.mrf.mxu0
        %v6311 = vadd.f32 0.0, %v6310
        %v6312 = vpop.f32.mrf.mxu0
        %6313 = vmatprep.mubr.bf16.mxu0 0
        %6314 = vmatmul.mubr.bf16.gmra.mxu0 %v6201
        %v6315 = vpop.f32.mrf.mxu0
        %v6316 = vadd.f32 0.0, %v6315
        %v6317 = vpop.f32.mrf.mxu0
        %v6318 = vpop.f32.mrf.mxu0
        %v6319 = vpop.f32.mrf.mxu0
        %6320 = vmatprep.mubr.bf16.mxu0 0
        %6321 = vmatmul.mubr.bf16.gmra.mxu0 %v6204
        %v6322 = vpop.f32.mrf.mxu0
        %v6323 = vadd.f32 0.0, %v6322
        %v6324 = vpop.f32.mrf.mxu0
        %v6325 = vpop.f32.mrf.mxu0
        %v6326 = vadd.f32 0.0, %v6325
        %v6327 = vpop.f32.mrf.mxu0
        %6328 = vmatprep.mubr.bf16.mxu0 0
        %6329 = vmatmul.mubr.bf16.gmra.mxu0 %v6207
        %v6330 = vpop.f32.mrf.mxu0
        %v6331 = vpop.f32.mrf.mxu0
        %v6332 = vpop.f32.mrf.mxu0
        %v6333 = vadd.f32 0.0, %v6332
        %v6334 = vpop.f32.mrf.mxu0
        %6335 = vmatprep.mubr.bf16.mxu0 0
        %6336 = vmatmul.mubr.bf16.gmra.mxu0 %v6210
        %v6337 = vpop.f32.mrf.mxu0
        %v6338 = vadd.f32 0.0, %v6337
        %v6339 = vpop.f32.mrf.mxu0
        %v6340 = vpop.f32.mrf.mxu0
        %v6341 = vpop.f32.mrf.mxu0
        %6342 = vmatprep.mubr.bf16.mxu0 0
        %6343 = vmatmul.mubr.bf16.gmra.mxu0 %v6213
        %v6344 = vpop.f32.mrf.mxu0
        %v6345 = vadd.f32 0.0, %v6344
        %v6346 = vpop.f32.mrf.mxu0
        %v6347 = vpop.f32.mrf.mxu0
        %v6348 = vadd.f32 0.0, %v6347
        %v6349 = vpop.f32.mrf.mxu0
        %6350 = vmatprep.mubr.bf16.mxu0 0
        %6351 = vmatmul.mubr.bf16.gmra.mxu0 %v6216
        %v6352 = vpop.f32.mrf.mxu0
        %v6353 = vpop.f32.mrf.mxu0
        %v6354 = vpop.f32.mrf.mxu0
        %v6355 = vadd.f32 0.0, %v6354
        %v6356 = vpop.f32.mrf.mxu0
        %6357 = vmatprep.mubr.bf16.mxu0 0
        %6358 = vmatmul.mubr.bf16.gmra.mxu0 %v6219
        %v6359 = vpop.f32.mrf.mxu0
        %v6360 = vadd.f32 0.0, %v6359
        %v6361 = vpop.f32.mrf.mxu0
        %v6362 = vpop.f32.mrf.mxu0
        %v6363 = vpop.f32.mrf.mxu0
        %6364 = vmatprep.mubr.bf16.mxu0 0
        %6365 = vmatmul.mubr.bf16.gmra.mxu0 %v6222
        %v6366 = vpop.f32.mrf.mxu0
        %v6367 = vadd.f32 0.0, %v6366
        %v6368 = vpop.f32.mrf.mxu0
        %v6369 = vpop.f32.mrf.mxu0
        %v6370 = vadd.f32 0.0, %v6369
        %v6371 = vpop.f32.mrf.mxu0
        %6372 = vmatprep.mubr.bf16.mxu0 0
        %6373 = vmatmul.mubr.bf16.gmra.mxu0 %v6225
        %v6374 = vpop.f32.mrf.mxu0
        %v6375 = vpop.f32.mrf.mxu0
        %v6376 = vpop.f32.mrf.mxu0
        %v6377 = vadd.f32 0.0, %v6376
        %v6378 = vpop.f32.mrf.mxu0
        %6379 = vmatprep.mubr.bf16.mxu0 0
        %6380 = vmatmul.mubr.bf16.gmra.mxu0 %v6228
        %v6381 = vpop.f32.mrf.mxu0
        %v6382 = vadd.f32 0.0, %v6381
        %v6383 = vpop.f32.mrf.mxu0
        %v6384 = vpop.f32.mrf.mxu0
        %v6385 = vpop.f32.mrf.mxu0
        %6386 = vmatprep.mubr.bf16.mxu0 0
        %6387 = vmatmul.mubr.bf16.gmra.mxu0 %v6231
        %v6388 = vpop.f32.mrf.mxu0
        %v6389 = vadd.f32 0.0, %v6388
        %v6390 = vpop.f32.mrf.mxu0
        %v6391 = vpop.f32.mrf.mxu0
        %v6392 = vadd.f32 0.0, %v6391
        %v6393 = vpop.f32.mrf.mxu0
        %6394 = vmatprep.mubr.bf16.mxu0 0
        %6395 = vmatmul.mubr.bf16.gmra.mxu0 %v6234
        %v6396 = vpop.f32.mrf.mxu0
        %v6397 = vpop.f32.mrf.mxu0
        %v6398 = vpop.f32.mrf.mxu0
        %v6399 = vadd.f32 0.0, %v6398
        %v6400 = vpop.f32.mrf.mxu0
        %6401 = vmatprep.mubr.bf16.mxu0 0
        %6402 = vmatmul.mubr.bf16.gmra.mxu0 %v6237
        %v6403 = vpop.f32.mrf.mxu0
        %v6404 = vadd.f32 0.0, %v6403
        %v6405 = vpop.f32.mrf.mxu0
        %v6406 = vpop.f32.mrf.mxu0
        %v6407 = vpop.f32.mrf.mxu0
        %6408 = vmatprep.mubr.bf16.mxu0 0
        %6409 = vmatmul.mubr.bf16.gmra.mxu0 %v6240
        %v6410 = vpop.f32.mrf.mxu0
        %v6411 = vadd.f32 0.0, %v6410
        %v6412 = vpop.f32.mrf.mxu0
        %v6413 = vpop.f32.mrf.mxu0
        %v6414 = vadd.f32 0.0, %v6413
        %v6415 = vpop.f32.mrf.mxu0
        %6416 = vmatprep.mubr.bf16.mxu0 0
        %6417 = vmatmul.mubr.bf16.gmra.mxu0 %v6243
        %v6418 = vpop.f32.mrf.mxu0
        %v6419 = vpop.f32.mrf.mxu0
        %v6420 = vpop.f32.mrf.mxu0
        %v6421 = vadd.f32 0.0, %v6420
        %v6422 = vpop.f32.mrf.mxu0
        %6423 = vmatprep.mubr.bf16.mxu0 0
        %6424 = vmatmul.mubr.bf16.gmra.mxu0 %v6246
        %v6425 = vpop.f32.mrf.mxu0
        %v6426 = vadd.f32 0.0, %v6425
        %v6427 = vpop.f32.mrf.mxu0
        %v6428 = vpop.f32.mrf.mxu0
        %v6429 = vpop.f32.mrf.mxu0
        %6430 = vmatprep.mubr.bf16.mxu0 0
        %6431 = vmatmul.mubr.bf16.gmra.mxu0 %v6249
        %v6432 = vpop.f32.mrf.mxu0
        %v6433 = vadd.f32 0.0, %v6432
        %v6434 = vpop.f32.mrf.mxu0
        %v6435 = vpop.f32.mrf.mxu0
        %v6436 = vadd.f32 0.0, %v6435
        %v6437 = vpop.f32.mrf.mxu0
        %6438 = vmatprep.mubr.bf16.mxu0 0
        %6439 = vmatmul.mubr.bf16.gmra.mxu0 %v6252
        %v6440 = vpop.f32.mrf.mxu0
        %v6441 = vpop.f32.mrf.mxu0
        %v6442 = vpop.f32.mrf.mxu0
        %v6443 = vadd.f32 0.0, %v6442
        %v6444 = vpop.f32.mrf.mxu0
        %6445 = vmatprep.mubr.bf16.mxu0 0
        %6446 = vmatmul.mubr.bf16.gmra.mxu0 %v6255
        %v6447 = vpop.f32.mrf.mxu0
        %v6448 = vadd.f32 0.0, %v6447
        %v6449 = vpop.f32.mrf.mxu0
        %v6450 = vpop.f32.mrf.mxu0
        %v6451 = vpop.f32.mrf.mxu0
        %6452 = vmatprep.mubr.bf16.mxu0 0
        %6453 = vmatmul.mubr.bf16.gmra.mxu0 %v6258
        %v6454 = vpop.f32.mrf.mxu0
        %v6455 = vadd.f32 0.0, %v6454
        %v6456 = vpop.f32.mrf.mxu0
        %v6457 = vpop.f32.mrf.mxu0
        %v6458 = vadd.f32 0.0, %v6457
        %v6459 = vpop.f32.mrf.mxu0
        %6460 = vmatprep.mubr.bf16.mxu0 0
        %6461 = vmatmul.mubr.bf16.gmra.mxu0 %v6261
        %v6462 = vpop.f32.mrf.mxu0
        %v6463 = vpop.f32.mrf.mxu0
        %v6464 = vpop.f32.mrf.mxu0
        %v6465 = vadd.f32 0.0, %v6464
        %v6466 = vpop.f32.mrf.mxu0
        %6467 = vmatprep.mubr.bf16.mxu0 0
        %6468 = vmatmul.mubr.bf16.gmra.mxu0 %v6264
        %v6469 = vpop.f32.mrf.mxu0
        %v6470 = vadd.f32 0.0, %v6469
        %v6471 = vpop.f32.mrf.mxu0
        %v6472 = vpop.f32.mrf.mxu0
        %v6473 = vpop.f32.mrf.mxu0
        %6474 = vdwg.mxu0
        %v6475 = vadd.f32 %v5956, %v6301
        %v6476 = vadd.f32 %v5957, %v6304
        %v6477 = vadd.f32 %v5958, %v6311
        %v6478 = vadd.f32 %v5959, %v6316
        %v6479 = vadd.f32 %v5960, %v6323
        %v6480 = vadd.f32 %v5961, %v6326
        %v6481 = vadd.f32 %v5962, %v6333
        %v6482 = vadd.f32 %v5963, %v6338
        %v6483 = vadd.f32 %v5964, %v6345
        %v6484 = vadd.f32 %v5965, %v6348
        %v6485 = vadd.f32 %v5966, %v6355
        %v6486 = vadd.f32 %v5967, %v6360
        %v6487 = vadd.f32 %v5968, %v6367
        %v6488 = vadd.f32 %v5969, %v6370
        %v6489 = vadd.f32 %v5970, %v6377
        %v6490 = vadd.f32 %v5971, %v6382
        %v6491 = vadd.f32 %v5972, %v6389
        %v6492 = vadd.f32 %v5973, %v6392
        %v6493 = vadd.f32 %v5974, %v6399
        %v6494 = vadd.f32 %v5975, %v6404
        %v6495 = vadd.f32 %v5976, %v6411
        %v6496 = vadd.f32 %v5977, %v6414
        %v6497 = vadd.f32 %v5978, %v6421
        %v6498 = vadd.f32 %v5979, %v6426
        %v6499 = vadd.f32 %v5980, %v6433
        %v6500 = vadd.f32 %v5981, %v6436
        %v6501 = vadd.f32 %v5982, %v6443
        %v6502 = vadd.f32 %v5983, %v6448
        %v6503 = vadd.f32 %v5984, %v6455
        %v6504 = vadd.f32 %v5985, %v6458
        %v6505 = vadd.f32 %v5986, %v6465
        %v6506 = vadd.f32 %v5987, %v6470
        %s6507 = scalar_lea.vmem %s4, 160
        %v6508 = vld [vmem:[%s6507] sm:$0xf]
        %v6509 = vld [vmem:[%s6507 + $0x4] sm:$0xf]
        %v6510 = vld [vmem:[%s6507 + $0x8] sm:$0xf]
        %v6511 = vld [vmem:[%s6507 + $0xc] sm:$0xf]
        %v6512 = vld [vmem:[%s6507 + $0x10] sm:$0xf]
        %v6513 = vld [vmem:[%s6507 + $0x14] sm:$0xf]
        %v6514 = vld [vmem:[%s6507 + $0x18] sm:$0xf]
        %v6515 = vld [vmem:[%s6507 + $0x1c] sm:$0xf]
        %v6516 = vrot.slane %v5627, 1
        %v6517 = vrot.slane %v5628, 1
        %v6518 = vsel %vm1435, %v6516, %v6517
        %v6519 = vrot.slane %v5629, 1
        %v6520 = vsel %vm1435, %v6517, %v6519
        %v6521 = vrot.slane %v5630, 1
        %v6522 = vsel %vm1435, %v6519, %v6521
        %v6523 = vrot.slane %v5631, 1
        %v6524 = vsel %vm1435, %v6521, %v6523
        %v6525 = vrot.slane %v5632, 1
        %v6526 = vsel %vm1435, %v6523, %v6525
        %v6527 = vrot.slane %v5633, 1
        %v6528 = vsel %vm1435, %v6525, %v6527
        %v6529 = vrot.slane %v5634, 1
        %v6530 = vsel %vm1435, %v6527, %v6529
        %v6531 = vrot.slane %v5635, 1
        %v6532 = vsel %vm1435, %v6529, %v6531
        %v6533 = vrot.slane %v5636, 1
        %v6534 = vsel %vm1435, %v6531, %v6533
        %v6535 = vrot.slane %v5637, 1
        %v6536 = vsel %vm1435, %v6533, %v6535
        %v6537 = vrot.slane %v5638, 1
        %v6538 = vsel %vm1435, %v6535, %v6537
        %v6539 = vrot.slane %v5639, 1
        %v6540 = vsel %vm1435, %v6537, %v6539
        %v6541 = vrot.slane %v5640, 1
        %v6542 = vsel %vm1435, %v6539, %v6541
        %v6543 = vrot.slane %v5641, 1
        %v6544 = vsel %vm1435, %v6541, %v6543
        %v6545 = vrot.slane %v5642, 1
        %v6546 = vsel %vm1435, %v6543, %v6545
        %v6547 = vrot.slane %v5643, 1
        %v6548 = vsel %vm1435, %v6545, %v6547
        %v6549 = vrot.slane %v5644, 1
        %v6550 = vsel %vm1435, %v6547, %v6549
        %v6551 = vrot.slane %v5645, 1
        %v6552 = vsel %vm1435, %v6549, %v6551
        %v6553 = vrot.slane %v5646, 1
        %v6554 = vsel %vm1435, %v6551, %v6553
        %v6555 = vrot.slane %v5647, 1
        %v6556 = vsel %vm1435, %v6553, %v6555
        %v6557 = vrot.slane %v5648, 1
        %v6558 = vsel %vm1435, %v6555, %v6557
        %v6559 = vrot.slane %v5649, 1
        %v6560 = vsel %vm1435, %v6557, %v6559
        %v6561 = vrot.slane %v5650, 1
        %v6562 = vsel %vm1435, %v6559, %v6561
        %v6563 = vrot.slane %v5997, 1
        %v6564 = vsel %vm1435, %v6561, %v6563
        %v6573 = vunpack.c.l.b16 %v6508
        %v6574 = vunpack.c.l.b16 %v6509
        %v6575 = vunpack.c.l.b16 %v6510
        %v6576 = vunpack.c.l.b16 %v6511
        %v6577 = vunpack.c.l.b16 %v6512
        %v6578 = vunpack.c.l.b16 %v6513
        %v6579 = vunpack.c.l.b16 %v6514
        %v6580 = vunpack.c.l.b16 %v6515
        %v6581 = vpack.c.b16 %v6574, %v6573
        %v6582 = vpack.c.b16 %v6576, %v6575
        %v6583 = vpack.c.b16 %v6578, %v6577
        %v6584 = vpack.c.b16 %v6580, %v6579
        %v6590 = vsel %vm278, %v6518, 0
        %v6593 = vsel %vm278, %v6520, 0
        %v6596 = vsel %vm278, %v6522, 0
        %v6599 = vsel %vm278, %v6524, 0
        %v6602 = vsel %vm278, %v6526, 0
        %v6605 = vsel %vm278, %v6528, 0
        %v6608 = vsel %vm278, %v6530, 0
        %v6611 = vsel %vm278, %v6532, 0
        %v6614 = vsel %vm278, %v6534, 0
        %v6617 = vsel %vm278, %v6536, 0
        %v6620 = vsel %vm278, %v6538, 0
        %v6623 = vsel %vm278, %v6540, 0
        %v6626 = vsel %vm278, %v6542, 0
        %v6629 = vsel %vm278, %v6544, 0
        %v6632 = vsel %vm278, %v6546, 0
        %v6635 = vsel %vm278, %v6548, 0
        %v6638 = vsel %vm278, %v6550, 0
        %v6641 = vsel %vm278, %v6552, 0
        %v6644 = vsel %vm278, %v6554, 0
        %v6647 = vsel %vm278, %v6556, 0
        %v6650 = vsel %vm278, %v6558, 0
        %v6653 = vsel %vm278, %v6560, 0
        %v6656 = vsel %vm278, %v6562, 0
        %v6659 = vsel %vm278, %v6564, 0
        %6661 = vmatprep.subr.bf16.mxu0 0
        %6662 = vmatpush1.bf16.msra.mxu0 0
        %6663 = vmatprep.subr.bf16.mxu0 0
        %6664 = vmatpush1.bf16.msra.mxu0 0
        %6665 = vmatprep.subr.bf16.mxu0 0
        %6666 = vmatpush1.bf16.msra.mxu0 0
        %6667 = vmatprep.subr.bf16.mxu0 0
        %6668 = vmatpush1.bf16.msra.mxu0 0
        %6669 = vmatprep.subr.bf16.mxu0 0
        %6670 = vmatpush1.bf16.msra.mxu0 %v6584
        %6671 = vmatprep.subr.bf16.mxu0 0
        %6672 = vmatpush1.bf16.msra.mxu0 %v6583
        %6673 = vmatprep.subr.bf16.mxu0 0
        %6674 = vmatpush1.bf16.msra.mxu0 %v6582
        %6675 = vmatprep.subr.bf16.mxu0 0
        %6676 = vmatpush1.bf16.msra.mxu0 %v6581
        %6677 = vmatprep.subr.bf16.mxu0 0
        %6678 = vmatpush2.bf16.msra.mxu0 0
        %6679 = vmatprep.subr.bf16.mxu0 0
        %6680 = vmatpush2.bf16.msra.mxu0 0
        %6681 = vmatprep.subr.bf16.mxu0 0
        %6682 = vmatpush2.bf16.msra.mxu0 0
        %6683 = vmatprep.subr.bf16.mxu0 0
        %6684 = vmatpush2.bf16.msra.mxu0 0
        %6685 = vmatprep.subr.bf16.mxu0 0
        %6686 = vmatpush2.bf16.msra.mxu0 0
        %6687 = vmatprep.subr.bf16.mxu0 0
        %6688 = vmatpush2.bf16.msra.mxu0 0
        %6689 = vmatprep.subr.bf16.mxu0 0
        %6690 = vmatpush2.bf16.msra.mxu0 0
        %6691 = vmatprep.subr.bf16.mxu0 0
        %6692 = vmatpush2.bf16.msra.mxu0 0
        %6693 = vmatprep.mubr.bf16.mxu0 0
        %6694 = vmatmul.mubr.bf16.gmra.mxu0 %v6590
        %v6695 = vpop.f32.mrf.mxu0
        %v6696 = vadd.f32 0.0, %v6695
        %v6697 = vpop.f32.mrf.mxu0
        %v6698 = vpop.f32.mrf.mxu0
        %v6699 = vadd.f32 0.0, %v6698
        %v6700 = vpop.f32.mrf.mxu0
        %6701 = vmatprep.mubr.bf16.mxu0 0
        %6702 = vmatmul.mubr.bf16.gmra.mxu0 %v6593
        %v6703 = vpop.f32.mrf.mxu0
        %v6704 = vpop.f32.mrf.mxu0
        %v6705 = vpop.f32.mrf.mxu0
        %v6706 = vadd.f32 0.0, %v6705
        %v6707 = vpop.f32.mrf.mxu0
        %6708 = vmatprep.mubr.bf16.mxu0 0
        %6709 = vmatmul.mubr.bf16.gmra.mxu0 %v6596
        %v6710 = vpop.f32.mrf.mxu0
        %v6711 = vadd.f32 0.0, %v6710
        %v6712 = vpop.f32.mrf.mxu0
        %v6713 = vpop.f32.mrf.mxu0
        %v6714 = vpop.f32.mrf.mxu0
        %6715 = vmatprep.mubr.bf16.mxu0 0
        %6716 = vmatmul.mubr.bf16.gmra.mxu0 %v6599
        %v6717 = vpop.f32.mrf.mxu0
        %v6718 = vadd.f32 0.0, %v6717
        %v6719 = vpop.f32.mrf.mxu0
        %v6720 = vpop.f32.mrf.mxu0
        %v6721 = vadd.f32 0.0, %v6720
        %v6722 = vpop.f32.mrf.mxu0
        %6723 = vmatprep.mubr.bf16.mxu0 0
        %6724 = vmatmul.mubr.bf16.gmra.mxu0 %v6602
        %v6725 = vpop.f32.mrf.mxu0
        %v6726 = vpop.f32.mrf.mxu0
        %v6727 = vpop.f32.mrf.mxu0
        %v6728 = vadd.f32 0.0, %v6727
        %v6729 = vpop.f32.mrf.mxu0
        %6730 = vmatprep.mubr.bf16.mxu0 0
        %6731 = vmatmul.mubr.bf16.gmra.mxu0 %v6605
        %v6732 = vpop.f32.mrf.mxu0
        %v6733 = vadd.f32 0.0, %v6732
        %v6734 = vpop.f32.mrf.mxu0
        %v6735 = vpop.f32.mrf.mxu0
        %v6736 = vpop.f32.mrf.mxu0
        %6737 = vmatprep.mubr.bf16.mxu0 0
        %6738 = vmatmul.mubr.bf16.gmra.mxu0 %v6608
        %v6739 = vpop.f32.mrf.mxu0
        %v6740 = vadd.f32 0.0, %v6739
        %v6741 = vpop.f32.mrf.mxu0
        %v6742 = vpop.f32.mrf.mxu0
        %v6743 = vadd.f32 0.0, %v6742
        %v6744 = vpop.f32.mrf.mxu0
        %6745 = vmatprep.mubr.bf16.mxu0 0
        %6746 = vmatmul.mubr.bf16.gmra.mxu0 %v6611
        %v6747 = vpop.f32.mrf.mxu0
        %v6748 = vpop.f32.mrf.mxu0
        %v6749 = vpop.f32.mrf.mxu0
        %v6750 = vadd.f32 0.0, %v6749
        %v6751 = vpop.f32.mrf.mxu0
        %6752 = vmatprep.mubr.bf16.mxu0 0
        %6753 = vmatmul.mubr.bf16.gmra.mxu0 %v6614
        %v6754 = vpop.f32.mrf.mxu0
        %v6755 = vadd.f32 0.0, %v6754
        %v6756 = vpop.f32.mrf.mxu0
        %v6757 = vpop.f32.mrf.mxu0
        %v6758 = vpop.f32.mrf.mxu0
        %6759 = vmatprep.mubr.bf16.mxu0 0
        %6760 = vmatmul.mubr.bf16.gmra.mxu0 %v6617
        %v6761 = vpop.f32.mrf.mxu0
        %v6762 = vadd.f32 0.0, %v6761
        %v6763 = vpop.f32.mrf.mxu0
        %v6764 = vpop.f32.mrf.mxu0
        %v6765 = vadd.f32 0.0, %v6764
        %v6766 = vpop.f32.mrf.mxu0
        %6767 = vmatprep.mubr.bf16.mxu0 0
        %6768 = vmatmul.mubr.bf16.gmra.mxu0 %v6620
        %v6769 = vpop.f32.mrf.mxu0
        %v6770 = vpop.f32.mrf.mxu0
        %v6771 = vpop.f32.mrf.mxu0
        %v6772 = vadd.f32 0.0, %v6771
        %v6773 = vpop.f32.mrf.mxu0
        %6774 = vmatprep.mubr.bf16.mxu0 0
        %6775 = vmatmul.mubr.bf16.gmra.mxu0 %v6623
        %v6776 = vpop.f32.mrf.mxu0
        %v6777 = vadd.f32 0.0, %v6776
        %v6778 = vpop.f32.mrf.mxu0
        %v6779 = vpop.f32.mrf.mxu0
        %v6780 = vpop.f32.mrf.mxu0
        %6781 = vmatprep.mubr.bf16.mxu0 0
        %6782 = vmatmul.mubr.bf16.gmra.mxu0 %v6626
        %v6783 = vpop.f32.mrf.mxu0
        %v6784 = vadd.f32 0.0, %v6783
        %v6785 = vpop.f32.mrf.mxu0
        %v6786 = vpop.f32.mrf.mxu0
        %v6787 = vadd.f32 0.0, %v6786
        %v6788 = vpop.f32.mrf.mxu0
        %6789 = vmatprep.mubr.bf16.mxu0 0
        %6790 = vmatmul.mubr.bf16.gmra.mxu0 %v6629
        %v6791 = vpop.f32.mrf.mxu0
        %v6792 = vpop.f32.mrf.mxu0
        %v6793 = vpop.f32.mrf.mxu0
        %v6794 = vadd.f32 0.0, %v6793
        %v6795 = vpop.f32.mrf.mxu0
        %6796 = vmatprep.mubr.bf16.mxu0 0
        %6797 = vmatmul.mubr.bf16.gmra.mxu0 %v6632
        %v6798 = vpop.f32.mrf.mxu0
        %v6799 = vadd.f32 0.0, %v6798
        %v6800 = vpop.f32.mrf.mxu0
        %v6801 = vpop.f32.mrf.mxu0
        %v6802 = vpop.f32.mrf.mxu0
        %6803 = vmatprep.mubr.bf16.mxu0 0
        %6804 = vmatmul.mubr.bf16.gmra.mxu0 %v6635
        %v6805 = vpop.f32.mrf.mxu0
        %v6806 = vadd.f32 0.0, %v6805
        %v6807 = vpop.f32.mrf.mxu0
        %v6808 = vpop.f32.mrf.mxu0
        %v6809 = vadd.f32 0.0, %v6808
        %v6810 = vpop.f32.mrf.mxu0
        %6811 = vmatprep.mubr.bf16.mxu0 0
        %6812 = vmatmul.mubr.bf16.gmra.mxu0 %v6638
        %v6813 = vpop.f32.mrf.mxu0
        %v6814 = vpop.f32.mrf.mxu0
        %v6815 = vpop.f32.mrf.mxu0
        %v6816 = vadd.f32 0.0, %v6815
        %v6817 = vpop.f32.mrf.mxu0
        %6818 = vmatprep.mubr.bf16.mxu0 0
        %6819 = vmatmul.mubr.bf16.gmra.mxu0 %v6641
        %v6820 = vpop.f32.mrf.mxu0
        %v6821 = vadd.f32 0.0, %v6820
        %v6822 = vpop.f32.mrf.mxu0
        %v6823 = vpop.f32.mrf.mxu0
        %v6824 = vpop.f32.mrf.mxu0
        %6825 = vmatprep.mubr.bf16.mxu0 0
        %6826 = vmatmul.mubr.bf16.gmra.mxu0 %v6644
        %v6827 = vpop.f32.mrf.mxu0
        %v6828 = vadd.f32 0.0, %v6827
        %v6829 = vpop.f32.mrf.mxu0
        %v6830 = vpop.f32.mrf.mxu0
        %v6831 = vadd.f32 0.0, %v6830
        %v6832 = vpop.f32.mrf.mxu0
        %6833 = vmatprep.mubr.bf16.mxu0 0
        %6834 = vmatmul.mubr.bf16.gmra.mxu0 %v6647
        %v6835 = vpop.f32.mrf.mxu0
        %v6836 = vpop.f32.mrf.mxu0
        %v6837 = vpop.f32.mrf.mxu0
        %v6838 = vadd.f32 0.0, %v6837
        %v6839 = vpop.f32.mrf.mxu0
        %6840 = vmatprep.mubr.bf16.mxu0 0
        %6841 = vmatmul.mubr.bf16.gmra.mxu0 %v6650
        %v6842 = vpop.f32.mrf.mxu0
        %v6843 = vadd.f32 0.0, %v6842
        %v6844 = vpop.f32.mrf.mxu0
        %v6845 = vpop.f32.mrf.mxu0
        %v6846 = vpop.f32.mrf.mxu0
        %6847 = vmatprep.mubr.bf16.mxu0 0
        %6848 = vmatmul.mubr.bf16.gmra.mxu0 %v6653
        %v6849 = vpop.f32.mrf.mxu0
        %v6850 = vadd.f32 0.0, %v6849
        %v6851 = vpop.f32.mrf.mxu0
        %v6852 = vpop.f32.mrf.mxu0
        %v6853 = vadd.f32 0.0, %v6852
        %v6854 = vpop.f32.mrf.mxu0
        %6855 = vmatprep.mubr.bf16.mxu0 0
        %6856 = vmatmul.mubr.bf16.gmra.mxu0 %v6656
        %v6857 = vpop.f32.mrf.mxu0
        %v6858 = vpop.f32.mrf.mxu0
        %v6859 = vpop.f32.mrf.mxu0
        %v6860 = vadd.f32 0.0, %v6859
        %v6861 = vpop.f32.mrf.mxu0
        %6862 = vmatprep.mubr.bf16.mxu0 0
        %6863 = vmatmul.mubr.bf16.gmra.mxu0 %v6659
        %v6864 = vpop.f32.mrf.mxu0
        %v6865 = vadd.f32 0.0, %v6864
        %v6866 = vpop.f32.mrf.mxu0
        %v6867 = vpop.f32.mrf.mxu0
        %v6868 = vpop.f32.mrf.mxu0
        %6869 = vdwg.mxu0
        %v6870 = vadd.f32 %v6475, %v6696
        %v6871 = vadd.f32 %v6476, %v6699
        %v6872 = vadd.f32 %v6477, %v6706
        %v6873 = vadd.f32 %v6478, %v6711
        %v6874 = vadd.f32 %v6479, %v6718
        %v6875 = vadd.f32 %v6480, %v6721
        %v6876 = vadd.f32 %v6481, %v6728
        %v6877 = vadd.f32 %v6482, %v6733
        %v6878 = vadd.f32 %v6483, %v6740
        %v6879 = vadd.f32 %v6484, %v6743
        %v6880 = vadd.f32 %v6485, %v6750
        %v6881 = vadd.f32 %v6486, %v6755
        %v6882 = vadd.f32 %v6487, %v6762
        %v6883 = vadd.f32 %v6488, %v6765
        %v6884 = vadd.f32 %v6489, %v6772
        %v6885 = vadd.f32 %v6490, %v6777
        %v6886 = vadd.f32 %v6491, %v6784
        %v6887 = vadd.f32 %v6492, %v6787
        %v6888 = vadd.f32 %v6493, %v6794
        %v6889 = vadd.f32 %v6494, %v6799
        %v6890 = vadd.f32 %v6495, %v6806
        %v6891 = vadd.f32 %v6496, %v6809
        %v6892 = vadd.f32 %v6497, %v6816
        %v6893 = vadd.f32 %v6498, %v6821
        %v6894 = vadd.f32 %v6499, %v6828
        %v6895 = vadd.f32 %v6500, %v6831
        %v6896 = vadd.f32 %v6501, %v6838
        %v6897 = vadd.f32 %v6502, %v6843
        %v6898 = vadd.f32 %v6503, %v6850
        %v6899 = vadd.f32 %v6504, %v6853
        %v6900 = vadd.f32 %v6505, %v6860
        %v6901 = vadd.f32 %v6506, %v6865
        %s6902 = scalar_lea.vmem %s4, 192
        %v6903 = vld [vmem:[%s6902] sm:$0xf]
        %v6904 = vld [vmem:[%s6902 + $0x4] sm:$0xf]
        %v6905 = vld [vmem:[%s6902 + $0x8] sm:$0xf]
        %v6906 = vld [vmem:[%s6902 + $0xc] sm:$0xf]
        %v6907 = vld [vmem:[%s6902 + $0x10] sm:$0xf]
        %v6908 = vld [vmem:[%s6902 + $0x14] sm:$0xf]
        %v6909 = vld [vmem:[%s6902 + $0x18] sm:$0xf]
        %v6910 = vld [vmem:[%s6902 + $0x1c] sm:$0xf]
        %v6911 = vpack.c.b16 %v4393, %v4392
        %v6912 = vpack.c.b16 %v4395, %v4394
        %v6913 = vpack.c.b16 %v4397, %v4396
        %v6922 = vunpack.c.l.b16 %v6903
        %v6923 = vunpack.c.l.b16 %v6904
        %v6924 = vunpack.c.l.b16 %v6905
        %v6925 = vunpack.c.l.b16 %v6906
        %v6926 = vunpack.c.l.b16 %v6907
        %v6927 = vunpack.c.l.b16 %v6908
        %v6928 = vunpack.c.l.b16 %v6909
        %v6929 = vunpack.c.l.b16 %v6910
        %v6930 = vpack.c.b16 %v6923, %v6922
        %v6931 = vpack.c.b16 %v6925, %v6924
        %v6932 = vpack.c.b16 %v6927, %v6926
        %v6933 = vpack.c.b16 %v6929, %v6928
        %v6939 = vsel %vm278, %v6911, 0
        %v6942 = vsel %vm278, %v6912, 0
        %v6945 = vsel %vm278, %v6913, 0
        %6947 = vmatprep.subr.bf16.mxu0 0
        %6948 = vmatpush1.bf16.msra.mxu0 0
        %6949 = vmatprep.subr.bf16.mxu0 0
        %6950 = vmatpush1.bf16.msra.mxu0 0
        %6951 = vmatprep.subr.bf16.mxu0 0
        %6952 = vmatpush1.bf16.msra.mxu0 0
        %6953 = vmatprep.subr.bf16.mxu0 0
        %6954 = vmatpush1.bf16.msra.mxu0 0
        %6955 = vmatprep.subr.bf16.mxu0 0
        %6956 = vmatpush1.bf16.msra.mxu0 %v6933
        %6957 = vmatprep.subr.bf16.mxu0 0
        %6958 = vmatpush1.bf16.msra.mxu0 %v6932
        %6959 = vmatprep.subr.bf16.mxu0 0
        %6960 = vmatpush1.bf16.msra.mxu0 %v6931
        %6961 = vmatprep.subr.bf16.mxu0 0
        %6962 = vmatpush1.bf16.msra.mxu0 %v6930
        %6963 = vmatprep.subr.bf16.mxu0 0
        %6964 = vmatpush2.bf16.msra.mxu0 0
        %6965 = vmatprep.subr.bf16.mxu0 0
        %6966 = vmatpush2.bf16.msra.mxu0 0
        %6967 = vmatprep.subr.bf16.mxu0 0
        %6968 = vmatpush2.bf16.msra.mxu0 0
        %6969 = vmatprep.subr.bf16.mxu0 0
        %6970 = vmatpush2.bf16.msra.mxu0 0
        %6971 = vmatprep.subr.bf16.mxu0 0
        %6972 = vmatpush2.bf16.msra.mxu0 0
        %6973 = vmatprep.subr.bf16.mxu0 0
        %6974 = vmatpush2.bf16.msra.mxu0 0
        %6975 = vmatprep.subr.bf16.mxu0 0
        %6976 = vmatpush2.bf16.msra.mxu0 0
        %6977 = vmatprep.subr.bf16.mxu0 0
        %6978 = vmatpush2.bf16.msra.mxu0 0
        %6979 = vmatprep.mubr.bf16.mxu0 0
        %6980 = vmatmul.mubr.bf16.gmra.mxu0 %v4972
        %v6981 = vpop.f32.mrf.mxu0
        %v6982 = vadd.f32 0.0, %v6981
        %v6983 = vpop.f32.mrf.mxu0
        %v6984 = vpop.f32.mrf.mxu0
        %v6985 = vadd.f32 0.0, %v6984
        %v6986 = vpop.f32.mrf.mxu0
        %6987 = vmatprep.mubr.bf16.mxu0 0
        %6988 = vmatmul.mubr.bf16.gmra.mxu0 %v4974
        %v6989 = vpop.f32.mrf.mxu0
        %v6990 = vpop.f32.mrf.mxu0
        %v6991 = vpop.f32.mrf.mxu0
        %v6992 = vadd.f32 0.0, %v6991
        %v6993 = vpop.f32.mrf.mxu0
        %6994 = vmatprep.mubr.bf16.mxu0 0
        %6995 = vmatmul.mubr.bf16.gmra.mxu0 %v4976
        %v6996 = vpop.f32.mrf.mxu0
        %v6997 = vadd.f32 0.0, %v6996
        %v6998 = vpop.f32.mrf.mxu0
        %v6999 = vpop.f32.mrf.mxu0
        %v7000 = vpop.f32.mrf.mxu0
        %7001 = vmatprep.mubr.bf16.mxu0 0
        %7002 = vmatmul.mubr.bf16.gmra.mxu0 %v4978
        %v7003 = vpop.f32.mrf.mxu0
        %v7004 = vadd.f32 0.0, %v7003
        %v7005 = vpop.f32.mrf.mxu0
        %v7006 = vpop.f32.mrf.mxu0
        %v7007 = vadd.f32 0.0, %v7006
        %v7008 = vpop.f32.mrf.mxu0
        %7009 = vmatprep.mubr.bf16.mxu0 0
        %7010 = vmatmul.mubr.bf16.gmra.mxu0 %v4980
        %v7011 = vpop.f32.mrf.mxu0
        %v7012 = vpop.f32.mrf.mxu0
        %v7013 = vpop.f32.mrf.mxu0
        %v7014 = vadd.f32 0.0, %v7013
        %v7015 = vpop.f32.mrf.mxu0
        %7016 = vmatprep.mubr.bf16.mxu0 0
        %7017 = vmatmul.mubr.bf16.gmra.mxu0 %v4982
        %v7018 = vpop.f32.mrf.mxu0
        %v7019 = vadd.f32 0.0, %v7018
        %v7020 = vpop.f32.mrf.mxu0
        %v7021 = vpop.f32.mrf.mxu0
        %v7022 = vpop.f32.mrf.mxu0
        %7023 = vmatprep.mubr.bf16.mxu0 0
        %7024 = vmatmul.mubr.bf16.gmra.mxu0 %v4984
        %v7025 = vpop.f32.mrf.mxu0
        %v7026 = vadd.f32 0.0, %v7025
        %v7027 = vpop.f32.mrf.mxu0
        %v7028 = vpop.f32.mrf.mxu0
        %v7029 = vadd.f32 0.0, %v7028
        %v7030 = vpop.f32.mrf.mxu0
        %7031 = vmatprep.mubr.bf16.mxu0 0
        %7032 = vmatmul.mubr.bf16.gmra.mxu0 %v4986
        %v7033 = vpop.f32.mrf.mxu0
        %v7034 = vpop.f32.mrf.mxu0
        %v7035 = vpop.f32.mrf.mxu0
        %v7036 = vadd.f32 0.0, %v7035
        %v7037 = vpop.f32.mrf.mxu0
        %7038 = vmatprep.mubr.bf16.mxu0 0
        %7039 = vmatmul.mubr.bf16.gmra.mxu0 %v4988
        %v7040 = vpop.f32.mrf.mxu0
        %v7041 = vadd.f32 0.0, %v7040
        %v7042 = vpop.f32.mrf.mxu0
        %v7043 = vpop.f32.mrf.mxu0
        %v7044 = vpop.f32.mrf.mxu0
        %7045 = vmatprep.mubr.bf16.mxu0 0
        %7046 = vmatmul.mubr.bf16.gmra.mxu0 %v4990
        %v7047 = vpop.f32.mrf.mxu0
        %v7048 = vadd.f32 0.0, %v7047
        %v7049 = vpop.f32.mrf.mxu0
        %v7050 = vpop.f32.mrf.mxu0
        %v7051 = vadd.f32 0.0, %v7050
        %v7052 = vpop.f32.mrf.mxu0
        %7053 = vmatprep.mubr.bf16.mxu0 0
        %7054 = vmatmul.mubr.bf16.gmra.mxu0 %v4992
        %v7055 = vpop.f32.mrf.mxu0
        %v7056 = vpop.f32.mrf.mxu0
        %v7057 = vpop.f32.mrf.mxu0
        %v7058 = vadd.f32 0.0, %v7057
        %v7059 = vpop.f32.mrf.mxu0
        %7060 = vmatprep.mubr.bf16.mxu0 0
        %7061 = vmatmul.mubr.bf16.gmra.mxu0 %v4994
        %v7062 = vpop.f32.mrf.mxu0
        %v7063 = vadd.f32 0.0, %v7062
        %v7064 = vpop.f32.mrf.mxu0
        %v7065 = vpop.f32.mrf.mxu0
        %v7066 = vpop.f32.mrf.mxu0
        %7067 = vmatprep.mubr.bf16.mxu0 0
        %7068 = vmatmul.mubr.bf16.gmra.mxu0 %v4996
        %v7069 = vpop.f32.mrf.mxu0
        %v7070 = vadd.f32 0.0, %v7069
        %v7071 = vpop.f32.mrf.mxu0
        %v7072 = vpop.f32.mrf.mxu0
        %v7073 = vadd.f32 0.0, %v7072
        %v7074 = vpop.f32.mrf.mxu0
        %7075 = vmatprep.mubr.bf16.mxu0 0
        %7076 = vmatmul.mubr.bf16.gmra.mxu0 %v4998
        %v7077 = vpop.f32.mrf.mxu0
        %v7078 = vpop.f32.mrf.mxu0
        %v7079 = vpop.f32.mrf.mxu0
        %v7080 = vadd.f32 0.0, %v7079
        %v7081 = vpop.f32.mrf.mxu0
        %7082 = vmatprep.mubr.bf16.mxu0 0
        %7083 = vmatmul.mubr.bf16.gmra.mxu0 %v5000
        %v7084 = vpop.f32.mrf.mxu0
        %v7085 = vadd.f32 0.0, %v7084
        %v7086 = vpop.f32.mrf.mxu0
        %v7087 = vpop.f32.mrf.mxu0
        %v7088 = vpop.f32.mrf.mxu0
        %7089 = vmatprep.mubr.bf16.mxu0 0
        %7090 = vmatmul.mubr.bf16.gmra.mxu0 %v5002
        %v7091 = vpop.f32.mrf.mxu0
        %v7092 = vadd.f32 0.0, %v7091
        %v7093 = vpop.f32.mrf.mxu0
        %v7094 = vpop.f32.mrf.mxu0
        %v7095 = vadd.f32 0.0, %v7094
        %v7096 = vpop.f32.mrf.mxu0
        %7097 = vmatprep.mubr.bf16.mxu0 0
        %7098 = vmatmul.mubr.bf16.gmra.mxu0 %v5004
        %v7099 = vpop.f32.mrf.mxu0
        %v7100 = vpop.f32.mrf.mxu0
        %v7101 = vpop.f32.mrf.mxu0
        %v7102 = vadd.f32 0.0, %v7101
        %v7103 = vpop.f32.mrf.mxu0
        %7104 = vmatprep.mubr.bf16.mxu0 0
        %7105 = vmatmul.mubr.bf16.gmra.mxu0 %v5006
        %v7106 = vpop.f32.mrf.mxu0
        %v7107 = vadd.f32 0.0, %v7106
        %v7108 = vpop.f32.mrf.mxu0
        %v7109 = vpop.f32.mrf.mxu0
        %v7110 = vpop.f32.mrf.mxu0
        %7111 = vmatprep.mubr.bf16.mxu0 0
        %7112 = vmatmul.mubr.bf16.gmra.mxu0 %v5008
        %v7113 = vpop.f32.mrf.mxu0
        %v7114 = vadd.f32 0.0, %v7113
        %v7115 = vpop.f32.mrf.mxu0
        %v7116 = vpop.f32.mrf.mxu0
        %v7117 = vadd.f32 0.0, %v7116
        %v7118 = vpop.f32.mrf.mxu0
        %7119 = vmatprep.mubr.bf16.mxu0 0
        %7120 = vmatmul.mubr.bf16.gmra.mxu0 %v5010
        %v7121 = vpop.f32.mrf.mxu0
        %v7122 = vpop.f32.mrf.mxu0
        %v7123 = vpop.f32.mrf.mxu0
        %v7124 = vadd.f32 0.0, %v7123
        %v7125 = vpop.f32.mrf.mxu0
        %7126 = vmatprep.mubr.bf16.mxu0 0
        %7127 = vmatmul.mubr.bf16.gmra.mxu0 %v5012
        %v7128 = vpop.f32.mrf.mxu0
        %v7129 = vadd.f32 0.0, %v7128
        %v7130 = vpop.f32.mrf.mxu0
        %v7131 = vpop.f32.mrf.mxu0
        %v7132 = vpop.f32.mrf.mxu0
        %7133 = vmatprep.mubr.bf16.mxu0 0
        %7134 = vmatmul.mubr.bf16.gmra.mxu0 %v6939
        %v7135 = vpop.f32.mrf.mxu0
        %v7136 = vadd.f32 0.0, %v7135
        %v7137 = vpop.f32.mrf.mxu0
        %v7138 = vpop.f32.mrf.mxu0
        %v7139 = vadd.f32 0.0, %v7138
        %v7140 = vpop.f32.mrf.mxu0
        %7141 = vmatprep.mubr.bf16.mxu0 0
        %7142 = vmatmul.mubr.bf16.gmra.mxu0 %v6942
        %v7143 = vpop.f32.mrf.mxu0
        %v7144 = vpop.f32.mrf.mxu0
        %v7145 = vpop.f32.mrf.mxu0
        %v7146 = vadd.f32 0.0, %v7145
        %v7147 = vpop.f32.mrf.mxu0
        %7148 = vmatprep.mubr.bf16.mxu0 0
        %7149 = vmatmul.mubr.bf16.gmra.mxu0 %v6945
        %v7150 = vpop.f32.mrf.mxu0
        %v7151 = vadd.f32 0.0, %v7150
        %v7152 = vpop.f32.mrf.mxu0
        %v7153 = vpop.f32.mrf.mxu0
        %v7154 = vpop.f32.mrf.mxu0
        %7155 = vdwg.mxu0
        %v7156 = vadd.f32 %v6870, %v6982
        %v7157 = vadd.f32 %v6871, %v6985
        %v7158 = vadd.f32 %v6872, %v6992
        %v7159 = vadd.f32 %v6873, %v6997
        %v7160 = vadd.f32 %v6874, %v7004
        %v7161 = vadd.f32 %v6875, %v7007
        %v7162 = vadd.f32 %v6876, %v7014
        %v7163 = vadd.f32 %v6877, %v7019
        %v7164 = vadd.f32 %v6878, %v7026
        %v7165 = vadd.f32 %v6879, %v7029
        %v7166 = vadd.f32 %v6880, %v7036
        %v7167 = vadd.f32 %v6881, %v7041
        %v7168 = vadd.f32 %v6882, %v7048
        %v7169 = vadd.f32 %v6883, %v7051
        %v7170 = vadd.f32 %v6884, %v7058
        %v7171 = vadd.f32 %v6885, %v7063
        %v7172 = vadd.f32 %v6886, %v7070
        %v7173 = vadd.f32 %v6887, %v7073
        %v7174 = vadd.f32 %v6888, %v7080
        %v7175 = vadd.f32 %v6889, %v7085
        %v7176 = vadd.f32 %v6890, %v7092
        %v7177 = vadd.f32 %v6891, %v7095
        %v7178 = vadd.f32 %v6892, %v7102
        %v7179 = vadd.f32 %v6893, %v7107
        %v7180 = vadd.f32 %v6894, %v7114
        %v7181 = vadd.f32 %v6895, %v7117
        %v7182 = vadd.f32 %v6896, %v7124
        %v7183 = vadd.f32 %v6897, %v7129
        %v7184 = vadd.f32 %v6898, %v7136
        %v7185 = vadd.f32 %v6899, %v7139
        %v7186 = vadd.f32 %v6900, %v7146
        %v7187 = vadd.f32 %v6901, %v7151
        %s7188 = scalar_lea.vmem %s4, 224
        %v7189 = vld [vmem:[%s7188] sm:$0xf]
        %v7190 = vld [vmem:[%s7188 + $0x4] sm:$0xf]
        %v7191 = vld [vmem:[%s7188 + $0x8] sm:$0xf]
        %v7192 = vld [vmem:[%s7188 + $0xc] sm:$0xf]
        %v7193 = vld [vmem:[%s7188 + $0x10] sm:$0xf]
        %v7194 = vld [vmem:[%s7188 + $0x14] sm:$0xf]
        %v7195 = vld [vmem:[%s7188 + $0x18] sm:$0xf]
        %v7196 = vld [vmem:[%s7188 + $0x1c] sm:$0xf]
        %v7197 = vpack.c.b16 %v4398, %v4398
        %v7198 = vshll.u32 %v6911, 16
        %v7200 = vrot.slane %v7198, 1
        %v7201 = vsel %vm643, %v4631, %v7200
        %v7202 = vshrl.u32 %v6911, 16
        %v7204 = vor.u32 %v7202, %v7200
        %v7205 = vshll.u32 %v6912, 16
        %v7207 = vrot.slane %v7205, 1
        %v7208 = vsel %vm643, %v7204, %v7207
        %v7209 = vshrl.u32 %v6912, 16
        %v7211 = vor.u32 %v7209, %v7207
        %v7212 = vshll.u32 %v6913, 16
        %v7214 = vrot.slane %v7212, 1
        %v7215 = vsel %vm643, %v7211, %v7214
        %v7216 = vshrl.u32 %v6913, 16
        %v7218 = vor.u32 %v7216, %v7214
        %v7220 = vshll.u32 %v7197, 16
        %v7222 = vrot.slane %v7220, 1
        %v7223 = vsel %vm643, %v7218, %v7222
        %v7232 = vunpack.c.l.b16 %v7189
        %v7233 = vunpack.c.l.b16 %v7190
        %v7234 = vunpack.c.l.b16 %v7191
        %v7235 = vunpack.c.l.b16 %v7192
        %v7236 = vunpack.c.l.b16 %v7193
        %v7237 = vunpack.c.l.b16 %v7194
        %v7238 = vunpack.c.l.b16 %v7195
        %v7239 = vunpack.c.l.b16 %v7196
        %v7240 = vpack.c.b16 %v7233, %v7232
        %v7241 = vpack.c.b16 %v7235, %v7234
        %v7242 = vpack.c.b16 %v7237, %v7236
        %v7243 = vpack.c.b16 %v7239, %v7238
        %v7249 = vsel %vm278, %v7201, 0
        %v7252 = vsel %vm278, %v7208, 0
        %v7255 = vsel %vm278, %v7215, 0
        %v7258 = vsel %vm278, %v7223, 0
        %7260 = vmatprep.subr.bf16.mxu0 0
        %7261 = vmatpush1.bf16.msra.mxu0 0
        %7262 = vmatprep.subr.bf16.mxu0 0
        %7263 = vmatpush1.bf16.msra.mxu0 0
        %7264 = vmatprep.subr.bf16.mxu0 0
        %7265 = vmatpush1.bf16.msra.mxu0 0
        %7266 = vmatprep.subr.bf16.mxu0 0
        %7267 = vmatpush1.bf16.msra.mxu0 0
        %7268 = vmatprep.subr.bf16.mxu0 0
        %7269 = vmatpush1.bf16.msra.mxu0 %v7243
        %7270 = vmatprep.subr.bf16.mxu0 0
        %7271 = vmatpush1.bf16.msra.mxu0 %v7242
        %7272 = vmatprep.subr.bf16.mxu0 0
        %7273 = vmatpush1.bf16.msra.mxu0 %v7241
        %7274 = vmatprep.subr.bf16.mxu0 0
        %7275 = vmatpush1.bf16.msra.mxu0 %v7240
        %7276 = vmatprep.subr.bf16.mxu0 0
        %7277 = vmatpush2.bf16.msra.mxu0 0
        %7278 = vmatprep.subr.bf16.mxu0 0
        %7279 = vmatpush2.bf16.msra.mxu0 0
        %7280 = vmatprep.subr.bf16.mxu0 0
        %7281 = vmatpush2.bf16.msra.mxu0 0
        %7282 = vmatprep.subr.bf16.mxu0 0
        %7283 = vmatpush2.bf16.msra.mxu0 0
        %7284 = vmatprep.subr.bf16.mxu0 0
        %7285 = vmatpush2.bf16.msra.mxu0 0
        %7286 = vmatprep.subr.bf16.mxu0 0
        %7287 = vmatpush2.bf16.msra.mxu0 0
        %7288 = vmatprep.subr.bf16.mxu0 0
        %7289 = vmatpush2.bf16.msra.mxu0 0
        %7290 = vmatprep.subr.bf16.mxu0 0
        %7291 = vmatpush2.bf16.msra.mxu0 0
        %7292 = vmatprep.mubr.bf16.mxu0 0
        %7293 = vmatmul.mubr.bf16.gmra.mxu0 %v4671
        %v7294 = vpop.f32.mrf.mxu0
        %v7295 = vadd.f32 0.0, %v7294
        %v7296 = vpop.f32.mrf.mxu0
        %v7297 = vpop.f32.mrf.mxu0
        %v7298 = vadd.f32 0.0, %v7297
        %v7299 = vpop.f32.mrf.mxu0
        %7300 = vmatprep.mubr.bf16.mxu0 0
        %7301 = vmatmul.mubr.bf16.gmra.mxu0 %v4674
        %v7302 = vpop.f32.mrf.mxu0
        %v7303 = vpop.f32.mrf.mxu0
        %v7304 = vpop.f32.mrf.mxu0
        %v7305 = vadd.f32 0.0, %v7304
        %v7306 = vpop.f32.mrf.mxu0
        %7307 = vmatprep.mubr.bf16.mxu0 0
        %7308 = vmatmul.mubr.bf16.gmra.mxu0 %v4677
        %v7309 = vpop.f32.mrf.mxu0
        %v7310 = vadd.f32 0.0, %v7309
        %v7311 = vpop.f32.mrf.mxu0
        %v7312 = vpop.f32.mrf.mxu0
        %v7313 = vpop.f32.mrf.mxu0
        %7314 = vmatprep.mubr.bf16.mxu0 0
        %7315 = vmatmul.mubr.bf16.gmra.mxu0 %v4680
        %v7316 = vpop.f32.mrf.mxu0
        %v7317 = vadd.f32 0.0, %v7316
        %v7318 = vpop.f32.mrf.mxu0
        %v7319 = vpop.f32.mrf.mxu0
        %v7320 = vadd.f32 0.0, %v7319
        %v7321 = vpop.f32.mrf.mxu0
        %7322 = vmatprep.mubr.bf16.mxu0 0
        %7323 = vmatmul.mubr.bf16.gmra.mxu0 %v4683
        %v7324 = vpop.f32.mrf.mxu0
        %v7325 = vpop.f32.mrf.mxu0
        %v7326 = vpop.f32.mrf.mxu0
        %v7327 = vadd.f32 0.0, %v7326
        %v7328 = vpop.f32.mrf.mxu0
        %7329 = vmatprep.mubr.bf16.mxu0 0
        %7330 = vmatmul.mubr.bf16.gmra.mxu0 %v4686
        %v7331 = vpop.f32.mrf.mxu0
        %v7332 = vadd.f32 0.0, %v7331
        %v7333 = vpop.f32.mrf.mxu0
        %v7334 = vpop.f32.mrf.mxu0
        %v7335 = vpop.f32.mrf.mxu0
        %7336 = vmatprep.mubr.bf16.mxu0 0
        %7337 = vmatmul.mubr.bf16.gmra.mxu0 %v4689
        %v7338 = vpop.f32.mrf.mxu0
        %v7339 = vadd.f32 0.0, %v7338
        %v7340 = vpop.f32.mrf.mxu0
        %v7341 = vpop.f32.mrf.mxu0
        %v7342 = vadd.f32 0.0, %v7341
        %v7343 = vpop.f32.mrf.mxu0
        %7344 = vmatprep.mubr.bf16.mxu0 0
        %7345 = vmatmul.mubr.bf16.gmra.mxu0 %v4692
        %v7346 = vpop.f32.mrf.mxu0
        %v7347 = vpop.f32.mrf.mxu0
        %v7348 = vpop.f32.mrf.mxu0
        %v7349 = vadd.f32 0.0, %v7348
        %v7350 = vpop.f32.mrf.mxu0
        %7351 = vmatprep.mubr.bf16.mxu0 0
        %7352 = vmatmul.mubr.bf16.gmra.mxu0 %v4695
        %v7353 = vpop.f32.mrf.mxu0
        %v7354 = vadd.f32 0.0, %v7353
        %v7355 = vpop.f32.mrf.mxu0
        %v7356 = vpop.f32.mrf.mxu0
        %v7357 = vpop.f32.mrf.mxu0
        %7358 = vmatprep.mubr.bf16.mxu0 0
        %7359 = vmatmul.mubr.bf16.gmra.mxu0 %v4698
        %v7360 = vpop.f32.mrf.mxu0
        %v7361 = vadd.f32 0.0, %v7360
        %v7362 = vpop.f32.mrf.mxu0
        %v7363 = vpop.f32.mrf.mxu0
        %v7364 = vadd.f32 0.0, %v7363
        %v7365 = vpop.f32.mrf.mxu0
        %7366 = vmatprep.mubr.bf16.mxu0 0
        %7367 = vmatmul.mubr.bf16.gmra.mxu0 %v4701
        %v7368 = vpop.f32.mrf.mxu0
        %v7369 = vpop.f32.mrf.mxu0
        %v7370 = vpop.f32.mrf.mxu0
        %v7371 = vadd.f32 0.0, %v7370
        %v7372 = vpop.f32.mrf.mxu0
        %7373 = vmatprep.mubr.bf16.mxu0 0
        %7374 = vmatmul.mubr.bf16.gmra.mxu0 %v4704
        %v7375 = vpop.f32.mrf.mxu0
        %v7376 = vadd.f32 0.0, %v7375
        %v7377 = vpop.f32.mrf.mxu0
        %v7378 = vpop.f32.mrf.mxu0
        %v7379 = vpop.f32.mrf.mxu0
        %7380 = vmatprep.mubr.bf16.mxu0 0
        %7381 = vmatmul.mubr.bf16.gmra.mxu0 %v4707
        %v7382 = vpop.f32.mrf.mxu0
        %v7383 = vadd.f32 0.0, %v7382
        %v7384 = vpop.f32.mrf.mxu0
        %v7385 = vpop.f32.mrf.mxu0
        %v7386 = vadd.f32 0.0, %v7385
        %v7387 = vpop.f32.mrf.mxu0
        %7388 = vmatprep.mubr.bf16.mxu0 0
        %7389 = vmatmul.mubr.bf16.gmra.mxu0 %v4710
        %v7390 = vpop.f32.mrf.mxu0
        %v7391 = vpop.f32.mrf.mxu0
        %v7392 = vpop.f32.mrf.mxu0
        %v7393 = vadd.f32 0.0, %v7392
        %v7394 = vpop.f32.mrf.mxu0
        %7395 = vmatprep.mubr.bf16.mxu0 0
        %7396 = vmatmul.mubr.bf16.gmra.mxu0 %v4713
        %v7397 = vpop.f32.mrf.mxu0
        %v7398 = vadd.f32 0.0, %v7397
        %v7399 = vpop.f32.mrf.mxu0
        %v7400 = vpop.f32.mrf.mxu0
        %v7401 = vpop.f32.mrf.mxu0
        %7402 = vmatprep.mubr.bf16.mxu0 0
        %7403 = vmatmul.mubr.bf16.gmra.mxu0 %v4716
        %v7404 = vpop.f32.mrf.mxu0
        %v7405 = vadd.f32 0.0, %v7404
        %v7406 = vpop.f32.mrf.mxu0
        %v7407 = vpop.f32.mrf.mxu0
        %v7408 = vadd.f32 0.0, %v7407
        %v7409 = vpop.f32.mrf.mxu0
        %7410 = vmatprep.mubr.bf16.mxu0 0
        %7411 = vmatmul.mubr.bf16.gmra.mxu0 %v4719
        %v7412 = vpop.f32.mrf.mxu0
        %v7413 = vpop.f32.mrf.mxu0
        %v7414 = vpop.f32.mrf.mxu0
        %v7415 = vadd.f32 0.0, %v7414
        %v7416 = vpop.f32.mrf.mxu0
        %7417 = vmatprep.mubr.bf16.mxu0 0
        %7418 = vmatmul.mubr.bf16.gmra.mxu0 %v4722
        %v7419 = vpop.f32.mrf.mxu0
        %v7420 = vadd.f32 0.0, %v7419
        %v7421 = vpop.f32.mrf.mxu0
        %v7422 = vpop.f32.mrf.mxu0
        %v7423 = vpop.f32.mrf.mxu0
        %7424 = vmatprep.mubr.bf16.mxu0 0
        %7425 = vmatmul.mubr.bf16.gmra.mxu0 %v4725
        %v7426 = vpop.f32.mrf.mxu0
        %v7427 = vadd.f32 0.0, %v7426
        %v7428 = vpop.f32.mrf.mxu0
        %v7429 = vpop.f32.mrf.mxu0
        %v7430 = vadd.f32 0.0, %v7429
        %v7431 = vpop.f32.mrf.mxu0
        %7432 = vmatprep.mubr.bf16.mxu0 0
        %7433 = vmatmul.mubr.bf16.gmra.mxu0 %v4728
        %v7434 = vpop.f32.mrf.mxu0
        %v7435 = vpop.f32.mrf.mxu0
        %v7436 = vpop.f32.mrf.mxu0
        %v7437 = vadd.f32 0.0, %v7436
        %v7438 = vpop.f32.mrf.mxu0
        %7439 = vmatprep.mubr.bf16.mxu0 0
        %7440 = vmatmul.mubr.bf16.gmra.mxu0 %v7249
        %v7441 = vpop.f32.mrf.mxu0
        %v7442 = vadd.f32 0.0, %v7441
        %v7443 = vpop.f32.mrf.mxu0
        %v7444 = vpop.f32.mrf.mxu0
        %v7445 = vpop.f32.mrf.mxu0
        %7446 = vmatprep.mubr.bf16.mxu0 0
        %7447 = vmatmul.mubr.bf16.gmra.mxu0 %v7252
        %v7448 = vpop.f32.mrf.mxu0
        %v7449 = vadd.f32 0.0, %v7448
        %v7450 = vpop.f32.mrf.mxu0
        %v7451 = vpop.f32.mrf.mxu0
        %v7452 = vadd.f32 0.0, %v7451
        %v7453 = vpop.f32.mrf.mxu0
        %7454 = vmatprep.mubr.bf16.mxu0 0
        %7455 = vmatmul.mubr.bf16.gmra.mxu0 %v7255
        %v7456 = vpop.f32.mrf.mxu0
        %v7457 = vpop.f32.mrf.mxu0
        %v7458 = vpop.f32.mrf.mxu0
        %v7459 = vadd.f32 0.0, %v7458
        %v7460 = vpop.f32.mrf.mxu0
        %7461 = vmatprep.mubr.bf16.mxu0 0
        %7462 = vmatmul.mubr.bf16.gmra.mxu0 %v7258
        %v7463 = vpop.f32.mrf.mxu0
        %v7464 = vadd.f32 0.0, %v7463
        %v7465 = vpop.f32.mrf.mxu0
        %v7466 = vpop.f32.mrf.mxu0
        %v7467 = vpop.f32.mrf.mxu0
        %7468 = vdwg.mxu0
        %v7469 = vadd.f32 %v7156, %v7295
        %v7470 = vadd.f32 %v7157, %v7298
        %v7471 = vadd.f32 %v7158, %v7305
        %v7472 = vadd.f32 %v7159, %v7310
        %v7473 = vadd.f32 %v7160, %v7317
        %v7474 = vadd.f32 %v7161, %v7320
        %v7475 = vadd.f32 %v7162, %v7327
        %v7476 = vadd.f32 %v7163, %v7332
        %v7477 = vadd.f32 %v7164, %v7339
        %v7478 = vadd.f32 %v7165, %v7342
        %v7479 = vadd.f32 %v7166, %v7349
        %v7480 = vadd.f32 %v7167, %v7354
        %v7481 = vadd.f32 %v7168, %v7361
        %v7482 = vadd.f32 %v7169, %v7364
        %v7483 = vadd.f32 %v7170, %v7371
        %v7484 = vadd.f32 %v7171, %v7376
        %v7485 = vadd.f32 %v7172, %v7383
        %v7486 = vadd.f32 %v7173, %v7386
        %v7487 = vadd.f32 %v7174, %v7393
        %v7488 = vadd.f32 %v7175, %v7398
        %v7489 = vadd.f32 %v7176, %v7405
        %v7490 = vadd.f32 %v7177, %v7408
        %v7491 = vadd.f32 %v7178, %v7415
        %v7492 = vadd.f32 %v7179, %v7420
        %v7493 = vadd.f32 %v7180, %v7427
        %v7494 = vadd.f32 %v7181, %v7430
        %v7495 = vadd.f32 %v7182, %v7437
        %v7496 = vadd.f32 %v7183, %v7442
        %v7497 = vadd.f32 %v7184, %v7449
        %v7498 = vadd.f32 %v7185, %v7452
        %v7499 = vadd.f32 %v7186, %v7459
        %v7500 = vadd.f32 %v7187, %v7464
        %s7501 = scalar_lea.vmem %s4, 256
        %v7502 = vld [vmem:[%s7501] sm:$0xf]
        %v7503 = vld [vmem:[%s7501 + $0x4] sm:$0xf]
        %v7504 = vld [vmem:[%s7501 + $0x8] sm:$0xf]
        %v7505 = vld [vmem:[%s7501 + $0xc] sm:$0xf]
        %v7506 = vld [vmem:[%s7501 + $0x10] sm:$0xf]
        %v7507 = vld [vmem:[%s7501 + $0x14] sm:$0xf]
        %v7508 = vld [vmem:[%s7501 + $0x18] sm:$0xf]
        %v7509 = vld [vmem:[%s7501 + $0x1c] sm:$0xf]
        %v7510 = vrot.slane %v6911, 1
        %v7511 = vsel %vm1435, %v5277, %v7510
        %v7512 = vrot.slane %v6912, 1
        %v7513 = vsel %vm1435, %v7510, %v7512
        %v7514 = vrot.slane %v6913, 1
        %v7515 = vsel %vm1435, %v7512, %v7514
        %v7516 = vrot.slane %v7197, 1
        %v7517 = vsel %vm1435, %v7514, %v7516
        %v7526 = vunpack.c.l.b16 %v7502
        %v7527 = vunpack.c.l.b16 %v7503
        %v7528 = vunpack.c.l.b16 %v7504
        %v7529 = vunpack.c.l.b16 %v7505
        %v7530 = vunpack.c.l.b16 %v7506
        %v7531 = vunpack.c.l.b16 %v7507
        %v7532 = vunpack.c.l.b16 %v7508
        %v7533 = vunpack.c.l.b16 %v7509
        %v7534 = vpack.c.b16 %v7527, %v7526
        %v7535 = vpack.c.b16 %v7529, %v7528
        %v7536 = vpack.c.b16 %v7531, %v7530
        %v7537 = vpack.c.b16 %v7533, %v7532
        %v7543 = vsel %vm278, %v7511, 0
        %v7546 = vsel %vm278, %v7513, 0
        %v7549 = vsel %vm278, %v7515, 0
        %v7552 = vsel %vm278, %v7517, 0
        %7554 = vmatprep.subr.bf16.mxu0 0
        %7555 = vmatpush1.bf16.msra.mxu0 0
        %7556 = vmatprep.subr.bf16.mxu0 0
        %7557 = vmatpush1.bf16.msra.mxu0 0
        %7558 = vmatprep.subr.bf16.mxu0 0
        %7559 = vmatpush1.bf16.msra.mxu0 0
        %7560 = vmatprep.subr.bf16.mxu0 0
        %7561 = vmatpush1.bf16.msra.mxu0 0
        %7562 = vmatprep.subr.bf16.mxu0 0
        %7563 = vmatpush1.bf16.msra.mxu0 %v7537
        %7564 = vmatprep.subr.bf16.mxu0 0
        %7565 = vmatpush1.bf16.msra.mxu0 %v7536
        %7566 = vmatprep.subr.bf16.mxu0 0
        %7567 = vmatpush1.bf16.msra.mxu0 %v7535
        %7568 = vmatprep.subr.bf16.mxu0 0
        %7569 = vmatpush1.bf16.msra.mxu0 %v7534
        %7570 = vmatprep.subr.bf16.mxu0 0
        %7571 = vmatpush2.bf16.msra.mxu0 0
        %7572 = vmatprep.subr.bf16.mxu0 0
        %7573 = vmatpush2.bf16.msra.mxu0 0
        %7574 = vmatprep.subr.bf16.mxu0 0
        %7575 = vmatpush2.bf16.msra.mxu0 0
        %7576 = vmatprep.subr.bf16.mxu0 0
        %7577 = vmatpush2.bf16.msra.mxu0 0
        %7578 = vmatprep.subr.bf16.mxu0 0
        %7579 = vmatpush2.bf16.msra.mxu0 0
        %7580 = vmatprep.subr.bf16.mxu0 0
        %7581 = vmatpush2.bf16.msra.mxu0 0
        %7582 = vmatprep.subr.bf16.mxu0 0
        %7583 = vmatpush2.bf16.msra.mxu0 0
        %7584 = vmatprep.subr.bf16.mxu0 0
        %7585 = vmatpush2.bf16.msra.mxu0 0
        %7586 = vmatprep.mubr.bf16.mxu0 0
        %7587 = vmatmul.mubr.bf16.gmra.mxu0 %v5315
        %v7588 = vpop.f32.mrf.mxu0
        %v7589 = vadd.f32 0.0, %v7588
        %v7590 = vpop.f32.mrf.mxu0
        %v7591 = vpop.f32.mrf.mxu0
        %v7592 = vadd.f32 0.0, %v7591
        %v7593 = vpop.f32.mrf.mxu0
        %7594 = vmatprep.mubr.bf16.mxu0 0
        %7595 = vmatmul.mubr.bf16.gmra.mxu0 %v5318
        %v7596 = vpop.f32.mrf.mxu0
        %v7597 = vpop.f32.mrf.mxu0
        %v7598 = vpop.f32.mrf.mxu0
        %v7599 = vadd.f32 0.0, %v7598
        %v7600 = vpop.f32.mrf.mxu0
        %7601 = vmatprep.mubr.bf16.mxu0 0
        %7602 = vmatmul.mubr.bf16.gmra.mxu0 %v5321
        %v7603 = vpop.f32.mrf.mxu0
        %v7604 = vadd.f32 0.0, %v7603
        %v7605 = vpop.f32.mrf.mxu0
        %v7606 = vpop.f32.mrf.mxu0
        %v7607 = vpop.f32.mrf.mxu0
        %7608 = vmatprep.mubr.bf16.mxu0 0
        %7609 = vmatmul.mubr.bf16.gmra.mxu0 %v5324
        %v7610 = vpop.f32.mrf.mxu0
        %v7611 = vadd.f32 0.0, %v7610
        %v7612 = vpop.f32.mrf.mxu0
        %v7613 = vpop.f32.mrf.mxu0
        %v7614 = vadd.f32 0.0, %v7613
        %v7615 = vpop.f32.mrf.mxu0
        %7616 = vmatprep.mubr.bf16.mxu0 0
        %7617 = vmatmul.mubr.bf16.gmra.mxu0 %v5327
        %v7618 = vpop.f32.mrf.mxu0
        %v7619 = vpop.f32.mrf.mxu0
        %v7620 = vpop.f32.mrf.mxu0
        %v7621 = vadd.f32 0.0, %v7620
        %v7622 = vpop.f32.mrf.mxu0
        %7623 = vmatprep.mubr.bf16.mxu0 0
        %7624 = vmatmul.mubr.bf16.gmra.mxu0 %v5330
        %v7625 = vpop.f32.mrf.mxu0
        %v7626 = vadd.f32 0.0, %v7625
        %v7627 = vpop.f32.mrf.mxu0
        %v7628 = vpop.f32.mrf.mxu0
        %v7629 = vpop.f32.mrf.mxu0
        %7630 = vmatprep.mubr.bf16.mxu0 0
        %7631 = vmatmul.mubr.bf16.gmra.mxu0 %v5333
        %v7632 = vpop.f32.mrf.mxu0
        %v7633 = vadd.f32 0.0, %v7632
        %v7634 = vpop.f32.mrf.mxu0
        %v7635 = vpop.f32.mrf.mxu0
        %v7636 = vadd.f32 0.0, %v7635
        %v7637 = vpop.f32.mrf.mxu0
        %7638 = vmatprep.mubr.bf16.mxu0 0
        %7639 = vmatmul.mubr.bf16.gmra.mxu0 %v5336
        %v7640 = vpop.f32.mrf.mxu0
        %v7641 = vpop.f32.mrf.mxu0
        %v7642 = vpop.f32.mrf.mxu0
        %v7643 = vadd.f32 0.0, %v7642
        %v7644 = vpop.f32.mrf.mxu0
        %7645 = vmatprep.mubr.bf16.mxu0 0
        %7646 = vmatmul.mubr.bf16.gmra.mxu0 %v5339
        %v7647 = vpop.f32.mrf.mxu0
        %v7648 = vadd.f32 0.0, %v7647
        %v7649 = vpop.f32.mrf.mxu0
        %v7650 = vpop.f32.mrf.mxu0
        %v7651 = vpop.f32.mrf.mxu0
        %7652 = vmatprep.mubr.bf16.mxu0 0
        %7653 = vmatmul.mubr.bf16.gmra.mxu0 %v5342
        %v7654 = vpop.f32.mrf.mxu0
        %v7655 = vadd.f32 0.0, %v7654
        %v7656 = vpop.f32.mrf.mxu0
        %v7657 = vpop.f32.mrf.mxu0
        %v7658 = vadd.f32 0.0, %v7657
        %v7659 = vpop.f32.mrf.mxu0
        %7660 = vmatprep.mubr.bf16.mxu0 0
        %7661 = vmatmul.mubr.bf16.gmra.mxu0 %v5345
        %v7662 = vpop.f32.mrf.mxu0
        %v7663 = vpop.f32.mrf.mxu0
        %v7664 = vpop.f32.mrf.mxu0
        %v7665 = vadd.f32 0.0, %v7664
        %v7666 = vpop.f32.mrf.mxu0
        %7667 = vmatprep.mubr.bf16.mxu0 0
        %7668 = vmatmul.mubr.bf16.gmra.mxu0 %v5348
        %v7669 = vpop.f32.mrf.mxu0
        %v7670 = vadd.f32 0.0, %v7669
        %v7671 = vpop.f32.mrf.mxu0
        %v7672 = vpop.f32.mrf.mxu0
        %v7673 = vpop.f32.mrf.mxu0
        %7674 = vmatprep.mubr.bf16.mxu0 0
        %7675 = vmatmul.mubr.bf16.gmra.mxu0 %v5351
        %v7676 = vpop.f32.mrf.mxu0
        %v7677 = vadd.f32 0.0, %v7676
        %v7678 = vpop.f32.mrf.mxu0
        %v7679 = vpop.f32.mrf.mxu0
        %v7680 = vadd.f32 0.0, %v7679
        %v7681 = vpop.f32.mrf.mxu0
        %7682 = vmatprep.mubr.bf16.mxu0 0
        %7683 = vmatmul.mubr.bf16.gmra.mxu0 %v5354
        %v7684 = vpop.f32.mrf.mxu0
        %v7685 = vpop.f32.mrf.mxu0
        %v7686 = vpop.f32.mrf.mxu0
        %v7687 = vadd.f32 0.0, %v7686
        %v7688 = vpop.f32.mrf.mxu0
        %7689 = vmatprep.mubr.bf16.mxu0 0
        %7690 = vmatmul.mubr.bf16.gmra.mxu0 %v5357
        %v7691 = vpop.f32.mrf.mxu0
        %v7692 = vadd.f32 0.0, %v7691
        %v7693 = vpop.f32.mrf.mxu0
        %v7694 = vpop.f32.mrf.mxu0
        %v7695 = vpop.f32.mrf.mxu0
        %7696 = vmatprep.mubr.bf16.mxu0 0
        %7697 = vmatmul.mubr.bf16.gmra.mxu0 %v5360
        %v7698 = vpop.f32.mrf.mxu0
        %v7699 = vadd.f32 0.0, %v7698
        %v7700 = vpop.f32.mrf.mxu0
        %v7701 = vpop.f32.mrf.mxu0
        %v7702 = vadd.f32 0.0, %v7701
        %v7703 = vpop.f32.mrf.mxu0
        %7704 = vmatprep.mubr.bf16.mxu0 0
        %7705 = vmatmul.mubr.bf16.gmra.mxu0 %v5363
        %v7706 = vpop.f32.mrf.mxu0
        %v7707 = vpop.f32.mrf.mxu0
        %v7708 = vpop.f32.mrf.mxu0
        %v7709 = vadd.f32 0.0, %v7708
        %v7710 = vpop.f32.mrf.mxu0
        %7711 = vmatprep.mubr.bf16.mxu0 0
        %7712 = vmatmul.mubr.bf16.gmra.mxu0 %v5366
        %v7713 = vpop.f32.mrf.mxu0
        %v7714 = vadd.f32 0.0, %v7713
        %v7715 = vpop.f32.mrf.mxu0
        %v7716 = vpop.f32.mrf.mxu0
        %v7717 = vpop.f32.mrf.mxu0
        %7718 = vmatprep.mubr.bf16.mxu0 0
        %7719 = vmatmul.mubr.bf16.gmra.mxu0 %v5369
        %v7720 = vpop.f32.mrf.mxu0
        %v7721 = vadd.f32 0.0, %v7720
        %v7722 = vpop.f32.mrf.mxu0
        %v7723 = vpop.f32.mrf.mxu0
        %v7724 = vadd.f32 0.0, %v7723
        %v7725 = vpop.f32.mrf.mxu0
        %7726 = vmatprep.mubr.bf16.mxu0 0
        %7727 = vmatmul.mubr.bf16.gmra.mxu0 %v5372
        %v7728 = vpop.f32.mrf.mxu0
        %v7729 = vpop.f32.mrf.mxu0
        %v7730 = vpop.f32.mrf.mxu0
        %v7731 = vadd.f32 0.0, %v7730
        %v7732 = vpop.f32.mrf.mxu0
        %7733 = vmatprep.mubr.bf16.mxu0 0
        %7734 = vmatmul.mubr.bf16.gmra.mxu0 %v7543
        %v7735 = vpop.f32.mrf.mxu0
        %v7736 = vadd.f32 0.0, %v7735
        %v7737 = vpop.f32.mrf.mxu0
        %v7738 = vpop.f32.mrf.mxu0
        %v7739 = vpop.f32.mrf.mxu0
        %7740 = vmatprep.mubr.bf16.mxu0 0
        %7741 = vmatmul.mubr.bf16.gmra.mxu0 %v7546
        %v7742 = vpop.f32.mrf.mxu0
        %v7743 = vadd.f32 0.0, %v7742
        %v7744 = vpop.f32.mrf.mxu0
        %v7745 = vpop.f32.mrf.mxu0
        %v7746 = vadd.f32 0.0, %v7745
        %v7747 = vpop.f32.mrf.mxu0
        %7748 = vmatprep.mubr.bf16.mxu0 0
        %7749 = vmatmul.mubr.bf16.gmra.mxu0 %v7549
        %v7750 = vpop.f32.mrf.mxu0
        %v7751 = vpop.f32.mrf.mxu0
        %v7752 = vpop.f32.mrf.mxu0
        %v7753 = vadd.f32 0.0, %v7752
        %v7754 = vpop.f32.mrf.mxu0
        %7755 = vmatprep.mubr.bf16.mxu0 0
        %7756 = vmatmul.mubr.bf16.gmra.mxu0 %v7552
        %v7757 = vpop.f32.mrf.mxu0
        %v7758 = vadd.f32 0.0, %v7757
        %v7759 = vpop.f32.mrf.mxu0
        %v7760 = vpop.f32.mrf.mxu0
        %v7761 = vpop.f32.mrf.mxu0
        %7762 = vdwg.mxu0
        %v7763 = vadd.f32 %v7469, %v7589
        %v7764 = vadd.f32 %v7470, %v7592
        %v7765 = vadd.f32 %v7471, %v7599
        %v7766 = vadd.f32 %v7472, %v7604
        %v7767 = vadd.f32 %v7473, %v7611
        %v7768 = vadd.f32 %v7474, %v7614
        %v7769 = vadd.f32 %v7475, %v7621
        %v7770 = vadd.f32 %v7476, %v7626
        %v7771 = vadd.f32 %v7477, %v7633
        %v7772 = vadd.f32 %v7478, %v7636
        %v7773 = vadd.f32 %v7479, %v7643
        %v7774 = vadd.f32 %v7480, %v7648
        %v7775 = vadd.f32 %v7481, %v7655
        %v7776 = vadd.f32 %v7482, %v7658
        %v7777 = vadd.f32 %v7483, %v7665
        %v7778 = vadd.f32 %v7484, %v7670
        %v7779 = vadd.f32 %v7485, %v7677
        %v7780 = vadd.f32 %v7486, %v7680
        %v7781 = vadd.f32 %v7487, %v7687
        %v7782 = vadd.f32 %v7488, %v7692
        %v7783 = vadd.f32 %v7489, %v7699
        %v7784 = vadd.f32 %v7490, %v7702
        %v7785 = vadd.f32 %v7491, %v7709
        %v7786 = vadd.f32 %v7492, %v7714
        %v7787 = vadd.f32 %v7493, %v7721
        %v7788 = vadd.f32 %v7494, %v7724
        %v7789 = vadd.f32 %v7495, %v7731
        %v7790 = vadd.f32 %v7496, %v7736
        %v7791 = vadd.f32 %v7497, %v7743
        %v7792 = vadd.f32 %v7498, %v7746
        %v7793 = vadd.f32 %v7499, %v7753
        %v7794 = vadd.f32 %v7500, %v7758
        %v7795 = vld [vmem:[%s5] sm:$0x1]
        %v7797 = vlaneseq
        %v7798 = vshrl.u32 %v7797, 7
        %v7799 = vsub.s32 0, %v7798
        %v7800 = vrot.slane %v7795, %v7799
        %v7802 = vmul.f32 %v7763, %v7800
        %v7803 = vmul.f32 %v7764, %v7800
        %v7804 = vmul.f32 %v7765, %v7800
        %v7805 = vmul.f32 %v7766, %v7800
        %v7806 = vmul.f32 %v7767, %v7800
        %v7807 = vmul.f32 %v7768, %v7800
        %v7808 = vmul.f32 %v7769, %v7800
        %v7809 = vmul.f32 %v7770, %v7800
        %v7810 = vmul.f32 %v7771, %v7800
        %v7811 = vmul.f32 %v7772, %v7800
        %v7812 = vmul.f32 %v7773, %v7800
        %v7813 = vmul.f32 %v7774, %v7800
        %v7814 = vmul.f32 %v7775, %v7800
        %v7815 = vmul.f32 %v7776, %v7800
        %v7816 = vmul.f32 %v7777, %v7800
        %v7817 = vmul.f32 %v7778, %v7800
        %v7818 = vmul.f32 %v7779, %v7800
        %v7819 = vmul.f32 %v7780, %v7800
        %v7820 = vmul.f32 %v7781, %v7800
        %v7821 = vmul.f32 %v7782, %v7800
        %v7822 = vmul.f32 %v7783, %v7800
        %v7823 = vmul.f32 %v7784, %v7800
        %v7824 = vmul.f32 %v7785, %v7800
        %v7825 = vmul.f32 %v7786, %v7800
        %v7826 = vmul.f32 %v7787, %v7800
        %v7827 = vmul.f32 %v7788, %v7800
        %v7828 = vmul.f32 %v7789, %v7800
        %v7829 = vmul.f32 %v7790, %v7800
        %v7830 = vmul.f32 %v7791, %v7800
        %v7831 = vmul.f32 %v7792, %v7800
        %v7832 = vmul.f32 %v7793, %v7800
        %v7833 = vmul.f32 %v7794, %v7800
        %v7834 = vld [vmem:[%s6] sm:$0x1]
        %v7836 = vlaneseq
        %v7837 = vshrl.u32 %v7836, 7
        %v7838 = vsub.s32 0, %v7837
        %v7839 = vrot.slane %v7834, %v7838
        %v7841 = vadd.f32 %v7802, %v7839
        %v7842 = vadd.f32 %v7803, %v7839
        %v7843 = vadd.f32 %v7804, %v7839
        %v7844 = vadd.f32 %v7805, %v7839
        %v7845 = vadd.f32 %v7806, %v7839
        %v7846 = vadd.f32 %v7807, %v7839
        %v7847 = vadd.f32 %v7808, %v7839
        %v7848 = vadd.f32 %v7809, %v7839
        %v7849 = vadd.f32 %v7810, %v7839
        %v7850 = vadd.f32 %v7811, %v7839
        %v7851 = vadd.f32 %v7812, %v7839
        %v7852 = vadd.f32 %v7813, %v7839
        %v7853 = vadd.f32 %v7814, %v7839
        %v7854 = vadd.f32 %v7815, %v7839
        %v7855 = vadd.f32 %v7816, %v7839
        %v7856 = vadd.f32 %v7817, %v7839
        %v7857 = vadd.f32 %v7818, %v7839
        %v7858 = vadd.f32 %v7819, %v7839
        %v7859 = vadd.f32 %v7820, %v7839
        %v7860 = vadd.f32 %v7821, %v7839
        %v7861 = vadd.f32 %v7822, %v7839
        %v7862 = vadd.f32 %v7823, %v7839
        %v7863 = vadd.f32 %v7824, %v7839
        %v7864 = vadd.f32 %v7825, %v7839
        %v7865 = vadd.f32 %v7826, %v7839
        %v7866 = vadd.f32 %v7827, %v7839
        %v7867 = vadd.f32 %v7828, %v7839
        %v7868 = vadd.f32 %v7829, %v7839
        %v7869 = vadd.f32 %v7830, %v7839
        %v7870 = vadd.f32 %v7831, %v7839
        %v7871 = vadd.f32 %v7832, %v7839
        %v7872 = vadd.f32 %v7833, %v7839
        %v7873 = vld [vmem:[%s276] sm:$0xff]
        %v7874 = vld [vmem:[%s276 + $0x8] sm:$0xff]
        %v7875 = vld [vmem:[%s276 + $0x10] sm:$0xff]
        %v7876 = vld [vmem:[%s276 + $0x18] sm:$0xff]
        %v7877 = vld [vmem:[%s276 + $0x20] sm:$0xff]
        %v7878 = vld [vmem:[%s276 + $0x28] sm:$0xff]
        %v7879 = vld [vmem:[%s276 + $0x30] sm:$0xff]
        %v7880 = vld [vmem:[%s276 + $0x38] sm:$0xff]
        %v7881 = vld [vmem:[%s276 + $0x40] sm:$0xff]
        %v7882 = vld [vmem:[%s276 + $0x48] sm:$0xff]
        %v7883 = vld [vmem:[%s276 + $0x50] sm:$0xff]
        %v7884 = vld [vmem:[%s276 + $0x58] sm:$0xff]
        %v7885 = vld [vmem:[%s276 + $0x60] sm:$0xff]
        %v7886 = vld [vmem:[%s276 + $0x68] sm:$0xff]
        %v7887 = vld [vmem:[%s276 + $0x70] sm:$0xff]
        %v7888 = vld [vmem:[%s276 + $0x78] sm:$0xff]
        %v7889 = vld [vmem:[%s276 + $0x80] sm:$0xff]
        %v7890 = vld [vmem:[%s276 + $0x88] sm:$0xff]
        %v7891 = vld [vmem:[%s276 + $0x90] sm:$0xff]
        %v7892 = vld [vmem:[%s276 + $0x98] sm:$0xff]
        %v7893 = vld [vmem:[%s276 + $0xa0] sm:$0xff]
        %v7894 = vld [vmem:[%s276 + $0xa8] sm:$0xff]
        %v7895 = vld [vmem:[%s276 + $0xb0] sm:$0xff]
        %v7896 = vld [vmem:[%s276 + $0xb8] sm:$0xff]
        %v7897 = vld [vmem:[%s276 + $0xc0] sm:$0xff]
        %v7898 = vld [vmem:[%s276 + $0xc8] sm:$0xff]
        %v7899 = vld [vmem:[%s276 + $0xd0] sm:$0xff]
        %v7900 = vld [vmem:[%s276 + $0xd8] sm:$0xff]
        %v7901 = vld [vmem:[%s276 + $0xe0] sm:$0xff]
        %v7902 = vld [vmem:[%s276 + $0xe8] sm:$0xff]
        %v7903 = vld [vmem:[%s276 + $0xf0] sm:$0xff]
        %v7904 = vld [vmem:[%s276 + $0xf8] sm:$0xff]
        %v7905 = vadd.f32 %v7841, %v7873
        %v7906 = vadd.f32 %v7842, %v7874
        %v7907 = vadd.f32 %v7843, %v7875
        %v7908 = vadd.f32 %v7844, %v7876
        %v7909 = vadd.f32 %v7845, %v7877
        %v7910 = vadd.f32 %v7846, %v7878
        %v7911 = vadd.f32 %v7847, %v7879
        %v7912 = vadd.f32 %v7848, %v7880
        %v7913 = vadd.f32 %v7849, %v7881
        %v7914 = vadd.f32 %v7850, %v7882
        %v7915 = vadd.f32 %v7851, %v7883
        %v7916 = vadd.f32 %v7852, %v7884
        %v7917 = vadd.f32 %v7853, %v7885
        %v7918 = vadd.f32 %v7854, %v7886
        %v7919 = vadd.f32 %v7855, %v7887
        %v7920 = vadd.f32 %v7856, %v7888
        %v7921 = vadd.f32 %v7857, %v7889
        %v7922 = vadd.f32 %v7858, %v7890
        %v7923 = vadd.f32 %v7859, %v7891
        %v7924 = vadd.f32 %v7860, %v7892
        %v7925 = vadd.f32 %v7861, %v7893
        %v7926 = vadd.f32 %v7862, %v7894
        %v7927 = vadd.f32 %v7863, %v7895
        %v7928 = vadd.f32 %v7864, %v7896
        %v7929 = vadd.f32 %v7865, %v7897
        %v7930 = vadd.f32 %v7866, %v7898
        %v7931 = vadd.f32 %v7867, %v7899
        %v7932 = vadd.f32 %v7868, %v7900
        %v7933 = vadd.f32 %v7869, %v7901
        %v7934 = vadd.f32 %v7870, %v7902
        %v7935 = vadd.f32 %v7871, %v7903
        %v7936 = vadd.f32 %v7872, %v7904
        %v7937 = vmax.f32 %v7905, 0.0
        %v7938 = vmax.f32 %v7906, 0.0
        %v7939 = vmax.f32 %v7907, 0.0
        %v7940 = vmax.f32 %v7908, 0.0
        %v7941 = vmax.f32 %v7909, 0.0
        %v7942 = vmax.f32 %v7910, 0.0
        %v7943 = vmax.f32 %v7911, 0.0
        %v7944 = vmax.f32 %v7912, 0.0
        %v7945 = vmax.f32 %v7913, 0.0
        %v7946 = vmax.f32 %v7914, 0.0
        %v7947 = vmax.f32 %v7915, 0.0
        %v7948 = vmax.f32 %v7916, 0.0
        %v7949 = vmax.f32 %v7917, 0.0
        %v7950 = vmax.f32 %v7918, 0.0
        %v7951 = vmax.f32 %v7919, 0.0
        %v7952 = vmax.f32 %v7920, 0.0
        %v7953 = vmax.f32 %v7921, 0.0
        %v7954 = vmax.f32 %v7922, 0.0
        %v7955 = vmax.f32 %v7923, 0.0
        %v7956 = vmax.f32 %v7924, 0.0
        %v7957 = vmax.f32 %v7925, 0.0
        %v7958 = vmax.f32 %v7926, 0.0
        %v7959 = vmax.f32 %v7927, 0.0
        %v7960 = vmax.f32 %v7928, 0.0
        %v7961 = vmax.f32 %v7929, 0.0
        %v7962 = vmax.f32 %v7930, 0.0
        %v7963 = vmax.f32 %v7931, 0.0
        %v7964 = vmax.f32 %v7932, 0.0
        %v7965 = vmax.f32 %v7933, 0.0
        %v7966 = vmax.f32 %v7934, 0.0
        %v7967 = vmax.f32 %v7935, 0.0
        %v7968 = vmax.f32 %v7936, 0.0
        %7969 = vst.msk [vmem:[%s271] sm:$0xff] %vm278, %v7937
        %7970 = vst.msk [vmem:[%s271 + $0x8] sm:$0xff] %vm278, %v7938
        %7971 = vst.msk [vmem:[%s271 + $0x10] sm:$0xff] %vm278, %v7939
        %7972 = vst.msk [vmem:[%s271 + $0x18] sm:$0xff] %vm278, %v7940
        %7973 = vst.msk [vmem:[%s271 + $0x20] sm:$0xff] %vm278, %v7941
        %7974 = vst.msk [vmem:[%s271 + $0x28] sm:$0xff] %vm278, %v7942
        %7975 = vst.msk [vmem:[%s271 + $0x30] sm:$0xff] %vm278, %v7943
        %7976 = vst.msk [vmem:[%s271 + $0x38] sm:$0xff] %vm278, %v7944
        %7977 = vst.msk [vmem:[%s271 + $0x40] sm:$0xff] %vm278, %v7945
        %7978 = vst.msk [vmem:[%s271 + $0x48] sm:$0xff] %vm278, %v7946
        %7979 = vst.msk [vmem:[%s271 + $0x50] sm:$0xff] %vm278, %v7947
        %7980 = vst.msk [vmem:[%s271 + $0x58] sm:$0xff] %vm278, %v7948
        %7981 = vst.msk [vmem:[%s271 + $0x60] sm:$0xff] %vm278, %v7949
        %7982 = vst.msk [vmem:[%s271 + $0x68] sm:$0xff] %vm278, %v7950
        %7983 = vst.msk [vmem:[%s271 + $0x70] sm:$0xff] %vm278, %v7951
        %7984 = vst.msk [vmem:[%s271 + $0x78] sm:$0xff] %vm278, %v7952
        %7985 = vst.msk [vmem:[%s271 + $0x80] sm:$0xff] %vm278, %v7953
        %7986 = vst.msk [vmem:[%s271 + $0x88] sm:$0xff] %vm278, %v7954
        %7987 = vst.msk [vmem:[%s271 + $0x90] sm:$0xff] %vm278, %v7955
        %7988 = vst.msk [vmem:[%s271 + $0x98] sm:$0xff] %vm278, %v7956
        %7989 = vst.msk [vmem:[%s271 + $0xa0] sm:$0xff] %vm278, %v7957
        %7990 = vst.msk [vmem:[%s271 + $0xa8] sm:$0xff] %vm278, %v7958
        %7991 = vst.msk [vmem:[%s271 + $0xb0] sm:$0xff] %vm278, %v7959
        %7992 = vst.msk [vmem:[%s271 + $0xb8] sm:$0xff] %vm278, %v7960
        %7993 = vst.msk [vmem:[%s271 + $0xc0] sm:$0xff] %vm278, %v7961
        %7994 = vst.msk [vmem:[%s271 + $0xc8] sm:$0xff] %vm278, %v7962
        %7995 = vst.msk [vmem:[%s271 + $0xd0] sm:$0xff] %vm278, %v7963
        %7996 = vst.msk [vmem:[%s271 + $0xd8] sm:$0xff] %vm278, %v7964
        %7997 = vst.msk [vmem:[%s271 + $0xe0] sm:$0xff] %vm278, %v7965
        %7998 = vst.msk [vmem:[%s271 + $0xe8] sm:$0xff] %vm278, %v7966
        %7999 = vst.msk [vmem:[%s271 + $0xf0] sm:$0xff] %vm278, %v7967
        %8000 = vst.msk [vmem:[%s271 + $0xf8] sm:$0xff] %vm278, %v7968
        %s8001 = sand.u32 %s181, 1
        %s8002 = scalar_lea.sflag [#allocation5], %s8001
        %s8003 = sand.u32 %s181, 1
        %s8004 = smul.addr %s8003, 256
        %s8005 = scalar_lea.vmem [#allocation4], %s8004
        // Predicated region
        $region49: #{basic_block_forward.1} parent=47 // pred_check
          %p8006 = pneg %p191
        $region50: #{basic_block_forward.1} parent=47 // pred_check_branch
          %8008 = sbr.rel (%p8006) target = $region52
        $region51: #{basic_block_forward.1} parent=47 // pred_region
          %s8010 = ssub.s32 4096, 4096
          %8011 = vsyncadd %s8002, %s8010
          %s8012 = smul.addr %s21, 32
          %s8013 = smul.addr %s8012, 128
          %s8014 = scalar_lea.hbm %s7, %s8013
          %s8015 = sshll.u32 %s8005, 4
          %s8016 = int_to_ptr.vmem [resolvable:$true] %s8015
          %8021 = dma.vmem_to_hbm [thread:$0]  %s8016, 4096, %s8014, %s8002, 128, 128, 8
        $region52: #{basic_block_forward.1} parent=47 // pred_fallthru
          _
      $region48: #{basic_block_forward.1} parent=5 // pred_fallthru
        _
      %p8022 = scmp.le.s32.totalorder 2, %s16
      // Predicated region
      $region53: #{basic_block_forward.1} parent=5 // pred_check
        %p8023 = pneg %p8022
      $region54: #{basic_block_forward.1} parent=5 // pred_check_branch
        %8025 = sbr.rel (%p8023) target = $region56
      $region55: #{basic_block_forward.1} parent=5 // pred_region
        %s8026 = ssub.s32 %s16, 2
        // Predicated region
        $region57: #{basic_block_forward.1} parent=55 // pred_check
          %p8027 = pneg %p197
        $region58: #{basic_block_forward.1} parent=55 // pred_check_branch
          %8029 = sbr.rel (%p8027) target = $region60
        $region59: #{basic_block_forward.1} parent=55 // pred_region
          %s8030 = sand.u32 %s182, 1
          %s8031 = scalar_lea.sflag [#allocation5], %s8030
          %s8032 = sand.u32 %s182, 1
          %s8033 = smul.addr %s8032, 256
          %s8034 = scalar_lea.vmem [#allocation4], %s8033
          %8035 = dma.done %s8031, 4096
        $region60: #{basic_block_forward.1} parent=55 // pred_fallthru
          _
      $region56: #{basic_block_forward.1} parent=5 // pred_fallthru
        _
    $region6: #{basic_block_forward.1} parent=1 // loop_footer
      %s20 = sadd.s32 1, %s16
    $region7: #{basic_block_forward.1} parent=1 // loop_footer_branch
      %15 = sbr.rel target = $region3
    $region8: #{basic_block_forward.1} parent=1 // loop_exit
      _
    %8036 = vsyncpa [#allocation5], 1
    %s8037 = scalar_lea.sflag [#allocation5], 1
    %8038 = vsyncpa %s8037, 1

</llo_original>
